<compile_context>
chip_gen: v7x
topology: tpu7x:2x2x1
jax: 0.10.0
libtpu: 0.0.40
codegen_flags: <defaults>
</compile_context>

<pallas_src>
import functools

import numpy as np

import jax
import jax.numpy as jnp
from jax import lax
from jax.experimental import pallas as pl
from jax.experimental.pallas import tpu as pltpu  # noqa: F401  (TPU backend)

BATCH = 2
CHANNELS = 3
IMG_SIZE = 16                       # 4 stride-2 convs: 16 -> 8 -> 4 -> 2 -> 1
DS_SIZE = IMG_SIZE // 2 ** 4        # = 1
C1, C2, C3, C4 = 16, 32, 64, 128
LRELU_SLOPE = 0.2
BN_EPS = 0.8                        # nn.BatchNorm2d(C, 0.8) -> eps = 0.8

assert DS_SIZE == 1, "adv-head flatten below assumes a 1x1 final feature map"


# --------------------------- constant 0/1 matrices ---------------------------

def _subsample_matrix(batch, h, w):
    """(batch*h/2*w/2, batch*h*w) selector picking rows (2i, 2j) of an
    (batch, h, w, C) -> (batch*h*w, C) flattened activation."""
    ho, wo = h // 2, w // 2
    s = np.zeros((batch * ho * wo, batch * h * w), np.float32)
    for b in range(batch):
        for i in range(ho):
            for j in range(wo):
                s[(b * ho + i) * wo + j, (b * h + 2 * i) * w + 2 * j] = 1.0
    return s


def _gather_taps(batch, h, w):
    """(9, batch*h/2*w/2, batch*h*w) per-tap gather matrices implementing the
    input gathering of a 3x3 / stride-2 / pad-1 conv on a flattened
    (batch*h*w, C) activation (rows falling in the padding stay all-zero)."""
    ho, wo = h // 2, w // 2
    g = np.zeros((9, batch * ho * wo, batch * h * w), np.float32)
    for dy in range(3):
        for dx in range(3):
            t = dy * 3 + dx
            for b in range(batch):
                for i in range(ho):
                    for j in range(wo):
                        hh, ww = 2 * i + dy - 1, 2 * j + dx - 1
                        if 0 <= hh < h and 0 <= ww < w:
                            g[t, (b * ho + i) * wo + j, (b * h + hh) * w + ww] = 1.0
    return g


def make_conv_gather_constants(batch, img_size):
    assert img_size % 16 == 0
    s1 = img_size
    s2, s3, s4 = s1 // 2, s1 // 4, s1 // 8
    return {
        "sel1": jnp.asarray(_subsample_matrix(batch, s1, s1)),  # (B*64, B*256)
        "gat2": jnp.asarray(_gather_taps(batch, s2, s2)),       # (9, B*16, B*64)
        "gat3": jnp.asarray(_gather_taps(batch, s3, s3)),       # (9, B*4,  B*16)
        "gat4": jnp.asarray(_gather_taps(batch, s4, s4)),       # (9, B*1,  B*4)
    }


# --------------------------------- kernel ------------------------------------

def _discriminator_kernel(
    img_ref,                       # (B, H+2, W+2, C0)  pre-padded NHWC input
    sel1_ref,                      # (B*H/2*W/2, B*H*W)
    gat2_ref, gat3_ref, gat4_ref,  # (9, M_out, M_in) per layer
    w1_ref, b1_ref,
    w2_ref, b2_ref, bn2g_ref, bn2b_ref,
    w3_ref, b3_ref, bn3g_ref, bn3b_ref,
    w4_ref, b4_ref, bn4g_ref, bn4b_ref,
    wl_ref, bl_ref,
    out_ref,
    *, slope, eps,
):
    f32 = jnp.float32

    def lrelu(x):
        return jnp.where(x >= 0.0, x, slope * x)

    def batchnorm(x, g_ref, b_ref):
        # training-mode batch stats over all rows (= N*H*W), biased variance,
        # one-pass E[x^2] - mean^2 (perf feedback: saves one reduce pass).
        mean = jnp.mean(x, axis=0, keepdims=True)
        var = jnp.mean(x * x, axis=0, keepdims=True) - mean * mean
        return (x - mean) * lax.rsqrt(var + eps) * g_ref[...] + b_ref[...]

    def conv_s2_gather(x2d, gat_ref, w_ref, b_ref):
        # x2d: (B*H*W, Cin) flattened activation
        # gat_ref: (9, B*Ho*Wo, B*H*W)   w_ref: (9, Cin, Cout)
        m2 = gat_ref.shape[1]
        cout = w_ref.shape[-1]
        acc = jnp.zeros((m2, cout), f32)
        for t in range(9):
            gathered = jnp.dot(gat_ref[t], x2d, preferred_element_type=f32)
            acc = acc + jnp.dot(gathered, w_ref[t], preferred_element_type=f32)
        return acc + b_ref[...]

    # ---------------- block 1: Conv(C0->16, s2, p1) + LeakyReLU (no BN) ------
    xpad = img_ref[...]                               # (B, H+2, W+2, C0)
    bsz, hp, wp, c0 = xpad.shape
    h, w = hp - 2, wp - 2
    c1 = w1_ref.shape[-1]
    acc = jnp.zeros((bsz * h * w, c1), f32)           # full-res (stride-1) conv
    for dy in range(3):
        for dx in range(3):
            patch = xpad[:, dy:dy + h, dx:dx + w, :].reshape(bsz * h * w, c0)
            acc = acc + jnp.dot(patch, w1_ref[dy * 3 + dx],
                                preferred_element_type=f32)
    # stride-2 subsample (rows with h%2==0, w%2==0) as one selection matmul
    z = jnp.dot(sel1_ref[...], acc, preferred_element_type=f32) + b1_ref[...]
    z = lrelu(z)
    # TODO(synk): Dropout2d(0.25) treated as identity (eval semantics);
    # training-mode channel dropout would need pltpu.prng_* and cannot match
    # the PyTorch RNG anyway.

    # ---------------- block 2: Conv(16->32, s2, p1) + LeakyReLU + BN ---------
    z = lrelu(conv_s2_gather(z, gat2_ref, w2_ref, b2_ref))    # (B*16, 32)
    z = batchnorm(z, bn2g_ref, bn2b_ref)

    # ---------------- block 3: Conv(32->64, s2, p1) + LeakyReLU + BN ---------
    z = lrelu(conv_s2_gather(z, gat3_ref, w3_ref, b3_ref))    # (B*4, 64)
    z = batchnorm(z, bn3g_ref, bn3b_ref)

    # ---------------- block 4: Conv(64->128, s2, p1) + LeakyReLU + BN --------
    z = lrelu(conv_s2_gather(z, gat4_ref, w4_ref, b4_ref))    # (B, 128): 1x1
    z = batchnorm(z, bn4g_ref, bn4b_ref)

    # ---------------- adv head: Linear(128*ds^2 -> 1) ------------------------
    out_ref[...] = (jnp.dot(z, wl_ref[...], preferred_element_type=f32)
                    + bl_ref[...]).astype(out_ref.dtype)


# -------------------------------- wrapper ------------------------------------

@jax.jit
def discriminator_forward(params, consts, img_nchw):
    b = img_nchw.shape[0]
    # Glue on the tiny network INPUT only (3 KB): NCHW -> NHWC + pad=1 for the
    # first conv.  All intermediate activations stay inside the fused kernel.
    img = jnp.transpose(img_nchw, (0, 2, 3, 1))
    img = jnp.pad(img, ((0, 0), (1, 1), (1, 1), (0, 0)))
    kernel = functools.partial(_discriminator_kernel,
                               slope=LRELU_SLOPE, eps=BN_EPS)
    return pl.pallas_call(
        kernel,
        out_shape=jax.ShapeDtypeStruct((b, 1), jnp.float32),
    )(img,
      consts["sel1"], consts["gat2"], consts["gat3"], consts["gat4"],
      params["w1"], params["b1"],
      params["w2"], params["b2"], params["bn2_g"], params["bn2_b"],
      params["w3"], params["b3"], params["bn3_g"], params["bn3_b"],
      params["w4"], params["b4"], params["bn4_g"], params["bn4_b"],
      params["wl"], params["bl"])


def init_params(key):
    ks = jax.random.split(key, 12)

    def n(k, shape):
        return 0.05 * jax.random.normal(k, shape, jnp.float32)

    return {
        # conv weights stored as (9, Cin, Cout): tap t = 3*dy + dx of the
        # PyTorch (Cout, Cin, 3, 3) kernel transposed to (dy, dx, Cin, Cout).
        "w1": n(ks[0], (9, CHANNELS, C1)), "b1": n(ks[1], (1, C1)),
        "w2": n(ks[2], (9, C1, C2)), "b2": n(ks[3], (1, C2)),
        "bn2_g": jnp.ones((1, C2), jnp.float32),
        "bn2_b": jnp.zeros((1, C2), jnp.float32),
        "w3": n(ks[4], (9, C2, C3)), "b3": n(ks[5], (1, C3)),
        "bn3_g": jnp.ones((1, C3), jnp.float32),
        "bn3_b": jnp.zeros((1, C3), jnp.float32),
        "w4": n(ks[6], (9, C3, C4)), "b4": n(ks[7], (1, C4)),
        "bn4_g": jnp.ones((1, C4), jnp.float32),
        "bn4_b": jnp.zeros((1, C4), jnp.float32),
        "wl": n(ks[8], (C4 * DS_SIZE * DS_SIZE, 1)), "bl": n(ks[9], (1, 1)),
    }


def reference_forward(params, img_nchw):
    """Pure-JAX/XLA reference with the exact PyTorch module semantics."""
    def conv_s2(x, w9, b):
        cin, cout = w9.shape[1], w9.shape[2]
        w = w9.reshape(3, 3, cin, cout)                       # HWIO
        y = lax.conv_general_dilated(
            x, w, window_strides=(2, 2), padding=((1, 1), (1, 1)),
            dimension_numbers=("NCHW", "HWIO", "NCHW"))
        return y + b.reshape(1, cout, 1, 1)

    def lrelu(x):
        return jnp.where(x >= 0, x, LRELU_SLOPE * x)

    def bn(x, g, b):
        mean = jnp.mean(x, axis=(0, 2, 3), keepdims=True)
        var = jnp.mean((x - mean) ** 2, axis=(0, 2, 3), keepdims=True)
        xhat = (x - mean) * lax.rsqrt(var + BN_EPS)
        return xhat * g.reshape(1, -1, 1, 1) + b.reshape(1, -1, 1, 1)

    x = lrelu(conv_s2(img_nchw, params["w1"], params["b1"]))
    x = bn(lrelu(conv_s2(x, params["w2"], params["b2"])),
           params["bn2_g"], params["bn2_b"])
    x = bn(lrelu(conv_s2(x, params["w3"], params["b3"])),
           params["bn3_g"], params["bn3_b"])
    x = bn(lrelu(conv_s2(x, params["w4"], params["b4"])),
           params["bn4_g"], params["bn4_b"])
    out = x.reshape(x.shape[0], -1)                           # (B, 128*ds^2)
    return out @ params["wl"] + params["bl"]


if __name__ == "__main__":
    key = jax.random.PRNGKey(0)
    pkey, xkey = jax.random.split(key)
    params = init_params(pkey)
    consts = make_conv_gather_constants(BATCH, IMG_SIZE)
    img = jax.random.normal(xkey, (BATCH, CHANNELS, IMG_SIZE, IMG_SIZE),
                            jnp.float32)

    validity = discriminator_forward(params, consts, img)
    jax.block_until_ready(validity)

    assert validity.shape == (BATCH, 1), validity.shape
    assert bool(jnp.all(jnp.isfinite(validity)))

    ref = reference_forward(params, img)
    np.testing.assert_allclose(np.asarray(validity), np.asarray(ref),
                               rtol=5e-3, atol=5e-3)
    print("KERNEL_OK")
</pallas_src>

<mosaic_0001>
module attributes {stable_mosaic.version = 11 : i64} {
  func.func @_discriminator_kernel(%arg0: memref<2x18x18x3xf32, #tpu.memory_space<vmem>>, %arg1: memref<128x512xf32, #tpu.memory_space<vmem>>, %arg2: memref<9x32x128xf32, #tpu.memory_space<vmem>>, %arg3: memref<9x8x32xf32, #tpu.memory_space<vmem>>, %arg4: memref<9x2x8xf32, #tpu.memory_space<vmem>>, %arg5: memref<9x3x16xf32, #tpu.memory_space<vmem>>, %arg6: memref<1x16xf32, #tpu.memory_space<vmem>>, %arg7: memref<9x16x32xf32, #tpu.memory_space<vmem>>, %arg8: memref<1x32xf32, #tpu.memory_space<vmem>>, %arg9: memref<1x32xf32, #tpu.memory_space<vmem>>, %arg10: memref<1x32xf32, #tpu.memory_space<vmem>>, %arg11: memref<9x32x64xf32, #tpu.memory_space<vmem>>, %arg12: memref<1x64xf32, #tpu.memory_space<vmem>>, %arg13: memref<1x64xf32, #tpu.memory_space<vmem>>, %arg14: memref<1x64xf32, #tpu.memory_space<vmem>>, %arg15: memref<9x64x128xf32, #tpu.memory_space<vmem>>, %arg16: memref<1x128xf32, #tpu.memory_space<vmem>>, %arg17: memref<1x128xf32, #tpu.memory_space<vmem>>, %arg18: memref<1x128xf32, #tpu.memory_space<vmem>>, %arg19: memref<128x1xf32, #tpu.memory_space<vmem>>, %arg20: memref<1x1xf32, #tpu.memory_space<vmem>>, %arg21: memref<2x1xf32, #tpu.memory_space<vmem>>) attributes {dimension_semantics = [], scalar_prefetch = 0 : i64, scratch_operands = 0 : i64, tpu.core_type = #tpu.core_type<tc>} {
    %c0 = arith.constant 0 : index
    %c0_0 = arith.constant 0 : index
    %c0_1 = arith.constant 0 : index
    %c0_2 = arith.constant 0 : index
    %0 = vector.load %arg0[%c0, %c0_0, %c0_1, %c0_2] : memref<2x18x18x3xf32, #tpu.memory_space<vmem>>, vector<2x18x18x3xf32>
    %cst = arith.constant 0.000000e+00 : f32
    %1 = vector.broadcast %cst : f32 to vector<512x16xf32>
    %2 = vector.extract_strided_slice %0 {offsets = [0, 0, 0, 0], sizes = [2, 16, 16, 3], strides = [1, 1, 1, 1]} : vector<2x18x18x3xf32> to vector<2x16x16x3xf32>
    %3 = vector.shape_cast %2 : vector<2x16x16x3xf32> to vector<512x3xf32>
    %c0_3 = arith.constant 0 : index
    %c0_4 = arith.constant 0 : index
    %c0_5 = arith.constant 0 : index
    %4 = vector.load %arg5[%c0_3, %c0_4, %c0_5] : memref<9x3x16xf32, #tpu.memory_space<vmem>>, vector<1x3x16xf32>
    %5 = vector.shape_cast %4 : vector<1x3x16xf32> to vector<3x16xf32>
    %cst_6 = arith.constant dense<0.000000e+00> : vector<512x16xf32>
    %6 = tpu.matmul %3, %5, %cst_6 {dimension_numbers = #tpu.dot_dimension_numbers<[1], [0], [0], [1], [0, 0, 1, 1], [], []>} : vector<512x3xf32>, vector<3x16xf32>, vector<512x16xf32> -> vector<512x16xf32>
    %7 = arith.addf %1, %6 : vector<512x16xf32>
    %8 = vector.extract_strided_slice %0 {offsets = [0, 0, 1, 0], sizes = [2, 16, 16, 3], strides = [1, 1, 1, 1]} : vector<2x18x18x3xf32> to vector<2x16x16x3xf32>
    %9 = vector.shape_cast %8 : vector<2x16x16x3xf32> to vector<512x3xf32>
    %c1 = arith.constant 1 : index
    %c0_7 = arith.constant 0 : index
    %c0_8 = arith.constant 0 : index
    %10 = vector.load %arg5[%c1, %c0_7, %c0_8] : memref<9x3x16xf32, #tpu.memory_space<vmem>>, vector<1x3x16xf32>
    %11 = vector.shape_cast %10 : vector<1x3x16xf32> to vector<3x16xf32>
    %cst_9 = arith.constant dense<0.000000e+00> : vector<512x16xf32>
    %12 = tpu.matmul %9, %11, %cst_9 {dimension_numbers = #tpu.dot_dimension_numbers<[1], [0], [0], [1], [0, 0, 1, 1], [], []>} : vector<512x3xf32>, vector<3x16xf32>, vector<512x16xf32> -> vector<512x16xf32>
    %13 = arith.addf %7, %12 : vector<512x16xf32>
    %14 = vector.extract_strided_slice %0 {offsets = [0, 0, 2, 0], sizes = [2, 16, 16, 3], strides = [1, 1, 1, 1]} : vector<2x18x18x3xf32> to vector<2x16x16x3xf32>
    %15 = vector.shape_cast %14 : vector<2x16x16x3xf32> to vector<512x3xf32>
    %c2 = arith.constant 2 : index
    %c0_10 = arith.constant 0 : index
    %c0_11 = arith.constant 0 : index
    %16 = vector.load %arg5[%c2, %c0_10, %c0_11] : memref<9x3x16xf32, #tpu.memory_space<vmem>>, vector<1x3x16xf32>
    %17 = vector.shape_cast %16 : vector<1x3x16xf32> to vector<3x16xf32>
    %cst_12 = arith.constant dense<0.000000e+00> : vector<512x16xf32>
    %18 = tpu.matmul %15, %17, %cst_12 {dimension_numbers = #tpu.dot_dimension_numbers<[1], [0], [0], [1], [0, 0, 1, 1], [], []>} : vector<512x3xf32>, vector<3x16xf32>, vector<512x16xf32> -> vector<512x16xf32>
    %19 = arith.addf %13, %18 : vector<512x16xf32>
    %20 = vector.extract_strided_slice %0 {offsets = [0, 1, 0, 0], sizes = [2, 16, 16, 3], strides = [1, 1, 1, 1]} : vector<2x18x18x3xf32> to vector<2x16x16x3xf32>
    %21 = vector.shape_cast %20 : vector<2x16x16x3xf32> to vector<512x3xf32>
    %c3 = arith.constant 3 : index
    %c0_13 = arith.constant 0 : index
    %c0_14 = arith.constant 0 : index
    %22 = vector.load %arg5[%c3, %c0_13, %c0_14] : memref<9x3x16xf32, #tpu.memory_space<vmem>>, vector<1x3x16xf32>
    %23 = vector.shape_cast %22 : vector<1x3x16xf32> to vector<3x16xf32>
    %cst_15 = arith.constant dense<0.000000e+00> : vector<512x16xf32>
    %24 = tpu.matmul %21, %23, %cst_15 {dimension_numbers = #tpu.dot_dimension_numbers<[1], [0], [0], [1], [0, 0, 1, 1], [], []>} : vector<512x3xf32>, vector<3x16xf32>, vector<512x16xf32> -> vector<512x16xf32>
    %25 = arith.addf %19, %24 : vector<512x16xf32>
    %26 = vector.extract_strided_slice %0 {offsets = [0, 1, 1, 0], sizes = [2, 16, 16, 3], strides = [1, 1, 1, 1]} : vector<2x18x18x3xf32> to vector<2x16x16x3xf32>
    %27 = vector.shape_cast %26 : vector<2x16x16x3xf32> to vector<512x3xf32>
    %c4 = arith.constant 4 : index
    %c0_16 = arith.constant 0 : index
    %c0_17 = arith.constant 0 : index
    %28 = vector.load %arg5[%c4, %c0_16, %c0_17] : memref<9x3x16xf32, #tpu.memory_space<vmem>>, vector<1x3x16xf32>
    %29 = vector.shape_cast %28 : vector<1x3x16xf32> to vector<3x16xf32>
    %cst_18 = arith.constant dense<0.000000e+00> : vector<512x16xf32>
    %30 = tpu.matmul %27, %29, %cst_18 {dimension_numbers = #tpu.dot_dimension_numbers<[1], [0], [0], [1], [0, 0, 1, 1], [], []>} : vector<512x3xf32>, vector<3x16xf32>, vector<512x16xf32> -> vector<512x16xf32>
    %31 = arith.addf %25, %30 : vector<512x16xf32>
    %32 = vector.extract_strided_slice %0 {offsets = [0, 1, 2, 0], sizes = [2, 16, 16, 3], strides = [1, 1, 1, 1]} : vector<2x18x18x3xf32> to vector<2x16x16x3xf32>
    %33 = vector.shape_cast %32 : vector<2x16x16x3xf32> to vector<512x3xf32>
    %c5 = arith.constant 5 : index
    %c0_19 = arith.constant 0 : index
    %c0_20 = arith.constant 0 : index
    %34 = vector.load %arg5[%c5, %c0_19, %c0_20] : memref<9x3x16xf32, #tpu.memory_space<vmem>>, vector<1x3x16xf32>
    %35 = vector.shape_cast %34 : vector<1x3x16xf32> to vector<3x16xf32>
    %cst_21 = arith.constant dense<0.000000e+00> : vector<512x16xf32>
    %36 = tpu.matmul %33, %35, %cst_21 {dimension_numbers = #tpu.dot_dimension_numbers<[1], [0], [0], [1], [0, 0, 1, 1], [], []>} : vector<512x3xf32>, vector<3x16xf32>, vector<512x16xf32> -> vector<512x16xf32>
    %37 = arith.addf %31, %36 : vector<512x16xf32>
    %38 = vector.extract_strided_slice %0 {offsets = [0, 2, 0, 0], sizes = [2, 16, 16, 3], strides = [1, 1, 1, 1]} : vector<2x18x18x3xf32> to vector<2x16x16x3xf32>
    %39 = vector.shape_cast %38 : vector<2x16x16x3xf32> to vector<512x3xf32>
    %c6 = arith.constant 6 : index
    %c0_22 = arith.constant 0 : index
    %c0_23 = arith.constant 0 : index
    %40 = vector.load %arg5[%c6, %c0_22, %c0_23] : memref<9x3x16xf32, #tpu.memory_space<vmem>>, vector<1x3x16xf32>
    %41 = vector.shape_cast %40 : vector<1x3x16xf32> to vector<3x16xf32>
    %cst_24 = arith.constant dense<0.000000e+00> : vector<512x16xf32>
    %42 = tpu.matmul %39, %41, %cst_24 {dimension_numbers = #tpu.dot_dimension_numbers<[1], [0], [0], [1], [0, 0, 1, 1], [], []>} : vector<512x3xf32>, vector<3x16xf32>, vector<512x16xf32> -> vector<512x16xf32>
    %43 = arith.addf %37, %42 : vector<512x16xf32>
    %44 = vector.extract_strided_slice %0 {offsets = [0, 2, 1, 0], sizes = [2, 16, 16, 3], strides = [1, 1, 1, 1]} : vector<2x18x18x3xf32> to vector<2x16x16x3xf32>
    %45 = vector.shape_cast %44 : vector<2x16x16x3xf32> to vector<512x3xf32>
    %c7 = arith.constant 7 : index
    %c0_25 = arith.constant 0 : index
    %c0_26 = arith.constant 0 : index
    %46 = vector.load %arg5[%c7, %c0_25, %c0_26] : memref<9x3x16xf32, #tpu.memory_space<vmem>>, vector<1x3x16xf32>
    %47 = vector.shape_cast %46 : vector<1x3x16xf32> to vector<3x16xf32>
    %cst_27 = arith.constant dense<0.000000e+00> : vector<512x16xf32>
    %48 = tpu.matmul %45, %47, %cst_27 {dimension_numbers = #tpu.dot_dimension_numbers<[1], [0], [0], [1], [0, 0, 1, 1], [], []>} : vector<512x3xf32>, vector<3x16xf32>, vector<512x16xf32> -> vector<512x16xf32>
    %49 = arith.addf %43, %48 : vector<512x16xf32>
    %50 = vector.extract_strided_slice %0 {offsets = [0, 2, 2, 0], sizes = [2, 16, 16, 3], strides = [1, 1, 1, 1]} : vector<2x18x18x3xf32> to vector<2x16x16x3xf32>
    %51 = vector.shape_cast %50 : vector<2x16x16x3xf32> to vector<512x3xf32>
    %c8 = arith.constant 8 : index
    %c0_28 = arith.constant 0 : index
    %c0_29 = arith.constant 0 : index
    %52 = vector.load %arg5[%c8, %c0_28, %c0_29] : memref<9x3x16xf32, #tpu.memory_space<vmem>>, vector<1x3x16xf32>
    %53 = vector.shape_cast %52 : vector<1x3x16xf32> to vector<3x16xf32>
    %cst_30 = arith.constant dense<0.000000e+00> : vector<512x16xf32>
    %54 = tpu.matmul %51, %53, %cst_30 {dimension_numbers = #tpu.dot_dimension_numbers<[1], [0], [0], [1], [0, 0, 1, 1], [], []>} : vector<512x3xf32>, vector<3x16xf32>, vector<512x16xf32> -> vector<512x16xf32>
    %55 = arith.addf %49, %54 : vector<512x16xf32>
    %c0_31 = arith.constant 0 : index
    %c0_32 = arith.constant 0 : index
    %56 = vector.load %arg1[%c0_31, %c0_32] : memref<128x512xf32, #tpu.memory_space<vmem>>, vector<128x512xf32>
    %cst_33 = arith.constant dense<0.000000e+00> : vector<128x16xf32>
    %57 = tpu.matmul %56, %55, %cst_33 {dimension_numbers = #tpu.dot_dimension_numbers<[1], [0], [0], [1], [0, 0, 1, 1], [], []>} : vector<128x512xf32>, vector<512x16xf32>, vector<128x16xf32> -> vector<128x16xf32>
    %c0_34 = arith.constant 0 : index
    %c0_35 = arith.constant 0 : index
    %58 = vector.load %arg6[%c0_34, %c0_35] : memref<1x16xf32, #tpu.memory_space<vmem>>, vector<1x16xf32>
    %59 = vector.broadcast %58 : vector<1x16xf32> to vector<128x16xf32>
    %60 = arith.addf %57, %59 : vector<128x16xf32>
    %cst_36 = arith.constant 0.000000e+00 : f32
    %61 = vector.broadcast %cst_36 : f32 to vector<128x16xf32>
    %62 = arith.cmpf oge, %60, %61 : vector<128x16xf32>
    %cst_37 = arith.constant 2.000000e-01 : f32
    %63 = vector.broadcast %cst_37 : f32 to vector<128x16xf32>
    %64 = arith.mulf %63, %60 : vector<128x16xf32>
    %65 = arith.select %62, %60, %64 : vector<128x16xi1>, vector<128x16xf32>
    %cst_38 = arith.constant 0.000000e+00 : f32
    %66 = vector.broadcast %cst_38 : f32 to vector<32x32xf32>
    %c0_39 = arith.constant 0 : index
    %c0_40 = arith.constant 0 : index
    %c0_41 = arith.constant 0 : index
    %67 = vector.load %arg2[%c0_39, %c0_40, %c0_41] : memref<9x32x128xf32, #tpu.memory_space<vmem>>, vector<1x32x128xf32>
    %68 = vector.shape_cast %67 : vector<1x32x128xf32> to vector<32x128xf32>
    %cst_42 = arith.constant dense<0.000000e+00> : vector<32x16xf32>
    %69 = tpu.matmul %68, %65, %cst_42 {dimension_numbers = #tpu.dot_dimension_numbers<[1], [0], [0], [1], [0, 0, 1, 1], [], []>} : vector<32x128xf32>, vector<128x16xf32>, vector<32x16xf32> -> vector<32x16xf32>
    %c0_43 = arith.constant 0 : index
    %c0_44 = arith.constant 0 : index
    %c0_45 = arith.constant 0 : index
    %70 = vector.load %arg7[%c0_43, %c0_44, %c0_45] : memref<9x16x32xf32, #tpu.memory_space<vmem>>, vector<1x16x32xf32>
    %71 = vector.shape_cast %70 : vector<1x16x32xf32> to vector<16x32xf32>
    %cst_46 = arith.constant dense<0.000000e+00> : vector<32x32xf32>
    %72 = tpu.matmul %69, %71, %cst_46 {dimension_numbers = #tpu.dot_dimension_numbers<[1], [0], [0], [1], [0, 0, 1, 1], [], []>} : vector<32x16xf32>, vector<16x32xf32>, vector<32x32xf32> -> vector<32x32xf32>
    %73 = arith.addf %66, %72 : vector<32x32xf32>
    %c1_47 = arith.constant 1 : index
    %c0_48 = arith.constant 0 : index
    %c0_49 = arith.constant 0 : index
    %74 = vector.load %arg2[%c1_47, %c0_48, %c0_49] : memref<9x32x128xf32, #tpu.memory_space<vmem>>, vector<1x32x128xf32>
    %75 = vector.shape_cast %74 : vector<1x32x128xf32> to vector<32x128xf32>
    %cst_50 = arith.constant dense<0.000000e+00> : vector<32x16xf32>
    %76 = tpu.matmul %75, %65, %cst_50 {dimension_numbers = #tpu.dot_dimension_numbers<[1], [0], [0], [1], [0, 0, 1, 1], [], []>} : vector<32x128xf32>, vector<128x16xf32>, vector<32x16xf32> -> vector<32x16xf32>
    %c1_51 = arith.constant 1 : index
    %c0_52 = arith.constant 0 : index
    %c0_53 = arith.constant 0 : index
    %77 = vector.load %arg7[%c1_51, %c0_52, %c0_53] : memref<9x16x32xf32, #tpu.memory_space<vmem>>, vector<1x16x32xf32>
    %78 = vector.shape_cast %77 : vector<1x16x32xf32> to vector<16x32xf32>
    %cst_54 = arith.constant dense<0.000000e+00> : vector<32x32xf32>
    %79 = tpu.matmul %76, %78, %cst_54 {dimension_numbers = #tpu.dot_dimension_numbers<[1], [0], [0], [1], [0, 0, 1, 1], [], []>} : vector<32x16xf32>, vector<16x32xf32>, vector<32x32xf32> -> vector<32x32xf32>
    %80 = arith.addf %73, %79 : vector<32x32xf32>
    %c2_55 = arith.constant 2 : index
    %c0_56 = arith.constant 0 : index
    %c0_57 = arith.constant 0 : index
    %81 = vector.load %arg2[%c2_55, %c0_56, %c0_57] : memref<9x32x128xf32, #tpu.memory_space<vmem>>, vector<1x32x128xf32>
    %82 = vector.shape_cast %81 : vector<1x32x128xf32> to vector<32x128xf32>
    %cst_58 = arith.constant dense<0.000000e+00> : vector<32x16xf32>
    %83 = tpu.matmul %82, %65, %cst_58 {dimension_numbers = #tpu.dot_dimension_numbers<[1], [0], [0], [1], [0, 0, 1, 1], [], []>} : vector<32x128xf32>, vector<128x16xf32>, vector<32x16xf32> -> vector<32x16xf32>
    %c2_59 = arith.constant 2 : index
    %c0_60 = arith.constant 0 : index
    %c0_61 = arith.constant 0 : index
    %84 = vector.load %arg7[%c2_59, %c0_60, %c0_61] : memref<9x16x32xf32, #tpu.memory_space<vmem>>, vector<1x16x32xf32>
    %85 = vector.shape_cast %84 : vector<1x16x32xf32> to vector<16x32xf32>
    %cst_62 = arith.constant dense<0.000000e+00> : vector<32x32xf32>
    %86 = tpu.matmul %83, %85, %cst_62 {dimension_numbers = #tpu.dot_dimension_numbers<[1], [0], [0], [1], [0, 0, 1, 1], [], []>} : vector<32x16xf32>, vector<16x32xf32>, vector<32x32xf32> -> vector<32x32xf32>
    %87 = arith.addf %80, %86 : vector<32x32xf32>
    %c3_63 = arith.constant 3 : index
    %c0_64 = arith.constant 0 : index
    %c0_65 = arith.constant 0 : index
    %88 = vector.load %arg2[%c3_63, %c0_64, %c0_65] : memref<9x32x128xf32, #tpu.memory_space<vmem>>, vector<1x32x128xf32>
    %89 = vector.shape_cast %88 : vector<1x32x128xf32> to vector<32x128xf32>
    %cst_66 = arith.constant dense<0.000000e+00> : vector<32x16xf32>
    %90 = tpu.matmul %89, %65, %cst_66 {dimension_numbers = #tpu.dot_dimension_numbers<[1], [0], [0], [1], [0, 0, 1, 1], [], []>} : vector<32x128xf32>, vector<128x16xf32>, vector<32x16xf32> -> vector<32x16xf32>
    %c3_67 = arith.constant 3 : index
    %c0_68 = arith.constant 0 : index
    %c0_69 = arith.constant 0 : index
    %91 = vector.load %arg7[%c3_67, %c0_68, %c0_69] : memref<9x16x32xf32, #tpu.memory_space<vmem>>, vector<1x16x32xf32>
    %92 = vector.shape_cast %91 : vector<1x16x32xf32> to vector<16x32xf32>
    %cst_70 = arith.constant dense<0.000000e+00> : vector<32x32xf32>
    %93 = tpu.matmul %90, %92, %cst_70 {dimension_numbers = #tpu.dot_dimension_numbers<[1], [0], [0], [1], [0, 0, 1, 1], [], []>} : vector<32x16xf32>, vector<16x32xf32>, vector<32x32xf32> -> vector<32x32xf32>
    %94 = arith.addf %87, %93 : vector<32x32xf32>
    %c4_71 = arith.constant 4 : index
    %c0_72 = arith.constant 0 : index
    %c0_73 = arith.constant 0 : index
    %95 = vector.load %arg2[%c4_71, %c0_72, %c0_73] : memref<9x32x128xf32, #tpu.memory_space<vmem>>, vector<1x32x128xf32>
    %96 = vector.shape_cast %95 : vector<1x32x128xf32> to vector<32x128xf32>
    %cst_74 = arith.constant dense<0.000000e+00> : vector<32x16xf32>
    %97 = tpu.matmul %96, %65, %cst_74 {dimension_numbers = #tpu.dot_dimension_numbers<[1], [0], [0], [1], [0, 0, 1, 1], [], []>} : vector<32x128xf32>, vector<128x16xf32>, vector<32x16xf32> -> vector<32x16xf32>
    %c4_75 = arith.constant 4 : index
    %c0_76 = arith.constant 0 : index
    %c0_77 = arith.constant 0 : index
    %98 = vector.load %arg7[%c4_75, %c0_76, %c0_77] : memref<9x16x32xf32, #tpu.memory_space<vmem>>, vector<1x16x32xf32>
    %99 = vector.shape_cast %98 : vector<1x16x32xf32> to vector<16x32xf32>
    %cst_78 = arith.constant dense<0.000000e+00> : vector<32x32xf32>
    %100 = tpu.matmul %97, %99, %cst_78 {dimension_numbers = #tpu.dot_dimension_numbers<[1], [0], [0], [1], [0, 0, 1, 1], [], []>} : vector<32x16xf32>, vector<16x32xf32>, vector<32x32xf32> -> vector<32x32xf32>
    %101 = arith.addf %94, %100 : vector<32x32xf32>
    %c5_79 = arith.constant 5 : index
    %c0_80 = arith.constant 0 : index
    %c0_81 = arith.constant 0 : index
    %102 = vector.load %arg2[%c5_79, %c0_80, %c0_81] : memref<9x32x128xf32, #tpu.memory_space<vmem>>, vector<1x32x128xf32>
    %103 = vector.shape_cast %102 : vector<1x32x128xf32> to vector<32x128xf32>
    %cst_82 = arith.constant dense<0.000000e+00> : vector<32x16xf32>
    %104 = tpu.matmul %103, %65, %cst_82 {dimension_numbers = #tpu.dot_dimension_numbers<[1], [0], [0], [1], [0, 0, 1, 1], [], []>} : vector<32x128xf32>, vector<128x16xf32>, vector<32x16xf32> -> vector<32x16xf32>
    %c5_83 = arith.constant 5 : index
    %c0_84 = arith.constant 0 : index
    %c0_85 = arith.constant 0 : index
    %105 = vector.load %arg7[%c5_83, %c0_84, %c0_85] : memref<9x16x32xf32, #tpu.memory_space<vmem>>, vector<1x16x32xf32>
    %106 = vector.shape_cast %105 : vector<1x16x32xf32> to vector<16x32xf32>
    %cst_86 = arith.constant dense<0.000000e+00> : vector<32x32xf32>
    %107 = tpu.matmul %104, %106, %cst_86 {dimension_numbers = #tpu.dot_dimension_numbers<[1], [0], [0], [1], [0, 0, 1, 1], [], []>} : vector<32x16xf32>, vector<16x32xf32>, vector<32x32xf32> -> vector<32x32xf32>
    %108 = arith.addf %101, %107 : vector<32x32xf32>
    %c6_87 = arith.constant 6 : index
    %c0_88 = arith.constant 0 : index
    %c0_89 = arith.constant 0 : index
    %109 = vector.load %arg2[%c6_87, %c0_88, %c0_89] : memref<9x32x128xf32, #tpu.memory_space<vmem>>, vector<1x32x128xf32>
    %110 = vector.shape_cast %109 : vector<1x32x128xf32> to vector<32x128xf32>
    %cst_90 = arith.constant dense<0.000000e+00> : vector<32x16xf32>
    %111 = tpu.matmul %110, %65, %cst_90 {dimension_numbers = #tpu.dot_dimension_numbers<[1], [0], [0], [1], [0, 0, 1, 1], [], []>} : vector<32x128xf32>, vector<128x16xf32>, vector<32x16xf32> -> vector<32x16xf32>
    %c6_91 = arith.constant 6 : index
    %c0_92 = arith.constant 0 : index
    %c0_93 = arith.constant 0 : index
    %112 = vector.load %arg7[%c6_91, %c0_92, %c0_93] : memref<9x16x32xf32, #tpu.memory_space<vmem>>, vector<1x16x32xf32>
    %113 = vector.shape_cast %112 : vector<1x16x32xf32> to vector<16x32xf32>
    %cst_94 = arith.constant dense<0.000000e+00> : vector<32x32xf32>
    %114 = tpu.matmul %111, %113, %cst_94 {dimension_numbers = #tpu.dot_dimension_numbers<[1], [0], [0], [1], [0, 0, 1, 1], [], []>} : vector<32x16xf32>, vector<16x32xf32>, vector<32x32xf32> -> vector<32x32xf32>
    %115 = arith.addf %108, %114 : vector<32x32xf32>
    %c7_95 = arith.constant 7 : index
    %c0_96 = arith.constant 0 : index
    %c0_97 = arith.constant 0 : index
    %116 = vector.load %arg2[%c7_95, %c0_96, %c0_97] : memref<9x32x128xf32, #tpu.memory_space<vmem>>, vector<1x32x128xf32>
    %117 = vector.shape_cast %116 : vector<1x32x128xf32> to vector<32x128xf32>
    %cst_98 = arith.constant dense<0.000000e+00> : vector<32x16xf32>
    %118 = tpu.matmul %117, %65, %cst_98 {dimension_numbers = #tpu.dot_dimension_numbers<[1], [0], [0], [1], [0, 0, 1, 1], [], []>} : vector<32x128xf32>, vector<128x16xf32>, vector<32x16xf32> -> vector<32x16xf32>
    %c7_99 = arith.constant 7 : index
    %c0_100 = arith.constant 0 : index
    %c0_101 = arith.constant 0 : index
    %119 = vector.load %arg7[%c7_99, %c0_100, %c0_101] : memref<9x16x32xf32, #tpu.memory_space<vmem>>, vector<1x16x32xf32>
    %120 = vector.shape_cast %119 : vector<1x16x32xf32> to vector<16x32xf32>
    %cst_102 = arith.constant dense<0.000000e+00> : vector<32x32xf32>
    %121 = tpu.matmul %118, %120, %cst_102 {dimension_numbers = #tpu.dot_dimension_numbers<[1], [0], [0], [1], [0, 0, 1, 1], [], []>} : vector<32x16xf32>, vector<16x32xf32>, vector<32x32xf32> -> vector<32x32xf32>
    %122 = arith.addf %115, %121 : vector<32x32xf32>
    %c8_103 = arith.constant 8 : index
    %c0_104 = arith.constant 0 : index
    %c0_105 = arith.constant 0 : index
    %123 = vector.load %arg2[%c8_103, %c0_104, %c0_105] : memref<9x32x128xf32, #tpu.memory_space<vmem>>, vector<1x32x128xf32>
    %124 = vector.shape_cast %123 : vector<1x32x128xf32> to vector<32x128xf32>
    %cst_106 = arith.constant dense<0.000000e+00> : vector<32x16xf32>
    %125 = tpu.matmul %124, %65, %cst_106 {dimension_numbers = #tpu.dot_dimension_numbers<[1], [0], [0], [1], [0, 0, 1, 1], [], []>} : vector<32x128xf32>, vector<128x16xf32>, vector<32x16xf32> -> vector<32x16xf32>
    %c8_107 = arith.constant 8 : index
    %c0_108 = arith.constant 0 : index
    %c0_109 = arith.constant 0 : index
    %126 = vector.load %arg7[%c8_107, %c0_108, %c0_109] : memref<9x16x32xf32, #tpu.memory_space<vmem>>, vector<1x16x32xf32>
    %127 = vector.shape_cast %126 : vector<1x16x32xf32> to vector<16x32xf32>
    %cst_110 = arith.constant dense<0.000000e+00> : vector<32x32xf32>
    %128 = tpu.matmul %125, %127, %cst_110 {dimension_numbers = #tpu.dot_dimension_numbers<[1], [0], [0], [1], [0, 0, 1, 1], [], []>} : vector<32x16xf32>, vector<16x32xf32>, vector<32x32xf32> -> vector<32x32xf32>
    %129 = arith.addf %122, %128 : vector<32x32xf32>
    %c0_111 = arith.constant 0 : index
    %c0_112 = arith.constant 0 : index
    %130 = vector.load %arg8[%c0_111, %c0_112] : memref<1x32xf32, #tpu.memory_space<vmem>>, vector<1x32xf32>
    %131 = vector.broadcast %130 : vector<1x32xf32> to vector<32x32xf32>
    %132 = arith.addf %129, %131 : vector<32x32xf32>
    %cst_113 = arith.constant 0.000000e+00 : f32
    %133 = vector.broadcast %cst_113 : f32 to vector<32x32xf32>
    %134 = arith.cmpf oge, %132, %133 : vector<32x32xf32>
    %cst_114 = arith.constant 2.000000e-01 : f32
    %135 = vector.broadcast %cst_114 : f32 to vector<32x32xf32>
    %136 = arith.mulf %135, %132 : vector<32x32xf32>
    %137 = arith.select %134, %132, %136 : vector<32x32xi1>, vector<32x32xf32>
    %cst_115 = arith.constant dense<0.000000e+00> : vector<32xf32>
    %138 = vector.multi_reduction <add>, %137, %cst_115 [0] : vector<32x32xf32> to vector<32xf32>
    %139 = vector.shape_cast %138 : vector<32xf32> to vector<1x32xf32>
    %cst_116 = arith.constant 3.200000e+01 : f32
    %140 = vector.broadcast %cst_116 : f32 to vector<1x32xf32>
    %141 = arith.divf %139, %140 : vector<1x32xf32>
    %142 = arith.mulf %137, %137 : vector<32x32xf32>
    %cst_117 = arith.constant dense<0.000000e+00> : vector<32xf32>
    %143 = vector.multi_reduction <add>, %142, %cst_117 [0] : vector<32x32xf32> to vector<32xf32>
    %144 = vector.shape_cast %143 : vector<32xf32> to vector<1x32xf32>
    %cst_118 = arith.constant 3.200000e+01 : f32
    %145 = vector.broadcast %cst_118 : f32 to vector<1x32xf32>
    %146 = arith.divf %144, %145 : vector<1x32xf32>
    %147 = arith.mulf %141, %141 : vector<1x32xf32>
    %148 = arith.subf %146, %147 : vector<1x32xf32>
    %149 = vector.broadcast %141 : vector<1x32xf32> to vector<32x32xf32>
    %150 = arith.subf %137, %149 : vector<32x32xf32>
    %cst_119 = arith.constant 8.000000e-01 : f32
    %151 = vector.broadcast %cst_119 : f32 to vector<1x32xf32>
    %152 = arith.addf %148, %151 : vector<1x32xf32>
    %153 = math.rsqrt %152 : vector<1x32xf32>
    %154 = vector.broadcast %153 : vector<1x32xf32> to vector<32x32xf32>
    %155 = arith.mulf %150, %154 : vector<32x32xf32>
    %c0_120 = arith.constant 0 : index
    %c0_121 = arith.constant 0 : index
    %156 = vector.load %arg9[%c0_120, %c0_121] : memref<1x32xf32, #tpu.memory_space<vmem>>, vector<1x32xf32>
    %157 = vector.broadcast %156 : vector<1x32xf32> to vector<32x32xf32>
    %158 = arith.mulf %155, %157 : vector<32x32xf32>
    %c0_122 = arith.constant 0 : index
    %c0_123 = arith.constant 0 : index
    %159 = vector.load %arg10[%c0_122, %c0_123] : memref<1x32xf32, #tpu.memory_space<vmem>>, vector<1x32xf32>
    %160 = vector.broadcast %159 : vector<1x32xf32> to vector<32x32xf32>
    %161 = arith.addf %158, %160 : vector<32x32xf32>
    %cst_124 = arith.constant 0.000000e+00 : f32
    %162 = vector.broadcast %cst_124 : f32 to vector<8x64xf32>
    %c0_125 = arith.constant 0 : index
    %c0_126 = arith.constant 0 : index
    %c0_127 = arith.constant 0 : index
    %163 = vector.load %arg3[%c0_125, %c0_126, %c0_127] : memref<9x8x32xf32, #tpu.memory_space<vmem>>, vector<1x8x32xf32>
    %164 = vector.shape_cast %163 : vector<1x8x32xf32> to vector<8x32xf32>
    %cst_128 = arith.constant dense<0.000000e+00> : vector<8x32xf32>
    %165 = tpu.matmul %164, %161, %cst_128 {dimension_numbers = #tpu.dot_dimension_numbers<[1], [0], [0], [1], [0, 0, 1, 1], [], []>} : vector<8x32xf32>, vector<32x32xf32>, vector<8x32xf32> -> vector<8x32xf32>
    %c0_129 = arith.constant 0 : index
    %c0_130 = arith.constant 0 : index
    %c0_131 = arith.constant 0 : index
    %166 = vector.load %arg11[%c0_129, %c0_130, %c0_131] : memref<9x32x64xf32, #tpu.memory_space<vmem>>, vector<1x32x64xf32>
    %167 = vector.shape_cast %166 : vector<1x32x64xf32> to vector<32x64xf32>
    %cst_132 = arith.constant dense<0.000000e+00> : vector<8x64xf32>
    %168 = tpu.matmul %165, %167, %cst_132 {dimension_numbers = #tpu.dot_dimension_numbers<[1], [0], [0], [1], [0, 0, 1, 1], [], []>} : vector<8x32xf32>, vector<32x64xf32>, vector<8x64xf32> -> vector<8x64xf32>
    %169 = arith.addf %162, %168 : vector<8x64xf32>
    %c1_133 = arith.constant 1 : index
    %c0_134 = arith.constant 0 : index
    %c0_135 = arith.constant 0 : index
    %170 = vector.load %arg3[%c1_133, %c0_134, %c0_135] : memref<9x8x32xf32, #tpu.memory_space<vmem>>, vector<1x8x32xf32>
    %171 = vector.shape_cast %170 : vector<1x8x32xf32> to vector<8x32xf32>
    %cst_136 = arith.constant dense<0.000000e+00> : vector<8x32xf32>
    %172 = tpu.matmul %171, %161, %cst_136 {dimension_numbers = #tpu.dot_dimension_numbers<[1], [0], [0], [1], [0, 0, 1, 1], [], []>} : vector<8x32xf32>, vector<32x32xf32>, vector<8x32xf32> -> vector<8x32xf32>
    %c1_137 = arith.constant 1 : index
    %c0_138 = arith.constant 0 : index
    %c0_139 = arith.constant 0 : index
    %173 = vector.load %arg11[%c1_137, %c0_138, %c0_139] : memref<9x32x64xf32, #tpu.memory_space<vmem>>, vector<1x32x64xf32>
    %174 = vector.shape_cast %173 : vector<1x32x64xf32> to vector<32x64xf32>
    %cst_140 = arith.constant dense<0.000000e+00> : vector<8x64xf32>
    %175 = tpu.matmul %172, %174, %cst_140 {dimension_numbers = #tpu.dot_dimension_numbers<[1], [0], [0], [1], [0, 0, 1, 1], [], []>} : vector<8x32xf32>, vector<32x64xf32>, vector<8x64xf32> -> vector<8x64xf32>
    %176 = arith.addf %169, %175 : vector<8x64xf32>
    %c2_141 = arith.constant 2 : index
    %c0_142 = arith.constant 0 : index
    %c0_143 = arith.constant 0 : index
    %177 = vector.load %arg3[%c2_141, %c0_142, %c0_143] : memref<9x8x32xf32, #tpu.memory_space<vmem>>, vector<1x8x32xf32>
    %178 = vector.shape_cast %177 : vector<1x8x32xf32> to vector<8x32xf32>
    %cst_144 = arith.constant dense<0.000000e+00> : vector<8x32xf32>
    %179 = tpu.matmul %178, %161, %cst_144 {dimension_numbers = #tpu.dot_dimension_numbers<[1], [0], [0], [1], [0, 0, 1, 1], [], []>} : vector<8x32xf32>, vector<32x32xf32>, vector<8x32xf32> -> vector<8x32xf32>
    %c2_145 = arith.constant 2 : index
    %c0_146 = arith.constant 0 : index
    %c0_147 = arith.constant 0 : index
    %180 = vector.load %arg11[%c2_145, %c0_146, %c0_147] : memref<9x32x64xf32, #tpu.memory_space<vmem>>, vector<1x32x64xf32>
    %181 = vector.shape_cast %180 : vector<1x32x64xf32> to vector<32x64xf32>
    %cst_148 = arith.constant dense<0.000000e+00> : vector<8x64xf32>
    %182 = tpu.matmul %179, %181, %cst_148 {dimension_numbers = #tpu.dot_dimension_numbers<[1], [0], [0], [1], [0, 0, 1, 1], [], []>} : vector<8x32xf32>, vector<32x64xf32>, vector<8x64xf32> -> vector<8x64xf32>
    %183 = arith.addf %176, %182 : vector<8x64xf32>
    %c3_149 = arith.constant 3 : index
    %c0_150 = arith.constant 0 : index
    %c0_151 = arith.constant 0 : index
    %184 = vector.load %arg3[%c3_149, %c0_150, %c0_151] : memref<9x8x32xf32, #tpu.memory_space<vmem>>, vector<1x8x32xf32>
    %185 = vector.shape_cast %184 : vector<1x8x32xf32> to vector<8x32xf32>
    %cst_152 = arith.constant dense<0.000000e+00> : vector<8x32xf32>
    %186 = tpu.matmul %185, %161, %cst_152 {dimension_numbers = #tpu.dot_dimension_numbers<[1], [0], [0], [1], [0, 0, 1, 1], [], []>} : vector<8x32xf32>, vector<32x32xf32>, vector<8x32xf32> -> vector<8x32xf32>
    %c3_153 = arith.constant 3 : index
    %c0_154 = arith.constant 0 : index
    %c0_155 = arith.constant 0 : index
    %187 = vector.load %arg11[%c3_153, %c0_154, %c0_155] : memref<9x32x64xf32, #tpu.memory_space<vmem>>, vector<1x32x64xf32>
    %188 = vector.shape_cast %187 : vector<1x32x64xf32> to vector<32x64xf32>
    %cst_156 = arith.constant dense<0.000000e+00> : vector<8x64xf32>
    %189 = tpu.matmul %186, %188, %cst_156 {dimension_numbers = #tpu.dot_dimension_numbers<[1], [0], [0], [1], [0, 0, 1, 1], [], []>} : vector<8x32xf32>, vector<32x64xf32>, vector<8x64xf32> -> vector<8x64xf32>
    %190 = arith.addf %183, %189 : vector<8x64xf32>
    %c4_157 = arith.constant 4 : index
    %c0_158 = arith.constant 0 : index
    %c0_159 = arith.constant 0 : index
    %191 = vector.load %arg3[%c4_157, %c0_158, %c0_159] : memref<9x8x32xf32, #tpu.memory_space<vmem>>, vector<1x8x32xf32>
    %192 = vector.shape_cast %191 : vector<1x8x32xf32> to vector<8x32xf32>
    %cst_160 = arith.constant dense<0.000000e+00> : vector<8x32xf32>
    %193 = tpu.matmul %192, %161, %cst_160 {dimension_numbers = #tpu.dot_dimension_numbers<[1], [0], [0], [1], [0, 0, 1, 1], [], []>} : vector<8x32xf32>, vector<32x32xf32>, vector<8x32xf32> -> vector<8x32xf32>
    %c4_161 = arith.constant 4 : index
    %c0_162 = arith.constant 0 : index
    %c0_163 = arith.constant 0 : index
    %194 = vector.load %arg11[%c4_161, %c0_162, %c0_163] : memref<9x32x64xf32, #tpu.memory_space<vmem>>, vector<1x32x64xf32>
    %195 = vector.shape_cast %194 : vector<1x32x64xf32> to vector<32x64xf32>
    %cst_164 = arith.constant dense<0.000000e+00> : vector<8x64xf32>
    %196 = tpu.matmul %193, %195, %cst_164 {dimension_numbers = #tpu.dot_dimension_numbers<[1], [0], [0], [1], [0, 0, 1, 1], [], []>} : vector<8x32xf32>, vector<32x64xf32>, vector<8x64xf32> -> vector<8x64xf32>
    %197 = arith.addf %190, %196 : vector<8x64xf32>
    %c5_165 = arith.constant 5 : index
    %c0_166 = arith.constant 0 : index
    %c0_167 = arith.constant 0 : index
    %198 = vector.load %arg3[%c5_165, %c0_166, %c0_167] : memref<9x8x32xf32, #tpu.memory_space<vmem>>, vector<1x8x32xf32>
    %199 = vector.shape_cast %198 : vector<1x8x32xf32> to vector<8x32xf32>
    %cst_168 = arith.constant dense<0.000000e+00> : vector<8x32xf32>
    %200 = tpu.matmul %199, %161, %cst_168 {dimension_numbers = #tpu.dot_dimension_numbers<[1], [0], [0], [1], [0, 0, 1, 1], [], []>} : vector<8x32xf32>, vector<32x32xf32>, vector<8x32xf32> -> vector<8x32xf32>
    %c5_169 = arith.constant 5 : index
    %c0_170 = arith.constant 0 : index
    %c0_171 = arith.constant 0 : index
    %201 = vector.load %arg11[%c5_169, %c0_170, %c0_171] : memref<9x32x64xf32, #tpu.memory_space<vmem>>, vector<1x32x64xf32>
    %202 = vector.shape_cast %201 : vector<1x32x64xf32> to vector<32x64xf32>
    %cst_172 = arith.constant dense<0.000000e+00> : vector<8x64xf32>
    %203 = tpu.matmul %200, %202, %cst_172 {dimension_numbers = #tpu.dot_dimension_numbers<[1], [0], [0], [1], [0, 0, 1, 1], [], []>} : vector<8x32xf32>, vector<32x64xf32>, vector<8x64xf32> -> vector<8x64xf32>
    %204 = arith.addf %197, %203 : vector<8x64xf32>
    %c6_173 = arith.constant 6 : index
    %c0_174 = arith.constant 0 : index
    %c0_175 = arith.constant 0 : index
    %205 = vector.load %arg3[%c6_173, %c0_174, %c0_175] : memref<9x8x32xf32, #tpu.memory_space<vmem>>, vector<1x8x32xf32>
    %206 = vector.shape_cast %205 : vector<1x8x32xf32> to vector<8x32xf32>
    %cst_176 = arith.constant dense<0.000000e+00> : vector<8x32xf32>
    %207 = tpu.matmul %206, %161, %cst_176 {dimension_numbers = #tpu.dot_dimension_numbers<[1], [0], [0], [1], [0, 0, 1, 1], [], []>} : vector<8x32xf32>, vector<32x32xf32>, vector<8x32xf32> -> vector<8x32xf32>
    %c6_177 = arith.constant 6 : index
    %c0_178 = arith.constant 0 : index
    %c0_179 = arith.constant 0 : index
    %208 = vector.load %arg11[%c6_177, %c0_178, %c0_179] : memref<9x32x64xf32, #tpu.memory_space<vmem>>, vector<1x32x64xf32>
    %209 = vector.shape_cast %208 : vector<1x32x64xf32> to vector<32x64xf32>
    %cst_180 = arith.constant dense<0.000000e+00> : vector<8x64xf32>
    %210 = tpu.matmul %207, %209, %cst_180 {dimension_numbers = #tpu.dot_dimension_numbers<[1], [0], [0], [1], [0, 0, 1, 1], [], []>} : vector<8x32xf32>, vector<32x64xf32>, vector<8x64xf32> -> vector<8x64xf32>
    %211 = arith.addf %204, %210 : vector<8x64xf32>
    %c7_181 = arith.constant 7 : index
    %c0_182 = arith.constant 0 : index
    %c0_183 = arith.constant 0 : index
    %212 = vector.load %arg3[%c7_181, %c0_182, %c0_183] : memref<9x8x32xf32, #tpu.memory_space<vmem>>, vector<1x8x32xf32>
    %213 = vector.shape_cast %212 : vector<1x8x32xf32> to vector<8x32xf32>
    %cst_184 = arith.constant dense<0.000000e+00> : vector<8x32xf32>
    %214 = tpu.matmul %213, %161, %cst_184 {dimension_numbers = #tpu.dot_dimension_numbers<[1], [0], [0], [1], [0, 0, 1, 1], [], []>} : vector<8x32xf32>, vector<32x32xf32>, vector<8x32xf32> -> vector<8x32xf32>
    %c7_185 = arith.constant 7 : index
    %c0_186 = arith.constant 0 : index
    %c0_187 = arith.constant 0 : index
    %215 = vector.load %arg11[%c7_185, %c0_186, %c0_187] : memref<9x32x64xf32, #tpu.memory_space<vmem>>, vector<1x32x64xf32>
    %216 = vector.shape_cast %215 : vector<1x32x64xf32> to vector<32x64xf32>
    %cst_188 = arith.constant dense<0.000000e+00> : vector<8x64xf32>
    %217 = tpu.matmul %214, %216, %cst_188 {dimension_numbers = #tpu.dot_dimension_numbers<[1], [0], [0], [1], [0, 0, 1, 1], [], []>} : vector<8x32xf32>, vector<32x64xf32>, vector<8x64xf32> -> vector<8x64xf32>
    %218 = arith.addf %211, %217 : vector<8x64xf32>
    %c8_189 = arith.constant 8 : index
    %c0_190 = arith.constant 0 : index
    %c0_191 = arith.constant 0 : index
    %219 = vector.load %arg3[%c8_189, %c0_190, %c0_191] : memref<9x8x32xf32, #tpu.memory_space<vmem>>, vector<1x8x32xf32>
    %220 = vector.shape_cast %219 : vector<1x8x32xf32> to vector<8x32xf32>
    %cst_192 = arith.constant dense<0.000000e+00> : vector<8x32xf32>
    %221 = tpu.matmul %220, %161, %cst_192 {dimension_numbers = #tpu.dot_dimension_numbers<[1], [0], [0], [1], [0, 0, 1, 1], [], []>} : vector<8x32xf32>, vector<32x32xf32>, vector<8x32xf32> -> vector<8x32xf32>
    %c8_193 = arith.constant 8 : index
    %c0_194 = arith.constant 0 : index
    %c0_195 = arith.constant 0 : index
    %222 = vector.load %arg11[%c8_193, %c0_194, %c0_195] : memref<9x32x64xf32, #tpu.memory_space<vmem>>, vector<1x32x64xf32>
    %223 = vector.shape_cast %222 : vector<1x32x64xf32> to vector<32x64xf32>
    %cst_196 = arith.constant dense<0.000000e+00> : vector<8x64xf32>
    %224 = tpu.matmul %221, %223, %cst_196 {dimension_numbers = #tpu.dot_dimension_numbers<[1], [0], [0], [1], [0, 0, 1, 1], [], []>} : vector<8x32xf32>, vector<32x64xf32>, vector<8x64xf32> -> vector<8x64xf32>
    %225 = arith.addf %218, %224 : vector<8x64xf32>
    %c0_197 = arith.constant 0 : index
    %c0_198 = arith.constant 0 : index
    %226 = vector.load %arg12[%c0_197, %c0_198] : memref<1x64xf32, #tpu.memory_space<vmem>>, vector<1x64xf32>
    %227 = vector.broadcast %226 : vector<1x64xf32> to vector<8x64xf32>
    %228 = arith.addf %225, %227 : vector<8x64xf32>
    %cst_199 = arith.constant 0.000000e+00 : f32
    %229 = vector.broadcast %cst_199 : f32 to vector<8x64xf32>
    %230 = arith.cmpf oge, %228, %229 : vector<8x64xf32>
    %cst_200 = arith.constant 2.000000e-01 : f32
    %231 = vector.broadcast %cst_200 : f32 to vector<8x64xf32>
    %232 = arith.mulf %231, %228 : vector<8x64xf32>
    %233 = arith.select %230, %228, %232 : vector<8x64xi1>, vector<8x64xf32>
    %cst_201 = arith.constant dense<0.000000e+00> : vector<64xf32>
    %234 = vector.multi_reduction <add>, %233, %cst_201 [0] : vector<8x64xf32> to vector<64xf32>
    %235 = vector.shape_cast %234 : vector<64xf32> to vector<1x64xf32>
    %cst_202 = arith.constant 8.000000e+00 : f32
    %236 = vector.broadcast %cst_202 : f32 to vector<1x64xf32>
    %237 = arith.divf %235, %236 : vector<1x64xf32>
    %238 = arith.mulf %233, %233 : vector<8x64xf32>
    %cst_203 = arith.constant dense<0.000000e+00> : vector<64xf32>
    %239 = vector.multi_reduction <add>, %238, %cst_203 [0] : vector<8x64xf32> to vector<64xf32>
    %240 = vector.shape_cast %239 : vector<64xf32> to vector<1x64xf32>
    %cst_204 = arith.constant 8.000000e+00 : f32
    %241 = vector.broadcast %cst_204 : f32 to vector<1x64xf32>
    %242 = arith.divf %240, %241 : vector<1x64xf32>
    %243 = arith.mulf %237, %237 : vector<1x64xf32>
    %244 = arith.subf %242, %243 : vector<1x64xf32>
    %245 = vector.broadcast %237 : vector<1x64xf32> to vector<8x64xf32>
    %246 = arith.subf %233, %245 : vector<8x64xf32>
    %cst_205 = arith.constant 8.000000e-01 : f32
    %247 = vector.broadcast %cst_205 : f32 to vector<1x64xf32>
    %248 = arith.addf %244, %247 : vector<1x64xf32>
    %249 = math.rsqrt %248 : vector<1x64xf32>
    %250 = vector.broadcast %249 : vector<1x64xf32> to vector<8x64xf32>
    %251 = arith.mulf %246, %250 : vector<8x64xf32>
    %c0_206 = arith.constant 0 : index
    %c0_207 = arith.constant 0 : index
    %252 = vector.load %arg13[%c0_206, %c0_207] : memref<1x64xf32, #tpu.memory_space<vmem>>, vector<1x64xf32>
    %253 = vector.broadcast %252 : vector<1x64xf32> to vector<8x64xf32>
    %254 = arith.mulf %251, %253 : vector<8x64xf32>
    %c0_208 = arith.constant 0 : index
    %c0_209 = arith.constant 0 : index
    %255 = vector.load %arg14[%c0_208, %c0_209] : memref<1x64xf32, #tpu.memory_space<vmem>>, vector<1x64xf32>
    %256 = vector.broadcast %255 : vector<1x64xf32> to vector<8x64xf32>
    %257 = arith.addf %254, %256 : vector<8x64xf32>
    %cst_210 = arith.constant 0.000000e+00 : f32
    %258 = vector.broadcast %cst_210 : f32 to vector<2x128xf32>
    %c0_211 = arith.constant 0 : index
    %c0_212 = arith.constant 0 : index
    %c0_213 = arith.constant 0 : index
    %259 = vector.load %arg4[%c0_211, %c0_212, %c0_213] : memref<9x2x8xf32, #tpu.memory_space<vmem>>, vector<1x2x8xf32>
    %260 = vector.shape_cast %259 : vector<1x2x8xf32> to vector<2x8xf32>
    %cst_214 = arith.constant dense<0.000000e+00> : vector<2x64xf32>
    %261 = tpu.matmul %260, %257, %cst_214 {dimension_numbers = #tpu.dot_dimension_numbers<[1], [0], [0], [1], [0, 0, 1, 1], [], []>} : vector<2x8xf32>, vector<8x64xf32>, vector<2x64xf32> -> vector<2x64xf32>
    %c0_215 = arith.constant 0 : index
    %c0_216 = arith.constant 0 : index
    %c0_217 = arith.constant 0 : index
    %262 = vector.load %arg15[%c0_215, %c0_216, %c0_217] : memref<9x64x128xf32, #tpu.memory_space<vmem>>, vector<1x64x128xf32>
    %263 = vector.shape_cast %262 : vector<1x64x128xf32> to vector<64x128xf32>
    %cst_218 = arith.constant dense<0.000000e+00> : vector<2x128xf32>
    %264 = tpu.matmul %261, %263, %cst_218 {dimension_numbers = #tpu.dot_dimension_numbers<[1], [0], [0], [1], [0, 0, 1, 1], [], []>} : vector<2x64xf32>, vector<64x128xf32>, vector<2x128xf32> -> vector<2x128xf32>
    %265 = arith.addf %258, %264 : vector<2x128xf32>
    %c1_219 = arith.constant 1 : index
    %c0_220 = arith.constant 0 : index
    %c0_221 = arith.constant 0 : index
    %266 = vector.load %arg4[%c1_219, %c0_220, %c0_221] : memref<9x2x8xf32, #tpu.memory_space<vmem>>, vector<1x2x8xf32>
    %267 = vector.shape_cast %266 : vector<1x2x8xf32> to vector<2x8xf32>
    %cst_222 = arith.constant dense<0.000000e+00> : vector<2x64xf32>
    %268 = tpu.matmul %267, %257, %cst_222 {dimension_numbers = #tpu.dot_dimension_numbers<[1], [0], [0], [1], [0, 0, 1, 1], [], []>} : vector<2x8xf32>, vector<8x64xf32>, vector<2x64xf32> -> vector<2x64xf32>
    %c1_223 = arith.constant 1 : index
    %c0_224 = arith.constant 0 : index
    %c0_225 = arith.constant 0 : index
    %269 = vector.load %arg15[%c1_223, %c0_224, %c0_225] : memref<9x64x128xf32, #tpu.memory_space<vmem>>, vector<1x64x128xf32>
    %270 = vector.shape_cast %269 : vector<1x64x128xf32> to vector<64x128xf32>
    %cst_226 = arith.constant dense<0.000000e+00> : vector<2x128xf32>
    %271 = tpu.matmul %268, %270, %cst_226 {dimension_numbers = #tpu.dot_dimension_numbers<[1], [0], [0], [1], [0, 0, 1, 1], [], []>} : vector<2x64xf32>, vector<64x128xf32>, vector<2x128xf32> -> vector<2x128xf32>
    %272 = arith.addf %265, %271 : vector<2x128xf32>
    %c2_227 = arith.constant 2 : index
    %c0_228 = arith.constant 0 : index
    %c0_229 = arith.constant 0 : index
    %273 = vector.load %arg4[%c2_227, %c0_228, %c0_229] : memref<9x2x8xf32, #tpu.memory_space<vmem>>, vector<1x2x8xf32>
    %274 = vector.shape_cast %273 : vector<1x2x8xf32> to vector<2x8xf32>
    %cst_230 = arith.constant dense<0.000000e+00> : vector<2x64xf32>
    %275 = tpu.matmul %274, %257, %cst_230 {dimension_numbers = #tpu.dot_dimension_numbers<[1], [0], [0], [1], [0, 0, 1, 1], [], []>} : vector<2x8xf32>, vector<8x64xf32>, vector<2x64xf32> -> vector<2x64xf32>
    %c2_231 = arith.constant 2 : index
    %c0_232 = arith.constant 0 : index
    %c0_233 = arith.constant 0 : index
    %276 = vector.load %arg15[%c2_231, %c0_232, %c0_233] : memref<9x64x128xf32, #tpu.memory_space<vmem>>, vector<1x64x128xf32>
    %277 = vector.shape_cast %276 : vector<1x64x128xf32> to vector<64x128xf32>
    %cst_234 = arith.constant dense<0.000000e+00> : vector<2x128xf32>
    %278 = tpu.matmul %275, %277, %cst_234 {dimension_numbers = #tpu.dot_dimension_numbers<[1], [0], [0], [1], [0, 0, 1, 1], [], []>} : vector<2x64xf32>, vector<64x128xf32>, vector<2x128xf32> -> vector<2x128xf32>
    %279 = arith.addf %272, %278 : vector<2x128xf32>
    %c3_235 = arith.constant 3 : index
    %c0_236 = arith.constant 0 : index
    %c0_237 = arith.constant 0 : index
    %280 = vector.load %arg4[%c3_235, %c0_236, %c0_237] : memref<9x2x8xf32, #tpu.memory_space<vmem>>, vector<1x2x8xf32>
    %281 = vector.shape_cast %280 : vector<1x2x8xf32> to vector<2x8xf32>
    %cst_238 = arith.constant dense<0.000000e+00> : vector<2x64xf32>
    %282 = tpu.matmul %281, %257, %cst_238 {dimension_numbers = #tpu.dot_dimension_numbers<[1], [0], [0], [1], [0, 0, 1, 1], [], []>} : vector<2x8xf32>, vector<8x64xf32>, vector<2x64xf32> -> vector<2x64xf32>
    %c3_239 = arith.constant 3 : index
    %c0_240 = arith.constant 0 : index
    %c0_241 = arith.constant 0 : index
    %283 = vector.load %arg15[%c3_239, %c0_240, %c0_241] : memref<9x64x128xf32, #tpu.memory_space<vmem>>, vector<1x64x128xf32>
    %284 = vector.shape_cast %283 : vector<1x64x128xf32> to vector<64x128xf32>
    %cst_242 = arith.constant dense<0.000000e+00> : vector<2x128xf32>
    %285 = tpu.matmul %282, %284, %cst_242 {dimension_numbers = #tpu.dot_dimension_numbers<[1], [0], [0], [1], [0, 0, 1, 1], [], []>} : vector<2x64xf32>, vector<64x128xf32>, vector<2x128xf32> -> vector<2x128xf32>
    %286 = arith.addf %279, %285 : vector<2x128xf32>
    %c4_243 = arith.constant 4 : index
    %c0_244 = arith.constant 0 : index
    %c0_245 = arith.constant 0 : index
    %287 = vector.load %arg4[%c4_243, %c0_244, %c0_245] : memref<9x2x8xf32, #tpu.memory_space<vmem>>, vector<1x2x8xf32>
    %288 = vector.shape_cast %287 : vector<1x2x8xf32> to vector<2x8xf32>
    %cst_246 = arith.constant dense<0.000000e+00> : vector<2x64xf32>
    %289 = tpu.matmul %288, %257, %cst_246 {dimension_numbers = #tpu.dot_dimension_numbers<[1], [0], [0], [1], [0, 0, 1, 1], [], []>} : vector<2x8xf32>, vector<8x64xf32>, vector<2x64xf32> -> vector<2x64xf32>
    %c4_247 = arith.constant 4 : index
    %c0_248 = arith.constant 0 : index
    %c0_249 = arith.constant 0 : index
    %290 = vector.load %arg15[%c4_247, %c0_248, %c0_249] : memref<9x64x128xf32, #tpu.memory_space<vmem>>, vector<1x64x128xf32>
    %291 = vector.shape_cast %290 : vector<1x64x128xf32> to vector<64x128xf32>
    %cst_250 = arith.constant dense<0.000000e+00> : vector<2x128xf32>
    %292 = tpu.matmul %289, %291, %cst_250 {dimension_numbers = #tpu.dot_dimension_numbers<[1], [0], [0], [1], [0, 0, 1, 1], [], []>} : vector<2x64xf32>, vector<64x128xf32>, vector<2x128xf32> -> vector<2x128xf32>
    %293 = arith.addf %286, %292 : vector<2x128xf32>
    %c5_251 = arith.constant 5 : index
    %c0_252 = arith.constant 0 : index
    %c0_253 = arith.constant 0 : index
    %294 = vector.load %arg4[%c5_251, %c0_252, %c0_253] : memref<9x2x8xf32, #tpu.memory_space<vmem>>, vector<1x2x8xf32>
    %295 = vector.shape_cast %294 : vector<1x2x8xf32> to vector<2x8xf32>
    %cst_254 = arith.constant dense<0.000000e+00> : vector<2x64xf32>
    %296 = tpu.matmul %295, %257, %cst_254 {dimension_numbers = #tpu.dot_dimension_numbers<[1], [0], [0], [1], [0, 0, 1, 1], [], []>} : vector<2x8xf32>, vector<8x64xf32>, vector<2x64xf32> -> vector<2x64xf32>
    %c5_255 = arith.constant 5 : index
    %c0_256 = arith.constant 0 : index
    %c0_257 = arith.constant 0 : index
    %297 = vector.load %arg15[%c5_255, %c0_256, %c0_257] : memref<9x64x128xf32, #tpu.memory_space<vmem>>, vector<1x64x128xf32>
    %298 = vector.shape_cast %297 : vector<1x64x128xf32> to vector<64x128xf32>
    %cst_258 = arith.constant dense<0.000000e+00> : vector<2x128xf32>
    %299 = tpu.matmul %296, %298, %cst_258 {dimension_numbers = #tpu.dot_dimension_numbers<[1], [0], [0], [1], [0, 0, 1, 1], [], []>} : vector<2x64xf32>, vector<64x128xf32>, vector<2x128xf32> -> vector<2x128xf32>
    %300 = arith.addf %293, %299 : vector<2x128xf32>
    %c6_259 = arith.constant 6 : index
    %c0_260 = arith.constant 0 : index
    %c0_261 = arith.constant 0 : index
    %301 = vector.load %arg4[%c6_259, %c0_260, %c0_261] : memref<9x2x8xf32, #tpu.memory_space<vmem>>, vector<1x2x8xf32>
    %302 = vector.shape_cast %301 : vector<1x2x8xf32> to vector<2x8xf32>
    %cst_262 = arith.constant dense<0.000000e+00> : vector<2x64xf32>
    %303 = tpu.matmul %302, %257, %cst_262 {dimension_numbers = #tpu.dot_dimension_numbers<[1], [0], [0], [1], [0, 0, 1, 1], [], []>} : vector<2x8xf32>, vector<8x64xf32>, vector<2x64xf32> -> vector<2x64xf32>
    %c6_263 = arith.constant 6 : index
    %c0_264 = arith.constant 0 : index
    %c0_265 = arith.constant 0 : index
    %304 = vector.load %arg15[%c6_263, %c0_264, %c0_265] : memref<9x64x128xf32, #tpu.memory_space<vmem>>, vector<1x64x128xf32>
    %305 = vector.shape_cast %304 : vector<1x64x128xf32> to vector<64x128xf32>
    %cst_266 = arith.constant dense<0.000000e+00> : vector<2x128xf32>
    %306 = tpu.matmul %303, %305, %cst_266 {dimension_numbers = #tpu.dot_dimension_numbers<[1], [0], [0], [1], [0, 0, 1, 1], [], []>} : vector<2x64xf32>, vector<64x128xf32>, vector<2x128xf32> -> vector<2x128xf32>
    %307 = arith.addf %300, %306 : vector<2x128xf32>
    %c7_267 = arith.constant 7 : index
    %c0_268 = arith.constant 0 : index
    %c0_269 = arith.constant 0 : index
    %308 = vector.load %arg4[%c7_267, %c0_268, %c0_269] : memref<9x2x8xf32, #tpu.memory_space<vmem>>, vector<1x2x8xf32>
    %309 = vector.shape_cast %308 : vector<1x2x8xf32> to vector<2x8xf32>
    %cst_270 = arith.constant dense<0.000000e+00> : vector<2x64xf32>
    %310 = tpu.matmul %309, %257, %cst_270 {dimension_numbers = #tpu.dot_dimension_numbers<[1], [0], [0], [1], [0, 0, 1, 1], [], []>} : vector<2x8xf32>, vector<8x64xf32>, vector<2x64xf32> -> vector<2x64xf32>
    %c7_271 = arith.constant 7 : index
    %c0_272 = arith.constant 0 : index
    %c0_273 = arith.constant 0 : index
    %311 = vector.load %arg15[%c7_271, %c0_272, %c0_273] : memref<9x64x128xf32, #tpu.memory_space<vmem>>, vector<1x64x128xf32>
    %312 = vector.shape_cast %311 : vector<1x64x128xf32> to vector<64x128xf32>
    %cst_274 = arith.constant dense<0.000000e+00> : vector<2x128xf32>
    %313 = tpu.matmul %310, %312, %cst_274 {dimension_numbers = #tpu.dot_dimension_numbers<[1], [0], [0], [1], [0, 0, 1, 1], [], []>} : vector<2x64xf32>, vector<64x128xf32>, vector<2x128xf32> -> vector<2x128xf32>
    %314 = arith.addf %307, %313 : vector<2x128xf32>
    %c8_275 = arith.constant 8 : index
    %c0_276 = arith.constant 0 : index
    %c0_277 = arith.constant 0 : index
    %315 = vector.load %arg4[%c8_275, %c0_276, %c0_277] : memref<9x2x8xf32, #tpu.memory_space<vmem>>, vector<1x2x8xf32>
    %316 = vector.shape_cast %315 : vector<1x2x8xf32> to vector<2x8xf32>
    %cst_278 = arith.constant dense<0.000000e+00> : vector<2x64xf32>
    %317 = tpu.matmul %316, %257, %cst_278 {dimension_numbers = #tpu.dot_dimension_numbers<[1], [0], [0], [1], [0, 0, 1, 1], [], []>} : vector<2x8xf32>, vector<8x64xf32>, vector<2x64xf32> -> vector<2x64xf32>
    %c8_279 = arith.constant 8 : index
    %c0_280 = arith.constant 0 : index
    %c0_281 = arith.constant 0 : index
    %318 = vector.load %arg15[%c8_279, %c0_280, %c0_281] : memref<9x64x128xf32, #tpu.memory_space<vmem>>, vector<1x64x128xf32>
    %319 = vector.shape_cast %318 : vector<1x64x128xf32> to vector<64x128xf32>
    %cst_282 = arith.constant dense<0.000000e+00> : vector<2x128xf32>
    %320 = tpu.matmul %317, %319, %cst_282 {dimension_numbers = #tpu.dot_dimension_numbers<[1], [0], [0], [1], [0, 0, 1, 1], [], []>} : vector<2x64xf32>, vector<64x128xf32>, vector<2x128xf32> -> vector<2x128xf32>
    %321 = arith.addf %314, %320 : vector<2x128xf32>
    %c0_283 = arith.constant 0 : index
    %c0_284 = arith.constant 0 : index
    %322 = vector.load %arg16[%c0_283, %c0_284] : memref<1x128xf32, #tpu.memory_space<vmem>>, vector<1x128xf32>
    %323 = vector.broadcast %322 : vector<1x128xf32> to vector<2x128xf32>
    %324 = arith.addf %321, %323 : vector<2x128xf32>
    %cst_285 = arith.constant 0.000000e+00 : f32
    %325 = vector.broadcast %cst_285 : f32 to vector<2x128xf32>
    %326 = arith.cmpf oge, %324, %325 : vector<2x128xf32>
    %cst_286 = arith.constant 2.000000e-01 : f32
    %327 = vector.broadcast %cst_286 : f32 to vector<2x128xf32>
    %328 = arith.mulf %327, %324 : vector<2x128xf32>
    %329 = arith.select %326, %324, %328 : vector<2x128xi1>, vector<2x128xf32>
    %cst_287 = arith.constant dense<0.000000e+00> : vector<128xf32>
    %330 = vector.multi_reduction <add>, %329, %cst_287 [0] : vector<2x128xf32> to vector<128xf32>
    %331 = vector.shape_cast %330 : vector<128xf32> to vector<1x128xf32>
    %cst_288 = arith.constant 2.000000e+00 : f32
    %332 = vector.broadcast %cst_288 : f32 to vector<1x128xf32>
    %333 = arith.divf %331, %332 : vector<1x128xf32>
    %334 = arith.mulf %329, %329 : vector<2x128xf32>
    %cst_289 = arith.constant dense<0.000000e+00> : vector<128xf32>
    %335 = vector.multi_reduction <add>, %334, %cst_289 [0] : vector<2x128xf32> to vector<128xf32>
    %336 = vector.shape_cast %335 : vector<128xf32> to vector<1x128xf32>
    %cst_290 = arith.constant 2.000000e+00 : f32
    %337 = vector.broadcast %cst_290 : f32 to vector<1x128xf32>
    %338 = arith.divf %336, %337 : vector<1x128xf32>
    %339 = arith.mulf %333, %333 : vector<1x128xf32>
    %340 = arith.subf %338, %339 : vector<1x128xf32>
    %341 = vector.broadcast %333 : vector<1x128xf32> to vector<2x128xf32>
    %342 = arith.subf %329, %341 : vector<2x128xf32>
    %cst_291 = arith.constant 8.000000e-01 : f32
    %343 = vector.broadcast %cst_291 : f32 to vector<1x128xf32>
    %344 = arith.addf %340, %343 : vector<1x128xf32>
    %345 = math.rsqrt %344 : vector<1x128xf32>
    %346 = vector.broadcast %345 : vector<1x128xf32> to vector<2x128xf32>
    %347 = arith.mulf %342, %346 : vector<2x128xf32>
    %c0_292 = arith.constant 0 : index
    %c0_293 = arith.constant 0 : index
    %348 = vector.load %arg17[%c0_292, %c0_293] : memref<1x128xf32, #tpu.memory_space<vmem>>, vector<1x128xf32>
    %349 = vector.broadcast %348 : vector<1x128xf32> to vector<2x128xf32>
    %350 = arith.mulf %347, %349 : vector<2x128xf32>
    %c0_294 = arith.constant 0 : index
    %c0_295 = arith.constant 0 : index
    %351 = vector.load %arg18[%c0_294, %c0_295] : memref<1x128xf32, #tpu.memory_space<vmem>>, vector<1x128xf32>
    %352 = vector.broadcast %351 : vector<1x128xf32> to vector<2x128xf32>
    %353 = arith.addf %350, %352 : vector<2x128xf32>
    %c0_296 = arith.constant 0 : index
    %c0_297 = arith.constant 0 : index
    %354 = vector.load %arg19[%c0_296, %c0_297] : memref<128x1xf32, #tpu.memory_space<vmem>>, vector<128x1xf32>
    %cst_298 = arith.constant dense<0.000000e+00> : vector<2x1xf32>
    %355 = tpu.matmul %353, %354, %cst_298 {dimension_numbers = #tpu.dot_dimension_numbers<[1], [0], [0], [1], [0, 0, 1, 1], [], []>} : vector<2x128xf32>, vector<128x1xf32>, vector<2x1xf32> -> vector<2x1xf32>
    %c0_299 = arith.constant 0 : index
    %c0_300 = arith.constant 0 : index
    %356 = vector.load %arg20[%c0_299, %c0_300] : memref<1x1xf32, #tpu.memory_space<vmem>>, vector<1x1xf32>
    %357 = vector.broadcast %356 : vector<1x1xf32> to vector<2x1xf32>
    %358 = arith.addf %355, %357 : vector<2x1xf32>
    %c0_301 = arith.constant 0 : index
    %c0_302 = arith.constant 0 : index
    %359 = vector.load %arg21[%c0_301, %c0_302] : memref<2x1xf32, #tpu.memory_space<vmem>>, vector<2x1xf32>
    tpu.vector_store %arg21[%c0_301, %c0_302], %358 {strides = array<i32>} : memref<2x1xf32, #tpu.memory_space<vmem>>, vector<2x1xf32>,
    return
  }
}

</mosaic_0001>

<llo_original>
// kernel: discriminator_forward.1
$region0: #{discriminator_forward.1}
  #allocation0 [shape = 'u32[]', space=smem, size = 0x4, offset = 0x4, fixed_abs, tag = 'smem constant byte address 0x4 - core index']
  #allocation1 [shape = 'u32[144,128]{1,0:T(1,128)}', space=vmem, size = 0x12000, scoped, tag = 'internal scratch']
  #allocation2 [shape = 'f32[1,1]{1,0:T(1,128)S(1)}', space=vmem, size = 0x200, scoped, tag = 'scoped memory for discriminator_forward.1']
  %s0 = inlined_call_operand.vmem [shape: f32[2,18,18,3], index: 0, kind: input, shape index: {}]
  %s1 = inlined_call_operand.vmem [shape: f32[128,512], index: 1, kind: input, shape index: {}]
  %s2 = inlined_call_operand.vmem [shape: f32[9,32,128], index: 2, kind: input, shape index: {}]
  %s3 = inlined_call_operand.vmem [shape: f32[9,8,32], index: 3, kind: input, shape index: {}]
  %s4 = inlined_call_operand.vmem [shape: f32[9,2,8], index: 4, kind: input, shape index: {}]
  %s5 = inlined_call_operand.vmem [shape: f32[9,3,16], index: 5, kind: input, shape index: {}]
  %s6 = inlined_call_operand.vmem [shape: f32[1,16], index: 6, kind: input, shape index: {}]
  %s7 = inlined_call_operand.vmem [shape: f32[9,16,32], index: 7, kind: input, shape index: {}]
  %s8 = inlined_call_operand.vmem [shape: f32[1,32], index: 8, kind: input, shape index: {}]
  %s9 = inlined_call_operand.vmem [shape: f32[1,32], index: 9, kind: input, shape index: {}]
  %s10 = inlined_call_operand.vmem [shape: f32[1,32], index: 10, kind: input, shape index: {}]
  %s11 = inlined_call_operand.vmem [shape: f32[9,32,64], index: 11, kind: input, shape index: {}]
  %s12 = inlined_call_operand.vmem [shape: f32[1,64], index: 12, kind: input, shape index: {}]
  %s13 = inlined_call_operand.vmem [shape: f32[1,64], index: 13, kind: input, shape index: {}]
  %s14 = inlined_call_operand.vmem [shape: f32[1,64], index: 14, kind: input, shape index: {}]
  %s15 = inlined_call_operand.vmem [shape: f32[9,64,128], index: 15, kind: input, shape index: {}]
  %s16 = inlined_call_operand.vmem [shape: f32[1,128], index: 16, kind: input, shape index: {}]
  %s17 = inlined_call_operand.vmem [shape: f32[1,128], index: 17, kind: input, shape index: {}]
  %s18 = inlined_call_operand.vmem [shape: f32[1,128], index: 18, kind: input, shape index: {}]
  %s19 = inlined_call_operand.vmem [shape: f32[128,1], index: 19, kind: input, shape index: {}]
  %s20 = inlined_call_operand.<no memory space> [shape: f32[1,1], index: 20, kind: input, shape index: {}]
  %s21 = inlined_call_operand.vmem [shape: f32[2,1], index: 21, kind: output, shape index: {}]
  %s22 = sld [smem:[#allocation0]]
  $region94: #{discriminator_forward.1} parent=0
    _
  %s24 = ssub.s32 1, %s22
  %s25 = scalar_select 0, %s24, %s22
  %v26 = vstv %s20
  %27 = vst [vmem:[#allocation2] sm:$0x1] %v26
  // Predicated region
  $region2: #{discriminator_forward.1} parent=0 // pred_check
    _
  $region3: #{discriminator_forward.1} parent=0 // pred_check_branch
    %29 = sbr.rel (0) target = $region5
  $region4: #{discriminator_forward.1} parent=0 // pred_region
    _
  $region5: #{discriminator_forward.1} parent=0 // pred_fallthru
    _
  // Predicated region
  $region6: #{discriminator_forward.1} parent=0 // pred_check
    _
  $region7: #{discriminator_forward.1} parent=0 // pred_check_branch
    %31 = sbr.rel (0) target = $region9
  $region8: #{discriminator_forward.1} parent=0 // pred_region
    _
  $region9: #{discriminator_forward.1} parent=0 // pred_fallthru
    _
  // Predicated region
  $region10: #{discriminator_forward.1} parent=0 // pred_check
    _
  $region11: #{discriminator_forward.1} parent=0 // pred_check_branch
    %33 = sbr.rel (0) target = $region13
  $region12: #{discriminator_forward.1} parent=0 // pred_region
    _
  $region13: #{discriminator_forward.1} parent=0 // pred_fallthru
    _
  // Predicated region
  $region14: #{discriminator_forward.1} parent=0 // pred_check
    _
  $region15: #{discriminator_forward.1} parent=0 // pred_check_branch
    %35 = sbr.rel (0) target = $region17
  $region16: #{discriminator_forward.1} parent=0 // pred_region
    _
  $region17: #{discriminator_forward.1} parent=0 // pred_fallthru
    _
  // Predicated region
  $region18: #{discriminator_forward.1} parent=0 // pred_check
    _
  $region19: #{discriminator_forward.1} parent=0 // pred_check_branch
    %37 = sbr.rel (0) target = $region21
  $region20: #{discriminator_forward.1} parent=0 // pred_region
    _
  $region21: #{discriminator_forward.1} parent=0 // pred_fallthru
    _
  // Predicated region
  $region22: #{discriminator_forward.1} parent=0 // pred_check
    _
  $region23: #{discriminator_forward.1} parent=0 // pred_check_branch
    %39 = sbr.rel (0) target = $region25
  $region24: #{discriminator_forward.1} parent=0 // pred_region
    _
  $region25: #{discriminator_forward.1} parent=0 // pred_fallthru
    _
  // Predicated region
  $region26: #{discriminator_forward.1} parent=0 // pred_check
    _
  $region27: #{discriminator_forward.1} parent=0 // pred_check_branch
    %41 = sbr.rel (0) target = $region29
  $region28: #{discriminator_forward.1} parent=0 // pred_region
    _
  $region29: #{discriminator_forward.1} parent=0 // pred_fallthru
    _
  // Predicated region
  $region30: #{discriminator_forward.1} parent=0 // pred_check
    _
  $region31: #{discriminator_forward.1} parent=0 // pred_check_branch
    %43 = sbr.rel (0) target = $region33
  $region32: #{discriminator_forward.1} parent=0 // pred_region
    _
  $region33: #{discriminator_forward.1} parent=0 // pred_fallthru
    _
  // Predicated region
  $region34: #{discriminator_forward.1} parent=0 // pred_check
    _
  $region35: #{discriminator_forward.1} parent=0 // pred_check_branch
    %45 = sbr.rel (0) target = $region37
  $region36: #{discriminator_forward.1} parent=0 // pred_region
    _
  $region37: #{discriminator_forward.1} parent=0 // pred_fallthru
    _
  // Predicated region
  $region38: #{discriminator_forward.1} parent=0 // pred_check
    _
  $region39: #{discriminator_forward.1} parent=0 // pred_check_branch
    %47 = sbr.rel (0) target = $region41
  $region40: #{discriminator_forward.1} parent=0 // pred_region
    _
  $region41: #{discriminator_forward.1} parent=0 // pred_fallthru
    _
  // Predicated region
  $region42: #{discriminator_forward.1} parent=0 // pred_check
    _
  $region43: #{discriminator_forward.1} parent=0 // pred_check_branch
    %49 = sbr.rel (0) target = $region45
  $region44: #{discriminator_forward.1} parent=0 // pred_region
    _
  $region45: #{discriminator_forward.1} parent=0 // pred_fallthru
    _
  // Predicated region
  $region46: #{discriminator_forward.1} parent=0 // pred_check
    _
  $region47: #{discriminator_forward.1} parent=0 // pred_check_branch
    %51 = sbr.rel (0) target = $region49
  $region48: #{discriminator_forward.1} parent=0 // pred_region
    _
  $region49: #{discriminator_forward.1} parent=0 // pred_fallthru
    _
  // Predicated region
  $region50: #{discriminator_forward.1} parent=0 // pred_check
    _
  $region51: #{discriminator_forward.1} parent=0 // pred_check_branch
    %53 = sbr.rel (0) target = $region53
  $region52: #{discriminator_forward.1} parent=0 // pred_region
    _
  $region53: #{discriminator_forward.1} parent=0 // pred_fallthru
    _
  // Predicated region
  $region54: #{discriminator_forward.1} parent=0 // pred_check
    _
  $region55: #{discriminator_forward.1} parent=0 // pred_check_branch
    %55 = sbr.rel (0) target = $region57
  $region56: #{discriminator_forward.1} parent=0 // pred_region
    _
  $region57: #{discriminator_forward.1} parent=0 // pred_fallthru
    _
  // Predicated region
  $region58: #{discriminator_forward.1} parent=0 // pred_check
    _
  $region59: #{discriminator_forward.1} parent=0 // pred_check_branch
    %57 = sbr.rel (0) target = $region61
  $region60: #{discriminator_forward.1} parent=0 // pred_region
    _
  $region61: #{discriminator_forward.1} parent=0 // pred_fallthru
    _
  // Predicated region
  $region62: #{discriminator_forward.1} parent=0 // pred_check
    _
  $region63: #{discriminator_forward.1} parent=0 // pred_check_branch
    %59 = sbr.rel (0) target = $region65
  $region64: #{discriminator_forward.1} parent=0 // pred_region
    _
  $region65: #{discriminator_forward.1} parent=0 // pred_fallthru
    _
  // Predicated region
  $region66: #{discriminator_forward.1} parent=0 // pred_check
    _
  $region67: #{discriminator_forward.1} parent=0 // pred_check_branch
    %61 = sbr.rel (0) target = $region69
  $region68: #{discriminator_forward.1} parent=0 // pred_region
    _
  $region69: #{discriminator_forward.1} parent=0 // pred_fallthru
    _
  // Predicated region
  $region70: #{discriminator_forward.1} parent=0 // pred_check
    _
  $region71: #{discriminator_forward.1} parent=0 // pred_check_branch
    %63 = sbr.rel (0) target = $region73
  $region72: #{discriminator_forward.1} parent=0 // pred_region
    _
  $region73: #{discriminator_forward.1} parent=0 // pred_fallthru
    _
  // Predicated region
  $region74: #{discriminator_forward.1} parent=0 // pred_check
    _
  $region75: #{discriminator_forward.1} parent=0 // pred_check_branch
    %65 = sbr.rel (0) target = $region77
  $region76: #{discriminator_forward.1} parent=0 // pred_region
    _
  $region77: #{discriminator_forward.1} parent=0 // pred_fallthru
    _
  // Predicated region
  $region78: #{discriminator_forward.1} parent=0 // pred_check
    _
  $region79: #{discriminator_forward.1} parent=0 // pred_check_branch
    %67 = sbr.rel (0) target = $region81
  $region80: #{discriminator_forward.1} parent=0 // pred_region
    _
  $region81: #{discriminator_forward.1} parent=0 // pred_fallthru
    _
  // Predicated region
  $region82: #{discriminator_forward.1} parent=0 // pred_check
    _
  $region83: #{discriminator_forward.1} parent=0 // pred_check_branch
    %69 = sbr.rel (0) target = $region85
  $region84: #{discriminator_forward.1} parent=0 // pred_region
    _
  $region85: #{discriminator_forward.1} parent=0 // pred_fallthru
    _
  %v70 = vld [vmem:[%s0] sm:$0xff]
  %v71 = vld [vmem:[%s0 + $0x8] sm:$0xff]
  %v72 = vld [vmem:[%s0 + $0x10] sm:$0x3]
  %v73 = vld [vmem:[%s0 + $0x18] sm:$0xff]
  %v74 = vld [vmem:[%s0 + $0x20] sm:$0xff]
  %v75 = vld [vmem:[%s0 + $0x28] sm:$0x3]
  %v76 = vld [vmem:[%s0 + $0x30] sm:$0xff]
  %v77 = vld [vmem:[%s0 + $0x38] sm:$0xff]
  %v78 = vld [vmem:[%s0 + $0x40] sm:$0x3]
  %v79 = vld [vmem:[%s0 + $0x48] sm:$0xff]
  %v80 = vld [vmem:[%s0 + $0x50] sm:$0xff]
  %v81 = vld [vmem:[%s0 + $0x58] sm:$0x3]
  %v82 = vld [vmem:[%s0 + $0x60] sm:$0xff]
  %v83 = vld [vmem:[%s0 + $0x68] sm:$0xff]
  %v84 = vld [vmem:[%s0 + $0x70] sm:$0x3]
  %v85 = vld [vmem:[%s0 + $0x78] sm:$0xff]
  %v86 = vld [vmem:[%s0 + $0x80] sm:$0xff]
  %v87 = vld [vmem:[%s0 + $0x88] sm:$0x3]
  %v88 = vld [vmem:[%s0 + $0x90] sm:$0xff]
  %v89 = vld [vmem:[%s0 + $0x98] sm:$0xff]
  %v90 = vld [vmem:[%s0 + $0xa0] sm:$0x3]
  %v91 = vld [vmem:[%s0 + $0xa8] sm:$0xff]
  %v92 = vld [vmem:[%s0 + $0xb0] sm:$0xff]
  %v93 = vld [vmem:[%s0 + $0xb8] sm:$0x3]
  %v94 = vld [vmem:[%s0 + $0xc0] sm:$0xff]
  %v95 = vld [vmem:[%s0 + $0xc8] sm:$0xff]
  %v96 = vld [vmem:[%s0 + $0xd0] sm:$0x3]
  %v97 = vld [vmem:[%s0 + $0xd8] sm:$0xff]
  %v98 = vld [vmem:[%s0 + $0xe0] sm:$0xff]
  %v99 = vld [vmem:[%s0 + $0xe8] sm:$0x3]
  %v100 = vld [vmem:[%s0 + $0xf0] sm:$0xff]
  %v101 = vld [vmem:[%s0 + $0xf8] sm:$0xff]
  %v102 = vld [vmem:[%s0 + $0x100] sm:$0x3]
  %v103 = vld [vmem:[%s0 + $0x108] sm:$0xff]
  %v104 = vld [vmem:[%s0 + $0x110] sm:$0xff]
  %v105 = vld [vmem:[%s0 + $0x118] sm:$0x3]
  %v106 = vld [vmem:[%s0 + $0x120] sm:$0xff]
  %v107 = vld [vmem:[%s0 + $0x128] sm:$0xff]
  %v108 = vld [vmem:[%s0 + $0x130] sm:$0x3]
  %v109 = vld [vmem:[%s0 + $0x138] sm:$0xff]
  %v110 = vld [vmem:[%s0 + $0x140] sm:$0xff]
  %v111 = vld [vmem:[%s0 + $0x148] sm:$0x3]
  %v112 = vld [vmem:[%s0 + $0x150] sm:$0xff]
  %v113 = vld [vmem:[%s0 + $0x158] sm:$0xff]
  %v114 = vld [vmem:[%s0 + $0x160] sm:$0x3]
  %v115 = vld [vmem:[%s0 + $0x168] sm:$0xff]
  %v116 = vld [vmem:[%s0 + $0x170] sm:$0xff]
  %v117 = vld [vmem:[%s0 + $0x178] sm:$0x3]
  %v118 = vld [vmem:[%s0 + $0x180] sm:$0xff]
  %v119 = vld [vmem:[%s0 + $0x188] sm:$0xff]
  %v120 = vld [vmem:[%s0 + $0x190] sm:$0x3]
  %v121 = vld [vmem:[%s0 + $0x198] sm:$0xff]
  %v122 = vld [vmem:[%s0 + $0x1a0] sm:$0xff]
  %v123 = vld [vmem:[%s0 + $0x1a8] sm:$0x3]
  %v124 = vld [vmem:[%s0 + $0x1b0] sm:$0xff]
  %v125 = vld [vmem:[%s0 + $0x1b8] sm:$0xff]
  %v126 = vld [vmem:[%s0 + $0x1c0] sm:$0x3]
  %v127 = vld [vmem:[%s0 + $0x1c8] sm:$0xff]
  %v128 = vld [vmem:[%s0 + $0x1d0] sm:$0xff]
  %v129 = vld [vmem:[%s0 + $0x1d8] sm:$0x3]
  %v130 = vld [vmem:[%s0 + $0x1e0] sm:$0xff]
  %v131 = vld [vmem:[%s0 + $0x1e8] sm:$0xff]
  %v132 = vld [vmem:[%s0 + $0x1f0] sm:$0x3]
  %v133 = vld [vmem:[%s0 + $0x1f8] sm:$0xff]
  %v134 = vld [vmem:[%s0 + $0x200] sm:$0xff]
  %v135 = vld [vmem:[%s0 + $0x208] sm:$0x3]
  %v136 = vld [vmem:[%s0 + $0x210] sm:$0xff]
  %v137 = vld [vmem:[%s0 + $0x218] sm:$0xff]
  %v138 = vld [vmem:[%s0 + $0x220] sm:$0x3]
  %v139 = vld [vmem:[%s0 + $0x228] sm:$0xff]
  %v140 = vld [vmem:[%s0 + $0x230] sm:$0xff]
  %v141 = vld [vmem:[%s0 + $0x238] sm:$0x3]
  %v142 = vld [vmem:[%s0 + $0x240] sm:$0xff]
  %v143 = vld [vmem:[%s0 + $0x248] sm:$0xff]
  %v144 = vld [vmem:[%s0 + $0x250] sm:$0x3]
  %v145 = vld [vmem:[%s0 + $0x258] sm:$0xff]
  %v146 = vld [vmem:[%s0 + $0x260] sm:$0xff]
  %v147 = vld [vmem:[%s0 + $0x268] sm:$0x3]
  %v148 = vld [vmem:[%s0 + $0x270] sm:$0xff]
  %v149 = vld [vmem:[%s0 + $0x278] sm:$0xff]
  %v150 = vld [vmem:[%s0 + $0x280] sm:$0x3]
  %v151 = vld [vmem:[%s0 + $0x288] sm:$0xff]
  %v152 = vld [vmem:[%s0 + $0x290] sm:$0xff]
  %v153 = vld [vmem:[%s0 + $0x298] sm:$0x3]
  %v154 = vld [vmem:[%s0 + $0x2a0] sm:$0xff]
  %v155 = vld [vmem:[%s0 + $0x2a8] sm:$0xff]
  %v156 = vld [vmem:[%s0 + $0x2b0] sm:$0x3]
  %v157 = vld [vmem:[%s0 + $0x2b8] sm:$0xff]
  %v158 = vld [vmem:[%s0 + $0x2c0] sm:$0xff]
  %v159 = vld [vmem:[%s0 + $0x2c8] sm:$0x3]
  %v160 = vld [vmem:[%s0 + $0x2d0] sm:$0xff]
  %v161 = vld [vmem:[%s0 + $0x2d8] sm:$0xff]
  %v162 = vld [vmem:[%s0 + $0x2e0] sm:$0x3]
  %v163 = vld [vmem:[%s0 + $0x2e8] sm:$0xff]
  %v164 = vld [vmem:[%s0 + $0x2f0] sm:$0xff]
  %v165 = vld [vmem:[%s0 + $0x2f8] sm:$0x3]
  %v166 = vld [vmem:[%s0 + $0x300] sm:$0xff]
  %v167 = vld [vmem:[%s0 + $0x308] sm:$0xff]
  %v168 = vld [vmem:[%s0 + $0x310] sm:$0x3]
  %v169 = vld [vmem:[%s0 + $0x318] sm:$0xff]
  %v170 = vld [vmem:[%s0 + $0x320] sm:$0xff]
  %v171 = vld [vmem:[%s0 + $0x328] sm:$0x3]
  %v172 = vld [vmem:[%s0 + $0x330] sm:$0xff]
  %v173 = vld [vmem:[%s0 + $0x338] sm:$0xff]
  %v174 = vld [vmem:[%s0 + $0x340] sm:$0x3]
  %v175 = vld [vmem:[%s0 + $0x348] sm:$0xff]
  %v176 = vld [vmem:[%s0 + $0x350] sm:$0xff]
  %v177 = vld [vmem:[%s0 + $0x358] sm:$0x3]
  %v178 = vld [vmem:[%s5] sm:$0x7]
  %vm275 = vcmask 1046528
  %v276 = vrot.slane %v70, 1
  %v277 = vrot.slane %v71, 1
  %v278 = vsel %vm275, %v276, %v277
  %v279 = vrot.slane %v72, 1
  %v280 = vsel %vm275, %v277, %v279
  %v281 = vrot.slane %v73, 1
  %v282 = vrot.slane %v74, 1
  %v283 = vsel %vm275, %v281, %v282
  %v284 = vrot.slane %v75, 1
  %v285 = vsel %vm275, %v282, %v284
  %v286 = vrot.slane %v76, 1
  %v287 = vrot.slane %v77, 1
  %v288 = vsel %vm275, %v286, %v287
  %v289 = vrot.slane %v78, 1
  %v290 = vsel %vm275, %v287, %v289
  %v291 = vrot.slane %v79, 1
  %v292 = vrot.slane %v80, 1
  %v293 = vsel %vm275, %v291, %v292
  %v294 = vrot.slane %v81, 1
  %v295 = vsel %vm275, %v292, %v294
  %v296 = vrot.slane %v82, 1
  %v297 = vrot.slane %v83, 1
  %v298 = vsel %vm275, %v296, %v297
  %v299 = vrot.slane %v84, 1
  %v300 = vsel %vm275, %v297, %v299
  %v301 = vrot.slane %v85, 1
  %v302 = vrot.slane %v86, 1
  %v303 = vsel %vm275, %v301, %v302
  %v304 = vrot.slane %v87, 1
  %v305 = vsel %vm275, %v302, %v304
  %v306 = vrot.slane %v88, 1
  %v307 = vrot.slane %v89, 1
  %v308 = vsel %vm275, %v306, %v307
  %v309 = vrot.slane %v90, 1
  %v310 = vsel %vm275, %v307, %v309
  %v311 = vrot.slane %v91, 1
  %v312 = vrot.slane %v92, 1
  %v313 = vsel %vm275, %v311, %v312
  %v314 = vrot.slane %v93, 1
  %v315 = vsel %vm275, %v312, %v314
  %v316 = vrot.slane %v94, 1
  %v317 = vrot.slane %v95, 1
  %v318 = vsel %vm275, %v316, %v317
  %v319 = vrot.slane %v96, 1
  %v320 = vsel %vm275, %v317, %v319
  %v321 = vrot.slane %v97, 1
  %v322 = vrot.slane %v98, 1
  %v323 = vsel %vm275, %v321, %v322
  %v324 = vrot.slane %v99, 1
  %v325 = vsel %vm275, %v322, %v324
  %v326 = vrot.slane %v100, 1
  %v327 = vrot.slane %v101, 1
  %v328 = vsel %vm275, %v326, %v327
  %v329 = vrot.slane %v102, 1
  %v330 = vsel %vm275, %v327, %v329
  %v331 = vrot.slane %v103, 1
  %v332 = vrot.slane %v104, 1
  %v333 = vsel %vm275, %v331, %v332
  %v334 = vrot.slane %v105, 1
  %v335 = vsel %vm275, %v332, %v334
  %v336 = vrot.slane %v106, 1
  %v337 = vrot.slane %v107, 1
  %v338 = vsel %vm275, %v336, %v337
  %v339 = vrot.slane %v108, 1
  %v340 = vsel %vm275, %v337, %v339
  %v341 = vrot.slane %v109, 1
  %v342 = vrot.slane %v110, 1
  %v343 = vsel %vm275, %v341, %v342
  %v344 = vrot.slane %v111, 1
  %v345 = vsel %vm275, %v342, %v344
  %v346 = vrot.slane %v112, 1
  %v347 = vrot.slane %v113, 1
  %v348 = vsel %vm275, %v346, %v347
  %v349 = vrot.slane %v114, 1
  %v350 = vsel %vm275, %v347, %v349
  %v351 = vrot.slane %v115, 1
  %v352 = vrot.slane %v116, 1
  %v353 = vsel %vm275, %v351, %v352
  %v354 = vrot.slane %v117, 1
  %v355 = vsel %vm275, %v352, %v354
  %v356 = vrot.slane %v124, 1
  %v357 = vrot.slane %v125, 1
  %v358 = vsel %vm275, %v356, %v357
  %v359 = vrot.slane %v126, 1
  %v360 = vsel %vm275, %v357, %v359
  %v361 = vrot.slane %v127, 1
  %v362 = vrot.slane %v128, 1
  %v363 = vsel %vm275, %v361, %v362
  %v364 = vrot.slane %v129, 1
  %v365 = vsel %vm275, %v362, %v364
  %v366 = vrot.slane %v130, 1
  %v367 = vrot.slane %v131, 1
  %v368 = vsel %vm275, %v366, %v367
  %v369 = vrot.slane %v132, 1
  %v370 = vsel %vm275, %v367, %v369
  %v371 = vrot.slane %v133, 1
  %v372 = vrot.slane %v134, 1
  %v373 = vsel %vm275, %v371, %v372
  %v374 = vrot.slane %v135, 1
  %v375 = vsel %vm275, %v372, %v374
  %v376 = vrot.slane %v136, 1
  %v377 = vrot.slane %v137, 1
  %v378 = vsel %vm275, %v376, %v377
  %v379 = vrot.slane %v138, 1
  %v380 = vsel %vm275, %v377, %v379
  %v381 = vrot.slane %v139, 1
  %v382 = vrot.slane %v140, 1
  %v383 = vsel %vm275, %v381, %v382
  %v384 = vrot.slane %v141, 1
  %v385 = vsel %vm275, %v382, %v384
  %v386 = vrot.slane %v142, 1
  %v387 = vrot.slane %v143, 1
  %v388 = vsel %vm275, %v386, %v387
  %v389 = vrot.slane %v144, 1
  %v390 = vsel %vm275, %v387, %v389
  %v391 = vrot.slane %v145, 1
  %v392 = vrot.slane %v146, 1
  %v393 = vsel %vm275, %v391, %v392
  %v394 = vrot.slane %v147, 1
  %v395 = vsel %vm275, %v392, %v394
  %v396 = vrot.slane %v148, 1
  %v397 = vrot.slane %v149, 1
  %v398 = vsel %vm275, %v396, %v397
  %v399 = vrot.slane %v150, 1
  %v400 = vsel %vm275, %v397, %v399
  %v401 = vrot.slane %v151, 1
  %v402 = vrot.slane %v152, 1
  %v403 = vsel %vm275, %v401, %v402
  %v404 = vrot.slane %v153, 1
  %v405 = vsel %vm275, %v402, %v404
  %v406 = vrot.slane %v154, 1
  %v407 = vrot.slane %v155, 1
  %v408 = vsel %vm275, %v406, %v407
  %v409 = vrot.slane %v156, 1
  %v410 = vsel %vm275, %v407, %v409
  %v411 = vrot.slane %v157, 1
  %v412 = vrot.slane %v158, 1
  %v413 = vsel %vm275, %v411, %v412
  %v414 = vrot.slane %v159, 1
  %v415 = vsel %vm275, %v412, %v414
  %v416 = vrot.slane %v160, 1
  %v417 = vrot.slane %v161, 1
  %v418 = vsel %vm275, %v416, %v417
  %v419 = vrot.slane %v162, 1
  %v420 = vsel %vm275, %v417, %v419
  %v421 = vrot.slane %v163, 1
  %v422 = vrot.slane %v164, 1
  %v423 = vsel %vm275, %v421, %v422
  %v424 = vrot.slane %v165, 1
  %v425 = vsel %vm275, %v422, %v424
  %v426 = vrot.slane %v166, 1
  %v427 = vrot.slane %v167, 1
  %v428 = vsel %vm275, %v426, %v427
  %v429 = vrot.slane %v168, 1
  %v430 = vsel %vm275, %v427, %v429
  %v431 = vrot.slane %v169, 1
  %v432 = vrot.slane %v170, 1
  %v433 = vsel %vm275, %v431, %v432
  %v434 = vrot.slane %v171, 1
  %v435 = vsel %vm275, %v432, %v434
  %s436 = scalar_lea.vmem %s5, 4
  %v437 = vld [vmem:[%s436] sm:$0x7]
  %vm438 = vcmask 23552
  %v439 = vsel %vm438, %v278, 0
  %v441 = vsel %vm438, %v280, 0
  %v443 = vsel %vm438, %v283, 0
  %v445 = vsel %vm438, %v285, 0
  %v447 = vsel %vm438, %v288, 0
  %v449 = vsel %vm438, %v290, 0
  %v451 = vsel %vm438, %v293, 0
  %v453 = vsel %vm438, %v295, 0
  %v455 = vsel %vm438, %v298, 0
  %v457 = vsel %vm438, %v300, 0
  %v459 = vsel %vm438, %v303, 0
  %v461 = vsel %vm438, %v305, 0
  %v463 = vsel %vm438, %v308, 0
  %v465 = vsel %vm438, %v310, 0
  %v467 = vsel %vm438, %v313, 0
  %v469 = vsel %vm438, %v315, 0
  %v471 = vsel %vm438, %v318, 0
  %v473 = vsel %vm438, %v320, 0
  %v475 = vsel %vm438, %v323, 0
  %v477 = vsel %vm438, %v325, 0
  %v479 = vsel %vm438, %v328, 0
  %v481 = vsel %vm438, %v330, 0
  %v483 = vsel %vm438, %v333, 0
  %v485 = vsel %vm438, %v335, 0
  %v487 = vsel %vm438, %v338, 0
  %v489 = vsel %vm438, %v340, 0
  %v491 = vsel %vm438, %v343, 0
  %v493 = vsel %vm438, %v345, 0
  %v495 = vsel %vm438, %v348, 0
  %v497 = vsel %vm438, %v350, 0
  %v499 = vsel %vm438, %v353, 0
  %v501 = vsel %vm438, %v355, 0
  %v503 = vsel %vm438, %v358, 0
  %v505 = vsel %vm438, %v360, 0
  %v507 = vsel %vm438, %v363, 0
  %v509 = vsel %vm438, %v365, 0
  %v511 = vsel %vm438, %v368, 0
  %v513 = vsel %vm438, %v370, 0
  %v515 = vsel %vm438, %v373, 0
  %v517 = vsel %vm438, %v375, 0
  %v519 = vsel %vm438, %v378, 0
  %v521 = vsel %vm438, %v380, 0
  %v523 = vsel %vm438, %v383, 0
  %v525 = vsel %vm438, %v385, 0
  %v527 = vsel %vm438, %v388, 0
  %v529 = vsel %vm438, %v390, 0
  %v531 = vsel %vm438, %v393, 0
  %v533 = vsel %vm438, %v395, 0
  %v535 = vsel %vm438, %v398, 0
  %v537 = vsel %vm438, %v400, 0
  %v539 = vsel %vm438, %v403, 0
  %v541 = vsel %vm438, %v405, 0
  %v543 = vsel %vm438, %v408, 0
  %v545 = vsel %vm438, %v410, 0
  %v547 = vsel %vm438, %v413, 0
  %v549 = vsel %vm438, %v415, 0
  %v551 = vsel %vm438, %v418, 0
  %v553 = vsel %vm438, %v420, 0
  %v555 = vsel %vm438, %v423, 0
  %v557 = vsel %vm438, %v425, 0
  %v559 = vsel %vm438, %v428, 0
  %v561 = vsel %vm438, %v430, 0
  %v563 = vsel %vm438, %v433, 0
  %v565 = vsel %vm438, %v435, 0
  %vm567 = vcmask 1042432
  %v569 = vsel %vm567, %v437, 0
  %571 = vmatprep.subr.mxu0 0.0
  %572 = vmatpush1.msra.mxu0 %v569
  %573 = vmatprep.subr.mxu0 0.0
  %574 = vmatpush1.msra.mxu0 0.0
  %575 = vmatprep.subr.mxu0 0.0
  %576 = vmatpush1.msra.mxu0 0.0
  %577 = vmatprep.subr.mxu0 0.0
  %578 = vmatpush1.msra.mxu0 0.0
  %579 = vmatprep.subr.mxu0 0.0
  %580 = vmatpush1.msra.mxu0 0.0
  %581 = vmatprep.subr.mxu0 0.0
  %582 = vmatpush1.msra.mxu0 0.0
  %583 = vmatprep.subr.mxu0 0.0
  %584 = vmatpush1.msra.mxu0 0.0
  %585 = vmatprep.subr.mxu0 0.0
  %586 = vmatpush1.msra.mxu0 0.0
  %587 = vmatprep.subr.mxu0 0.0
  %588 = vmatpush1.msra.mxu0 0.0
  %589 = vmatprep.subr.mxu0 0.0
  %590 = vmatpush1.msra.mxu0 0.0
  %591 = vmatprep.subr.mxu0 0.0
  %592 = vmatpush1.msra.mxu0 0.0
  %593 = vmatprep.subr.mxu0 0.0
  %594 = vmatpush1.msra.mxu0 0.0
  %595 = vmatprep.subr.mxu0 0.0
  %596 = vmatpush1.msra.mxu0 0.0
  %597 = vmatprep.subr.mxu0 0.0
  %598 = vmatpush1.msra.mxu0 0.0
  %599 = vmatprep.subr.mxu0 0.0
  %600 = vmatpush1.msra.mxu0 0.0
  %601 = vmatprep.subr.mxu0 0.0
  %602 = vmatpush1.msra.mxu0 0.0
  %603 = vmatprep.subr.mxu0 0.0
  %604 = vmatpush1.msra.mxu0 0.0
  %605 = vmatprep.subr.mxu0 0.0
  %606 = vmatpush1.msra.mxu0 0.0
  %607 = vmatprep.subr.mxu0 0.0
  %608 = vmatpush1.msra.mxu0 0.0
  %609 = vmatprep.subr.mxu0 0.0
  %610 = vmatpush1.msra.mxu0 0.0
  %611 = vmatprep.subr.mxu0 0.0
  %612 = vmatpush1.msra.mxu0 0.0
  %613 = vmatprep.subr.mxu0 0.0
  %614 = vmatpush1.msra.mxu0 0.0
  %615 = vmatprep.subr.mxu0 0.0
  %616 = vmatpush1.msra.mxu0 0.0
  %617 = vmatprep.subr.mxu0 0.0
  %618 = vmatpush1.msra.mxu0 0.0
  %619 = vmatprep.subr.mxu0 0.0
  %620 = vmatpush1.msra.mxu0 0.0
  %621 = vmatprep.subr.mxu0 0.0
  %622 = vmatpush1.msra.mxu0 0.0
  %623 = vmatprep.subr.mxu0 0.0
  %624 = vmatpush1.msra.mxu0 0.0
  %625 = vmatprep.subr.mxu0 0.0
  %626 = vmatpush1.msra.mxu0 0.0
  %627 = vmatprep.subr.mxu0 0.0
  %628 = vmatpush1.msra.mxu0 0.0
  %629 = vmatprep.subr.mxu0 0.0
  %630 = vmatpush1.msra.mxu0 0.0
  %631 = vmatprep.subr.mxu0 0.0
  %632 = vmatpush1.msra.mxu0 0.0
  %633 = vmatprep.subr.mxu0 0.0
  %634 = vmatpush1.msra.mxu0 0.0
  %635 = vmatprep.mubr.f32.mxu0 0.0
  %636 = vmatmul.mubr.f32.gmra.mrb[0].mxu0 %v439
  %v637 = vpop.f32.mrb[0].mxu0
  %v638 = vadd.f32 0.0, %v637
  %v639 = vpop.f32.mrb[0].mxu0
  %640 = vmatprep.mubr.f32.mxu0 0.0
  %641 = vmatmul.mubr.f32.gmra.mrb[0].mxu0 %v441
  %v642 = vpop.f32.mrb[0].mxu0
  %v643 = vadd.f32 0.0, %v642
  %v644 = vpop.f32.mrb[0].mxu0
  %645 = vmatprep.mubr.f32.mxu0 0.0
  %646 = vmatmul.mubr.f32.gmra.mrb[0].mxu0 %v443
  %v647 = vpop.f32.mrb[0].mxu0
  %v648 = vadd.f32 0.0, %v647
  %v649 = vpop.f32.mrb[0].mxu0
  %650 = vmatprep.mubr.f32.mxu0 0.0
  %651 = vmatmul.mubr.f32.gmra.mrb[0].mxu0 %v445
  %v652 = vpop.f32.mrb[0].mxu0
  %v653 = vadd.f32 0.0, %v652
  %v654 = vpop.f32.mrb[0].mxu0
  %655 = vmatprep.mubr.f32.mxu0 0.0
  %656 = vmatmul.mubr.f32.gmra.mrb[0].mxu0 %v447
  %v657 = vpop.f32.mrb[0].mxu0
  %v658 = vadd.f32 0.0, %v657
  %v659 = vpop.f32.mrb[0].mxu0
  %660 = vmatprep.mubr.f32.mxu0 0.0
  %661 = vmatmul.mubr.f32.gmra.mrb[0].mxu0 %v449
  %v662 = vpop.f32.mrb[0].mxu0
  %v663 = vadd.f32 0.0, %v662
  %v664 = vpop.f32.mrb[0].mxu0
  %665 = vmatprep.mubr.f32.mxu0 0.0
  %666 = vmatmul.mubr.f32.gmra.mrb[0].mxu0 %v451
  %v667 = vpop.f32.mrb[0].mxu0
  %v668 = vadd.f32 0.0, %v667
  %v669 = vpop.f32.mrb[0].mxu0
  %670 = vmatprep.mubr.f32.mxu0 0.0
  %671 = vmatmul.mubr.f32.gmra.mrb[0].mxu0 %v453
  %v672 = vpop.f32.mrb[0].mxu0
  %v673 = vadd.f32 0.0, %v672
  %v674 = vpop.f32.mrb[0].mxu0
  %675 = vmatprep.mubr.f32.mxu0 0.0
  %676 = vmatmul.mubr.f32.gmra.mrb[0].mxu0 %v455
  %v677 = vpop.f32.mrb[0].mxu0
  %v678 = vadd.f32 0.0, %v677
  %v679 = vpop.f32.mrb[0].mxu0
  %680 = vmatprep.mubr.f32.mxu0 0.0
  %681 = vmatmul.mubr.f32.gmra.mrb[0].mxu0 %v457
  %v682 = vpop.f32.mrb[0].mxu0
  %v683 = vadd.f32 0.0, %v682
  %v684 = vpop.f32.mrb[0].mxu0
  %685 = vmatprep.mubr.f32.mxu0 0.0
  %686 = vmatmul.mubr.f32.gmra.mrb[0].mxu0 %v459
  %v687 = vpop.f32.mrb[0].mxu0
  %v688 = vadd.f32 0.0, %v687
  %v689 = vpop.f32.mrb[0].mxu0
  %690 = vmatprep.mubr.f32.mxu0 0.0
  %691 = vmatmul.mubr.f32.gmra.mrb[0].mxu0 %v461
  %v692 = vpop.f32.mrb[0].mxu0
  %v693 = vadd.f32 0.0, %v692
  %v694 = vpop.f32.mrb[0].mxu0
  %695 = vmatprep.mubr.f32.mxu0 0.0
  %696 = vmatmul.mubr.f32.gmra.mrb[0].mxu0 %v463
  %v697 = vpop.f32.mrb[0].mxu0
  %v698 = vadd.f32 0.0, %v697
  %v699 = vpop.f32.mrb[0].mxu0
  %700 = vmatprep.mubr.f32.mxu0 0.0
  %701 = vmatmul.mubr.f32.gmra.mrb[0].mxu0 %v465
  %v702 = vpop.f32.mrb[0].mxu0
  %v703 = vadd.f32 0.0, %v702
  %v704 = vpop.f32.mrb[0].mxu0
  %705 = vmatprep.mubr.f32.mxu0 0.0
  %706 = vmatmul.mubr.f32.gmra.mrb[0].mxu0 %v467
  %v707 = vpop.f32.mrb[0].mxu0
  %v708 = vadd.f32 0.0, %v707
  %v709 = vpop.f32.mrb[0].mxu0
  %710 = vmatprep.mubr.f32.mxu0 0.0
  %711 = vmatmul.mubr.f32.gmra.mrb[0].mxu0 %v469
  %v712 = vpop.f32.mrb[0].mxu0
  %v713 = vadd.f32 0.0, %v712
  %v714 = vpop.f32.mrb[0].mxu0
  %715 = vmatprep.mubr.f32.mxu0 0.0
  %716 = vmatmul.mubr.f32.gmra.mrb[0].mxu0 %v471
  %v717 = vpop.f32.mrb[0].mxu0
  %v718 = vadd.f32 0.0, %v717
  %v719 = vpop.f32.mrb[0].mxu0
  %720 = vmatprep.mubr.f32.mxu0 0.0
  %721 = vmatmul.mubr.f32.gmra.mrb[0].mxu0 %v473
  %v722 = vpop.f32.mrb[0].mxu0
  %v723 = vadd.f32 0.0, %v722
  %v724 = vpop.f32.mrb[0].mxu0
  %725 = vmatprep.mubr.f32.mxu0 0.0
  %726 = vmatmul.mubr.f32.gmra.mrb[0].mxu0 %v475
  %v727 = vpop.f32.mrb[0].mxu0
  %v728 = vadd.f32 0.0, %v727
  %v729 = vpop.f32.mrb[0].mxu0
  %730 = vmatprep.mubr.f32.mxu0 0.0
  %731 = vmatmul.mubr.f32.gmra.mrb[0].mxu0 %v477
  %v732 = vpop.f32.mrb[0].mxu0
  %v733 = vadd.f32 0.0, %v732
  %v734 = vpop.f32.mrb[0].mxu0
  %735 = vmatprep.mubr.f32.mxu0 0.0
  %736 = vmatmul.mubr.f32.gmra.mrb[0].mxu0 %v479
  %v737 = vpop.f32.mrb[0].mxu0
  %v738 = vadd.f32 0.0, %v737
  %v739 = vpop.f32.mrb[0].mxu0
  %740 = vmatprep.mubr.f32.mxu0 0.0
  %741 = vmatmul.mubr.f32.gmra.mrb[0].mxu0 %v481
  %v742 = vpop.f32.mrb[0].mxu0
  %v743 = vadd.f32 0.0, %v742
  %v744 = vpop.f32.mrb[0].mxu0
  %745 = vmatprep.mubr.f32.mxu0 0.0
  %746 = vmatmul.mubr.f32.gmra.mrb[0].mxu0 %v483
  %v747 = vpop.f32.mrb[0].mxu0
  %v748 = vadd.f32 0.0, %v747
  %v749 = vpop.f32.mrb[0].mxu0
  %750 = vmatprep.mubr.f32.mxu0 0.0
  %751 = vmatmul.mubr.f32.gmra.mrb[0].mxu0 %v485
  %v752 = vpop.f32.mrb[0].mxu0
  %v753 = vadd.f32 0.0, %v752
  %v754 = vpop.f32.mrb[0].mxu0
  %755 = vmatprep.mubr.f32.mxu0 0.0
  %756 = vmatmul.mubr.f32.gmra.mrb[0].mxu0 %v487
  %v757 = vpop.f32.mrb[0].mxu0
  %v758 = vadd.f32 0.0, %v757
  %v759 = vpop.f32.mrb[0].mxu0
  %760 = vmatprep.mubr.f32.mxu0 0.0
  %761 = vmatmul.mubr.f32.gmra.mrb[0].mxu0 %v489
  %v762 = vpop.f32.mrb[0].mxu0
  %v763 = vadd.f32 0.0, %v762
  %v764 = vpop.f32.mrb[0].mxu0
  %765 = vmatprep.mubr.f32.mxu0 0.0
  %766 = vmatmul.mubr.f32.gmra.mrb[0].mxu0 %v491
  %v767 = vpop.f32.mrb[0].mxu0
  %v768 = vadd.f32 0.0, %v767
  %v769 = vpop.f32.mrb[0].mxu0
  %770 = vmatprep.mubr.f32.mxu0 0.0
  %771 = vmatmul.mubr.f32.gmra.mrb[0].mxu0 %v493
  %v772 = vpop.f32.mrb[0].mxu0
  %v773 = vadd.f32 0.0, %v772
  %v774 = vpop.f32.mrb[0].mxu0
  %775 = vmatprep.mubr.f32.mxu0 0.0
  %776 = vmatmul.mubr.f32.gmra.mrb[0].mxu0 %v495
  %v777 = vpop.f32.mrb[0].mxu0
  %v778 = vadd.f32 0.0, %v777
  %v779 = vpop.f32.mrb[0].mxu0
  %780 = vmatprep.mubr.f32.mxu0 0.0
  %781 = vmatmul.mubr.f32.gmra.mrb[0].mxu0 %v497
  %v782 = vpop.f32.mrb[0].mxu0
  %v783 = vadd.f32 0.0, %v782
  %v784 = vpop.f32.mrb[0].mxu0
  %785 = vmatprep.mubr.f32.mxu0 0.0
  %786 = vmatmul.mubr.f32.gmra.mrb[0].mxu0 %v499
  %v787 = vpop.f32.mrb[0].mxu0
  %v788 = vadd.f32 0.0, %v787
  %v789 = vpop.f32.mrb[0].mxu0
  %790 = vmatprep.mubr.f32.mxu0 0.0
  %791 = vmatmul.mubr.f32.gmra.mrb[0].mxu0 %v501
  %v792 = vpop.f32.mrb[0].mxu0
  %v793 = vadd.f32 0.0, %v792
  %v794 = vpop.f32.mrb[0].mxu0
  %795 = vmatprep.mubr.f32.mxu0 0.0
  %796 = vmatmul.mubr.f32.gmra.mrb[0].mxu0 %v503
  %v797 = vpop.f32.mrb[0].mxu0
  %v798 = vadd.f32 0.0, %v797
  %v799 = vpop.f32.mrb[0].mxu0
  %800 = vmatprep.mubr.f32.mxu0 0.0
  %801 = vmatmul.mubr.f32.gmra.mrb[0].mxu0 %v505
  %v802 = vpop.f32.mrb[0].mxu0
  %v803 = vadd.f32 0.0, %v802
  %v804 = vpop.f32.mrb[0].mxu0
  %805 = vmatprep.mubr.f32.mxu0 0.0
  %806 = vmatmul.mubr.f32.gmra.mrb[0].mxu0 %v507
  %v807 = vpop.f32.mrb[0].mxu0
  %v808 = vadd.f32 0.0, %v807
  %v809 = vpop.f32.mrb[0].mxu0
  %810 = vmatprep.mubr.f32.mxu0 0.0
  %811 = vmatmul.mubr.f32.gmra.mrb[0].mxu0 %v509
  %v812 = vpop.f32.mrb[0].mxu0
  %v813 = vadd.f32 0.0, %v812
  %v814 = vpop.f32.mrb[0].mxu0
  %815 = vmatprep.mubr.f32.mxu0 0.0
  %816 = vmatmul.mubr.f32.gmra.mrb[0].mxu0 %v511
  %v817 = vpop.f32.mrb[0].mxu0
  %v818 = vadd.f32 0.0, %v817
  %v819 = vpop.f32.mrb[0].mxu0
  %820 = vmatprep.mubr.f32.mxu0 0.0
  %821 = vmatmul.mubr.f32.gmra.mrb[0].mxu0 %v513
  %v822 = vpop.f32.mrb[0].mxu0
  %v823 = vadd.f32 0.0, %v822
  %v824 = vpop.f32.mrb[0].mxu0
  %825 = vmatprep.mubr.f32.mxu0 0.0
  %826 = vmatmul.mubr.f32.gmra.mrb[0].mxu0 %v515
  %v827 = vpop.f32.mrb[0].mxu0
  %v828 = vadd.f32 0.0, %v827
  %v829 = vpop.f32.mrb[0].mxu0
  %830 = vmatprep.mubr.f32.mxu0 0.0
  %831 = vmatmul.mubr.f32.gmra.mrb[0].mxu0 %v517
  %v832 = vpop.f32.mrb[0].mxu0
  %v833 = vadd.f32 0.0, %v832
  %v834 = vpop.f32.mrb[0].mxu0
  %835 = vmatprep.mubr.f32.mxu0 0.0
  %836 = vmatmul.mubr.f32.gmra.mrb[0].mxu0 %v519
  %v837 = vpop.f32.mrb[0].mxu0
  %v838 = vadd.f32 0.0, %v837
  %v839 = vpop.f32.mrb[0].mxu0
  %840 = vmatprep.mubr.f32.mxu0 0.0
  %841 = vmatmul.mubr.f32.gmra.mrb[0].mxu0 %v521
  %v842 = vpop.f32.mrb[0].mxu0
  %v843 = vadd.f32 0.0, %v842
  %v844 = vpop.f32.mrb[0].mxu0
  %845 = vmatprep.mubr.f32.mxu0 0.0
  %846 = vmatmul.mubr.f32.gmra.mrb[0].mxu0 %v523
  %v847 = vpop.f32.mrb[0].mxu0
  %v848 = vadd.f32 0.0, %v847
  %v849 = vpop.f32.mrb[0].mxu0
  %850 = vmatprep.mubr.f32.mxu0 0.0
  %851 = vmatmul.mubr.f32.gmra.mrb[0].mxu0 %v525
  %v852 = vpop.f32.mrb[0].mxu0
  %v853 = vadd.f32 0.0, %v852
  %v854 = vpop.f32.mrb[0].mxu0
  %855 = vmatprep.mubr.f32.mxu0 0.0
  %856 = vmatmul.mubr.f32.gmra.mrb[0].mxu0 %v527
  %v857 = vpop.f32.mrb[0].mxu0
  %v858 = vadd.f32 0.0, %v857
  %v859 = vpop.f32.mrb[0].mxu0
  %860 = vmatprep.mubr.f32.mxu0 0.0
  %861 = vmatmul.mubr.f32.gmra.mrb[0].mxu0 %v529
  %v862 = vpop.f32.mrb[0].mxu0
  %v863 = vadd.f32 0.0, %v862
  %v864 = vpop.f32.mrb[0].mxu0
  %865 = vmatprep.mubr.f32.mxu0 0.0
  %866 = vmatmul.mubr.f32.gmra.mrb[0].mxu0 %v531
  %v867 = vpop.f32.mrb[0].mxu0
  %v868 = vadd.f32 0.0, %v867
  %v869 = vpop.f32.mrb[0].mxu0
  %870 = vmatprep.mubr.f32.mxu0 0.0
  %871 = vmatmul.mubr.f32.gmra.mrb[0].mxu0 %v533
  %v872 = vpop.f32.mrb[0].mxu0
  %v873 = vadd.f32 0.0, %v872
  %v874 = vpop.f32.mrb[0].mxu0
  %875 = vmatprep.mubr.f32.mxu0 0.0
  %876 = vmatmul.mubr.f32.gmra.mrb[0].mxu0 %v535
  %v877 = vpop.f32.mrb[0].mxu0
  %v878 = vadd.f32 0.0, %v877
  %v879 = vpop.f32.mrb[0].mxu0
  %880 = vmatprep.mubr.f32.mxu0 0.0
  %881 = vmatmul.mubr.f32.gmra.mrb[0].mxu0 %v537
  %v882 = vpop.f32.mrb[0].mxu0
  %v883 = vadd.f32 0.0, %v882
  %v884 = vpop.f32.mrb[0].mxu0
  %885 = vmatprep.mubr.f32.mxu0 0.0
  %886 = vmatmul.mubr.f32.gmra.mrb[0].mxu0 %v539
  %v887 = vpop.f32.mrb[0].mxu0
  %v888 = vadd.f32 0.0, %v887
  %v889 = vpop.f32.mrb[0].mxu0
  %890 = vmatprep.mubr.f32.mxu0 0.0
  %891 = vmatmul.mubr.f32.gmra.mrb[0].mxu0 %v541
  %v892 = vpop.f32.mrb[0].mxu0
  %v893 = vadd.f32 0.0, %v892
  %v894 = vpop.f32.mrb[0].mxu0
  %895 = vmatprep.mubr.f32.mxu0 0.0
  %896 = vmatmul.mubr.f32.gmra.mrb[0].mxu0 %v543
  %v897 = vpop.f32.mrb[0].mxu0
  %v898 = vadd.f32 0.0, %v897
  %v899 = vpop.f32.mrb[0].mxu0
  %900 = vmatprep.mubr.f32.mxu0 0.0
  %901 = vmatmul.mubr.f32.gmra.mrb[0].mxu0 %v545
  %v902 = vpop.f32.mrb[0].mxu0
  %v903 = vadd.f32 0.0, %v902
  %v904 = vpop.f32.mrb[0].mxu0
  %905 = vmatprep.mubr.f32.mxu0 0.0
  %906 = vmatmul.mubr.f32.gmra.mrb[0].mxu0 %v547
  %v907 = vpop.f32.mrb[0].mxu0
  %v908 = vadd.f32 0.0, %v907
  %v909 = vpop.f32.mrb[0].mxu0
  %910 = vmatprep.mubr.f32.mxu0 0.0
  %911 = vmatmul.mubr.f32.gmra.mrb[0].mxu0 %v549
  %v912 = vpop.f32.mrb[0].mxu0
  %v913 = vadd.f32 0.0, %v912
  %v914 = vpop.f32.mrb[0].mxu0
  %915 = vmatprep.mubr.f32.mxu0 0.0
  %916 = vmatmul.mubr.f32.gmra.mrb[0].mxu0 %v551
  %v917 = vpop.f32.mrb[0].mxu0
  %v918 = vadd.f32 0.0, %v917
  %v919 = vpop.f32.mrb[0].mxu0
  %920 = vmatprep.mubr.f32.mxu0 0.0
  %921 = vmatmul.mubr.f32.gmra.mrb[0].mxu0 %v553
  %v922 = vpop.f32.mrb[0].mxu0
  %v923 = vadd.f32 0.0, %v922
  %v924 = vpop.f32.mrb[0].mxu0
  %925 = vmatprep.mubr.f32.mxu0 0.0
  %926 = vmatmul.mubr.f32.gmra.mrb[0].mxu0 %v555
  %v927 = vpop.f32.mrb[0].mxu0
  %v928 = vadd.f32 0.0, %v927
  %v929 = vpop.f32.mrb[0].mxu0
  %930 = vmatprep.mubr.f32.mxu0 0.0
  %931 = vmatmul.mubr.f32.gmra.mrb[0].mxu0 %v557
  %v932 = vpop.f32.mrb[0].mxu0
  %v933 = vadd.f32 0.0, %v932
  %v934 = vpop.f32.mrb[0].mxu0
  %935 = vmatprep.mubr.f32.mxu0 0.0
  %936 = vmatmul.mubr.f32.gmra.mrb[0].mxu0 %v559
  %v937 = vpop.f32.mrb[0].mxu0
  %v938 = vadd.f32 0.0, %v937
  %v939 = vpop.f32.mrb[0].mxu0
  %940 = vmatprep.mubr.f32.mxu0 0.0
  %941 = vmatmul.mubr.f32.gmra.mrb[0].mxu0 %v561
  %v942 = vpop.f32.mrb[0].mxu0
  %v943 = vadd.f32 0.0, %v942
  %v944 = vpop.f32.mrb[0].mxu0
  %945 = vmatprep.mubr.f32.mxu0 0.0
  %946 = vmatmul.mubr.f32.gmra.mrb[0].mxu0 %v563
  %v947 = vpop.f32.mrb[0].mxu0
  %v948 = vadd.f32 0.0, %v947
  %v949 = vpop.f32.mrb[0].mxu0
  %950 = vmatprep.mubr.f32.mxu0 0.0
  %951 = vmatmul.mubr.f32.gmra.mrb[0].mxu0 %v565
  %v952 = vpop.f32.mrb[0].mxu0
  %v953 = vadd.f32 0.0, %v952
  %v954 = vpop.f32.mrb[0].mxu0
  %955 = vdwg.mxu0
  %v956 = vsel %vm438, %v70, 0
  %v958 = vsel %vm438, %v71, 0
  %v960 = vsel %vm438, %v73, 0
  %v962 = vsel %vm438, %v74, 0
  %v964 = vsel %vm438, %v76, 0
  %v966 = vsel %vm438, %v77, 0
  %v968 = vsel %vm438, %v79, 0
  %v970 = vsel %vm438, %v80, 0
  %v972 = vsel %vm438, %v82, 0
  %v974 = vsel %vm438, %v83, 0
  %v976 = vsel %vm438, %v85, 0
  %v978 = vsel %vm438, %v86, 0
  %v980 = vsel %vm438, %v88, 0
  %v982 = vsel %vm438, %v89, 0
  %v984 = vsel %vm438, %v91, 0
  %v986 = vsel %vm438, %v92, 0
  %v988 = vsel %vm438, %v94, 0
  %v990 = vsel %vm438, %v95, 0
  %v992 = vsel %vm438, %v97, 0
  %v994 = vsel %vm438, %v98, 0
  %v996 = vsel %vm438, %v100, 0
  %v998 = vsel %vm438, %v101, 0
  %v1000 = vsel %vm438, %v103, 0
  %v1002 = vsel %vm438, %v104, 0
  %v1004 = vsel %vm438, %v106, 0
  %v1006 = vsel %vm438, %v107, 0
  %v1008 = vsel %vm438, %v109, 0
  %v1010 = vsel %vm438, %v110, 0
  %v1012 = vsel %vm438, %v112, 0
  %v1014 = vsel %vm438, %v113, 0
  %v1016 = vsel %vm438, %v115, 0
  %v1018 = vsel %vm438, %v116, 0
  %v1020 = vsel %vm438, %v124, 0
  %v1022 = vsel %vm438, %v125, 0
  %v1024 = vsel %vm438, %v127, 0
  %v1026 = vsel %vm438, %v128, 0
  %v1028 = vsel %vm438, %v130, 0
  %v1030 = vsel %vm438, %v131, 0
  %v1032 = vsel %vm438, %v133, 0
  %v1034 = vsel %vm438, %v134, 0
  %v1036 = vsel %vm438, %v136, 0
  %v1038 = vsel %vm438, %v137, 0
  %v1040 = vsel %vm438, %v139, 0
  %v1042 = vsel %vm438, %v140, 0
  %v1044 = vsel %vm438, %v142, 0
  %v1046 = vsel %vm438, %v143, 0
  %v1048 = vsel %vm438, %v145, 0
  %v1050 = vsel %vm438, %v146, 0
  %v1052 = vsel %vm438, %v148, 0
  %v1054 = vsel %vm438, %v149, 0
  %v1056 = vsel %vm438, %v151, 0
  %v1058 = vsel %vm438, %v152, 0
  %v1060 = vsel %vm438, %v154, 0
  %v1062 = vsel %vm438, %v155, 0
  %v1064 = vsel %vm438, %v157, 0
  %v1066 = vsel %vm438, %v158, 0
  %v1068 = vsel %vm438, %v160, 0
  %v1070 = vsel %vm438, %v161, 0
  %v1072 = vsel %vm438, %v163, 0
  %v1074 = vsel %vm438, %v164, 0
  %v1076 = vsel %vm438, %v166, 0
  %v1078 = vsel %vm438, %v167, 0
  %v1080 = vsel %vm438, %v169, 0
  %v1082 = vsel %vm438, %v170, 0
  %v1085 = vsel %vm567, %v178, 0
  %1087 = vmatprep.subr.mxu0 0.0
  %1088 = vmatpush1.msra.mxu0 %v1085
  %1089 = vmatprep.subr.mxu0 0.0
  %1090 = vmatpush1.msra.mxu0 0.0
  %1091 = vmatprep.subr.mxu0 0.0
  %1092 = vmatpush1.msra.mxu0 0.0
  %1093 = vmatprep.subr.mxu0 0.0
  %1094 = vmatpush1.msra.mxu0 0.0
  %1095 = vmatprep.subr.mxu0 0.0
  %1096 = vmatpush1.msra.mxu0 0.0
  %1097 = vmatprep.subr.mxu0 0.0
  %1098 = vmatpush1.msra.mxu0 0.0
  %1099 = vmatprep.subr.mxu0 0.0
  %1100 = vmatpush1.msra.mxu0 0.0
  %1101 = vmatprep.subr.mxu0 0.0
  %1102 = vmatpush1.msra.mxu0 0.0
  %1103 = vmatprep.subr.mxu0 0.0
  %1104 = vmatpush1.msra.mxu0 0.0
  %1105 = vmatprep.subr.mxu0 0.0
  %1106 = vmatpush1.msra.mxu0 0.0
  %1107 = vmatprep.subr.mxu0 0.0
  %1108 = vmatpush1.msra.mxu0 0.0
  %1109 = vmatprep.subr.mxu0 0.0
  %1110 = vmatpush1.msra.mxu0 0.0
  %1111 = vmatprep.subr.mxu0 0.0
  %1112 = vmatpush1.msra.mxu0 0.0
  %1113 = vmatprep.subr.mxu0 0.0
  %1114 = vmatpush1.msra.mxu0 0.0
  %1115 = vmatprep.subr.mxu0 0.0
  %1116 = vmatpush1.msra.mxu0 0.0
  %1117 = vmatprep.subr.mxu0 0.0
  %1118 = vmatpush1.msra.mxu0 0.0
  %1119 = vmatprep.subr.mxu0 0.0
  %1120 = vmatpush1.msra.mxu0 0.0
  %1121 = vmatprep.subr.mxu0 0.0
  %1122 = vmatpush1.msra.mxu0 0.0
  %1123 = vmatprep.subr.mxu0 0.0
  %1124 = vmatpush1.msra.mxu0 0.0
  %1125 = vmatprep.subr.mxu0 0.0
  %1126 = vmatpush1.msra.mxu0 0.0
  %1127 = vmatprep.subr.mxu0 0.0
  %1128 = vmatpush1.msra.mxu0 0.0
  %1129 = vmatprep.subr.mxu0 0.0
  %1130 = vmatpush1.msra.mxu0 0.0
  %1131 = vmatprep.subr.mxu0 0.0
  %1132 = vmatpush1.msra.mxu0 0.0
  %1133 = vmatprep.subr.mxu0 0.0
  %1134 = vmatpush1.msra.mxu0 0.0
  %1135 = vmatprep.subr.mxu0 0.0
  %1136 = vmatpush1.msra.mxu0 0.0
  %1137 = vmatprep.subr.mxu0 0.0
  %1138 = vmatpush1.msra.mxu0 0.0
  %1139 = vmatprep.subr.mxu0 0.0
  %1140 = vmatpush1.msra.mxu0 0.0
  %1141 = vmatprep.subr.mxu0 0.0
  %1142 = vmatpush1.msra.mxu0 0.0
  %1143 = vmatprep.subr.mxu0 0.0
  %1144 = vmatpush1.msra.mxu0 0.0
  %1145 = vmatprep.subr.mxu0 0.0
  %1146 = vmatpush1.msra.mxu0 0.0
  %1147 = vmatprep.subr.mxu0 0.0
  %1148 = vmatpush1.msra.mxu0 0.0
  %1149 = vmatprep.subr.mxu0 0.0
  %1150 = vmatpush1.msra.mxu0 0.0
  %1151 = vmatprep.mubr.f32.mxu0 0.0
  %1152 = vmatmul.mubr.f32.gmra.mrb[0].mxu0 %v956
  %v1153 = vpop.f32.mrb[0].mxu0
  %v1154 = vadd.f32 %v638, %v1153
  %v1155 = vpop.f32.mrb[0].mxu0
  %1156 = vmatprep.mubr.f32.mxu0 0.0
  %1157 = vmatmul.mubr.f32.gmra.mrb[0].mxu0 %v958
  %v1158 = vpop.f32.mrb[0].mxu0
  %v1159 = vadd.f32 %v643, %v1158
  %v1160 = vpop.f32.mrb[0].mxu0
  %1161 = vmatprep.mubr.f32.mxu0 0.0
  %1162 = vmatmul.mubr.f32.gmra.mrb[0].mxu0 %v960
  %v1163 = vpop.f32.mrb[0].mxu0
  %v1164 = vadd.f32 %v648, %v1163
  %v1165 = vpop.f32.mrb[0].mxu0
  %1166 = vmatprep.mubr.f32.mxu0 0.0
  %1167 = vmatmul.mubr.f32.gmra.mrb[0].mxu0 %v962
  %v1168 = vpop.f32.mrb[0].mxu0
  %v1169 = vadd.f32 %v653, %v1168
  %v1170 = vpop.f32.mrb[0].mxu0
  %1171 = vmatprep.mubr.f32.mxu0 0.0
  %1172 = vmatmul.mubr.f32.gmra.mrb[0].mxu0 %v964
  %v1173 = vpop.f32.mrb[0].mxu0
  %v1174 = vadd.f32 %v658, %v1173
  %v1175 = vpop.f32.mrb[0].mxu0
  %1176 = vmatprep.mubr.f32.mxu0 0.0
  %1177 = vmatmul.mubr.f32.gmra.mrb[0].mxu0 %v966
  %v1178 = vpop.f32.mrb[0].mxu0
  %v1179 = vadd.f32 %v663, %v1178
  %v1180 = vpop.f32.mrb[0].mxu0
  %1181 = vmatprep.mubr.f32.mxu0 0.0
  %1182 = vmatmul.mubr.f32.gmra.mrb[0].mxu0 %v968
  %v1183 = vpop.f32.mrb[0].mxu0
  %v1184 = vadd.f32 %v668, %v1183
  %v1185 = vpop.f32.mrb[0].mxu0
  %1186 = vmatprep.mubr.f32.mxu0 0.0
  %1187 = vmatmul.mubr.f32.gmra.mrb[0].mxu0 %v970
  %v1188 = vpop.f32.mrb[0].mxu0
  %v1189 = vadd.f32 %v673, %v1188
  %v1190 = vpop.f32.mrb[0].mxu0
  %1191 = vmatprep.mubr.f32.mxu0 0.0
  %1192 = vmatmul.mubr.f32.gmra.mrb[0].mxu0 %v972
  %v1193 = vpop.f32.mrb[0].mxu0
  %v1194 = vadd.f32 %v678, %v1193
  %v1195 = vpop.f32.mrb[0].mxu0
  %1196 = vmatprep.mubr.f32.mxu0 0.0
  %1197 = vmatmul.mubr.f32.gmra.mrb[0].mxu0 %v974
  %v1198 = vpop.f32.mrb[0].mxu0
  %v1199 = vadd.f32 %v683, %v1198
  %v1200 = vpop.f32.mrb[0].mxu0
  %1201 = vmatprep.mubr.f32.mxu0 0.0
  %1202 = vmatmul.mubr.f32.gmra.mrb[0].mxu0 %v976
  %v1203 = vpop.f32.mrb[0].mxu0
  %v1204 = vadd.f32 %v688, %v1203
  %v1205 = vpop.f32.mrb[0].mxu0
  %1206 = vmatprep.mubr.f32.mxu0 0.0
  %1207 = vmatmul.mubr.f32.gmra.mrb[0].mxu0 %v978
  %v1208 = vpop.f32.mrb[0].mxu0
  %v1209 = vadd.f32 %v693, %v1208
  %v1210 = vpop.f32.mrb[0].mxu0
  %1211 = vmatprep.mubr.f32.mxu0 0.0
  %1212 = vmatmul.mubr.f32.gmra.mrb[0].mxu0 %v980
  %v1213 = vpop.f32.mrb[0].mxu0
  %v1214 = vadd.f32 %v698, %v1213
  %v1215 = vpop.f32.mrb[0].mxu0
  %1216 = vmatprep.mubr.f32.mxu0 0.0
  %1217 = vmatmul.mubr.f32.gmra.mrb[0].mxu0 %v982
  %v1218 = vpop.f32.mrb[0].mxu0
  %v1219 = vadd.f32 %v703, %v1218
  %v1220 = vpop.f32.mrb[0].mxu0
  %1221 = vmatprep.mubr.f32.mxu0 0.0
  %1222 = vmatmul.mubr.f32.gmra.mrb[0].mxu0 %v984
  %v1223 = vpop.f32.mrb[0].mxu0
  %v1224 = vadd.f32 %v708, %v1223
  %v1225 = vpop.f32.mrb[0].mxu0
  %1226 = vmatprep.mubr.f32.mxu0 0.0
  %1227 = vmatmul.mubr.f32.gmra.mrb[0].mxu0 %v986
  %v1228 = vpop.f32.mrb[0].mxu0
  %v1229 = vadd.f32 %v713, %v1228
  %v1230 = vpop.f32.mrb[0].mxu0
  %1231 = vmatprep.mubr.f32.mxu0 0.0
  %1232 = vmatmul.mubr.f32.gmra.mrb[0].mxu0 %v988
  %v1233 = vpop.f32.mrb[0].mxu0
  %v1234 = vadd.f32 %v718, %v1233
  %v1235 = vpop.f32.mrb[0].mxu0
  %1236 = vmatprep.mubr.f32.mxu0 0.0
  %1237 = vmatmul.mubr.f32.gmra.mrb[0].mxu0 %v990
  %v1238 = vpop.f32.mrb[0].mxu0
  %v1239 = vadd.f32 %v723, %v1238
  %v1240 = vpop.f32.mrb[0].mxu0
  %1241 = vmatprep.mubr.f32.mxu0 0.0
  %1242 = vmatmul.mubr.f32.gmra.mrb[0].mxu0 %v992
  %v1243 = vpop.f32.mrb[0].mxu0
  %v1244 = vadd.f32 %v728, %v1243
  %v1245 = vpop.f32.mrb[0].mxu0
  %1246 = vmatprep.mubr.f32.mxu0 0.0
  %1247 = vmatmul.mubr.f32.gmra.mrb[0].mxu0 %v994
  %v1248 = vpop.f32.mrb[0].mxu0
  %v1249 = vadd.f32 %v733, %v1248
  %v1250 = vpop.f32.mrb[0].mxu0
  %1251 = vmatprep.mubr.f32.mxu0 0.0
  %1252 = vmatmul.mubr.f32.gmra.mrb[0].mxu0 %v996
  %v1253 = vpop.f32.mrb[0].mxu0
  %v1254 = vadd.f32 %v738, %v1253
  %v1255 = vpop.f32.mrb[0].mxu0
  %1256 = vmatprep.mubr.f32.mxu0 0.0
  %1257 = vmatmul.mubr.f32.gmra.mrb[0].mxu0 %v998
  %v1258 = vpop.f32.mrb[0].mxu0
  %v1259 = vadd.f32 %v743, %v1258
  %v1260 = vpop.f32.mrb[0].mxu0
  %1261 = vmatprep.mubr.f32.mxu0 0.0
  %1262 = vmatmul.mubr.f32.gmra.mrb[0].mxu0 %v1000
  %v1263 = vpop.f32.mrb[0].mxu0
  %v1264 = vadd.f32 %v748, %v1263
  %v1265 = vpop.f32.mrb[0].mxu0
  %1266 = vmatprep.mubr.f32.mxu0 0.0
  %1267 = vmatmul.mubr.f32.gmra.mrb[0].mxu0 %v1002
  %v1268 = vpop.f32.mrb[0].mxu0
  %v1269 = vadd.f32 %v753, %v1268
  %v1270 = vpop.f32.mrb[0].mxu0
  %1271 = vmatprep.mubr.f32.mxu0 0.0
  %1272 = vmatmul.mubr.f32.gmra.mrb[0].mxu0 %v1004
  %v1273 = vpop.f32.mrb[0].mxu0
  %v1274 = vadd.f32 %v758, %v1273
  %v1275 = vpop.f32.mrb[0].mxu0
  %1276 = vmatprep.mubr.f32.mxu0 0.0
  %1277 = vmatmul.mubr.f32.gmra.mrb[0].mxu0 %v1006
  %v1278 = vpop.f32.mrb[0].mxu0
  %v1279 = vadd.f32 %v763, %v1278
  %v1280 = vpop.f32.mrb[0].mxu0
  %1281 = vmatprep.mubr.f32.mxu0 0.0
  %1282 = vmatmul.mubr.f32.gmra.mrb[0].mxu0 %v1008
  %v1283 = vpop.f32.mrb[0].mxu0
  %v1284 = vadd.f32 %v768, %v1283
  %v1285 = vpop.f32.mrb[0].mxu0
  %1286 = vmatprep.mubr.f32.mxu0 0.0
  %1287 = vmatmul.mubr.f32.gmra.mrb[0].mxu0 %v1010
  %v1288 = vpop.f32.mrb[0].mxu0
  %v1289 = vadd.f32 %v773, %v1288
  %v1290 = vpop.f32.mrb[0].mxu0
  %1291 = vmatprep.mubr.f32.mxu0 0.0
  %1292 = vmatmul.mubr.f32.gmra.mrb[0].mxu0 %v1012
  %v1293 = vpop.f32.mrb[0].mxu0
  %v1294 = vadd.f32 %v778, %v1293
  %v1295 = vpop.f32.mrb[0].mxu0
  %1296 = vmatprep.mubr.f32.mxu0 0.0
  %1297 = vmatmul.mubr.f32.gmra.mrb[0].mxu0 %v1014
  %v1298 = vpop.f32.mrb[0].mxu0
  %v1299 = vadd.f32 %v783, %v1298
  %v1300 = vpop.f32.mrb[0].mxu0
  %1301 = vmatprep.mubr.f32.mxu0 0.0
  %1302 = vmatmul.mubr.f32.gmra.mrb[0].mxu0 %v1016
  %v1303 = vpop.f32.mrb[0].mxu0
  %v1304 = vadd.f32 %v788, %v1303
  %v1305 = vpop.f32.mrb[0].mxu0
  %1306 = vmatprep.mubr.f32.mxu0 0.0
  %1307 = vmatmul.mubr.f32.gmra.mrb[0].mxu0 %v1018
  %v1308 = vpop.f32.mrb[0].mxu0
  %v1309 = vadd.f32 %v793, %v1308
  %v1310 = vpop.f32.mrb[0].mxu0
  %1311 = vmatprep.mubr.f32.mxu0 0.0
  %1312 = vmatmul.mubr.f32.gmra.mrb[0].mxu0 %v1020
  %v1313 = vpop.f32.mrb[0].mxu0
  %v1314 = vadd.f32 %v798, %v1313
  %v1315 = vpop.f32.mrb[0].mxu0
  %1316 = vmatprep.mubr.f32.mxu0 0.0
  %1317 = vmatmul.mubr.f32.gmra.mrb[0].mxu0 %v1022
  %v1318 = vpop.f32.mrb[0].mxu0
  %v1319 = vadd.f32 %v803, %v1318
  %v1320 = vpop.f32.mrb[0].mxu0
  %1321 = vmatprep.mubr.f32.mxu0 0.0
  %1322 = vmatmul.mubr.f32.gmra.mrb[0].mxu0 %v1024
  %v1323 = vpop.f32.mrb[0].mxu0
  %v1324 = vadd.f32 %v808, %v1323
  %v1325 = vpop.f32.mrb[0].mxu0
  %1326 = vmatprep.mubr.f32.mxu0 0.0
  %1327 = vmatmul.mubr.f32.gmra.mrb[0].mxu0 %v1026
  %v1328 = vpop.f32.mrb[0].mxu0
  %v1329 = vadd.f32 %v813, %v1328
  %v1330 = vpop.f32.mrb[0].mxu0
  %1331 = vmatprep.mubr.f32.mxu0 0.0
  %1332 = vmatmul.mubr.f32.gmra.mrb[0].mxu0 %v1028
  %v1333 = vpop.f32.mrb[0].mxu0
  %v1334 = vadd.f32 %v818, %v1333
  %v1335 = vpop.f32.mrb[0].mxu0
  %1336 = vmatprep.mubr.f32.mxu0 0.0
  %1337 = vmatmul.mubr.f32.gmra.mrb[0].mxu0 %v1030
  %v1338 = vpop.f32.mrb[0].mxu0
  %v1339 = vadd.f32 %v823, %v1338
  %v1340 = vpop.f32.mrb[0].mxu0
  %1341 = vmatprep.mubr.f32.mxu0 0.0
  %1342 = vmatmul.mubr.f32.gmra.mrb[0].mxu0 %v1032
  %v1343 = vpop.f32.mrb[0].mxu0
  %v1344 = vadd.f32 %v828, %v1343
  %v1345 = vpop.f32.mrb[0].mxu0
  %1346 = vmatprep.mubr.f32.mxu0 0.0
  %1347 = vmatmul.mubr.f32.gmra.mrb[0].mxu0 %v1034
  %v1348 = vpop.f32.mrb[0].mxu0
  %v1349 = vadd.f32 %v833, %v1348
  %v1350 = vpop.f32.mrb[0].mxu0
  %1351 = vmatprep.mubr.f32.mxu0 0.0
  %1352 = vmatmul.mubr.f32.gmra.mrb[0].mxu0 %v1036
  %v1353 = vpop.f32.mrb[0].mxu0
  %v1354 = vadd.f32 %v838, %v1353
  %v1355 = vpop.f32.mrb[0].mxu0
  %1356 = vmatprep.mubr.f32.mxu0 0.0
  %1357 = vmatmul.mubr.f32.gmra.mrb[0].mxu0 %v1038
  %v1358 = vpop.f32.mrb[0].mxu0
  %v1359 = vadd.f32 %v843, %v1358
  %v1360 = vpop.f32.mrb[0].mxu0
  %1361 = vmatprep.mubr.f32.mxu0 0.0
  %1362 = vmatmul.mubr.f32.gmra.mrb[0].mxu0 %v1040
  %v1363 = vpop.f32.mrb[0].mxu0
  %v1364 = vadd.f32 %v848, %v1363
  %v1365 = vpop.f32.mrb[0].mxu0
  %1366 = vmatprep.mubr.f32.mxu0 0.0
  %1367 = vmatmul.mubr.f32.gmra.mrb[0].mxu0 %v1042
  %v1368 = vpop.f32.mrb[0].mxu0
  %v1369 = vadd.f32 %v853, %v1368
  %v1370 = vpop.f32.mrb[0].mxu0
  %1371 = vmatprep.mubr.f32.mxu0 0.0
  %1372 = vmatmul.mubr.f32.gmra.mrb[0].mxu0 %v1044
  %v1373 = vpop.f32.mrb[0].mxu0
  %v1374 = vadd.f32 %v858, %v1373
  %v1375 = vpop.f32.mrb[0].mxu0
  %1376 = vmatprep.mubr.f32.mxu0 0.0
  %1377 = vmatmul.mubr.f32.gmra.mrb[0].mxu0 %v1046
  %v1378 = vpop.f32.mrb[0].mxu0
  %v1379 = vadd.f32 %v863, %v1378
  %v1380 = vpop.f32.mrb[0].mxu0
  %1381 = vmatprep.mubr.f32.mxu0 0.0
  %1382 = vmatmul.mubr.f32.gmra.mrb[0].mxu0 %v1048
  %v1383 = vpop.f32.mrb[0].mxu0
  %v1384 = vadd.f32 %v868, %v1383
  %v1385 = vpop.f32.mrb[0].mxu0
  %1386 = vmatprep.mubr.f32.mxu0 0.0
  %1387 = vmatmul.mubr.f32.gmra.mrb[0].mxu0 %v1050
  %v1388 = vpop.f32.mrb[0].mxu0
  %v1389 = vadd.f32 %v873, %v1388
  %v1390 = vpop.f32.mrb[0].mxu0
  %1391 = vmatprep.mubr.f32.mxu0 0.0
  %1392 = vmatmul.mubr.f32.gmra.mrb[0].mxu0 %v1052
  %v1393 = vpop.f32.mrb[0].mxu0
  %v1394 = vadd.f32 %v878, %v1393
  %v1395 = vpop.f32.mrb[0].mxu0
  %1396 = vmatprep.mubr.f32.mxu0 0.0
  %1397 = vmatmul.mubr.f32.gmra.mrb[0].mxu0 %v1054
  %v1398 = vpop.f32.mrb[0].mxu0
  %v1399 = vadd.f32 %v883, %v1398
  %v1400 = vpop.f32.mrb[0].mxu0
  %1401 = vmatprep.mubr.f32.mxu0 0.0
  %1402 = vmatmul.mubr.f32.gmra.mrb[0].mxu0 %v1056
  %v1403 = vpop.f32.mrb[0].mxu0
  %v1404 = vadd.f32 %v888, %v1403
  %v1405 = vpop.f32.mrb[0].mxu0
  %1406 = vmatprep.mubr.f32.mxu0 0.0
  %1407 = vmatmul.mubr.f32.gmra.mrb[0].mxu0 %v1058
  %v1408 = vpop.f32.mrb[0].mxu0
  %v1409 = vadd.f32 %v893, %v1408
  %v1410 = vpop.f32.mrb[0].mxu0
  %1411 = vmatprep.mubr.f32.mxu0 0.0
  %1412 = vmatmul.mubr.f32.gmra.mrb[0].mxu0 %v1060
  %v1413 = vpop.f32.mrb[0].mxu0
  %v1414 = vadd.f32 %v898, %v1413
  %v1415 = vpop.f32.mrb[0].mxu0
  %1416 = vmatprep.mubr.f32.mxu0 0.0
  %1417 = vmatmul.mubr.f32.gmra.mrb[0].mxu0 %v1062
  %v1418 = vpop.f32.mrb[0].mxu0
  %v1419 = vadd.f32 %v903, %v1418
  %v1420 = vpop.f32.mrb[0].mxu0
  %1421 = vmatprep.mubr.f32.mxu0 0.0
  %1422 = vmatmul.mubr.f32.gmra.mrb[0].mxu0 %v1064
  %v1423 = vpop.f32.mrb[0].mxu0
  %v1424 = vadd.f32 %v908, %v1423
  %v1425 = vpop.f32.mrb[0].mxu0
  %1426 = vmatprep.mubr.f32.mxu0 0.0
  %1427 = vmatmul.mubr.f32.gmra.mrb[0].mxu0 %v1066
  %v1428 = vpop.f32.mrb[0].mxu0
  %v1429 = vadd.f32 %v913, %v1428
  %v1430 = vpop.f32.mrb[0].mxu0
  %1431 = vmatprep.mubr.f32.mxu0 0.0
  %1432 = vmatmul.mubr.f32.gmra.mrb[0].mxu0 %v1068
  %v1433 = vpop.f32.mrb[0].mxu0
  %v1434 = vadd.f32 %v918, %v1433
  %v1435 = vpop.f32.mrb[0].mxu0
  %1436 = vmatprep.mubr.f32.mxu0 0.0
  %1437 = vmatmul.mubr.f32.gmra.mrb[0].mxu0 %v1070
  %v1438 = vpop.f32.mrb[0].mxu0
  %v1439 = vadd.f32 %v923, %v1438
  %v1440 = vpop.f32.mrb[0].mxu0
  %1441 = vmatprep.mubr.f32.mxu0 0.0
  %1442 = vmatmul.mubr.f32.gmra.mrb[0].mxu0 %v1072
  %v1443 = vpop.f32.mrb[0].mxu0
  %v1444 = vadd.f32 %v928, %v1443
  %v1445 = vpop.f32.mrb[0].mxu0
  %1446 = vmatprep.mubr.f32.mxu0 0.0
  %1447 = vmatmul.mubr.f32.gmra.mrb[0].mxu0 %v1074
  %v1448 = vpop.f32.mrb[0].mxu0
  %v1449 = vadd.f32 %v933, %v1448
  %v1450 = vpop.f32.mrb[0].mxu0
  %1451 = vmatprep.mubr.f32.mxu0 0.0
  %1452 = vmatmul.mubr.f32.gmra.mrb[0].mxu0 %v1076
  %v1453 = vpop.f32.mrb[0].mxu0
  %v1454 = vadd.f32 %v938, %v1453
  %v1455 = vpop.f32.mrb[0].mxu0
  %1456 = vmatprep.mubr.f32.mxu0 0.0
  %1457 = vmatmul.mubr.f32.gmra.mrb[0].mxu0 %v1078
  %v1458 = vpop.f32.mrb[0].mxu0
  %v1459 = vadd.f32 %v943, %v1458
  %v1460 = vpop.f32.mrb[0].mxu0
  %1461 = vmatprep.mubr.f32.mxu0 0.0
  %1462 = vmatmul.mubr.f32.gmra.mrb[0].mxu0 %v1080
  %v1463 = vpop.f32.mrb[0].mxu0
  %v1464 = vadd.f32 %v948, %v1463
  %v1465 = vpop.f32.mrb[0].mxu0
  %1466 = vmatprep.mubr.f32.mxu0 0.0
  %1467 = vmatmul.mubr.f32.gmra.mrb[0].mxu0 %v1082
  %v1468 = vpop.f32.mrb[0].mxu0
  %v1469 = vadd.f32 %v953, %v1468
  %v1470 = vpop.f32.mrb[0].mxu0
  %1471 = vdwg.mxu0
  %vm1472 = vcmask 1045504
  %v1473 = vrot.slane %v70, 2
  %v1474 = vrot.slane %v71, 2
  %v1475 = vsel %vm1472, %v1473, %v1474
  %v1476 = vrot.slane %v72, 2
  %v1477 = vsel %vm1472, %v1474, %v1476
  %v1478 = vrot.slane %v73, 2
  %v1479 = vrot.slane %v74, 2
  %v1480 = vsel %vm1472, %v1478, %v1479
  %v1481 = vrot.slane %v75, 2
  %v1482 = vsel %vm1472, %v1479, %v1481
  %v1483 = vrot.slane %v76, 2
  %v1484 = vrot.slane %v77, 2
  %v1485 = vsel %vm1472, %v1483, %v1484
  %v1486 = vrot.slane %v78, 2
  %v1487 = vsel %vm1472, %v1484, %v1486
  %v1488 = vrot.slane %v79, 2
  %v1489 = vrot.slane %v80, 2
  %v1490 = vsel %vm1472, %v1488, %v1489
  %v1491 = vrot.slane %v81, 2
  %v1492 = vsel %vm1472, %v1489, %v1491
  %v1493 = vrot.slane %v82, 2
  %v1494 = vrot.slane %v83, 2
  %v1495 = vsel %vm1472, %v1493, %v1494
  %v1496 = vrot.slane %v84, 2
  %v1497 = vsel %vm1472, %v1494, %v1496
  %v1498 = vrot.slane %v85, 2
  %v1499 = vrot.slane %v86, 2
  %v1500 = vsel %vm1472, %v1498, %v1499
  %v1501 = vrot.slane %v87, 2
  %v1502 = vsel %vm1472, %v1499, %v1501
  %v1503 = vrot.slane %v88, 2
  %v1504 = vrot.slane %v89, 2
  %v1505 = vsel %vm1472, %v1503, %v1504
  %v1506 = vrot.slane %v90, 2
  %v1507 = vsel %vm1472, %v1504, %v1506
  %v1508 = vrot.slane %v91, 2
  %v1509 = vrot.slane %v92, 2
  %v1510 = vsel %vm1472, %v1508, %v1509
  %v1511 = vrot.slane %v93, 2
  %v1512 = vsel %vm1472, %v1509, %v1511
  %v1513 = vrot.slane %v94, 2
  %v1514 = vrot.slane %v95, 2
  %v1515 = vsel %vm1472, %v1513, %v1514
  %v1516 = vrot.slane %v96, 2
  %v1517 = vsel %vm1472, %v1514, %v1516
  %v1518 = vrot.slane %v97, 2
  %v1519 = vrot.slane %v98, 2
  %v1520 = vsel %vm1472, %v1518, %v1519
  %v1521 = vrot.slane %v99, 2
  %v1522 = vsel %vm1472, %v1519, %v1521
  %v1523 = vrot.slane %v100, 2
  %v1524 = vrot.slane %v101, 2
  %v1525 = vsel %vm1472, %v1523, %v1524
  %v1526 = vrot.slane %v102, 2
  %v1527 = vsel %vm1472, %v1524, %v1526
  %v1528 = vrot.slane %v103, 2
  %v1529 = vrot.slane %v104, 2
  %v1530 = vsel %vm1472, %v1528, %v1529
  %v1531 = vrot.slane %v105, 2
  %v1532 = vsel %vm1472, %v1529, %v1531
  %v1533 = vrot.slane %v106, 2
  %v1534 = vrot.slane %v107, 2
  %v1535 = vsel %vm1472, %v1533, %v1534
  %v1536 = vrot.slane %v108, 2
  %v1537 = vsel %vm1472, %v1534, %v1536
  %v1538 = vrot.slane %v109, 2
  %v1539 = vrot.slane %v110, 2
  %v1540 = vsel %vm1472, %v1538, %v1539
  %v1541 = vrot.slane %v111, 2
  %v1542 = vsel %vm1472, %v1539, %v1541
  %v1543 = vrot.slane %v112, 2
  %v1544 = vrot.slane %v113, 2
  %v1545 = vsel %vm1472, %v1543, %v1544
  %v1546 = vrot.slane %v114, 2
  %v1547 = vsel %vm1472, %v1544, %v1546
  %v1548 = vrot.slane %v115, 2
  %v1549 = vrot.slane %v116, 2
  %v1550 = vsel %vm1472, %v1548, %v1549
  %v1551 = vrot.slane %v117, 2
  %v1552 = vsel %vm1472, %v1549, %v1551
  %v1553 = vrot.slane %v124, 2
  %v1554 = vrot.slane %v125, 2
  %v1555 = vsel %vm1472, %v1553, %v1554
  %v1556 = vrot.slane %v126, 2
  %v1557 = vsel %vm1472, %v1554, %v1556
  %v1558 = vrot.slane %v127, 2
  %v1559 = vrot.slane %v128, 2
  %v1560 = vsel %vm1472, %v1558, %v1559
  %v1561 = vrot.slane %v129, 2
  %v1562 = vsel %vm1472, %v1559, %v1561
  %v1563 = vrot.slane %v130, 2
  %v1564 = vrot.slane %v131, 2
  %v1565 = vsel %vm1472, %v1563, %v1564
  %v1566 = vrot.slane %v132, 2
  %v1567 = vsel %vm1472, %v1564, %v1566
  %v1568 = vrot.slane %v133, 2
  %v1569 = vrot.slane %v134, 2
  %v1570 = vsel %vm1472, %v1568, %v1569
  %v1571 = vrot.slane %v135, 2
  %v1572 = vsel %vm1472, %v1569, %v1571
  %v1573 = vrot.slane %v136, 2
  %v1574 = vrot.slane %v137, 2
  %v1575 = vsel %vm1472, %v1573, %v1574
  %v1576 = vrot.slane %v138, 2
  %v1577 = vsel %vm1472, %v1574, %v1576
  %v1578 = vrot.slane %v139, 2
  %v1579 = vrot.slane %v140, 2
  %v1580 = vsel %vm1472, %v1578, %v1579
  %v1581 = vrot.slane %v141, 2
  %v1582 = vsel %vm1472, %v1579, %v1581
  %v1583 = vrot.slane %v142, 2
  %v1584 = vrot.slane %v143, 2
  %v1585 = vsel %vm1472, %v1583, %v1584
  %v1586 = vrot.slane %v144, 2
  %v1587 = vsel %vm1472, %v1584, %v1586
  %v1588 = vrot.slane %v145, 2
  %v1589 = vrot.slane %v146, 2
  %v1590 = vsel %vm1472, %v1588, %v1589
  %v1591 = vrot.slane %v147, 2
  %v1592 = vsel %vm1472, %v1589, %v1591
  %v1593 = vrot.slane %v148, 2
  %v1594 = vrot.slane %v149, 2
  %v1595 = vsel %vm1472, %v1593, %v1594
  %v1596 = vrot.slane %v150, 2
  %v1597 = vsel %vm1472, %v1594, %v1596
  %v1598 = vrot.slane %v151, 2
  %v1599 = vrot.slane %v152, 2
  %v1600 = vsel %vm1472, %v1598, %v1599
  %v1601 = vrot.slane %v153, 2
  %v1602 = vsel %vm1472, %v1599, %v1601
  %v1603 = vrot.slane %v154, 2
  %v1604 = vrot.slane %v155, 2
  %v1605 = vsel %vm1472, %v1603, %v1604
  %v1606 = vrot.slane %v156, 2
  %v1607 = vsel %vm1472, %v1604, %v1606
  %v1608 = vrot.slane %v157, 2
  %v1609 = vrot.slane %v158, 2
  %v1610 = vsel %vm1472, %v1608, %v1609
  %v1611 = vrot.slane %v159, 2
  %v1612 = vsel %vm1472, %v1609, %v1611
  %v1613 = vrot.slane %v160, 2
  %v1614 = vrot.slane %v161, 2
  %v1615 = vsel %vm1472, %v1613, %v1614
  %v1616 = vrot.slane %v162, 2
  %v1617 = vsel %vm1472, %v1614, %v1616
  %v1618 = vrot.slane %v163, 2
  %v1619 = vrot.slane %v164, 2
  %v1620 = vsel %vm1472, %v1618, %v1619
  %v1621 = vrot.slane %v165, 2
  %v1622 = vsel %vm1472, %v1619, %v1621
  %v1623 = vrot.slane %v166, 2
  %v1624 = vrot.slane %v167, 2
  %v1625 = vsel %vm1472, %v1623, %v1624
  %v1626 = vrot.slane %v168, 2
  %v1627 = vsel %vm1472, %v1624, %v1626
  %v1628 = vrot.slane %v169, 2
  %v1629 = vrot.slane %v170, 2
  %v1630 = vsel %vm1472, %v1628, %v1629
  %v1631 = vrot.slane %v171, 2
  %v1632 = vsel %vm1472, %v1629, %v1631
  %s1633 = scalar_lea.vmem %s5, 8
  %v1634 = vld [vmem:[%s1633] sm:$0x7]
  %v1635 = vsel %vm438, %v1475, 0
  %v1637 = vsel %vm438, %v1477, 0
  %v1639 = vsel %vm438, %v1480, 0
  %v1641 = vsel %vm438, %v1482, 0
  %v1643 = vsel %vm438, %v1485, 0
  %v1645 = vsel %vm438, %v1487, 0
  %v1647 = vsel %vm438, %v1490, 0
  %v1649 = vsel %vm438, %v1492, 0
  %v1651 = vsel %vm438, %v1495, 0
  %v1653 = vsel %vm438, %v1497, 0
  %v1655 = vsel %vm438, %v1500, 0
  %v1657 = vsel %vm438, %v1502, 0
  %v1659 = vsel %vm438, %v1505, 0
  %v1661 = vsel %vm438, %v1507, 0
  %v1663 = vsel %vm438, %v1510, 0
  %v1665 = vsel %vm438, %v1512, 0
  %v1667 = vsel %vm438, %v1515, 0
  %v1669 = vsel %vm438, %v1517, 0
  %v1671 = vsel %vm438, %v1520, 0
  %v1673 = vsel %vm438, %v1522, 0
  %v1675 = vsel %vm438, %v1525, 0
  %v1677 = vsel %vm438, %v1527, 0
  %v1679 = vsel %vm438, %v1530, 0
  %v1681 = vsel %vm438, %v1532, 0
  %v1683 = vsel %vm438, %v1535, 0
  %v1685 = vsel %vm438, %v1537, 0
  %v1687 = vsel %vm438, %v1540, 0
  %v1689 = vsel %vm438, %v1542, 0
  %v1691 = vsel %vm438, %v1545, 0
  %v1693 = vsel %vm438, %v1547, 0
  %v1695 = vsel %vm438, %v1550, 0
  %v1697 = vsel %vm438, %v1552, 0
  %v1699 = vsel %vm438, %v1555, 0
  %v1701 = vsel %vm438, %v1557, 0
  %v1703 = vsel %vm438, %v1560, 0
  %v1705 = vsel %vm438, %v1562, 0
  %v1707 = vsel %vm438, %v1565, 0
  %v1709 = vsel %vm438, %v1567, 0
  %v1711 = vsel %vm438, %v1570, 0
  %v1713 = vsel %vm438, %v1572, 0
  %v1715 = vsel %vm438, %v1575, 0
  %v1717 = vsel %vm438, %v1577, 0
  %v1719 = vsel %vm438, %v1580, 0
  %v1721 = vsel %vm438, %v1582, 0
  %v1723 = vsel %vm438, %v1585, 0
  %v1725 = vsel %vm438, %v1587, 0
  %v1727 = vsel %vm438, %v1590, 0
  %v1729 = vsel %vm438, %v1592, 0
  %v1731 = vsel %vm438, %v1595, 0
  %v1733 = vsel %vm438, %v1597, 0
  %v1735 = vsel %vm438, %v1600, 0
  %v1737 = vsel %vm438, %v1602, 0
  %v1739 = vsel %vm438, %v1605, 0
  %v1741 = vsel %vm438, %v1607, 0
  %v1743 = vsel %vm438, %v1610, 0
  %v1745 = vsel %vm438, %v1612, 0
  %v1747 = vsel %vm438, %v1615, 0
  %v1749 = vsel %vm438, %v1617, 0
  %v1751 = vsel %vm438, %v1620, 0
  %v1753 = vsel %vm438, %v1622, 0
  %v1755 = vsel %vm438, %v1625, 0
  %v1757 = vsel %vm438, %v1627, 0
  %v1759 = vsel %vm438, %v1630, 0
  %v1761 = vsel %vm438, %v1632, 0
  %v1764 = vsel %vm567, %v1634, 0
  %1766 = vmatprep.subr.mxu0 0.0
  %1767 = vmatpush1.msra.mxu0 %v1764
  %1768 = vmatprep.subr.mxu0 0.0
  %1769 = vmatpush1.msra.mxu0 0.0
  %1770 = vmatprep.subr.mxu0 0.0
  %1771 = vmatpush1.msra.mxu0 0.0
  %1772 = vmatprep.subr.mxu0 0.0
  %1773 = vmatpush1.msra.mxu0 0.0
  %1774 = vmatprep.subr.mxu0 0.0
  %1775 = vmatpush1.msra.mxu0 0.0
  %1776 = vmatprep.subr.mxu0 0.0
  %1777 = vmatpush1.msra.mxu0 0.0
  %1778 = vmatprep.subr.mxu0 0.0
  %1779 = vmatpush1.msra.mxu0 0.0
  %1780 = vmatprep.subr.mxu0 0.0
  %1781 = vmatpush1.msra.mxu0 0.0
  %1782 = vmatprep.subr.mxu0 0.0
  %1783 = vmatpush1.msra.mxu0 0.0
  %1784 = vmatprep.subr.mxu0 0.0
  %1785 = vmatpush1.msra.mxu0 0.0
  %1786 = vmatprep.subr.mxu0 0.0
  %1787 = vmatpush1.msra.mxu0 0.0
  %1788 = vmatprep.subr.mxu0 0.0
  %1789 = vmatpush1.msra.mxu0 0.0
  %1790 = vmatprep.subr.mxu0 0.0
  %1791 = vmatpush1.msra.mxu0 0.0
  %1792 = vmatprep.subr.mxu0 0.0
  %1793 = vmatpush1.msra.mxu0 0.0
  %1794 = vmatprep.subr.mxu0 0.0
  %1795 = vmatpush1.msra.mxu0 0.0
  %1796 = vmatprep.subr.mxu0 0.0
  %1797 = vmatpush1.msra.mxu0 0.0
  %1798 = vmatprep.subr.mxu0 0.0
  %1799 = vmatpush1.msra.mxu0 0.0
  %1800 = vmatprep.subr.mxu0 0.0
  %1801 = vmatpush1.msra.mxu0 0.0
  %1802 = vmatprep.subr.mxu0 0.0
  %1803 = vmatpush1.msra.mxu0 0.0
  %1804 = vmatprep.subr.mxu0 0.0
  %1805 = vmatpush1.msra.mxu0 0.0
  %1806 = vmatprep.subr.mxu0 0.0
  %1807 = vmatpush1.msra.mxu0 0.0
  %1808 = vmatprep.subr.mxu0 0.0
  %1809 = vmatpush1.msra.mxu0 0.0
  %1810 = vmatprep.subr.mxu0 0.0
  %1811 = vmatpush1.msra.mxu0 0.0
  %1812 = vmatprep.subr.mxu0 0.0
  %1813 = vmatpush1.msra.mxu0 0.0
  %1814 = vmatprep.subr.mxu0 0.0
  %1815 = vmatpush1.msra.mxu0 0.0
  %1816 = vmatprep.subr.mxu0 0.0
  %1817 = vmatpush1.msra.mxu0 0.0
  %1818 = vmatprep.subr.mxu0 0.0
  %1819 = vmatpush1.msra.mxu0 0.0
  %1820 = vmatprep.subr.mxu0 0.0
  %1821 = vmatpush1.msra.mxu0 0.0
  %1822 = vmatprep.subr.mxu0 0.0
  %1823 = vmatpush1.msra.mxu0 0.0
  %1824 = vmatprep.subr.mxu0 0.0
  %1825 = vmatpush1.msra.mxu0 0.0
  %1826 = vmatprep.subr.mxu0 0.0
  %1827 = vmatpush1.msra.mxu0 0.0
  %1828 = vmatprep.subr.mxu0 0.0
  %1829 = vmatpush1.msra.mxu0 0.0
  %1830 = vmatprep.mubr.f32.mxu0 0.0
  %1831 = vmatmul.mubr.f32.gmra.mrb[0].mxu0 %v1635
  %v1832 = vpop.f32.mrb[0].mxu0
  %v1833 = vadd.f32 0.0, %v1832
  %v1834 = vpop.f32.mrb[0].mxu0
  %1835 = vmatprep.mubr.f32.mxu0 0.0
  %1836 = vmatmul.mubr.f32.gmra.mrb[0].mxu0 %v1637
  %v1837 = vpop.f32.mrb[0].mxu0
  %v1838 = vadd.f32 0.0, %v1837
  %v1839 = vpop.f32.mrb[0].mxu0
  %1840 = vmatprep.mubr.f32.mxu0 0.0
  %1841 = vmatmul.mubr.f32.gmra.mrb[0].mxu0 %v1639
  %v1842 = vpop.f32.mrb[0].mxu0
  %v1843 = vadd.f32 0.0, %v1842
  %v1844 = vpop.f32.mrb[0].mxu0
  %1845 = vmatprep.mubr.f32.mxu0 0.0
  %1846 = vmatmul.mubr.f32.gmra.mrb[0].mxu0 %v1641
  %v1847 = vpop.f32.mrb[0].mxu0
  %v1848 = vadd.f32 0.0, %v1847
  %v1849 = vpop.f32.mrb[0].mxu0
  %1850 = vmatprep.mubr.f32.mxu0 0.0
  %1851 = vmatmul.mubr.f32.gmra.mrb[0].mxu0 %v1643
  %v1852 = vpop.f32.mrb[0].mxu0
  %v1853 = vadd.f32 0.0, %v1852
  %v1854 = vpop.f32.mrb[0].mxu0
  %1855 = vmatprep.mubr.f32.mxu0 0.0
  %1856 = vmatmul.mubr.f32.gmra.mrb[0].mxu0 %v1645
  %v1857 = vpop.f32.mrb[0].mxu0
  %v1858 = vadd.f32 0.0, %v1857
  %v1859 = vpop.f32.mrb[0].mxu0
  %1860 = vmatprep.mubr.f32.mxu0 0.0
  %1861 = vmatmul.mubr.f32.gmra.mrb[0].mxu0 %v1647
  %v1862 = vpop.f32.mrb[0].mxu0
  %v1863 = vadd.f32 0.0, %v1862
  %v1864 = vpop.f32.mrb[0].mxu0
  %1865 = vmatprep.mubr.f32.mxu0 0.0
  %1866 = vmatmul.mubr.f32.gmra.mrb[0].mxu0 %v1649
  %v1867 = vpop.f32.mrb[0].mxu0
  %v1868 = vadd.f32 0.0, %v1867
  %v1869 = vpop.f32.mrb[0].mxu0
  %1870 = vmatprep.mubr.f32.mxu0 0.0
  %1871 = vmatmul.mubr.f32.gmra.mrb[0].mxu0 %v1651
  %v1872 = vpop.f32.mrb[0].mxu0
  %v1873 = vadd.f32 0.0, %v1872
  %v1874 = vpop.f32.mrb[0].mxu0
  %1875 = vmatprep.mubr.f32.mxu0 0.0
  %1876 = vmatmul.mubr.f32.gmra.mrb[0].mxu0 %v1653
  %v1877 = vpop.f32.mrb[0].mxu0
  %v1878 = vadd.f32 0.0, %v1877
  %v1879 = vpop.f32.mrb[0].mxu0
  %1880 = vmatprep.mubr.f32.mxu0 0.0
  %1881 = vmatmul.mubr.f32.gmra.mrb[0].mxu0 %v1655
  %v1882 = vpop.f32.mrb[0].mxu0
  %v1883 = vadd.f32 0.0, %v1882
  %v1884 = vpop.f32.mrb[0].mxu0
  %1885 = vmatprep.mubr.f32.mxu0 0.0
  %1886 = vmatmul.mubr.f32.gmra.mrb[0].mxu0 %v1657
  %v1887 = vpop.f32.mrb[0].mxu0
  %v1888 = vadd.f32 0.0, %v1887
  %v1889 = vpop.f32.mrb[0].mxu0
  %1890 = vmatprep.mubr.f32.mxu0 0.0
  %1891 = vmatmul.mubr.f32.gmra.mrb[0].mxu0 %v1659
  %v1892 = vpop.f32.mrb[0].mxu0
  %v1893 = vadd.f32 0.0, %v1892
  %v1894 = vpop.f32.mrb[0].mxu0
  %1895 = vmatprep.mubr.f32.mxu0 0.0
  %1896 = vmatmul.mubr.f32.gmra.mrb[0].mxu0 %v1661
  %v1897 = vpop.f32.mrb[0].mxu0
  %v1898 = vadd.f32 0.0, %v1897
  %v1899 = vpop.f32.mrb[0].mxu0
  %1900 = vmatprep.mubr.f32.mxu0 0.0
  %1901 = vmatmul.mubr.f32.gmra.mrb[0].mxu0 %v1663
  %v1902 = vpop.f32.mrb[0].mxu0
  %v1903 = vadd.f32 0.0, %v1902
  %v1904 = vpop.f32.mrb[0].mxu0
  %1905 = vmatprep.mubr.f32.mxu0 0.0
  %1906 = vmatmul.mubr.f32.gmra.mrb[0].mxu0 %v1665
  %v1907 = vpop.f32.mrb[0].mxu0
  %v1908 = vadd.f32 0.0, %v1907
  %v1909 = vpop.f32.mrb[0].mxu0
  %1910 = vmatprep.mubr.f32.mxu0 0.0
  %1911 = vmatmul.mubr.f32.gmra.mrb[0].mxu0 %v1667
  %v1912 = vpop.f32.mrb[0].mxu0
  %v1913 = vadd.f32 0.0, %v1912
  %v1914 = vpop.f32.mrb[0].mxu0
  %1915 = vmatprep.mubr.f32.mxu0 0.0
  %1916 = vmatmul.mubr.f32.gmra.mrb[0].mxu0 %v1669
  %v1917 = vpop.f32.mrb[0].mxu0
  %v1918 = vadd.f32 0.0, %v1917
  %v1919 = vpop.f32.mrb[0].mxu0
  %1920 = vmatprep.mubr.f32.mxu0 0.0
  %1921 = vmatmul.mubr.f32.gmra.mrb[0].mxu0 %v1671
  %v1922 = vpop.f32.mrb[0].mxu0
  %v1923 = vadd.f32 0.0, %v1922
  %v1924 = vpop.f32.mrb[0].mxu0
  %1925 = vmatprep.mubr.f32.mxu0 0.0
  %1926 = vmatmul.mubr.f32.gmra.mrb[0].mxu0 %v1673
  %v1927 = vpop.f32.mrb[0].mxu0
  %v1928 = vadd.f32 0.0, %v1927
  %v1929 = vpop.f32.mrb[0].mxu0
  %1930 = vmatprep.mubr.f32.mxu0 0.0
  %1931 = vmatmul.mubr.f32.gmra.mrb[0].mxu0 %v1675
  %v1932 = vpop.f32.mrb[0].mxu0
  %v1933 = vadd.f32 0.0, %v1932
  %v1934 = vpop.f32.mrb[0].mxu0
  %1935 = vmatprep.mubr.f32.mxu0 0.0
  %1936 = vmatmul.mubr.f32.gmra.mrb[0].mxu0 %v1677
  %v1937 = vpop.f32.mrb[0].mxu0
  %v1938 = vadd.f32 0.0, %v1937
  %v1939 = vpop.f32.mrb[0].mxu0
  %1940 = vmatprep.mubr.f32.mxu0 0.0
  %1941 = vmatmul.mubr.f32.gmra.mrb[0].mxu0 %v1679
  %v1942 = vpop.f32.mrb[0].mxu0
  %v1943 = vadd.f32 0.0, %v1942
  %v1944 = vpop.f32.mrb[0].mxu0
  %1945 = vmatprep.mubr.f32.mxu0 0.0
  %1946 = vmatmul.mubr.f32.gmra.mrb[0].mxu0 %v1681
  %v1947 = vpop.f32.mrb[0].mxu0
  %v1948 = vadd.f32 0.0, %v1947
  %v1949 = vpop.f32.mrb[0].mxu0
  %1950 = vmatprep.mubr.f32.mxu0 0.0
  %1951 = vmatmul.mubr.f32.gmra.mrb[0].mxu0 %v1683
  %v1952 = vpop.f32.mrb[0].mxu0
  %v1953 = vadd.f32 0.0, %v1952
  %v1954 = vpop.f32.mrb[0].mxu0
  %1955 = vmatprep.mubr.f32.mxu0 0.0
  %1956 = vmatmul.mubr.f32.gmra.mrb[0].mxu0 %v1685
  %v1957 = vpop.f32.mrb[0].mxu0
  %v1958 = vadd.f32 0.0, %v1957
  %v1959 = vpop.f32.mrb[0].mxu0
  %1960 = vmatprep.mubr.f32.mxu0 0.0
  %1961 = vmatmul.mubr.f32.gmra.mrb[0].mxu0 %v1687
  %v1962 = vpop.f32.mrb[0].mxu0
  %v1963 = vadd.f32 0.0, %v1962
  %v1964 = vpop.f32.mrb[0].mxu0
  %1965 = vmatprep.mubr.f32.mxu0 0.0
  %1966 = vmatmul.mubr.f32.gmra.mrb[0].mxu0 %v1689
  %v1967 = vpop.f32.mrb[0].mxu0
  %v1968 = vadd.f32 0.0, %v1967
  %v1969 = vpop.f32.mrb[0].mxu0
  %1970 = vmatprep.mubr.f32.mxu0 0.0
  %1971 = vmatmul.mubr.f32.gmra.mrb[0].mxu0 %v1691
  %v1972 = vpop.f32.mrb[0].mxu0
  %v1973 = vadd.f32 0.0, %v1972
  %v1974 = vpop.f32.mrb[0].mxu0
  %1975 = vmatprep.mubr.f32.mxu0 0.0
  %1976 = vmatmul.mubr.f32.gmra.mrb[0].mxu0 %v1693
  %v1977 = vpop.f32.mrb[0].mxu0
  %v1978 = vadd.f32 0.0, %v1977
  %v1979 = vpop.f32.mrb[0].mxu0
  %1980 = vmatprep.mubr.f32.mxu0 0.0
  %1981 = vmatmul.mubr.f32.gmra.mrb[0].mxu0 %v1695
  %v1982 = vpop.f32.mrb[0].mxu0
  %v1983 = vadd.f32 0.0, %v1982
  %v1984 = vpop.f32.mrb[0].mxu0
  %1985 = vmatprep.mubr.f32.mxu0 0.0
  %1986 = vmatmul.mubr.f32.gmra.mrb[0].mxu0 %v1697
  %v1987 = vpop.f32.mrb[0].mxu0
  %v1988 = vadd.f32 0.0, %v1987
  %v1989 = vpop.f32.mrb[0].mxu0
  %1990 = vmatprep.mubr.f32.mxu0 0.0
  %1991 = vmatmul.mubr.f32.gmra.mrb[0].mxu0 %v1699
  %v1992 = vpop.f32.mrb[0].mxu0
  %v1993 = vadd.f32 0.0, %v1992
  %v1994 = vpop.f32.mrb[0].mxu0
  %1995 = vmatprep.mubr.f32.mxu0 0.0
  %1996 = vmatmul.mubr.f32.gmra.mrb[0].mxu0 %v1701
  %v1997 = vpop.f32.mrb[0].mxu0
  %v1998 = vadd.f32 0.0, %v1997
  %v1999 = vpop.f32.mrb[0].mxu0
  %2000 = vmatprep.mubr.f32.mxu0 0.0
  %2001 = vmatmul.mubr.f32.gmra.mrb[0].mxu0 %v1703
  %v2002 = vpop.f32.mrb[0].mxu0
  %v2003 = vadd.f32 0.0, %v2002
  %v2004 = vpop.f32.mrb[0].mxu0
  %2005 = vmatprep.mubr.f32.mxu0 0.0
  %2006 = vmatmul.mubr.f32.gmra.mrb[0].mxu0 %v1705
  %v2007 = vpop.f32.mrb[0].mxu0
  %v2008 = vadd.f32 0.0, %v2007
  %v2009 = vpop.f32.mrb[0].mxu0
  %2010 = vmatprep.mubr.f32.mxu0 0.0
  %2011 = vmatmul.mubr.f32.gmra.mrb[0].mxu0 %v1707
  %v2012 = vpop.f32.mrb[0].mxu0
  %v2013 = vadd.f32 0.0, %v2012
  %v2014 = vpop.f32.mrb[0].mxu0
  %2015 = vmatprep.mubr.f32.mxu0 0.0
  %2016 = vmatmul.mubr.f32.gmra.mrb[0].mxu0 %v1709
  %v2017 = vpop.f32.mrb[0].mxu0
  %v2018 = vadd.f32 0.0, %v2017
  %v2019 = vpop.f32.mrb[0].mxu0
  %2020 = vmatprep.mubr.f32.mxu0 0.0
  %2021 = vmatmul.mubr.f32.gmra.mrb[0].mxu0 %v1711
  %v2022 = vpop.f32.mrb[0].mxu0
  %v2023 = vadd.f32 0.0, %v2022
  %v2024 = vpop.f32.mrb[0].mxu0
  %2025 = vmatprep.mubr.f32.mxu0 0.0
  %2026 = vmatmul.mubr.f32.gmra.mrb[0].mxu0 %v1713
  %v2027 = vpop.f32.mrb[0].mxu0
  %v2028 = vadd.f32 0.0, %v2027
  %v2029 = vpop.f32.mrb[0].mxu0
  %2030 = vmatprep.mubr.f32.mxu0 0.0
  %2031 = vmatmul.mubr.f32.gmra.mrb[0].mxu0 %v1715
  %v2032 = vpop.f32.mrb[0].mxu0
  %v2033 = vadd.f32 0.0, %v2032
  %v2034 = vpop.f32.mrb[0].mxu0
  %2035 = vmatprep.mubr.f32.mxu0 0.0
  %2036 = vmatmul.mubr.f32.gmra.mrb[0].mxu0 %v1717
  %v2037 = vpop.f32.mrb[0].mxu0
  %v2038 = vadd.f32 0.0, %v2037
  %v2039 = vpop.f32.mrb[0].mxu0
  %2040 = vmatprep.mubr.f32.mxu0 0.0
  %2041 = vmatmul.mubr.f32.gmra.mrb[0].mxu0 %v1719
  %v2042 = vpop.f32.mrb[0].mxu0
  %v2043 = vadd.f32 0.0, %v2042
  %v2044 = vpop.f32.mrb[0].mxu0
  %2045 = vmatprep.mubr.f32.mxu0 0.0
  %2046 = vmatmul.mubr.f32.gmra.mrb[0].mxu0 %v1721
  %v2047 = vpop.f32.mrb[0].mxu0
  %v2048 = vadd.f32 0.0, %v2047
  %v2049 = vpop.f32.mrb[0].mxu0
  %2050 = vmatprep.mubr.f32.mxu0 0.0
  %2051 = vmatmul.mubr.f32.gmra.mrb[0].mxu0 %v1723
  %v2052 = vpop.f32.mrb[0].mxu0
  %v2053 = vadd.f32 0.0, %v2052
  %v2054 = vpop.f32.mrb[0].mxu0
  %2055 = vmatprep.mubr.f32.mxu0 0.0
  %2056 = vmatmul.mubr.f32.gmra.mrb[0].mxu0 %v1725
  %v2057 = vpop.f32.mrb[0].mxu0
  %v2058 = vadd.f32 0.0, %v2057
  %v2059 = vpop.f32.mrb[0].mxu0
  %2060 = vmatprep.mubr.f32.mxu0 0.0
  %2061 = vmatmul.mubr.f32.gmra.mrb[0].mxu0 %v1727
  %v2062 = vpop.f32.mrb[0].mxu0
  %v2063 = vadd.f32 0.0, %v2062
  %v2064 = vpop.f32.mrb[0].mxu0
  %2065 = vmatprep.mubr.f32.mxu0 0.0
  %2066 = vmatmul.mubr.f32.gmra.mrb[0].mxu0 %v1729
  %v2067 = vpop.f32.mrb[0].mxu0
  %v2068 = vadd.f32 0.0, %v2067
  %v2069 = vpop.f32.mrb[0].mxu0
  %2070 = vmatprep.mubr.f32.mxu0 0.0
  %2071 = vmatmul.mubr.f32.gmra.mrb[0].mxu0 %v1731
  %v2072 = vpop.f32.mrb[0].mxu0
  %v2073 = vadd.f32 0.0, %v2072
  %v2074 = vpop.f32.mrb[0].mxu0
  %2075 = vmatprep.mubr.f32.mxu0 0.0
  %2076 = vmatmul.mubr.f32.gmra.mrb[0].mxu0 %v1733
  %v2077 = vpop.f32.mrb[0].mxu0
  %v2078 = vadd.f32 0.0, %v2077
  %v2079 = vpop.f32.mrb[0].mxu0
  %2080 = vmatprep.mubr.f32.mxu0 0.0
  %2081 = vmatmul.mubr.f32.gmra.mrb[0].mxu0 %v1735
  %v2082 = vpop.f32.mrb[0].mxu0
  %v2083 = vadd.f32 0.0, %v2082
  %v2084 = vpop.f32.mrb[0].mxu0
  %2085 = vmatprep.mubr.f32.mxu0 0.0
  %2086 = vmatmul.mubr.f32.gmra.mrb[0].mxu0 %v1737
  %v2087 = vpop.f32.mrb[0].mxu0
  %v2088 = vadd.f32 0.0, %v2087
  %v2089 = vpop.f32.mrb[0].mxu0
  %2090 = vmatprep.mubr.f32.mxu0 0.0
  %2091 = vmatmul.mubr.f32.gmra.mrb[0].mxu0 %v1739
  %v2092 = vpop.f32.mrb[0].mxu0
  %v2093 = vadd.f32 0.0, %v2092
  %v2094 = vpop.f32.mrb[0].mxu0
  %2095 = vmatprep.mubr.f32.mxu0 0.0
  %2096 = vmatmul.mubr.f32.gmra.mrb[0].mxu0 %v1741
  %v2097 = vpop.f32.mrb[0].mxu0
  %v2098 = vadd.f32 0.0, %v2097
  %v2099 = vpop.f32.mrb[0].mxu0
  %2100 = vmatprep.mubr.f32.mxu0 0.0
  %2101 = vmatmul.mubr.f32.gmra.mrb[0].mxu0 %v1743
  %v2102 = vpop.f32.mrb[0].mxu0
  %v2103 = vadd.f32 0.0, %v2102
  %v2104 = vpop.f32.mrb[0].mxu0
  %2105 = vmatprep.mubr.f32.mxu0 0.0
  %2106 = vmatmul.mubr.f32.gmra.mrb[0].mxu0 %v1745
  %v2107 = vpop.f32.mrb[0].mxu0
  %v2108 = vadd.f32 0.0, %v2107
  %v2109 = vpop.f32.mrb[0].mxu0
  %2110 = vmatprep.mubr.f32.mxu0 0.0
  %2111 = vmatmul.mubr.f32.gmra.mrb[0].mxu0 %v1747
  %v2112 = vpop.f32.mrb[0].mxu0
  %v2113 = vadd.f32 0.0, %v2112
  %v2114 = vpop.f32.mrb[0].mxu0
  %2115 = vmatprep.mubr.f32.mxu0 0.0
  %2116 = vmatmul.mubr.f32.gmra.mrb[0].mxu0 %v1749
  %v2117 = vpop.f32.mrb[0].mxu0
  %v2118 = vadd.f32 0.0, %v2117
  %v2119 = vpop.f32.mrb[0].mxu0
  %2120 = vmatprep.mubr.f32.mxu0 0.0
  %2121 = vmatmul.mubr.f32.gmra.mrb[0].mxu0 %v1751
  %v2122 = vpop.f32.mrb[0].mxu0
  %v2123 = vadd.f32 0.0, %v2122
  %v2124 = vpop.f32.mrb[0].mxu0
  %2125 = vmatprep.mubr.f32.mxu0 0.0
  %2126 = vmatmul.mubr.f32.gmra.mrb[0].mxu0 %v1753
  %v2127 = vpop.f32.mrb[0].mxu0
  %v2128 = vadd.f32 0.0, %v2127
  %v2129 = vpop.f32.mrb[0].mxu0
  %2130 = vmatprep.mubr.f32.mxu0 0.0
  %2131 = vmatmul.mubr.f32.gmra.mrb[0].mxu0 %v1755
  %v2132 = vpop.f32.mrb[0].mxu0
  %v2133 = vadd.f32 0.0, %v2132
  %v2134 = vpop.f32.mrb[0].mxu0
  %2135 = vmatprep.mubr.f32.mxu0 0.0
  %2136 = vmatmul.mubr.f32.gmra.mrb[0].mxu0 %v1757
  %v2137 = vpop.f32.mrb[0].mxu0
  %v2138 = vadd.f32 0.0, %v2137
  %v2139 = vpop.f32.mrb[0].mxu0
  %2140 = vmatprep.mubr.f32.mxu0 0.0
  %2141 = vmatmul.mubr.f32.gmra.mrb[0].mxu0 %v1759
  %v2142 = vpop.f32.mrb[0].mxu0
  %v2143 = vadd.f32 0.0, %v2142
  %v2144 = vpop.f32.mrb[0].mxu0
  %2145 = vmatprep.mubr.f32.mxu0 0.0
  %2146 = vmatmul.mubr.f32.gmra.mrb[0].mxu0 %v1761
  %v2147 = vpop.f32.mrb[0].mxu0
  %v2148 = vadd.f32 0.0, %v2147
  %v2149 = vpop.f32.mrb[0].mxu0
  %2150 = vdwg.mxu0
  %v2151 = vadd.f32 %v1154, %v1833
  %v2152 = vadd.f32 %v1159, %v1838
  %v2153 = vadd.f32 %v1164, %v1843
  %v2154 = vadd.f32 %v1169, %v1848
  %v2155 = vadd.f32 %v1174, %v1853
  %v2156 = vadd.f32 %v1179, %v1858
  %v2157 = vadd.f32 %v1184, %v1863
  %v2158 = vadd.f32 %v1189, %v1868
  %v2159 = vadd.f32 %v1194, %v1873
  %v2160 = vadd.f32 %v1199, %v1878
  %v2161 = vadd.f32 %v1204, %v1883
  %v2162 = vadd.f32 %v1209, %v1888
  %v2163 = vadd.f32 %v1214, %v1893
  %v2164 = vadd.f32 %v1219, %v1898
  %v2165 = vadd.f32 %v1224, %v1903
  %v2166 = vadd.f32 %v1229, %v1908
  %v2167 = vadd.f32 %v1234, %v1913
  %v2168 = vadd.f32 %v1239, %v1918
  %v2169 = vadd.f32 %v1244, %v1923
  %v2170 = vadd.f32 %v1249, %v1928
  %v2171 = vadd.f32 %v1254, %v1933
  %v2172 = vadd.f32 %v1259, %v1938
  %v2173 = vadd.f32 %v1264, %v1943
  %v2174 = vadd.f32 %v1269, %v1948
  %v2175 = vadd.f32 %v1274, %v1953
  %v2176 = vadd.f32 %v1279, %v1958
  %v2177 = vadd.f32 %v1284, %v1963
  %v2178 = vadd.f32 %v1289, %v1968
  %v2179 = vadd.f32 %v1294, %v1973
  %v2180 = vadd.f32 %v1299, %v1978
  %v2181 = vadd.f32 %v1304, %v1983
  %v2182 = vadd.f32 %v1309, %v1988
  %v2183 = vadd.f32 %v1314, %v1993
  %v2184 = vadd.f32 %v1319, %v1998
  %v2185 = vadd.f32 %v1324, %v2003
  %v2186 = vadd.f32 %v1329, %v2008
  %v2187 = vadd.f32 %v1334, %v2013
  %v2188 = vadd.f32 %v1339, %v2018
  %v2189 = vadd.f32 %v1344, %v2023
  %v2190 = vadd.f32 %v1349, %v2028
  %v2191 = vadd.f32 %v1354, %v2033
  %v2192 = vadd.f32 %v1359, %v2038
  %v2193 = vadd.f32 %v1364, %v2043
  %v2194 = vadd.f32 %v1369, %v2048
  %v2195 = vadd.f32 %v1374, %v2053
  %v2196 = vadd.f32 %v1379, %v2058
  %v2197 = vadd.f32 %v1384, %v2063
  %v2198 = vadd.f32 %v1389, %v2068
  %v2199 = vadd.f32 %v1394, %v2073
  %v2200 = vadd.f32 %v1399, %v2078
  %v2201 = vadd.f32 %v1404, %v2083
  %v2202 = vadd.f32 %v1409, %v2088
  %v2203 = vadd.f32 %v1414, %v2093
  %v2204 = vadd.f32 %v1419, %v2098
  %v2205 = vadd.f32 %v1424, %v2103
  %v2206 = vadd.f32 %v1429, %v2108
  %v2207 = vadd.f32 %v1434, %v2113
  %v2208 = vadd.f32 %v1439, %v2118
  %v2209 = vadd.f32 %v1444, %v2123
  %v2210 = vadd.f32 %v1449, %v2128
  %v2211 = vadd.f32 %v1454, %v2133
  %v2212 = vadd.f32 %v1459, %v2138
  %v2213 = vadd.f32 %v1464, %v2143
  %v2214 = vadd.f32 %v1469, %v2148
  %s2215 = scalar_lea.vmem %s5, 12
  %v2216 = vld [vmem:[%s2215] sm:$0x7]
  %v2218 = vsel %vm438, %v118, 0
  %v2221 = vsel %vm438, %v119, 0
  %v2224 = vsel %vm438, %v172, 0
  %v2227 = vsel %vm438, %v173, 0
  %v2230 = vsel %vm567, %v2216, 0
  %2232 = vmatprep.subr.mxu0 0.0
  %2233 = vmatpush1.msra.mxu0 %v2230
  %2234 = vmatprep.subr.mxu0 0.0
  %2235 = vmatpush1.msra.mxu0 0.0
  %2236 = vmatprep.subr.mxu0 0.0
  %2237 = vmatpush1.msra.mxu0 0.0
  %2238 = vmatprep.subr.mxu0 0.0
  %2239 = vmatpush1.msra.mxu0 0.0
  %2240 = vmatprep.subr.mxu0 0.0
  %2241 = vmatpush1.msra.mxu0 0.0
  %2242 = vmatprep.subr.mxu0 0.0
  %2243 = vmatpush1.msra.mxu0 0.0
  %2244 = vmatprep.subr.mxu0 0.0
  %2245 = vmatpush1.msra.mxu0 0.0
  %2246 = vmatprep.subr.mxu0 0.0
  %2247 = vmatpush1.msra.mxu0 0.0
  %2248 = vmatprep.subr.mxu0 0.0
  %2249 = vmatpush1.msra.mxu0 0.0
  %2250 = vmatprep.subr.mxu0 0.0
  %2251 = vmatpush1.msra.mxu0 0.0
  %2252 = vmatprep.subr.mxu0 0.0
  %2253 = vmatpush1.msra.mxu0 0.0
  %2254 = vmatprep.subr.mxu0 0.0
  %2255 = vmatpush1.msra.mxu0 0.0
  %2256 = vmatprep.subr.mxu0 0.0
  %2257 = vmatpush1.msra.mxu0 0.0
  %2258 = vmatprep.subr.mxu0 0.0
  %2259 = vmatpush1.msra.mxu0 0.0
  %2260 = vmatprep.subr.mxu0 0.0
  %2261 = vmatpush1.msra.mxu0 0.0
  %2262 = vmatprep.subr.mxu0 0.0
  %2263 = vmatpush1.msra.mxu0 0.0
  %2264 = vmatprep.subr.mxu0 0.0
  %2265 = vmatpush1.msra.mxu0 0.0
  %2266 = vmatprep.subr.mxu0 0.0
  %2267 = vmatpush1.msra.mxu0 0.0
  %2268 = vmatprep.subr.mxu0 0.0
  %2269 = vmatpush1.msra.mxu0 0.0
  %2270 = vmatprep.subr.mxu0 0.0
  %2271 = vmatpush1.msra.mxu0 0.0
  %2272 = vmatprep.subr.mxu0 0.0
  %2273 = vmatpush1.msra.mxu0 0.0
  %2274 = vmatprep.subr.mxu0 0.0
  %2275 = vmatpush1.msra.mxu0 0.0
  %2276 = vmatprep.subr.mxu0 0.0
  %2277 = vmatpush1.msra.mxu0 0.0
  %2278 = vmatprep.subr.mxu0 0.0
  %2279 = vmatpush1.msra.mxu0 0.0
  %2280 = vmatprep.subr.mxu0 0.0
  %2281 = vmatpush1.msra.mxu0 0.0
  %2282 = vmatprep.subr.mxu0 0.0
  %2283 = vmatpush1.msra.mxu0 0.0
  %2284 = vmatprep.subr.mxu0 0.0
  %2285 = vmatpush1.msra.mxu0 0.0
  %2286 = vmatprep.subr.mxu0 0.0
  %2287 = vmatpush1.msra.mxu0 0.0
  %2288 = vmatprep.subr.mxu0 0.0
  %2289 = vmatpush1.msra.mxu0 0.0
  %2290 = vmatprep.subr.mxu0 0.0
  %2291 = vmatpush1.msra.mxu0 0.0
  %2292 = vmatprep.subr.mxu0 0.0
  %2293 = vmatpush1.msra.mxu0 0.0
  %2294 = vmatprep.subr.mxu0 0.0
  %2295 = vmatpush1.msra.mxu0 0.0
  %2296 = vmatprep.mubr.f32.mxu0 0.0
  %2297 = vmatmul.mubr.f32.gmra.mrb[0].mxu0 %v960
  %v2298 = vpop.f32.mrb[0].mxu0
  %v2299 = vadd.f32 0.0, %v2298
  %v2300 = vpop.f32.mrb[0].mxu0
  %2301 = vmatprep.mubr.f32.mxu0 0.0
  %2302 = vmatmul.mubr.f32.gmra.mrb[0].mxu0 %v962
  %v2303 = vpop.f32.mrb[0].mxu0
  %v2304 = vadd.f32 0.0, %v2303
  %v2305 = vpop.f32.mrb[0].mxu0
  %2306 = vmatprep.mubr.f32.mxu0 0.0
  %2307 = vmatmul.mubr.f32.gmra.mrb[0].mxu0 %v964
  %v2308 = vpop.f32.mrb[0].mxu0
  %v2309 = vadd.f32 0.0, %v2308
  %v2310 = vpop.f32.mrb[0].mxu0
  %2311 = vmatprep.mubr.f32.mxu0 0.0
  %2312 = vmatmul.mubr.f32.gmra.mrb[0].mxu0 %v966
  %v2313 = vpop.f32.mrb[0].mxu0
  %v2314 = vadd.f32 0.0, %v2313
  %v2315 = vpop.f32.mrb[0].mxu0
  %2316 = vmatprep.mubr.f32.mxu0 0.0
  %2317 = vmatmul.mubr.f32.gmra.mrb[0].mxu0 %v968
  %v2318 = vpop.f32.mrb[0].mxu0
  %v2319 = vadd.f32 0.0, %v2318
  %v2320 = vpop.f32.mrb[0].mxu0
  %2321 = vmatprep.mubr.f32.mxu0 0.0
  %2322 = vmatmul.mubr.f32.gmra.mrb[0].mxu0 %v970
  %v2323 = vpop.f32.mrb[0].mxu0
  %v2324 = vadd.f32 0.0, %v2323
  %v2325 = vpop.f32.mrb[0].mxu0
  %2326 = vmatprep.mubr.f32.mxu0 0.0
  %2327 = vmatmul.mubr.f32.gmra.mrb[0].mxu0 %v972
  %v2328 = vpop.f32.mrb[0].mxu0
  %v2329 = vadd.f32 0.0, %v2328
  %v2330 = vpop.f32.mrb[0].mxu0
  %2331 = vmatprep.mubr.f32.mxu0 0.0
  %2332 = vmatmul.mubr.f32.gmra.mrb[0].mxu0 %v974
  %v2333 = vpop.f32.mrb[0].mxu0
  %v2334 = vadd.f32 0.0, %v2333
  %v2335 = vpop.f32.mrb[0].mxu0
  %2336 = vmatprep.mubr.f32.mxu0 0.0
  %2337 = vmatmul.mubr.f32.gmra.mrb[0].mxu0 %v976
  %v2338 = vpop.f32.mrb[0].mxu0
  %v2339 = vadd.f32 0.0, %v2338
  %v2340 = vpop.f32.mrb[0].mxu0
  %2341 = vmatprep.mubr.f32.mxu0 0.0
  %2342 = vmatmul.mubr.f32.gmra.mrb[0].mxu0 %v978
  %v2343 = vpop.f32.mrb[0].mxu0
  %v2344 = vadd.f32 0.0, %v2343
  %v2345 = vpop.f32.mrb[0].mxu0
  %2346 = vmatprep.mubr.f32.mxu0 0.0
  %2347 = vmatmul.mubr.f32.gmra.mrb[0].mxu0 %v980
  %v2348 = vpop.f32.mrb[0].mxu0
  %v2349 = vadd.f32 0.0, %v2348
  %v2350 = vpop.f32.mrb[0].mxu0
  %2351 = vmatprep.mubr.f32.mxu0 0.0
  %2352 = vmatmul.mubr.f32.gmra.mrb[0].mxu0 %v982
  %v2353 = vpop.f32.mrb[0].mxu0
  %v2354 = vadd.f32 0.0, %v2353
  %v2355 = vpop.f32.mrb[0].mxu0
  %2356 = vmatprep.mubr.f32.mxu0 0.0
  %2357 = vmatmul.mubr.f32.gmra.mrb[0].mxu0 %v984
  %v2358 = vpop.f32.mrb[0].mxu0
  %v2359 = vadd.f32 0.0, %v2358
  %v2360 = vpop.f32.mrb[0].mxu0
  %2361 = vmatprep.mubr.f32.mxu0 0.0
  %2362 = vmatmul.mubr.f32.gmra.mrb[0].mxu0 %v986
  %v2363 = vpop.f32.mrb[0].mxu0
  %v2364 = vadd.f32 0.0, %v2363
  %v2365 = vpop.f32.mrb[0].mxu0
  %2366 = vmatprep.mubr.f32.mxu0 0.0
  %2367 = vmatmul.mubr.f32.gmra.mrb[0].mxu0 %v988
  %v2368 = vpop.f32.mrb[0].mxu0
  %v2369 = vadd.f32 0.0, %v2368
  %v2370 = vpop.f32.mrb[0].mxu0
  %2371 = vmatprep.mubr.f32.mxu0 0.0
  %2372 = vmatmul.mubr.f32.gmra.mrb[0].mxu0 %v990
  %v2373 = vpop.f32.mrb[0].mxu0
  %v2374 = vadd.f32 0.0, %v2373
  %v2375 = vpop.f32.mrb[0].mxu0
  %2376 = vmatprep.mubr.f32.mxu0 0.0
  %2377 = vmatmul.mubr.f32.gmra.mrb[0].mxu0 %v992
  %v2378 = vpop.f32.mrb[0].mxu0
  %v2379 = vadd.f32 0.0, %v2378
  %v2380 = vpop.f32.mrb[0].mxu0
  %2381 = vmatprep.mubr.f32.mxu0 0.0
  %2382 = vmatmul.mubr.f32.gmra.mrb[0].mxu0 %v994
  %v2383 = vpop.f32.mrb[0].mxu0
  %v2384 = vadd.f32 0.0, %v2383
  %v2385 = vpop.f32.mrb[0].mxu0
  %2386 = vmatprep.mubr.f32.mxu0 0.0
  %2387 = vmatmul.mubr.f32.gmra.mrb[0].mxu0 %v996
  %v2388 = vpop.f32.mrb[0].mxu0
  %v2389 = vadd.f32 0.0, %v2388
  %v2390 = vpop.f32.mrb[0].mxu0
  %2391 = vmatprep.mubr.f32.mxu0 0.0
  %2392 = vmatmul.mubr.f32.gmra.mrb[0].mxu0 %v998
  %v2393 = vpop.f32.mrb[0].mxu0
  %v2394 = vadd.f32 0.0, %v2393
  %v2395 = vpop.f32.mrb[0].mxu0
  %2396 = vmatprep.mubr.f32.mxu0 0.0
  %2397 = vmatmul.mubr.f32.gmra.mrb[0].mxu0 %v1000
  %v2398 = vpop.f32.mrb[0].mxu0
  %v2399 = vadd.f32 0.0, %v2398
  %v2400 = vpop.f32.mrb[0].mxu0
  %2401 = vmatprep.mubr.f32.mxu0 0.0
  %2402 = vmatmul.mubr.f32.gmra.mrb[0].mxu0 %v1002
  %v2403 = vpop.f32.mrb[0].mxu0
  %v2404 = vadd.f32 0.0, %v2403
  %v2405 = vpop.f32.mrb[0].mxu0
  %2406 = vmatprep.mubr.f32.mxu0 0.0
  %2407 = vmatmul.mubr.f32.gmra.mrb[0].mxu0 %v1004
  %v2408 = vpop.f32.mrb[0].mxu0
  %v2409 = vadd.f32 0.0, %v2408
  %v2410 = vpop.f32.mrb[0].mxu0
  %2411 = vmatprep.mubr.f32.mxu0 0.0
  %2412 = vmatmul.mubr.f32.gmra.mrb[0].mxu0 %v1006
  %v2413 = vpop.f32.mrb[0].mxu0
  %v2414 = vadd.f32 0.0, %v2413
  %v2415 = vpop.f32.mrb[0].mxu0
  %2416 = vmatprep.mubr.f32.mxu0 0.0
  %2417 = vmatmul.mubr.f32.gmra.mrb[0].mxu0 %v1008
  %v2418 = vpop.f32.mrb[0].mxu0
  %v2419 = vadd.f32 0.0, %v2418
  %v2420 = vpop.f32.mrb[0].mxu0
  %2421 = vmatprep.mubr.f32.mxu0 0.0
  %2422 = vmatmul.mubr.f32.gmra.mrb[0].mxu0 %v1010
  %v2423 = vpop.f32.mrb[0].mxu0
  %v2424 = vadd.f32 0.0, %v2423
  %v2425 = vpop.f32.mrb[0].mxu0
  %2426 = vmatprep.mubr.f32.mxu0 0.0
  %2427 = vmatmul.mubr.f32.gmra.mrb[0].mxu0 %v1012
  %v2428 = vpop.f32.mrb[0].mxu0
  %v2429 = vadd.f32 0.0, %v2428
  %v2430 = vpop.f32.mrb[0].mxu0
  %2431 = vmatprep.mubr.f32.mxu0 0.0
  %2432 = vmatmul.mubr.f32.gmra.mrb[0].mxu0 %v1014
  %v2433 = vpop.f32.mrb[0].mxu0
  %v2434 = vadd.f32 0.0, %v2433
  %v2435 = vpop.f32.mrb[0].mxu0
  %2436 = vmatprep.mubr.f32.mxu0 0.0
  %2437 = vmatmul.mubr.f32.gmra.mrb[0].mxu0 %v1016
  %v2438 = vpop.f32.mrb[0].mxu0
  %v2439 = vadd.f32 0.0, %v2438
  %v2440 = vpop.f32.mrb[0].mxu0
  %2441 = vmatprep.mubr.f32.mxu0 0.0
  %2442 = vmatmul.mubr.f32.gmra.mrb[0].mxu0 %v1018
  %v2443 = vpop.f32.mrb[0].mxu0
  %v2444 = vadd.f32 0.0, %v2443
  %v2445 = vpop.f32.mrb[0].mxu0
  %2446 = vmatprep.mubr.f32.mxu0 0.0
  %2447 = vmatmul.mubr.f32.gmra.mrb[0].mxu0 %v2218
  %v2448 = vpop.f32.mrb[0].mxu0
  %v2449 = vadd.f32 0.0, %v2448
  %v2450 = vpop.f32.mrb[0].mxu0
  %2451 = vmatprep.mubr.f32.mxu0 0.0
  %2452 = vmatmul.mubr.f32.gmra.mrb[0].mxu0 %v2221
  %v2453 = vpop.f32.mrb[0].mxu0
  %v2454 = vadd.f32 0.0, %v2453
  %v2455 = vpop.f32.mrb[0].mxu0
  %2456 = vmatprep.mubr.f32.mxu0 0.0
  %2457 = vmatmul.mubr.f32.gmra.mrb[0].mxu0 %v1024
  %v2458 = vpop.f32.mrb[0].mxu0
  %v2459 = vadd.f32 0.0, %v2458
  %v2460 = vpop.f32.mrb[0].mxu0
  %2461 = vmatprep.mubr.f32.mxu0 0.0
  %2462 = vmatmul.mubr.f32.gmra.mrb[0].mxu0 %v1026
  %v2463 = vpop.f32.mrb[0].mxu0
  %v2464 = vadd.f32 0.0, %v2463
  %v2465 = vpop.f32.mrb[0].mxu0
  %2466 = vmatprep.mubr.f32.mxu0 0.0
  %2467 = vmatmul.mubr.f32.gmra.mrb[0].mxu0 %v1028
  %v2468 = vpop.f32.mrb[0].mxu0
  %v2469 = vadd.f32 0.0, %v2468
  %v2470 = vpop.f32.mrb[0].mxu0
  %2471 = vmatprep.mubr.f32.mxu0 0.0
  %2472 = vmatmul.mubr.f32.gmra.mrb[0].mxu0 %v1030
  %v2473 = vpop.f32.mrb[0].mxu0
  %v2474 = vadd.f32 0.0, %v2473
  %v2475 = vpop.f32.mrb[0].mxu0
  %2476 = vmatprep.mubr.f32.mxu0 0.0
  %2477 = vmatmul.mubr.f32.gmra.mrb[0].mxu0 %v1032
  %v2478 = vpop.f32.mrb[0].mxu0
  %v2479 = vadd.f32 0.0, %v2478
  %v2480 = vpop.f32.mrb[0].mxu0
  %2481 = vmatprep.mubr.f32.mxu0 0.0
  %2482 = vmatmul.mubr.f32.gmra.mrb[0].mxu0 %v1034
  %v2483 = vpop.f32.mrb[0].mxu0
  %v2484 = vadd.f32 0.0, %v2483
  %v2485 = vpop.f32.mrb[0].mxu0
  %2486 = vmatprep.mubr.f32.mxu0 0.0
  %2487 = vmatmul.mubr.f32.gmra.mrb[0].mxu0 %v1036
  %v2488 = vpop.f32.mrb[0].mxu0
  %v2489 = vadd.f32 0.0, %v2488
  %v2490 = vpop.f32.mrb[0].mxu0
  %2491 = vmatprep.mubr.f32.mxu0 0.0
  %2492 = vmatmul.mubr.f32.gmra.mrb[0].mxu0 %v1038
  %v2493 = vpop.f32.mrb[0].mxu0
  %v2494 = vadd.f32 0.0, %v2493
  %v2495 = vpop.f32.mrb[0].mxu0
  %2496 = vmatprep.mubr.f32.mxu0 0.0
  %2497 = vmatmul.mubr.f32.gmra.mrb[0].mxu0 %v1040
  %v2498 = vpop.f32.mrb[0].mxu0
  %v2499 = vadd.f32 0.0, %v2498
  %v2500 = vpop.f32.mrb[0].mxu0
  %2501 = vmatprep.mubr.f32.mxu0 0.0
  %2502 = vmatmul.mubr.f32.gmra.mrb[0].mxu0 %v1042
  %v2503 = vpop.f32.mrb[0].mxu0
  %v2504 = vadd.f32 0.0, %v2503
  %v2505 = vpop.f32.mrb[0].mxu0
  %2506 = vmatprep.mubr.f32.mxu0 0.0
  %2507 = vmatmul.mubr.f32.gmra.mrb[0].mxu0 %v1044
  %v2508 = vpop.f32.mrb[0].mxu0
  %v2509 = vadd.f32 0.0, %v2508
  %v2510 = vpop.f32.mrb[0].mxu0
  %2511 = vmatprep.mubr.f32.mxu0 0.0
  %2512 = vmatmul.mubr.f32.gmra.mrb[0].mxu0 %v1046
  %v2513 = vpop.f32.mrb[0].mxu0
  %v2514 = vadd.f32 0.0, %v2513
  %v2515 = vpop.f32.mrb[0].mxu0
  %2516 = vmatprep.mubr.f32.mxu0 0.0
  %2517 = vmatmul.mubr.f32.gmra.mrb[0].mxu0 %v1048
  %v2518 = vpop.f32.mrb[0].mxu0
  %v2519 = vadd.f32 0.0, %v2518
  %v2520 = vpop.f32.mrb[0].mxu0
  %2521 = vmatprep.mubr.f32.mxu0 0.0
  %2522 = vmatmul.mubr.f32.gmra.mrb[0].mxu0 %v1050
  %v2523 = vpop.f32.mrb[0].mxu0
  %v2524 = vadd.f32 0.0, %v2523
  %v2525 = vpop.f32.mrb[0].mxu0
  %2526 = vmatprep.mubr.f32.mxu0 0.0
  %2527 = vmatmul.mubr.f32.gmra.mrb[0].mxu0 %v1052
  %v2528 = vpop.f32.mrb[0].mxu0
  %v2529 = vadd.f32 0.0, %v2528
  %v2530 = vpop.f32.mrb[0].mxu0
  %2531 = vmatprep.mubr.f32.mxu0 0.0
  %2532 = vmatmul.mubr.f32.gmra.mrb[0].mxu0 %v1054
  %v2533 = vpop.f32.mrb[0].mxu0
  %v2534 = vadd.f32 0.0, %v2533
  %v2535 = vpop.f32.mrb[0].mxu0
  %2536 = vmatprep.mubr.f32.mxu0 0.0
  %2537 = vmatmul.mubr.f32.gmra.mrb[0].mxu0 %v1056
  %v2538 = vpop.f32.mrb[0].mxu0
  %v2539 = vadd.f32 0.0, %v2538
  %v2540 = vpop.f32.mrb[0].mxu0
  %2541 = vmatprep.mubr.f32.mxu0 0.0
  %2542 = vmatmul.mubr.f32.gmra.mrb[0].mxu0 %v1058
  %v2543 = vpop.f32.mrb[0].mxu0
  %v2544 = vadd.f32 0.0, %v2543
  %v2545 = vpop.f32.mrb[0].mxu0
  %2546 = vmatprep.mubr.f32.mxu0 0.0
  %2547 = vmatmul.mubr.f32.gmra.mrb[0].mxu0 %v1060
  %v2548 = vpop.f32.mrb[0].mxu0
  %v2549 = vadd.f32 0.0, %v2548
  %v2550 = vpop.f32.mrb[0].mxu0
  %2551 = vmatprep.mubr.f32.mxu0 0.0
  %2552 = vmatmul.mubr.f32.gmra.mrb[0].mxu0 %v1062
  %v2553 = vpop.f32.mrb[0].mxu0
  %v2554 = vadd.f32 0.0, %v2553
  %v2555 = vpop.f32.mrb[0].mxu0
  %2556 = vmatprep.mubr.f32.mxu0 0.0
  %2557 = vmatmul.mubr.f32.gmra.mrb[0].mxu0 %v1064
  %v2558 = vpop.f32.mrb[0].mxu0
  %v2559 = vadd.f32 0.0, %v2558
  %v2560 = vpop.f32.mrb[0].mxu0
  %2561 = vmatprep.mubr.f32.mxu0 0.0
  %2562 = vmatmul.mubr.f32.gmra.mrb[0].mxu0 %v1066
  %v2563 = vpop.f32.mrb[0].mxu0
  %v2564 = vadd.f32 0.0, %v2563
  %v2565 = vpop.f32.mrb[0].mxu0
  %2566 = vmatprep.mubr.f32.mxu0 0.0
  %2567 = vmatmul.mubr.f32.gmra.mrb[0].mxu0 %v1068
  %v2568 = vpop.f32.mrb[0].mxu0
  %v2569 = vadd.f32 0.0, %v2568
  %v2570 = vpop.f32.mrb[0].mxu0
  %2571 = vmatprep.mubr.f32.mxu0 0.0
  %2572 = vmatmul.mubr.f32.gmra.mrb[0].mxu0 %v1070
  %v2573 = vpop.f32.mrb[0].mxu0
  %v2574 = vadd.f32 0.0, %v2573
  %v2575 = vpop.f32.mrb[0].mxu0
  %2576 = vmatprep.mubr.f32.mxu0 0.0
  %2577 = vmatmul.mubr.f32.gmra.mrb[0].mxu0 %v1072
  %v2578 = vpop.f32.mrb[0].mxu0
  %v2579 = vadd.f32 0.0, %v2578
  %v2580 = vpop.f32.mrb[0].mxu0
  %2581 = vmatprep.mubr.f32.mxu0 0.0
  %2582 = vmatmul.mubr.f32.gmra.mrb[0].mxu0 %v1074
  %v2583 = vpop.f32.mrb[0].mxu0
  %v2584 = vadd.f32 0.0, %v2583
  %v2585 = vpop.f32.mrb[0].mxu0
  %2586 = vmatprep.mubr.f32.mxu0 0.0
  %2587 = vmatmul.mubr.f32.gmra.mrb[0].mxu0 %v1076
  %v2588 = vpop.f32.mrb[0].mxu0
  %v2589 = vadd.f32 0.0, %v2588
  %v2590 = vpop.f32.mrb[0].mxu0
  %2591 = vmatprep.mubr.f32.mxu0 0.0
  %2592 = vmatmul.mubr.f32.gmra.mrb[0].mxu0 %v1078
  %v2593 = vpop.f32.mrb[0].mxu0
  %v2594 = vadd.f32 0.0, %v2593
  %v2595 = vpop.f32.mrb[0].mxu0
  %2596 = vmatprep.mubr.f32.mxu0 0.0
  %2597 = vmatmul.mubr.f32.gmra.mrb[0].mxu0 %v1080
  %v2598 = vpop.f32.mrb[0].mxu0
  %v2599 = vadd.f32 0.0, %v2598
  %v2600 = vpop.f32.mrb[0].mxu0
  %2601 = vmatprep.mubr.f32.mxu0 0.0
  %2602 = vmatmul.mubr.f32.gmra.mrb[0].mxu0 %v1082
  %v2603 = vpop.f32.mrb[0].mxu0
  %v2604 = vadd.f32 0.0, %v2603
  %v2605 = vpop.f32.mrb[0].mxu0
  %2606 = vmatprep.mubr.f32.mxu0 0.0
  %2607 = vmatmul.mubr.f32.gmra.mrb[0].mxu0 %v2224
  %v2608 = vpop.f32.mrb[0].mxu0
  %v2609 = vadd.f32 0.0, %v2608
  %v2610 = vpop.f32.mrb[0].mxu0
  %2611 = vmatprep.mubr.f32.mxu0 0.0
  %2612 = vmatmul.mubr.f32.gmra.mrb[0].mxu0 %v2227
  %v2613 = vpop.f32.mrb[0].mxu0
  %v2614 = vadd.f32 0.0, %v2613
  %v2615 = vpop.f32.mrb[0].mxu0
  %2616 = vdwg.mxu0
  %v2617 = vadd.f32 %v2151, %v2299
  %v2618 = vadd.f32 %v2152, %v2304
  %v2619 = vadd.f32 %v2153, %v2309
  %v2620 = vadd.f32 %v2154, %v2314
  %v2621 = vadd.f32 %v2155, %v2319
  %v2622 = vadd.f32 %v2156, %v2324
  %v2623 = vadd.f32 %v2157, %v2329
  %v2624 = vadd.f32 %v2158, %v2334
  %v2625 = vadd.f32 %v2159, %v2339
  %v2626 = vadd.f32 %v2160, %v2344
  %v2627 = vadd.f32 %v2161, %v2349
  %v2628 = vadd.f32 %v2162, %v2354
  %v2629 = vadd.f32 %v2163, %v2359
  %v2630 = vadd.f32 %v2164, %v2364
  %v2631 = vadd.f32 %v2165, %v2369
  %v2632 = vadd.f32 %v2166, %v2374
  %v2633 = vadd.f32 %v2167, %v2379
  %v2634 = vadd.f32 %v2168, %v2384
  %v2635 = vadd.f32 %v2169, %v2389
  %v2636 = vadd.f32 %v2170, %v2394
  %v2637 = vadd.f32 %v2171, %v2399
  %v2638 = vadd.f32 %v2172, %v2404
  %v2639 = vadd.f32 %v2173, %v2409
  %v2640 = vadd.f32 %v2174, %v2414
  %v2641 = vadd.f32 %v2175, %v2419
  %v2642 = vadd.f32 %v2176, %v2424
  %v2643 = vadd.f32 %v2177, %v2429
  %v2644 = vadd.f32 %v2178, %v2434
  %v2645 = vadd.f32 %v2179, %v2439
  %v2646 = vadd.f32 %v2180, %v2444
  %v2647 = vadd.f32 %v2181, %v2449
  %v2648 = vadd.f32 %v2182, %v2454
  %v2649 = vadd.f32 %v2183, %v2459
  %v2650 = vadd.f32 %v2184, %v2464
  %v2651 = vadd.f32 %v2185, %v2469
  %v2652 = vadd.f32 %v2186, %v2474
  %v2653 = vadd.f32 %v2187, %v2479
  %v2654 = vadd.f32 %v2188, %v2484
  %v2655 = vadd.f32 %v2189, %v2489
  %v2656 = vadd.f32 %v2190, %v2494
  %v2657 = vadd.f32 %v2191, %v2499
  %v2658 = vadd.f32 %v2192, %v2504
  %v2659 = vadd.f32 %v2193, %v2509
  %v2660 = vadd.f32 %v2194, %v2514
  %v2661 = vadd.f32 %v2195, %v2519
  %v2662 = vadd.f32 %v2196, %v2524
  %v2663 = vadd.f32 %v2197, %v2529
  %v2664 = vadd.f32 %v2198, %v2534
  %v2665 = vadd.f32 %v2199, %v2539
  %v2666 = vadd.f32 %v2200, %v2544
  %v2667 = vadd.f32 %v2201, %v2549
  %v2668 = vadd.f32 %v2202, %v2554
  %v2669 = vadd.f32 %v2203, %v2559
  %v2670 = vadd.f32 %v2204, %v2564
  %v2671 = vadd.f32 %v2205, %v2569
  %v2672 = vadd.f32 %v2206, %v2574
  %v2673 = vadd.f32 %v2207, %v2579
  %v2674 = vadd.f32 %v2208, %v2584
  %v2675 = vadd.f32 %v2209, %v2589
  %v2676 = vadd.f32 %v2210, %v2594
  %v2677 = vadd.f32 %v2211, %v2599
  %v2678 = vadd.f32 %v2212, %v2604
  %v2679 = vadd.f32 %v2213, %v2609
  %v2680 = vadd.f32 %v2214, %v2614
  %v2683 = vrot.slane %v118, 1
  %v2684 = vrot.slane %v119, 1
  %v2685 = vsel %vm275, %v2683, %v2684
  %v2686 = vrot.slane %v120, 1
  %v2687 = vsel %vm275, %v2684, %v2686
  %v2688 = vrot.slane %v172, 1
  %v2689 = vrot.slane %v173, 1
  %v2690 = vsel %vm275, %v2688, %v2689
  %v2691 = vrot.slane %v174, 1
  %v2692 = vsel %vm275, %v2689, %v2691
  %s2693 = scalar_lea.vmem %s5, 16
  %v2694 = vld [vmem:[%s2693] sm:$0x7]
  %v2695 = vsel %vm438, %v2685, 0
  %v2697 = vsel %vm438, %v2687, 0
  %v2699 = vsel %vm438, %v2690, 0
  %v2701 = vsel %vm438, %v2692, 0
  %v2704 = vsel %vm567, %v2694, 0
  %2706 = vmatprep.subr.mxu0 0.0
  %2707 = vmatpush1.msra.mxu0 %v2704
  %2708 = vmatprep.subr.mxu0 0.0
  %2709 = vmatpush1.msra.mxu0 0.0
  %2710 = vmatprep.subr.mxu0 0.0
  %2711 = vmatpush1.msra.mxu0 0.0
  %2712 = vmatprep.subr.mxu0 0.0
  %2713 = vmatpush1.msra.mxu0 0.0
  %2714 = vmatprep.subr.mxu0 0.0
  %2715 = vmatpush1.msra.mxu0 0.0
  %2716 = vmatprep.subr.mxu0 0.0
  %2717 = vmatpush1.msra.mxu0 0.0
  %2718 = vmatprep.subr.mxu0 0.0
  %2719 = vmatpush1.msra.mxu0 0.0
  %2720 = vmatprep.subr.mxu0 0.0
  %2721 = vmatpush1.msra.mxu0 0.0
  %2722 = vmatprep.subr.mxu0 0.0
  %2723 = vmatpush1.msra.mxu0 0.0
  %2724 = vmatprep.subr.mxu0 0.0
  %2725 = vmatpush1.msra.mxu0 0.0
  %2726 = vmatprep.subr.mxu0 0.0
  %2727 = vmatpush1.msra.mxu0 0.0
  %2728 = vmatprep.subr.mxu0 0.0
  %2729 = vmatpush1.msra.mxu0 0.0
  %2730 = vmatprep.subr.mxu0 0.0
  %2731 = vmatpush1.msra.mxu0 0.0
  %2732 = vmatprep.subr.mxu0 0.0
  %2733 = vmatpush1.msra.mxu0 0.0
  %2734 = vmatprep.subr.mxu0 0.0
  %2735 = vmatpush1.msra.mxu0 0.0
  %2736 = vmatprep.subr.mxu0 0.0
  %2737 = vmatpush1.msra.mxu0 0.0
  %2738 = vmatprep.subr.mxu0 0.0
  %2739 = vmatpush1.msra.mxu0 0.0
  %2740 = vmatprep.subr.mxu0 0.0
  %2741 = vmatpush1.msra.mxu0 0.0
  %2742 = vmatprep.subr.mxu0 0.0
  %2743 = vmatpush1.msra.mxu0 0.0
  %2744 = vmatprep.subr.mxu0 0.0
  %2745 = vmatpush1.msra.mxu0 0.0
  %2746 = vmatprep.subr.mxu0 0.0
  %2747 = vmatpush1.msra.mxu0 0.0
  %2748 = vmatprep.subr.mxu0 0.0
  %2749 = vmatpush1.msra.mxu0 0.0
  %2750 = vmatprep.subr.mxu0 0.0
  %2751 = vmatpush1.msra.mxu0 0.0
  %2752 = vmatprep.subr.mxu0 0.0
  %2753 = vmatpush1.msra.mxu0 0.0
  %2754 = vmatprep.subr.mxu0 0.0
  %2755 = vmatpush1.msra.mxu0 0.0
  %2756 = vmatprep.subr.mxu0 0.0
  %2757 = vmatpush1.msra.mxu0 0.0
  %2758 = vmatprep.subr.mxu0 0.0
  %2759 = vmatpush1.msra.mxu0 0.0
  %2760 = vmatprep.subr.mxu0 0.0
  %2761 = vmatpush1.msra.mxu0 0.0
  %2762 = vmatprep.subr.mxu0 0.0
  %2763 = vmatpush1.msra.mxu0 0.0
  %2764 = vmatprep.subr.mxu0 0.0
  %2765 = vmatpush1.msra.mxu0 0.0
  %2766 = vmatprep.subr.mxu0 0.0
  %2767 = vmatpush1.msra.mxu0 0.0
  %2768 = vmatprep.subr.mxu0 0.0
  %2769 = vmatpush1.msra.mxu0 0.0
  %2770 = vmatprep.mubr.f32.mxu0 0.0
  %2771 = vmatmul.mubr.f32.gmra.mrb[0].mxu0 %v443
  %v2772 = vpop.f32.mrb[0].mxu0
  %v2773 = vadd.f32 0.0, %v2772
  %v2774 = vpop.f32.mrb[0].mxu0
  %2775 = vmatprep.mubr.f32.mxu0 0.0
  %2776 = vmatmul.mubr.f32.gmra.mrb[0].mxu0 %v445
  %v2777 = vpop.f32.mrb[0].mxu0
  %v2778 = vadd.f32 0.0, %v2777
  %v2779 = vpop.f32.mrb[0].mxu0
  %2780 = vmatprep.mubr.f32.mxu0 0.0
  %2781 = vmatmul.mubr.f32.gmra.mrb[0].mxu0 %v447
  %v2782 = vpop.f32.mrb[0].mxu0
  %v2783 = vadd.f32 0.0, %v2782
  %v2784 = vpop.f32.mrb[0].mxu0
  %2785 = vmatprep.mubr.f32.mxu0 0.0
  %2786 = vmatmul.mubr.f32.gmra.mrb[0].mxu0 %v449
  %v2787 = vpop.f32.mrb[0].mxu0
  %v2788 = vadd.f32 0.0, %v2787
  %v2789 = vpop.f32.mrb[0].mxu0
  %2790 = vmatprep.mubr.f32.mxu0 0.0
  %2791 = vmatmul.mubr.f32.gmra.mrb[0].mxu0 %v451
  %v2792 = vpop.f32.mrb[0].mxu0
  %v2793 = vadd.f32 0.0, %v2792
  %v2794 = vpop.f32.mrb[0].mxu0
  %2795 = vmatprep.mubr.f32.mxu0 0.0
  %2796 = vmatmul.mubr.f32.gmra.mrb[0].mxu0 %v453
  %v2797 = vpop.f32.mrb[0].mxu0
  %v2798 = vadd.f32 0.0, %v2797
  %v2799 = vpop.f32.mrb[0].mxu0
  %2800 = vmatprep.mubr.f32.mxu0 0.0
  %2801 = vmatmul.mubr.f32.gmra.mrb[0].mxu0 %v455
  %v2802 = vpop.f32.mrb[0].mxu0
  %v2803 = vadd.f32 0.0, %v2802
  %v2804 = vpop.f32.mrb[0].mxu0
  %2805 = vmatprep.mubr.f32.mxu0 0.0
  %2806 = vmatmul.mubr.f32.gmra.mrb[0].mxu0 %v457
  %v2807 = vpop.f32.mrb[0].mxu0
  %v2808 = vadd.f32 0.0, %v2807
  %v2809 = vpop.f32.mrb[0].mxu0
  %2810 = vmatprep.mubr.f32.mxu0 0.0
  %2811 = vmatmul.mubr.f32.gmra.mrb[0].mxu0 %v459
  %v2812 = vpop.f32.mrb[0].mxu0
  %v2813 = vadd.f32 0.0, %v2812
  %v2814 = vpop.f32.mrb[0].mxu0
  %2815 = vmatprep.mubr.f32.mxu0 0.0
  %2816 = vmatmul.mubr.f32.gmra.mrb[0].mxu0 %v461
  %v2817 = vpop.f32.mrb[0].mxu0
  %v2818 = vadd.f32 0.0, %v2817
  %v2819 = vpop.f32.mrb[0].mxu0
  %2820 = vmatprep.mubr.f32.mxu0 0.0
  %2821 = vmatmul.mubr.f32.gmra.mrb[0].mxu0 %v463
  %v2822 = vpop.f32.mrb[0].mxu0
  %v2823 = vadd.f32 0.0, %v2822
  %v2824 = vpop.f32.mrb[0].mxu0
  %2825 = vmatprep.mubr.f32.mxu0 0.0
  %2826 = vmatmul.mubr.f32.gmra.mrb[0].mxu0 %v465
  %v2827 = vpop.f32.mrb[0].mxu0
  %v2828 = vadd.f32 0.0, %v2827
  %v2829 = vpop.f32.mrb[0].mxu0
  %2830 = vmatprep.mubr.f32.mxu0 0.0
  %2831 = vmatmul.mubr.f32.gmra.mrb[0].mxu0 %v467
  %v2832 = vpop.f32.mrb[0].mxu0
  %v2833 = vadd.f32 0.0, %v2832
  %v2834 = vpop.f32.mrb[0].mxu0
  %2835 = vmatprep.mubr.f32.mxu0 0.0
  %2836 = vmatmul.mubr.f32.gmra.mrb[0].mxu0 %v469
  %v2837 = vpop.f32.mrb[0].mxu0
  %v2838 = vadd.f32 0.0, %v2837
  %v2839 = vpop.f32.mrb[0].mxu0
  %2840 = vmatprep.mubr.f32.mxu0 0.0
  %2841 = vmatmul.mubr.f32.gmra.mrb[0].mxu0 %v471
  %v2842 = vpop.f32.mrb[0].mxu0
  %v2843 = vadd.f32 0.0, %v2842
  %v2844 = vpop.f32.mrb[0].mxu0
  %2845 = vmatprep.mubr.f32.mxu0 0.0
  %2846 = vmatmul.mubr.f32.gmra.mrb[0].mxu0 %v473
  %v2847 = vpop.f32.mrb[0].mxu0
  %v2848 = vadd.f32 0.0, %v2847
  %v2849 = vpop.f32.mrb[0].mxu0
  %2850 = vmatprep.mubr.f32.mxu0 0.0
  %2851 = vmatmul.mubr.f32.gmra.mrb[0].mxu0 %v475
  %v2852 = vpop.f32.mrb[0].mxu0
  %v2853 = vadd.f32 0.0, %v2852
  %v2854 = vpop.f32.mrb[0].mxu0
  %2855 = vmatprep.mubr.f32.mxu0 0.0
  %2856 = vmatmul.mubr.f32.gmra.mrb[0].mxu0 %v477
  %v2857 = vpop.f32.mrb[0].mxu0
  %v2858 = vadd.f32 0.0, %v2857
  %v2859 = vpop.f32.mrb[0].mxu0
  %2860 = vmatprep.mubr.f32.mxu0 0.0
  %2861 = vmatmul.mubr.f32.gmra.mrb[0].mxu0 %v479
  %v2862 = vpop.f32.mrb[0].mxu0
  %v2863 = vadd.f32 0.0, %v2862
  %v2864 = vpop.f32.mrb[0].mxu0
  %2865 = vmatprep.mubr.f32.mxu0 0.0
  %2866 = vmatmul.mubr.f32.gmra.mrb[0].mxu0 %v481
  %v2867 = vpop.f32.mrb[0].mxu0
  %v2868 = vadd.f32 0.0, %v2867
  %v2869 = vpop.f32.mrb[0].mxu0
  %2870 = vmatprep.mubr.f32.mxu0 0.0
  %2871 = vmatmul.mubr.f32.gmra.mrb[0].mxu0 %v483
  %v2872 = vpop.f32.mrb[0].mxu0
  %v2873 = vadd.f32 0.0, %v2872
  %v2874 = vpop.f32.mrb[0].mxu0
  %2875 = vmatprep.mubr.f32.mxu0 0.0
  %2876 = vmatmul.mubr.f32.gmra.mrb[0].mxu0 %v485
  %v2877 = vpop.f32.mrb[0].mxu0
  %v2878 = vadd.f32 0.0, %v2877
  %v2879 = vpop.f32.mrb[0].mxu0
  %2880 = vmatprep.mubr.f32.mxu0 0.0
  %2881 = vmatmul.mubr.f32.gmra.mrb[0].mxu0 %v487
  %v2882 = vpop.f32.mrb[0].mxu0
  %v2883 = vadd.f32 0.0, %v2882
  %v2884 = vpop.f32.mrb[0].mxu0
  %2885 = vmatprep.mubr.f32.mxu0 0.0
  %2886 = vmatmul.mubr.f32.gmra.mrb[0].mxu0 %v489
  %v2887 = vpop.f32.mrb[0].mxu0
  %v2888 = vadd.f32 0.0, %v2887
  %v2889 = vpop.f32.mrb[0].mxu0
  %2890 = vmatprep.mubr.f32.mxu0 0.0
  %2891 = vmatmul.mubr.f32.gmra.mrb[0].mxu0 %v491
  %v2892 = vpop.f32.mrb[0].mxu0
  %v2893 = vadd.f32 0.0, %v2892
  %v2894 = vpop.f32.mrb[0].mxu0
  %2895 = vmatprep.mubr.f32.mxu0 0.0
  %2896 = vmatmul.mubr.f32.gmra.mrb[0].mxu0 %v493
  %v2897 = vpop.f32.mrb[0].mxu0
  %v2898 = vadd.f32 0.0, %v2897
  %v2899 = vpop.f32.mrb[0].mxu0
  %2900 = vmatprep.mubr.f32.mxu0 0.0
  %2901 = vmatmul.mubr.f32.gmra.mrb[0].mxu0 %v495
  %v2902 = vpop.f32.mrb[0].mxu0
  %v2903 = vadd.f32 0.0, %v2902
  %v2904 = vpop.f32.mrb[0].mxu0
  %2905 = vmatprep.mubr.f32.mxu0 0.0
  %2906 = vmatmul.mubr.f32.gmra.mrb[0].mxu0 %v497
  %v2907 = vpop.f32.mrb[0].mxu0
  %v2908 = vadd.f32 0.0, %v2907
  %v2909 = vpop.f32.mrb[0].mxu0
  %2910 = vmatprep.mubr.f32.mxu0 0.0
  %2911 = vmatmul.mubr.f32.gmra.mrb[0].mxu0 %v499
  %v2912 = vpop.f32.mrb[0].mxu0
  %v2913 = vadd.f32 0.0, %v2912
  %v2914 = vpop.f32.mrb[0].mxu0
  %2915 = vmatprep.mubr.f32.mxu0 0.0
  %2916 = vmatmul.mubr.f32.gmra.mrb[0].mxu0 %v501
  %v2917 = vpop.f32.mrb[0].mxu0
  %v2918 = vadd.f32 0.0, %v2917
  %v2919 = vpop.f32.mrb[0].mxu0
  %2920 = vmatprep.mubr.f32.mxu0 0.0
  %2921 = vmatmul.mubr.f32.gmra.mrb[0].mxu0 %v2695
  %v2922 = vpop.f32.mrb[0].mxu0
  %v2923 = vadd.f32 0.0, %v2922
  %v2924 = vpop.f32.mrb[0].mxu0
  %2925 = vmatprep.mubr.f32.mxu0 0.0
  %2926 = vmatmul.mubr.f32.gmra.mrb[0].mxu0 %v2697
  %v2927 = vpop.f32.mrb[0].mxu0
  %v2928 = vadd.f32 0.0, %v2927
  %v2929 = vpop.f32.mrb[0].mxu0
  %2930 = vmatprep.mubr.f32.mxu0 0.0
  %2931 = vmatmul.mubr.f32.gmra.mrb[0].mxu0 %v507
  %v2932 = vpop.f32.mrb[0].mxu0
  %v2933 = vadd.f32 0.0, %v2932
  %v2934 = vpop.f32.mrb[0].mxu0
  %2935 = vmatprep.mubr.f32.mxu0 0.0
  %2936 = vmatmul.mubr.f32.gmra.mrb[0].mxu0 %v509
  %v2937 = vpop.f32.mrb[0].mxu0
  %v2938 = vadd.f32 0.0, %v2937
  %v2939 = vpop.f32.mrb[0].mxu0
  %2940 = vmatprep.mubr.f32.mxu0 0.0
  %2941 = vmatmul.mubr.f32.gmra.mrb[0].mxu0 %v511
  %v2942 = vpop.f32.mrb[0].mxu0
  %v2943 = vadd.f32 0.0, %v2942
  %v2944 = vpop.f32.mrb[0].mxu0
  %2945 = vmatprep.mubr.f32.mxu0 0.0
  %2946 = vmatmul.mubr.f32.gmra.mrb[0].mxu0 %v513
  %v2947 = vpop.f32.mrb[0].mxu0
  %v2948 = vadd.f32 0.0, %v2947
  %v2949 = vpop.f32.mrb[0].mxu0
  %2950 = vmatprep.mubr.f32.mxu0 0.0
  %2951 = vmatmul.mubr.f32.gmra.mrb[0].mxu0 %v515
  %v2952 = vpop.f32.mrb[0].mxu0
  %v2953 = vadd.f32 0.0, %v2952
  %v2954 = vpop.f32.mrb[0].mxu0
  %2955 = vmatprep.mubr.f32.mxu0 0.0
  %2956 = vmatmul.mubr.f32.gmra.mrb[0].mxu0 %v517
  %v2957 = vpop.f32.mrb[0].mxu0
  %v2958 = vadd.f32 0.0, %v2957
  %v2959 = vpop.f32.mrb[0].mxu0
  %2960 = vmatprep.mubr.f32.mxu0 0.0
  %2961 = vmatmul.mubr.f32.gmra.mrb[0].mxu0 %v519
  %v2962 = vpop.f32.mrb[0].mxu0
  %v2963 = vadd.f32 0.0, %v2962
  %v2964 = vpop.f32.mrb[0].mxu0
  %2965 = vmatprep.mubr.f32.mxu0 0.0
  %2966 = vmatmul.mubr.f32.gmra.mrb[0].mxu0 %v521
  %v2967 = vpop.f32.mrb[0].mxu0
  %v2968 = vadd.f32 0.0, %v2967
  %v2969 = vpop.f32.mrb[0].mxu0
  %2970 = vmatprep.mubr.f32.mxu0 0.0
  %2971 = vmatmul.mubr.f32.gmra.mrb[0].mxu0 %v523
  %v2972 = vpop.f32.mrb[0].mxu0
  %v2973 = vadd.f32 0.0, %v2972
  %v2974 = vpop.f32.mrb[0].mxu0
  %2975 = vmatprep.mubr.f32.mxu0 0.0
  %2976 = vmatmul.mubr.f32.gmra.mrb[0].mxu0 %v525
  %v2977 = vpop.f32.mrb[0].mxu0
  %v2978 = vadd.f32 0.0, %v2977
  %v2979 = vpop.f32.mrb[0].mxu0
  %2980 = vmatprep.mubr.f32.mxu0 0.0
  %2981 = vmatmul.mubr.f32.gmra.mrb[0].mxu0 %v527
  %v2982 = vpop.f32.mrb[0].mxu0
  %v2983 = vadd.f32 0.0, %v2982
  %v2984 = vpop.f32.mrb[0].mxu0
  %2985 = vmatprep.mubr.f32.mxu0 0.0
  %2986 = vmatmul.mubr.f32.gmra.mrb[0].mxu0 %v529
  %v2987 = vpop.f32.mrb[0].mxu0
  %v2988 = vadd.f32 0.0, %v2987
  %v2989 = vpop.f32.mrb[0].mxu0
  %2990 = vmatprep.mubr.f32.mxu0 0.0
  %2991 = vmatmul.mubr.f32.gmra.mrb[0].mxu0 %v531
  %v2992 = vpop.f32.mrb[0].mxu0
  %v2993 = vadd.f32 0.0, %v2992
  %v2994 = vpop.f32.mrb[0].mxu0
  %2995 = vmatprep.mubr.f32.mxu0 0.0
  %2996 = vmatmul.mubr.f32.gmra.mrb[0].mxu0 %v533
  %v2997 = vpop.f32.mrb[0].mxu0
  %v2998 = vadd.f32 0.0, %v2997
  %v2999 = vpop.f32.mrb[0].mxu0
  %3000 = vmatprep.mubr.f32.mxu0 0.0
  %3001 = vmatmul.mubr.f32.gmra.mrb[0].mxu0 %v535
  %v3002 = vpop.f32.mrb[0].mxu0
  %v3003 = vadd.f32 0.0, %v3002
  %v3004 = vpop.f32.mrb[0].mxu0
  %3005 = vmatprep.mubr.f32.mxu0 0.0
  %3006 = vmatmul.mubr.f32.gmra.mrb[0].mxu0 %v537
  %v3007 = vpop.f32.mrb[0].mxu0
  %v3008 = vadd.f32 0.0, %v3007
  %v3009 = vpop.f32.mrb[0].mxu0
  %3010 = vmatprep.mubr.f32.mxu0 0.0
  %3011 = vmatmul.mubr.f32.gmra.mrb[0].mxu0 %v539
  %v3012 = vpop.f32.mrb[0].mxu0
  %v3013 = vadd.f32 0.0, %v3012
  %v3014 = vpop.f32.mrb[0].mxu0
  %3015 = vmatprep.mubr.f32.mxu0 0.0
  %3016 = vmatmul.mubr.f32.gmra.mrb[0].mxu0 %v541
  %v3017 = vpop.f32.mrb[0].mxu0
  %v3018 = vadd.f32 0.0, %v3017
  %v3019 = vpop.f32.mrb[0].mxu0
  %3020 = vmatprep.mubr.f32.mxu0 0.0
  %3021 = vmatmul.mubr.f32.gmra.mrb[0].mxu0 %v543
  %v3022 = vpop.f32.mrb[0].mxu0
  %v3023 = vadd.f32 0.0, %v3022
  %v3024 = vpop.f32.mrb[0].mxu0
  %3025 = vmatprep.mubr.f32.mxu0 0.0
  %3026 = vmatmul.mubr.f32.gmra.mrb[0].mxu0 %v545
  %v3027 = vpop.f32.mrb[0].mxu0
  %v3028 = vadd.f32 0.0, %v3027
  %v3029 = vpop.f32.mrb[0].mxu0
  %3030 = vmatprep.mubr.f32.mxu0 0.0
  %3031 = vmatmul.mubr.f32.gmra.mrb[0].mxu0 %v547
  %v3032 = vpop.f32.mrb[0].mxu0
  %v3033 = vadd.f32 0.0, %v3032
  %v3034 = vpop.f32.mrb[0].mxu0
  %3035 = vmatprep.mubr.f32.mxu0 0.0
  %3036 = vmatmul.mubr.f32.gmra.mrb[0].mxu0 %v549
  %v3037 = vpop.f32.mrb[0].mxu0
  %v3038 = vadd.f32 0.0, %v3037
  %v3039 = vpop.f32.mrb[0].mxu0
  %3040 = vmatprep.mubr.f32.mxu0 0.0
  %3041 = vmatmul.mubr.f32.gmra.mrb[0].mxu0 %v551
  %v3042 = vpop.f32.mrb[0].mxu0
  %v3043 = vadd.f32 0.0, %v3042
  %v3044 = vpop.f32.mrb[0].mxu0
  %3045 = vmatprep.mubr.f32.mxu0 0.0
  %3046 = vmatmul.mubr.f32.gmra.mrb[0].mxu0 %v553
  %v3047 = vpop.f32.mrb[0].mxu0
  %v3048 = vadd.f32 0.0, %v3047
  %v3049 = vpop.f32.mrb[0].mxu0
  %3050 = vmatprep.mubr.f32.mxu0 0.0
  %3051 = vmatmul.mubr.f32.gmra.mrb[0].mxu0 %v555
  %v3052 = vpop.f32.mrb[0].mxu0
  %v3053 = vadd.f32 0.0, %v3052
  %v3054 = vpop.f32.mrb[0].mxu0
  %3055 = vmatprep.mubr.f32.mxu0 0.0
  %3056 = vmatmul.mubr.f32.gmra.mrb[0].mxu0 %v557
  %v3057 = vpop.f32.mrb[0].mxu0
  %v3058 = vadd.f32 0.0, %v3057
  %v3059 = vpop.f32.mrb[0].mxu0
  %3060 = vmatprep.mubr.f32.mxu0 0.0
  %3061 = vmatmul.mubr.f32.gmra.mrb[0].mxu0 %v559
  %v3062 = vpop.f32.mrb[0].mxu0
  %v3063 = vadd.f32 0.0, %v3062
  %v3064 = vpop.f32.mrb[0].mxu0
  %3065 = vmatprep.mubr.f32.mxu0 0.0
  %3066 = vmatmul.mubr.f32.gmra.mrb[0].mxu0 %v561
  %v3067 = vpop.f32.mrb[0].mxu0
  %v3068 = vadd.f32 0.0, %v3067
  %v3069 = vpop.f32.mrb[0].mxu0
  %3070 = vmatprep.mubr.f32.mxu0 0.0
  %3071 = vmatmul.mubr.f32.gmra.mrb[0].mxu0 %v563
  %v3072 = vpop.f32.mrb[0].mxu0
  %v3073 = vadd.f32 0.0, %v3072
  %v3074 = vpop.f32.mrb[0].mxu0
  %3075 = vmatprep.mubr.f32.mxu0 0.0
  %3076 = vmatmul.mubr.f32.gmra.mrb[0].mxu0 %v565
  %v3077 = vpop.f32.mrb[0].mxu0
  %v3078 = vadd.f32 0.0, %v3077
  %v3079 = vpop.f32.mrb[0].mxu0
  %3080 = vmatprep.mubr.f32.mxu0 0.0
  %3081 = vmatmul.mubr.f32.gmra.mrb[0].mxu0 %v2699
  %v3082 = vpop.f32.mrb[0].mxu0
  %v3083 = vadd.f32 0.0, %v3082
  %v3084 = vpop.f32.mrb[0].mxu0
  %3085 = vmatprep.mubr.f32.mxu0 0.0
  %3086 = vmatmul.mubr.f32.gmra.mrb[0].mxu0 %v2701
  %v3087 = vpop.f32.mrb[0].mxu0
  %v3088 = vadd.f32 0.0, %v3087
  %v3089 = vpop.f32.mrb[0].mxu0
  %3090 = vdwg.mxu0
  %v3091 = vadd.f32 %v2617, %v2773
  %v3092 = vadd.f32 %v2618, %v2778
  %v3093 = vadd.f32 %v2619, %v2783
  %v3094 = vadd.f32 %v2620, %v2788
  %v3095 = vadd.f32 %v2621, %v2793
  %v3096 = vadd.f32 %v2622, %v2798
  %v3097 = vadd.f32 %v2623, %v2803
  %v3098 = vadd.f32 %v2624, %v2808
  %v3099 = vadd.f32 %v2625, %v2813
  %v3100 = vadd.f32 %v2626, %v2818
  %v3101 = vadd.f32 %v2627, %v2823
  %v3102 = vadd.f32 %v2628, %v2828
  %v3103 = vadd.f32 %v2629, %v2833
  %v3104 = vadd.f32 %v2630, %v2838
  %v3105 = vadd.f32 %v2631, %v2843
  %v3106 = vadd.f32 %v2632, %v2848
  %v3107 = vadd.f32 %v2633, %v2853
  %v3108 = vadd.f32 %v2634, %v2858
  %v3109 = vadd.f32 %v2635, %v2863
  %v3110 = vadd.f32 %v2636, %v2868
  %v3111 = vadd.f32 %v2637, %v2873
  %v3112 = vadd.f32 %v2638, %v2878
  %v3113 = vadd.f32 %v2639, %v2883
  %v3114 = vadd.f32 %v2640, %v2888
  %v3115 = vadd.f32 %v2641, %v2893
  %v3116 = vadd.f32 %v2642, %v2898
  %v3117 = vadd.f32 %v2643, %v2903
  %v3118 = vadd.f32 %v2644, %v2908
  %v3119 = vadd.f32 %v2645, %v2913
  %v3120 = vadd.f32 %v2646, %v2918
  %v3121 = vadd.f32 %v2647, %v2923
  %v3122 = vadd.f32 %v2648, %v2928
  %v3123 = vadd.f32 %v2649, %v2933
  %v3124 = vadd.f32 %v2650, %v2938
  %v3125 = vadd.f32 %v2651, %v2943
  %v3126 = vadd.f32 %v2652, %v2948
  %v3127 = vadd.f32 %v2653, %v2953
  %v3128 = vadd.f32 %v2654, %v2958
  %v3129 = vadd.f32 %v2655, %v2963
  %v3130 = vadd.f32 %v2656, %v2968
  %v3131 = vadd.f32 %v2657, %v2973
  %v3132 = vadd.f32 %v2658, %v2978
  %v3133 = vadd.f32 %v2659, %v2983
  %v3134 = vadd.f32 %v2660, %v2988
  %v3135 = vadd.f32 %v2661, %v2993
  %v3136 = vadd.f32 %v2662, %v2998
  %v3137 = vadd.f32 %v2663, %v3003
  %v3138 = vadd.f32 %v2664, %v3008
  %v3139 = vadd.f32 %v2665, %v3013
  %v3140 = vadd.f32 %v2666, %v3018
  %v3141 = vadd.f32 %v2667, %v3023
  %v3142 = vadd.f32 %v2668, %v3028
  %v3143 = vadd.f32 %v2669, %v3033
  %v3144 = vadd.f32 %v2670, %v3038
  %v3145 = vadd.f32 %v2671, %v3043
  %v3146 = vadd.f32 %v2672, %v3048
  %v3147 = vadd.f32 %v2673, %v3053
  %v3148 = vadd.f32 %v2674, %v3058
  %v3149 = vadd.f32 %v2675, %v3063
  %v3150 = vadd.f32 %v2676, %v3068
  %v3151 = vadd.f32 %v2677, %v3073
  %v3152 = vadd.f32 %v2678, %v3078
  %v3153 = vadd.f32 %v2679, %v3083
  %v3154 = vadd.f32 %v2680, %v3088
  %v3155 = vrot.slane %v118, 2
  %v3156 = vrot.slane %v119, 2
  %v3157 = vsel %vm1472, %v3155, %v3156
  %v3158 = vrot.slane %v120, 2
  %v3159 = vsel %vm1472, %v3156, %v3158
  %v3160 = vrot.slane %v172, 2
  %v3161 = vrot.slane %v173, 2
  %v3162 = vsel %vm1472, %v3160, %v3161
  %v3163 = vrot.slane %v174, 2
  %v3164 = vsel %vm1472, %v3161, %v3163
  %s3165 = scalar_lea.vmem %s5, 20
  %v3166 = vld [vmem:[%s3165] sm:$0x7]
  %v3167 = vsel %vm438, %v3157, 0
  %v3169 = vsel %vm438, %v3159, 0
  %v3171 = vsel %vm438, %v3162, 0
  %v3173 = vsel %vm438, %v3164, 0
  %v3176 = vsel %vm567, %v3166, 0
  %3178 = vmatprep.subr.mxu0 0.0
  %3179 = vmatpush1.msra.mxu0 %v3176
  %3180 = vmatprep.subr.mxu0 0.0
  %3181 = vmatpush1.msra.mxu0 0.0
  %3182 = vmatprep.subr.mxu0 0.0
  %3183 = vmatpush1.msra.mxu0 0.0
  %3184 = vmatprep.subr.mxu0 0.0
  %3185 = vmatpush1.msra.mxu0 0.0
  %3186 = vmatprep.subr.mxu0 0.0
  %3187 = vmatpush1.msra.mxu0 0.0
  %3188 = vmatprep.subr.mxu0 0.0
  %3189 = vmatpush1.msra.mxu0 0.0
  %3190 = vmatprep.subr.mxu0 0.0
  %3191 = vmatpush1.msra.mxu0 0.0
  %3192 = vmatprep.subr.mxu0 0.0
  %3193 = vmatpush1.msra.mxu0 0.0
  %3194 = vmatprep.subr.mxu0 0.0
  %3195 = vmatpush1.msra.mxu0 0.0
  %3196 = vmatprep.subr.mxu0 0.0
  %3197 = vmatpush1.msra.mxu0 0.0
  %3198 = vmatprep.subr.mxu0 0.0
  %3199 = vmatpush1.msra.mxu0 0.0
  %3200 = vmatprep.subr.mxu0 0.0
  %3201 = vmatpush1.msra.mxu0 0.0
  %3202 = vmatprep.subr.mxu0 0.0
  %3203 = vmatpush1.msra.mxu0 0.0
  %3204 = vmatprep.subr.mxu0 0.0
  %3205 = vmatpush1.msra.mxu0 0.0
  %3206 = vmatprep.subr.mxu0 0.0
  %3207 = vmatpush1.msra.mxu0 0.0
  %3208 = vmatprep.subr.mxu0 0.0
  %3209 = vmatpush1.msra.mxu0 0.0
  %3210 = vmatprep.subr.mxu0 0.0
  %3211 = vmatpush1.msra.mxu0 0.0
  %3212 = vmatprep.subr.mxu0 0.0
  %3213 = vmatpush1.msra.mxu0 0.0
  %3214 = vmatprep.subr.mxu0 0.0
  %3215 = vmatpush1.msra.mxu0 0.0
  %3216 = vmatprep.subr.mxu0 0.0
  %3217 = vmatpush1.msra.mxu0 0.0
  %3218 = vmatprep.subr.mxu0 0.0
  %3219 = vmatpush1.msra.mxu0 0.0
  %3220 = vmatprep.subr.mxu0 0.0
  %3221 = vmatpush1.msra.mxu0 0.0
  %3222 = vmatprep.subr.mxu0 0.0
  %3223 = vmatpush1.msra.mxu0 0.0
  %3224 = vmatprep.subr.mxu0 0.0
  %3225 = vmatpush1.msra.mxu0 0.0
  %3226 = vmatprep.subr.mxu0 0.0
  %3227 = vmatpush1.msra.mxu0 0.0
  %3228 = vmatprep.subr.mxu0 0.0
  %3229 = vmatpush1.msra.mxu0 0.0
  %3230 = vmatprep.subr.mxu0 0.0
  %3231 = vmatpush1.msra.mxu0 0.0
  %3232 = vmatprep.subr.mxu0 0.0
  %3233 = vmatpush1.msra.mxu0 0.0
  %3234 = vmatprep.subr.mxu0 0.0
  %3235 = vmatpush1.msra.mxu0 0.0
  %3236 = vmatprep.subr.mxu0 0.0
  %3237 = vmatpush1.msra.mxu0 0.0
  %3238 = vmatprep.subr.mxu0 0.0
  %3239 = vmatpush1.msra.mxu0 0.0
  %3240 = vmatprep.subr.mxu0 0.0
  %3241 = vmatpush1.msra.mxu0 0.0
  %3242 = vmatprep.mubr.f32.mxu0 0.0
  %3243 = vmatmul.mubr.f32.gmra.mrb[0].mxu0 %v1639
  %v3244 = vpop.f32.mrb[0].mxu0
  %v3245 = vadd.f32 0.0, %v3244
  %v3246 = vpop.f32.mrb[0].mxu0
  %3247 = vmatprep.mubr.f32.mxu0 0.0
  %3248 = vmatmul.mubr.f32.gmra.mrb[0].mxu0 %v1641
  %v3249 = vpop.f32.mrb[0].mxu0
  %v3250 = vadd.f32 0.0, %v3249
  %v3251 = vpop.f32.mrb[0].mxu0
  %3252 = vmatprep.mubr.f32.mxu0 0.0
  %3253 = vmatmul.mubr.f32.gmra.mrb[0].mxu0 %v1643
  %v3254 = vpop.f32.mrb[0].mxu0
  %v3255 = vadd.f32 0.0, %v3254
  %v3256 = vpop.f32.mrb[0].mxu0
  %3257 = vmatprep.mubr.f32.mxu0 0.0
  %3258 = vmatmul.mubr.f32.gmra.mrb[0].mxu0 %v1645
  %v3259 = vpop.f32.mrb[0].mxu0
  %v3260 = vadd.f32 0.0, %v3259
  %v3261 = vpop.f32.mrb[0].mxu0
  %3262 = vmatprep.mubr.f32.mxu0 0.0
  %3263 = vmatmul.mubr.f32.gmra.mrb[0].mxu0 %v1647
  %v3264 = vpop.f32.mrb[0].mxu0
  %v3265 = vadd.f32 0.0, %v3264
  %v3266 = vpop.f32.mrb[0].mxu0
  %3267 = vmatprep.mubr.f32.mxu0 0.0
  %3268 = vmatmul.mubr.f32.gmra.mrb[0].mxu0 %v1649
  %v3269 = vpop.f32.mrb[0].mxu0
  %v3270 = vadd.f32 0.0, %v3269
  %v3271 = vpop.f32.mrb[0].mxu0
  %3272 = vmatprep.mubr.f32.mxu0 0.0
  %3273 = vmatmul.mubr.f32.gmra.mrb[0].mxu0 %v1651
  %v3274 = vpop.f32.mrb[0].mxu0
  %v3275 = vadd.f32 0.0, %v3274
  %v3276 = vpop.f32.mrb[0].mxu0
  %3277 = vmatprep.mubr.f32.mxu0 0.0
  %3278 = vmatmul.mubr.f32.gmra.mrb[0].mxu0 %v1653
  %v3279 = vpop.f32.mrb[0].mxu0
  %v3280 = vadd.f32 0.0, %v3279
  %v3281 = vpop.f32.mrb[0].mxu0
  %3282 = vmatprep.mubr.f32.mxu0 0.0
  %3283 = vmatmul.mubr.f32.gmra.mrb[0].mxu0 %v1655
  %v3284 = vpop.f32.mrb[0].mxu0
  %v3285 = vadd.f32 0.0, %v3284
  %v3286 = vpop.f32.mrb[0].mxu0
  %3287 = vmatprep.mubr.f32.mxu0 0.0
  %3288 = vmatmul.mubr.f32.gmra.mrb[0].mxu0 %v1657
  %v3289 = vpop.f32.mrb[0].mxu0
  %v3290 = vadd.f32 0.0, %v3289
  %v3291 = vpop.f32.mrb[0].mxu0
  %3292 = vmatprep.mubr.f32.mxu0 0.0
  %3293 = vmatmul.mubr.f32.gmra.mrb[0].mxu0 %v1659
  %v3294 = vpop.f32.mrb[0].mxu0
  %v3295 = vadd.f32 0.0, %v3294
  %v3296 = vpop.f32.mrb[0].mxu0
  %3297 = vmatprep.mubr.f32.mxu0 0.0
  %3298 = vmatmul.mubr.f32.gmra.mrb[0].mxu0 %v1661
  %v3299 = vpop.f32.mrb[0].mxu0
  %v3300 = vadd.f32 0.0, %v3299
  %v3301 = vpop.f32.mrb[0].mxu0
  %3302 = vmatprep.mubr.f32.mxu0 0.0
  %3303 = vmatmul.mubr.f32.gmra.mrb[0].mxu0 %v1663
  %v3304 = vpop.f32.mrb[0].mxu0
  %v3305 = vadd.f32 0.0, %v3304
  %v3306 = vpop.f32.mrb[0].mxu0
  %3307 = vmatprep.mubr.f32.mxu0 0.0
  %3308 = vmatmul.mubr.f32.gmra.mrb[0].mxu0 %v1665
  %v3309 = vpop.f32.mrb[0].mxu0
  %v3310 = vadd.f32 0.0, %v3309
  %v3311 = vpop.f32.mrb[0].mxu0
  %3312 = vmatprep.mubr.f32.mxu0 0.0
  %3313 = vmatmul.mubr.f32.gmra.mrb[0].mxu0 %v1667
  %v3314 = vpop.f32.mrb[0].mxu0
  %v3315 = vadd.f32 0.0, %v3314
  %v3316 = vpop.f32.mrb[0].mxu0
  %3317 = vmatprep.mubr.f32.mxu0 0.0
  %3318 = vmatmul.mubr.f32.gmra.mrb[0].mxu0 %v1669
  %v3319 = vpop.f32.mrb[0].mxu0
  %v3320 = vadd.f32 0.0, %v3319
  %v3321 = vpop.f32.mrb[0].mxu0
  %3322 = vmatprep.mubr.f32.mxu0 0.0
  %3323 = vmatmul.mubr.f32.gmra.mrb[0].mxu0 %v1671
  %v3324 = vpop.f32.mrb[0].mxu0
  %v3325 = vadd.f32 0.0, %v3324
  %v3326 = vpop.f32.mrb[0].mxu0
  %3327 = vmatprep.mubr.f32.mxu0 0.0
  %3328 = vmatmul.mubr.f32.gmra.mrb[0].mxu0 %v1673
  %v3329 = vpop.f32.mrb[0].mxu0
  %v3330 = vadd.f32 0.0, %v3329
  %v3331 = vpop.f32.mrb[0].mxu0
  %3332 = vmatprep.mubr.f32.mxu0 0.0
  %3333 = vmatmul.mubr.f32.gmra.mrb[0].mxu0 %v1675
  %v3334 = vpop.f32.mrb[0].mxu0
  %v3335 = vadd.f32 0.0, %v3334
  %v3336 = vpop.f32.mrb[0].mxu0
  %3337 = vmatprep.mubr.f32.mxu0 0.0
  %3338 = vmatmul.mubr.f32.gmra.mrb[0].mxu0 %v1677
  %v3339 = vpop.f32.mrb[0].mxu0
  %v3340 = vadd.f32 0.0, %v3339
  %v3341 = vpop.f32.mrb[0].mxu0
  %3342 = vmatprep.mubr.f32.mxu0 0.0
  %3343 = vmatmul.mubr.f32.gmra.mrb[0].mxu0 %v1679
  %v3344 = vpop.f32.mrb[0].mxu0
  %v3345 = vadd.f32 0.0, %v3344
  %v3346 = vpop.f32.mrb[0].mxu0
  %3347 = vmatprep.mubr.f32.mxu0 0.0
  %3348 = vmatmul.mubr.f32.gmra.mrb[0].mxu0 %v1681
  %v3349 = vpop.f32.mrb[0].mxu0
  %v3350 = vadd.f32 0.0, %v3349
  %v3351 = vpop.f32.mrb[0].mxu0
  %3352 = vmatprep.mubr.f32.mxu0 0.0
  %3353 = vmatmul.mubr.f32.gmra.mrb[0].mxu0 %v1683
  %v3354 = vpop.f32.mrb[0].mxu0
  %v3355 = vadd.f32 0.0, %v3354
  %v3356 = vpop.f32.mrb[0].mxu0
  %3357 = vmatprep.mubr.f32.mxu0 0.0
  %3358 = vmatmul.mubr.f32.gmra.mrb[0].mxu0 %v1685
  %v3359 = vpop.f32.mrb[0].mxu0
  %v3360 = vadd.f32 0.0, %v3359
  %v3361 = vpop.f32.mrb[0].mxu0
  %3362 = vmatprep.mubr.f32.mxu0 0.0
  %3363 = vmatmul.mubr.f32.gmra.mrb[0].mxu0 %v1687
  %v3364 = vpop.f32.mrb[0].mxu0
  %v3365 = vadd.f32 0.0, %v3364
  %v3366 = vpop.f32.mrb[0].mxu0
  %3367 = vmatprep.mubr.f32.mxu0 0.0
  %3368 = vmatmul.mubr.f32.gmra.mrb[0].mxu0 %v1689
  %v3369 = vpop.f32.mrb[0].mxu0
  %v3370 = vadd.f32 0.0, %v3369
  %v3371 = vpop.f32.mrb[0].mxu0
  %3372 = vmatprep.mubr.f32.mxu0 0.0
  %3373 = vmatmul.mubr.f32.gmra.mrb[0].mxu0 %v1691
  %v3374 = vpop.f32.mrb[0].mxu0
  %v3375 = vadd.f32 0.0, %v3374
  %v3376 = vpop.f32.mrb[0].mxu0
  %3377 = vmatprep.mubr.f32.mxu0 0.0
  %3378 = vmatmul.mubr.f32.gmra.mrb[0].mxu0 %v1693
  %v3379 = vpop.f32.mrb[0].mxu0
  %v3380 = vadd.f32 0.0, %v3379
  %v3381 = vpop.f32.mrb[0].mxu0
  %3382 = vmatprep.mubr.f32.mxu0 0.0
  %3383 = vmatmul.mubr.f32.gmra.mrb[0].mxu0 %v1695
  %v3384 = vpop.f32.mrb[0].mxu0
  %v3385 = vadd.f32 0.0, %v3384
  %v3386 = vpop.f32.mrb[0].mxu0
  %3387 = vmatprep.mubr.f32.mxu0 0.0
  %3388 = vmatmul.mubr.f32.gmra.mrb[0].mxu0 %v1697
  %v3389 = vpop.f32.mrb[0].mxu0
  %v3390 = vadd.f32 0.0, %v3389
  %v3391 = vpop.f32.mrb[0].mxu0
  %3392 = vmatprep.mubr.f32.mxu0 0.0
  %3393 = vmatmul.mubr.f32.gmra.mrb[0].mxu0 %v3167
  %v3394 = vpop.f32.mrb[0].mxu0
  %v3395 = vadd.f32 0.0, %v3394
  %v3396 = vpop.f32.mrb[0].mxu0
  %3397 = vmatprep.mubr.f32.mxu0 0.0
  %3398 = vmatmul.mubr.f32.gmra.mrb[0].mxu0 %v3169
  %v3399 = vpop.f32.mrb[0].mxu0
  %v3400 = vadd.f32 0.0, %v3399
  %v3401 = vpop.f32.mrb[0].mxu0
  %3402 = vmatprep.mubr.f32.mxu0 0.0
  %3403 = vmatmul.mubr.f32.gmra.mrb[0].mxu0 %v1703
  %v3404 = vpop.f32.mrb[0].mxu0
  %v3405 = vadd.f32 0.0, %v3404
  %v3406 = vpop.f32.mrb[0].mxu0
  %3407 = vmatprep.mubr.f32.mxu0 0.0
  %3408 = vmatmul.mubr.f32.gmra.mrb[0].mxu0 %v1705
  %v3409 = vpop.f32.mrb[0].mxu0
  %v3410 = vadd.f32 0.0, %v3409
  %v3411 = vpop.f32.mrb[0].mxu0
  %3412 = vmatprep.mubr.f32.mxu0 0.0
  %3413 = vmatmul.mubr.f32.gmra.mrb[0].mxu0 %v1707
  %v3414 = vpop.f32.mrb[0].mxu0
  %v3415 = vadd.f32 0.0, %v3414
  %v3416 = vpop.f32.mrb[0].mxu0
  %3417 = vmatprep.mubr.f32.mxu0 0.0
  %3418 = vmatmul.mubr.f32.gmra.mrb[0].mxu0 %v1709
  %v3419 = vpop.f32.mrb[0].mxu0
  %v3420 = vadd.f32 0.0, %v3419
  %v3421 = vpop.f32.mrb[0].mxu0
  %3422 = vmatprep.mubr.f32.mxu0 0.0
  %3423 = vmatmul.mubr.f32.gmra.mrb[0].mxu0 %v1711
  %v3424 = vpop.f32.mrb[0].mxu0
  %v3425 = vadd.f32 0.0, %v3424
  %v3426 = vpop.f32.mrb[0].mxu0
  %3427 = vmatprep.mubr.f32.mxu0 0.0
  %3428 = vmatmul.mubr.f32.gmra.mrb[0].mxu0 %v1713
  %v3429 = vpop.f32.mrb[0].mxu0
  %v3430 = vadd.f32 0.0, %v3429
  %v3431 = vpop.f32.mrb[0].mxu0
  %3432 = vmatprep.mubr.f32.mxu0 0.0
  %3433 = vmatmul.mubr.f32.gmra.mrb[0].mxu0 %v1715
  %v3434 = vpop.f32.mrb[0].mxu0
  %v3435 = vadd.f32 0.0, %v3434
  %v3436 = vpop.f32.mrb[0].mxu0
  %3437 = vmatprep.mubr.f32.mxu0 0.0
  %3438 = vmatmul.mubr.f32.gmra.mrb[0].mxu0 %v1717
  %v3439 = vpop.f32.mrb[0].mxu0
  %v3440 = vadd.f32 0.0, %v3439
  %v3441 = vpop.f32.mrb[0].mxu0
  %3442 = vmatprep.mubr.f32.mxu0 0.0
  %3443 = vmatmul.mubr.f32.gmra.mrb[0].mxu0 %v1719
  %v3444 = vpop.f32.mrb[0].mxu0
  %v3445 = vadd.f32 0.0, %v3444
  %v3446 = vpop.f32.mrb[0].mxu0
  %3447 = vmatprep.mubr.f32.mxu0 0.0
  %3448 = vmatmul.mubr.f32.gmra.mrb[0].mxu0 %v1721
  %v3449 = vpop.f32.mrb[0].mxu0
  %v3450 = vadd.f32 0.0, %v3449
  %v3451 = vpop.f32.mrb[0].mxu0
  %3452 = vmatprep.mubr.f32.mxu0 0.0
  %3453 = vmatmul.mubr.f32.gmra.mrb[0].mxu0 %v1723
  %v3454 = vpop.f32.mrb[0].mxu0
  %v3455 = vadd.f32 0.0, %v3454
  %v3456 = vpop.f32.mrb[0].mxu0
  %3457 = vmatprep.mubr.f32.mxu0 0.0
  %3458 = vmatmul.mubr.f32.gmra.mrb[0].mxu0 %v1725
  %v3459 = vpop.f32.mrb[0].mxu0
  %v3460 = vadd.f32 0.0, %v3459
  %v3461 = vpop.f32.mrb[0].mxu0
  %3462 = vmatprep.mubr.f32.mxu0 0.0
  %3463 = vmatmul.mubr.f32.gmra.mrb[0].mxu0 %v1727
  %v3464 = vpop.f32.mrb[0].mxu0
  %v3465 = vadd.f32 0.0, %v3464
  %v3466 = vpop.f32.mrb[0].mxu0
  %3467 = vmatprep.mubr.f32.mxu0 0.0
  %3468 = vmatmul.mubr.f32.gmra.mrb[0].mxu0 %v1729
  %v3469 = vpop.f32.mrb[0].mxu0
  %v3470 = vadd.f32 0.0, %v3469
  %v3471 = vpop.f32.mrb[0].mxu0
  %3472 = vmatprep.mubr.f32.mxu0 0.0
  %3473 = vmatmul.mubr.f32.gmra.mrb[0].mxu0 %v1731
  %v3474 = vpop.f32.mrb[0].mxu0
  %v3475 = vadd.f32 0.0, %v3474
  %v3476 = vpop.f32.mrb[0].mxu0
  %3477 = vmatprep.mubr.f32.mxu0 0.0
  %3478 = vmatmul.mubr.f32.gmra.mrb[0].mxu0 %v1733
  %v3479 = vpop.f32.mrb[0].mxu0
  %v3480 = vadd.f32 0.0, %v3479
  %v3481 = vpop.f32.mrb[0].mxu0
  %3482 = vmatprep.mubr.f32.mxu0 0.0
  %3483 = vmatmul.mubr.f32.gmra.mrb[0].mxu0 %v1735
  %v3484 = vpop.f32.mrb[0].mxu0
  %v3485 = vadd.f32 0.0, %v3484
  %v3486 = vpop.f32.mrb[0].mxu0
  %3487 = vmatprep.mubr.f32.mxu0 0.0
  %3488 = vmatmul.mubr.f32.gmra.mrb[0].mxu0 %v1737
  %v3489 = vpop.f32.mrb[0].mxu0
  %v3490 = vadd.f32 0.0, %v3489
  %v3491 = vpop.f32.mrb[0].mxu0
  %3492 = vmatprep.mubr.f32.mxu0 0.0
  %3493 = vmatmul.mubr.f32.gmra.mrb[0].mxu0 %v1739
  %v3494 = vpop.f32.mrb[0].mxu0
  %v3495 = vadd.f32 0.0, %v3494
  %v3496 = vpop.f32.mrb[0].mxu0
  %3497 = vmatprep.mubr.f32.mxu0 0.0
  %3498 = vmatmul.mubr.f32.gmra.mrb[0].mxu0 %v1741
  %v3499 = vpop.f32.mrb[0].mxu0
  %v3500 = vadd.f32 0.0, %v3499
  %v3501 = vpop.f32.mrb[0].mxu0
  %3502 = vmatprep.mubr.f32.mxu0 0.0
  %3503 = vmatmul.mubr.f32.gmra.mrb[0].mxu0 %v1743
  %v3504 = vpop.f32.mrb[0].mxu0
  %v3505 = vadd.f32 0.0, %v3504
  %v3506 = vpop.f32.mrb[0].mxu0
  %3507 = vmatprep.mubr.f32.mxu0 0.0
  %3508 = vmatmul.mubr.f32.gmra.mrb[0].mxu0 %v1745
  %v3509 = vpop.f32.mrb[0].mxu0
  %v3510 = vadd.f32 0.0, %v3509
  %v3511 = vpop.f32.mrb[0].mxu0
  %3512 = vmatprep.mubr.f32.mxu0 0.0
  %3513 = vmatmul.mubr.f32.gmra.mrb[0].mxu0 %v1747
  %v3514 = vpop.f32.mrb[0].mxu0
  %v3515 = vadd.f32 0.0, %v3514
  %v3516 = vpop.f32.mrb[0].mxu0
  %3517 = vmatprep.mubr.f32.mxu0 0.0
  %3518 = vmatmul.mubr.f32.gmra.mrb[0].mxu0 %v1749
  %v3519 = vpop.f32.mrb[0].mxu0
  %v3520 = vadd.f32 0.0, %v3519
  %v3521 = vpop.f32.mrb[0].mxu0
  %3522 = vmatprep.mubr.f32.mxu0 0.0
  %3523 = vmatmul.mubr.f32.gmra.mrb[0].mxu0 %v1751
  %v3524 = vpop.f32.mrb[0].mxu0
  %v3525 = vadd.f32 0.0, %v3524
  %v3526 = vpop.f32.mrb[0].mxu0
  %3527 = vmatprep.mubr.f32.mxu0 0.0
  %3528 = vmatmul.mubr.f32.gmra.mrb[0].mxu0 %v1753
  %v3529 = vpop.f32.mrb[0].mxu0
  %v3530 = vadd.f32 0.0, %v3529
  %v3531 = vpop.f32.mrb[0].mxu0
  %3532 = vmatprep.mubr.f32.mxu0 0.0
  %3533 = vmatmul.mubr.f32.gmra.mrb[0].mxu0 %v1755
  %v3534 = vpop.f32.mrb[0].mxu0
  %v3535 = vadd.f32 0.0, %v3534
  %v3536 = vpop.f32.mrb[0].mxu0
  %3537 = vmatprep.mubr.f32.mxu0 0.0
  %3538 = vmatmul.mubr.f32.gmra.mrb[0].mxu0 %v1757
  %v3539 = vpop.f32.mrb[0].mxu0
  %v3540 = vadd.f32 0.0, %v3539
  %v3541 = vpop.f32.mrb[0].mxu0
  %3542 = vmatprep.mubr.f32.mxu0 0.0
  %3543 = vmatmul.mubr.f32.gmra.mrb[0].mxu0 %v1759
  %v3544 = vpop.f32.mrb[0].mxu0
  %v3545 = vadd.f32 0.0, %v3544
  %v3546 = vpop.f32.mrb[0].mxu0
  %3547 = vmatprep.mubr.f32.mxu0 0.0
  %3548 = vmatmul.mubr.f32.gmra.mrb[0].mxu0 %v1761
  %v3549 = vpop.f32.mrb[0].mxu0
  %v3550 = vadd.f32 0.0, %v3549
  %v3551 = vpop.f32.mrb[0].mxu0
  %3552 = vmatprep.mubr.f32.mxu0 0.0
  %3553 = vmatmul.mubr.f32.gmra.mrb[0].mxu0 %v3171
  %v3554 = vpop.f32.mrb[0].mxu0
  %v3555 = vadd.f32 0.0, %v3554
  %v3556 = vpop.f32.mrb[0].mxu0
  %3557 = vmatprep.mubr.f32.mxu0 0.0
  %3558 = vmatmul.mubr.f32.gmra.mrb[0].mxu0 %v3173
  %v3559 = vpop.f32.mrb[0].mxu0
  %v3560 = vadd.f32 0.0, %v3559
  %v3561 = vpop.f32.mrb[0].mxu0
  %3562 = vdwg.mxu0
  %v3563 = vadd.f32 %v3091, %v3245
  %v3564 = vadd.f32 %v3092, %v3250
  %v3565 = vadd.f32 %v3093, %v3255
  %v3566 = vadd.f32 %v3094, %v3260
  %v3567 = vadd.f32 %v3095, %v3265
  %v3568 = vadd.f32 %v3096, %v3270
  %v3569 = vadd.f32 %v3097, %v3275
  %v3570 = vadd.f32 %v3098, %v3280
  %v3571 = vadd.f32 %v3099, %v3285
  %v3572 = vadd.f32 %v3100, %v3290
  %v3573 = vadd.f32 %v3101, %v3295
  %v3574 = vadd.f32 %v3102, %v3300
  %v3575 = vadd.f32 %v3103, %v3305
  %v3576 = vadd.f32 %v3104, %v3310
  %v3577 = vadd.f32 %v3105, %v3315
  %v3578 = vadd.f32 %v3106, %v3320
  %v3579 = vadd.f32 %v3107, %v3325
  %v3580 = vadd.f32 %v3108, %v3330
  %v3581 = vadd.f32 %v3109, %v3335
  %v3582 = vadd.f32 %v3110, %v3340
  %v3583 = vadd.f32 %v3111, %v3345
  %v3584 = vadd.f32 %v3112, %v3350
  %v3585 = vadd.f32 %v3113, %v3355
  %v3586 = vadd.f32 %v3114, %v3360
  %v3587 = vadd.f32 %v3115, %v3365
  %v3588 = vadd.f32 %v3116, %v3370
  %v3589 = vadd.f32 %v3117, %v3375
  %v3590 = vadd.f32 %v3118, %v3380
  %v3591 = vadd.f32 %v3119, %v3385
  %v3592 = vadd.f32 %v3120, %v3390
  %v3593 = vadd.f32 %v3121, %v3395
  %v3594 = vadd.f32 %v3122, %v3400
  %v3595 = vadd.f32 %v3123, %v3405
  %v3596 = vadd.f32 %v3124, %v3410
  %v3597 = vadd.f32 %v3125, %v3415
  %v3598 = vadd.f32 %v3126, %v3420
  %v3599 = vadd.f32 %v3127, %v3425
  %v3600 = vadd.f32 %v3128, %v3430
  %v3601 = vadd.f32 %v3129, %v3435
  %v3602 = vadd.f32 %v3130, %v3440
  %v3603 = vadd.f32 %v3131, %v3445
  %v3604 = vadd.f32 %v3132, %v3450
  %v3605 = vadd.f32 %v3133, %v3455
  %v3606 = vadd.f32 %v3134, %v3460
  %v3607 = vadd.f32 %v3135, %v3465
  %v3608 = vadd.f32 %v3136, %v3470
  %v3609 = vadd.f32 %v3137, %v3475
  %v3610 = vadd.f32 %v3138, %v3480
  %v3611 = vadd.f32 %v3139, %v3485
  %v3612 = vadd.f32 %v3140, %v3490
  %v3613 = vadd.f32 %v3141, %v3495
  %v3614 = vadd.f32 %v3142, %v3500
  %v3615 = vadd.f32 %v3143, %v3505
  %v3616 = vadd.f32 %v3144, %v3510
  %v3617 = vadd.f32 %v3145, %v3515
  %v3618 = vadd.f32 %v3146, %v3520
  %v3619 = vadd.f32 %v3147, %v3525
  %v3620 = vadd.f32 %v3148, %v3530
  %v3621 = vadd.f32 %v3149, %v3535
  %v3622 = vadd.f32 %v3150, %v3540
  %v3623 = vadd.f32 %v3151, %v3545
  %v3624 = vadd.f32 %v3152, %v3550
  %v3625 = vadd.f32 %v3153, %v3555
  %v3626 = vadd.f32 %v3154, %v3560
  %s3627 = scalar_lea.vmem %s5, 24
  %v3628 = vld [vmem:[%s3627] sm:$0x7]
  %v3630 = vsel %vm438, %v121, 0
  %v3633 = vsel %vm438, %v122, 0
  %v3636 = vsel %vm438, %v175, 0
  %v3639 = vsel %vm438, %v176, 0
  %v3642 = vsel %vm567, %v3628, 0
  %3644 = vmatprep.subr.mxu0 0.0
  %3645 = vmatpush1.msra.mxu0 %v3642
  %3646 = vmatprep.subr.mxu0 0.0
  %3647 = vmatpush1.msra.mxu0 0.0
  %3648 = vmatprep.subr.mxu0 0.0
  %3649 = vmatpush1.msra.mxu0 0.0
  %3650 = vmatprep.subr.mxu0 0.0
  %3651 = vmatpush1.msra.mxu0 0.0
  %3652 = vmatprep.subr.mxu0 0.0
  %3653 = vmatpush1.msra.mxu0 0.0
  %3654 = vmatprep.subr.mxu0 0.0
  %3655 = vmatpush1.msra.mxu0 0.0
  %3656 = vmatprep.subr.mxu0 0.0
  %3657 = vmatpush1.msra.mxu0 0.0
  %3658 = vmatprep.subr.mxu0 0.0
  %3659 = vmatpush1.msra.mxu0 0.0
  %3660 = vmatprep.subr.mxu0 0.0
  %3661 = vmatpush1.msra.mxu0 0.0
  %3662 = vmatprep.subr.mxu0 0.0
  %3663 = vmatpush1.msra.mxu0 0.0
  %3664 = vmatprep.subr.mxu0 0.0
  %3665 = vmatpush1.msra.mxu0 0.0
  %3666 = vmatprep.subr.mxu0 0.0
  %3667 = vmatpush1.msra.mxu0 0.0
  %3668 = vmatprep.subr.mxu0 0.0
  %3669 = vmatpush1.msra.mxu0 0.0
  %3670 = vmatprep.subr.mxu0 0.0
  %3671 = vmatpush1.msra.mxu0 0.0
  %3672 = vmatprep.subr.mxu0 0.0
  %3673 = vmatpush1.msra.mxu0 0.0
  %3674 = vmatprep.subr.mxu0 0.0
  %3675 = vmatpush1.msra.mxu0 0.0
  %3676 = vmatprep.subr.mxu0 0.0
  %3677 = vmatpush1.msra.mxu0 0.0
  %3678 = vmatprep.subr.mxu0 0.0
  %3679 = vmatpush1.msra.mxu0 0.0
  %3680 = vmatprep.subr.mxu0 0.0
  %3681 = vmatpush1.msra.mxu0 0.0
  %3682 = vmatprep.subr.mxu0 0.0
  %3683 = vmatpush1.msra.mxu0 0.0
  %3684 = vmatprep.subr.mxu0 0.0
  %3685 = vmatpush1.msra.mxu0 0.0
  %3686 = vmatprep.subr.mxu0 0.0
  %3687 = vmatpush1.msra.mxu0 0.0
  %3688 = vmatprep.subr.mxu0 0.0
  %3689 = vmatpush1.msra.mxu0 0.0
  %3690 = vmatprep.subr.mxu0 0.0
  %3691 = vmatpush1.msra.mxu0 0.0
  %3692 = vmatprep.subr.mxu0 0.0
  %3693 = vmatpush1.msra.mxu0 0.0
  %3694 = vmatprep.subr.mxu0 0.0
  %3695 = vmatpush1.msra.mxu0 0.0
  %3696 = vmatprep.subr.mxu0 0.0
  %3697 = vmatpush1.msra.mxu0 0.0
  %3698 = vmatprep.subr.mxu0 0.0
  %3699 = vmatpush1.msra.mxu0 0.0
  %3700 = vmatprep.subr.mxu0 0.0
  %3701 = vmatpush1.msra.mxu0 0.0
  %3702 = vmatprep.subr.mxu0 0.0
  %3703 = vmatpush1.msra.mxu0 0.0
  %3704 = vmatprep.subr.mxu0 0.0
  %3705 = vmatpush1.msra.mxu0 0.0
  %3706 = vmatprep.subr.mxu0 0.0
  %3707 = vmatpush1.msra.mxu0 0.0
  %3708 = vmatprep.mubr.f32.mxu0 0.0
  %3709 = vmatmul.mubr.f32.gmra.mrb[0].mxu0 %v964
  %v3710 = vpop.f32.mrb[0].mxu0
  %v3711 = vadd.f32 0.0, %v3710
  %v3712 = vpop.f32.mrb[0].mxu0
  %3713 = vmatprep.mubr.f32.mxu0 0.0
  %3714 = vmatmul.mubr.f32.gmra.mrb[0].mxu0 %v966
  %v3715 = vpop.f32.mrb[0].mxu0
  %v3716 = vadd.f32 0.0, %v3715
  %v3717 = vpop.f32.mrb[0].mxu0
  %3718 = vmatprep.mubr.f32.mxu0 0.0
  %3719 = vmatmul.mubr.f32.gmra.mrb[0].mxu0 %v968
  %v3720 = vpop.f32.mrb[0].mxu0
  %v3721 = vadd.f32 0.0, %v3720
  %v3722 = vpop.f32.mrb[0].mxu0
  %3723 = vmatprep.mubr.f32.mxu0 0.0
  %3724 = vmatmul.mubr.f32.gmra.mrb[0].mxu0 %v970
  %v3725 = vpop.f32.mrb[0].mxu0
  %v3726 = vadd.f32 0.0, %v3725
  %v3727 = vpop.f32.mrb[0].mxu0
  %3728 = vmatprep.mubr.f32.mxu0 0.0
  %3729 = vmatmul.mubr.f32.gmra.mrb[0].mxu0 %v972
  %v3730 = vpop.f32.mrb[0].mxu0
  %v3731 = vadd.f32 0.0, %v3730
  %v3732 = vpop.f32.mrb[0].mxu0
  %3733 = vmatprep.mubr.f32.mxu0 0.0
  %3734 = vmatmul.mubr.f32.gmra.mrb[0].mxu0 %v974
  %v3735 = vpop.f32.mrb[0].mxu0
  %v3736 = vadd.f32 0.0, %v3735
  %v3737 = vpop.f32.mrb[0].mxu0
  %3738 = vmatprep.mubr.f32.mxu0 0.0
  %3739 = vmatmul.mubr.f32.gmra.mrb[0].mxu0 %v976
  %v3740 = vpop.f32.mrb[0].mxu0
  %v3741 = vadd.f32 0.0, %v3740
  %v3742 = vpop.f32.mrb[0].mxu0
  %3743 = vmatprep.mubr.f32.mxu0 0.0
  %3744 = vmatmul.mubr.f32.gmra.mrb[0].mxu0 %v978
  %v3745 = vpop.f32.mrb[0].mxu0
  %v3746 = vadd.f32 0.0, %v3745
  %v3747 = vpop.f32.mrb[0].mxu0
  %3748 = vmatprep.mubr.f32.mxu0 0.0
  %3749 = vmatmul.mubr.f32.gmra.mrb[0].mxu0 %v980
  %v3750 = vpop.f32.mrb[0].mxu0
  %v3751 = vadd.f32 0.0, %v3750
  %v3752 = vpop.f32.mrb[0].mxu0
  %3753 = vmatprep.mubr.f32.mxu0 0.0
  %3754 = vmatmul.mubr.f32.gmra.mrb[0].mxu0 %v982
  %v3755 = vpop.f32.mrb[0].mxu0
  %v3756 = vadd.f32 0.0, %v3755
  %v3757 = vpop.f32.mrb[0].mxu0
  %3758 = vmatprep.mubr.f32.mxu0 0.0
  %3759 = vmatmul.mubr.f32.gmra.mrb[0].mxu0 %v984
  %v3760 = vpop.f32.mrb[0].mxu0
  %v3761 = vadd.f32 0.0, %v3760
  %v3762 = vpop.f32.mrb[0].mxu0
  %3763 = vmatprep.mubr.f32.mxu0 0.0
  %3764 = vmatmul.mubr.f32.gmra.mrb[0].mxu0 %v986
  %v3765 = vpop.f32.mrb[0].mxu0
  %v3766 = vadd.f32 0.0, %v3765
  %v3767 = vpop.f32.mrb[0].mxu0
  %3768 = vmatprep.mubr.f32.mxu0 0.0
  %3769 = vmatmul.mubr.f32.gmra.mrb[0].mxu0 %v988
  %v3770 = vpop.f32.mrb[0].mxu0
  %v3771 = vadd.f32 0.0, %v3770
  %v3772 = vpop.f32.mrb[0].mxu0
  %3773 = vmatprep.mubr.f32.mxu0 0.0
  %3774 = vmatmul.mubr.f32.gmra.mrb[0].mxu0 %v990
  %v3775 = vpop.f32.mrb[0].mxu0
  %v3776 = vadd.f32 0.0, %v3775
  %v3777 = vpop.f32.mrb[0].mxu0
  %3778 = vmatprep.mubr.f32.mxu0 0.0
  %3779 = vmatmul.mubr.f32.gmra.mrb[0].mxu0 %v992
  %v3780 = vpop.f32.mrb[0].mxu0
  %v3781 = vadd.f32 0.0, %v3780
  %v3782 = vpop.f32.mrb[0].mxu0
  %3783 = vmatprep.mubr.f32.mxu0 0.0
  %3784 = vmatmul.mubr.f32.gmra.mrb[0].mxu0 %v994
  %v3785 = vpop.f32.mrb[0].mxu0
  %v3786 = vadd.f32 0.0, %v3785
  %v3787 = vpop.f32.mrb[0].mxu0
  %3788 = vmatprep.mubr.f32.mxu0 0.0
  %3789 = vmatmul.mubr.f32.gmra.mrb[0].mxu0 %v996
  %v3790 = vpop.f32.mrb[0].mxu0
  %v3791 = vadd.f32 0.0, %v3790
  %v3792 = vpop.f32.mrb[0].mxu0
  %3793 = vmatprep.mubr.f32.mxu0 0.0
  %3794 = vmatmul.mubr.f32.gmra.mrb[0].mxu0 %v998
  %v3795 = vpop.f32.mrb[0].mxu0
  %v3796 = vadd.f32 0.0, %v3795
  %v3797 = vpop.f32.mrb[0].mxu0
  %3798 = vmatprep.mubr.f32.mxu0 0.0
  %3799 = vmatmul.mubr.f32.gmra.mrb[0].mxu0 %v1000
  %v3800 = vpop.f32.mrb[0].mxu0
  %v3801 = vadd.f32 0.0, %v3800
  %v3802 = vpop.f32.mrb[0].mxu0
  %3803 = vmatprep.mubr.f32.mxu0 0.0
  %3804 = vmatmul.mubr.f32.gmra.mrb[0].mxu0 %v1002
  %v3805 = vpop.f32.mrb[0].mxu0
  %v3806 = vadd.f32 0.0, %v3805
  %v3807 = vpop.f32.mrb[0].mxu0
  %3808 = vmatprep.mubr.f32.mxu0 0.0
  %3809 = vmatmul.mubr.f32.gmra.mrb[0].mxu0 %v1004
  %v3810 = vpop.f32.mrb[0].mxu0
  %v3811 = vadd.f32 0.0, %v3810
  %v3812 = vpop.f32.mrb[0].mxu0
  %3813 = vmatprep.mubr.f32.mxu0 0.0
  %3814 = vmatmul.mubr.f32.gmra.mrb[0].mxu0 %v1006
  %v3815 = vpop.f32.mrb[0].mxu0
  %v3816 = vadd.f32 0.0, %v3815
  %v3817 = vpop.f32.mrb[0].mxu0
  %3818 = vmatprep.mubr.f32.mxu0 0.0
  %3819 = vmatmul.mubr.f32.gmra.mrb[0].mxu0 %v1008
  %v3820 = vpop.f32.mrb[0].mxu0
  %v3821 = vadd.f32 0.0, %v3820
  %v3822 = vpop.f32.mrb[0].mxu0
  %3823 = vmatprep.mubr.f32.mxu0 0.0
  %3824 = vmatmul.mubr.f32.gmra.mrb[0].mxu0 %v1010
  %v3825 = vpop.f32.mrb[0].mxu0
  %v3826 = vadd.f32 0.0, %v3825
  %v3827 = vpop.f32.mrb[0].mxu0
  %3828 = vmatprep.mubr.f32.mxu0 0.0
  %3829 = vmatmul.mubr.f32.gmra.mrb[0].mxu0 %v1012
  %v3830 = vpop.f32.mrb[0].mxu0
  %v3831 = vadd.f32 0.0, %v3830
  %v3832 = vpop.f32.mrb[0].mxu0
  %3833 = vmatprep.mubr.f32.mxu0 0.0
  %3834 = vmatmul.mubr.f32.gmra.mrb[0].mxu0 %v1014
  %v3835 = vpop.f32.mrb[0].mxu0
  %v3836 = vadd.f32 0.0, %v3835
  %v3837 = vpop.f32.mrb[0].mxu0
  %3838 = vmatprep.mubr.f32.mxu0 0.0
  %3839 = vmatmul.mubr.f32.gmra.mrb[0].mxu0 %v1016
  %v3840 = vpop.f32.mrb[0].mxu0
  %v3841 = vadd.f32 0.0, %v3840
  %v3842 = vpop.f32.mrb[0].mxu0
  %3843 = vmatprep.mubr.f32.mxu0 0.0
  %3844 = vmatmul.mubr.f32.gmra.mrb[0].mxu0 %v1018
  %v3845 = vpop.f32.mrb[0].mxu0
  %v3846 = vadd.f32 0.0, %v3845
  %v3847 = vpop.f32.mrb[0].mxu0
  %3848 = vmatprep.mubr.f32.mxu0 0.0
  %3849 = vmatmul.mubr.f32.gmra.mrb[0].mxu0 %v2218
  %v3850 = vpop.f32.mrb[0].mxu0
  %v3851 = vadd.f32 0.0, %v3850
  %v3852 = vpop.f32.mrb[0].mxu0
  %3853 = vmatprep.mubr.f32.mxu0 0.0
  %3854 = vmatmul.mubr.f32.gmra.mrb[0].mxu0 %v2221
  %v3855 = vpop.f32.mrb[0].mxu0
  %v3856 = vadd.f32 0.0, %v3855
  %v3857 = vpop.f32.mrb[0].mxu0
  %3858 = vmatprep.mubr.f32.mxu0 0.0
  %3859 = vmatmul.mubr.f32.gmra.mrb[0].mxu0 %v3630
  %v3860 = vpop.f32.mrb[0].mxu0
  %v3861 = vadd.f32 0.0, %v3860
  %v3862 = vpop.f32.mrb[0].mxu0
  %3863 = vmatprep.mubr.f32.mxu0 0.0
  %3864 = vmatmul.mubr.f32.gmra.mrb[0].mxu0 %v3633
  %v3865 = vpop.f32.mrb[0].mxu0
  %v3866 = vadd.f32 0.0, %v3865
  %v3867 = vpop.f32.mrb[0].mxu0
  %3868 = vmatprep.mubr.f32.mxu0 0.0
  %3869 = vmatmul.mubr.f32.gmra.mrb[0].mxu0 %v1028
  %v3870 = vpop.f32.mrb[0].mxu0
  %v3871 = vadd.f32 0.0, %v3870
  %v3872 = vpop.f32.mrb[0].mxu0
  %3873 = vmatprep.mubr.f32.mxu0 0.0
  %3874 = vmatmul.mubr.f32.gmra.mrb[0].mxu0 %v1030
  %v3875 = vpop.f32.mrb[0].mxu0
  %v3876 = vadd.f32 0.0, %v3875
  %v3877 = vpop.f32.mrb[0].mxu0
  %3878 = vmatprep.mubr.f32.mxu0 0.0
  %3879 = vmatmul.mubr.f32.gmra.mrb[0].mxu0 %v1032
  %v3880 = vpop.f32.mrb[0].mxu0
  %v3881 = vadd.f32 0.0, %v3880
  %v3882 = vpop.f32.mrb[0].mxu0
  %3883 = vmatprep.mubr.f32.mxu0 0.0
  %3884 = vmatmul.mubr.f32.gmra.mrb[0].mxu0 %v1034
  %v3885 = vpop.f32.mrb[0].mxu0
  %v3886 = vadd.f32 0.0, %v3885
  %v3887 = vpop.f32.mrb[0].mxu0
  %3888 = vmatprep.mubr.f32.mxu0 0.0
  %3889 = vmatmul.mubr.f32.gmra.mrb[0].mxu0 %v1036
  %v3890 = vpop.f32.mrb[0].mxu0
  %v3891 = vadd.f32 0.0, %v3890
  %v3892 = vpop.f32.mrb[0].mxu0
  %3893 = vmatprep.mubr.f32.mxu0 0.0
  %3894 = vmatmul.mubr.f32.gmra.mrb[0].mxu0 %v1038
  %v3895 = vpop.f32.mrb[0].mxu0
  %v3896 = vadd.f32 0.0, %v3895
  %v3897 = vpop.f32.mrb[0].mxu0
  %3898 = vmatprep.mubr.f32.mxu0 0.0
  %3899 = vmatmul.mubr.f32.gmra.mrb[0].mxu0 %v1040
  %v3900 = vpop.f32.mrb[0].mxu0
  %v3901 = vadd.f32 0.0, %v3900
  %v3902 = vpop.f32.mrb[0].mxu0
  %3903 = vmatprep.mubr.f32.mxu0 0.0
  %3904 = vmatmul.mubr.f32.gmra.mrb[0].mxu0 %v1042
  %v3905 = vpop.f32.mrb[0].mxu0
  %v3906 = vadd.f32 0.0, %v3905
  %v3907 = vpop.f32.mrb[0].mxu0
  %3908 = vmatprep.mubr.f32.mxu0 0.0
  %3909 = vmatmul.mubr.f32.gmra.mrb[0].mxu0 %v1044
  %v3910 = vpop.f32.mrb[0].mxu0
  %v3911 = vadd.f32 0.0, %v3910
  %v3912 = vpop.f32.mrb[0].mxu0
  %3913 = vmatprep.mubr.f32.mxu0 0.0
  %3914 = vmatmul.mubr.f32.gmra.mrb[0].mxu0 %v1046
  %v3915 = vpop.f32.mrb[0].mxu0
  %v3916 = vadd.f32 0.0, %v3915
  %v3917 = vpop.f32.mrb[0].mxu0
  %3918 = vmatprep.mubr.f32.mxu0 0.0
  %3919 = vmatmul.mubr.f32.gmra.mrb[0].mxu0 %v1048
  %v3920 = vpop.f32.mrb[0].mxu0
  %v3921 = vadd.f32 0.0, %v3920
  %v3922 = vpop.f32.mrb[0].mxu0
  %3923 = vmatprep.mubr.f32.mxu0 0.0
  %3924 = vmatmul.mubr.f32.gmra.mrb[0].mxu0 %v1050
  %v3925 = vpop.f32.mrb[0].mxu0
  %v3926 = vadd.f32 0.0, %v3925
  %v3927 = vpop.f32.mrb[0].mxu0
  %3928 = vmatprep.mubr.f32.mxu0 0.0
  %3929 = vmatmul.mubr.f32.gmra.mrb[0].mxu0 %v1052
  %v3930 = vpop.f32.mrb[0].mxu0
  %v3931 = vadd.f32 0.0, %v3930
  %v3932 = vpop.f32.mrb[0].mxu0
  %3933 = vmatprep.mubr.f32.mxu0 0.0
  %3934 = vmatmul.mubr.f32.gmra.mrb[0].mxu0 %v1054
  %v3935 = vpop.f32.mrb[0].mxu0
  %v3936 = vadd.f32 0.0, %v3935
  %v3937 = vpop.f32.mrb[0].mxu0
  %3938 = vmatprep.mubr.f32.mxu0 0.0
  %3939 = vmatmul.mubr.f32.gmra.mrb[0].mxu0 %v1056
  %v3940 = vpop.f32.mrb[0].mxu0
  %v3941 = vadd.f32 0.0, %v3940
  %v3942 = vpop.f32.mrb[0].mxu0
  %3943 = vmatprep.mubr.f32.mxu0 0.0
  %3944 = vmatmul.mubr.f32.gmra.mrb[0].mxu0 %v1058
  %v3945 = vpop.f32.mrb[0].mxu0
  %v3946 = vadd.f32 0.0, %v3945
  %v3947 = vpop.f32.mrb[0].mxu0
  %3948 = vmatprep.mubr.f32.mxu0 0.0
  %3949 = vmatmul.mubr.f32.gmra.mrb[0].mxu0 %v1060
  %v3950 = vpop.f32.mrb[0].mxu0
  %v3951 = vadd.f32 0.0, %v3950
  %v3952 = vpop.f32.mrb[0].mxu0
  %3953 = vmatprep.mubr.f32.mxu0 0.0
  %3954 = vmatmul.mubr.f32.gmra.mrb[0].mxu0 %v1062
  %v3955 = vpop.f32.mrb[0].mxu0
  %v3956 = vadd.f32 0.0, %v3955
  %v3957 = vpop.f32.mrb[0].mxu0
  %3958 = vmatprep.mubr.f32.mxu0 0.0
  %3959 = vmatmul.mubr.f32.gmra.mrb[0].mxu0 %v1064
  %v3960 = vpop.f32.mrb[0].mxu0
  %v3961 = vadd.f32 0.0, %v3960
  %v3962 = vpop.f32.mrb[0].mxu0
  %3963 = vmatprep.mubr.f32.mxu0 0.0
  %3964 = vmatmul.mubr.f32.gmra.mrb[0].mxu0 %v1066
  %v3965 = vpop.f32.mrb[0].mxu0
  %v3966 = vadd.f32 0.0, %v3965
  %v3967 = vpop.f32.mrb[0].mxu0
  %3968 = vmatprep.mubr.f32.mxu0 0.0
  %3969 = vmatmul.mubr.f32.gmra.mrb[0].mxu0 %v1068
  %v3970 = vpop.f32.mrb[0].mxu0
  %v3971 = vadd.f32 0.0, %v3970
  %v3972 = vpop.f32.mrb[0].mxu0
  %3973 = vmatprep.mubr.f32.mxu0 0.0
  %3974 = vmatmul.mubr.f32.gmra.mrb[0].mxu0 %v1070
  %v3975 = vpop.f32.mrb[0].mxu0
  %v3976 = vadd.f32 0.0, %v3975
  %v3977 = vpop.f32.mrb[0].mxu0
  %3978 = vmatprep.mubr.f32.mxu0 0.0
  %3979 = vmatmul.mubr.f32.gmra.mrb[0].mxu0 %v1072
  %v3980 = vpop.f32.mrb[0].mxu0
  %v3981 = vadd.f32 0.0, %v3980
  %v3982 = vpop.f32.mrb[0].mxu0
  %3983 = vmatprep.mubr.f32.mxu0 0.0
  %3984 = vmatmul.mubr.f32.gmra.mrb[0].mxu0 %v1074
  %v3985 = vpop.f32.mrb[0].mxu0
  %v3986 = vadd.f32 0.0, %v3985
  %v3987 = vpop.f32.mrb[0].mxu0
  %3988 = vmatprep.mubr.f32.mxu0 0.0
  %3989 = vmatmul.mubr.f32.gmra.mrb[0].mxu0 %v1076
  %v3990 = vpop.f32.mrb[0].mxu0
  %v3991 = vadd.f32 0.0, %v3990
  %v3992 = vpop.f32.mrb[0].mxu0
  %3993 = vmatprep.mubr.f32.mxu0 0.0
  %3994 = vmatmul.mubr.f32.gmra.mrb[0].mxu0 %v1078
  %v3995 = vpop.f32.mrb[0].mxu0
  %v3996 = vadd.f32 0.0, %v3995
  %v3997 = vpop.f32.mrb[0].mxu0
  %3998 = vmatprep.mubr.f32.mxu0 0.0
  %3999 = vmatmul.mubr.f32.gmra.mrb[0].mxu0 %v1080
  %v4000 = vpop.f32.mrb[0].mxu0
  %v4001 = vadd.f32 0.0, %v4000
  %v4002 = vpop.f32.mrb[0].mxu0
  %4003 = vmatprep.mubr.f32.mxu0 0.0
  %4004 = vmatmul.mubr.f32.gmra.mrb[0].mxu0 %v1082
  %v4005 = vpop.f32.mrb[0].mxu0
  %v4006 = vadd.f32 0.0, %v4005
  %v4007 = vpop.f32.mrb[0].mxu0
  %4008 = vmatprep.mubr.f32.mxu0 0.0
  %4009 = vmatmul.mubr.f32.gmra.mrb[0].mxu0 %v2224
  %v4010 = vpop.f32.mrb[0].mxu0
  %v4011 = vadd.f32 0.0, %v4010
  %v4012 = vpop.f32.mrb[0].mxu0
  %4013 = vmatprep.mubr.f32.mxu0 0.0
  %4014 = vmatmul.mubr.f32.gmra.mrb[0].mxu0 %v2227
  %v4015 = vpop.f32.mrb[0].mxu0
  %v4016 = vadd.f32 0.0, %v4015
  %v4017 = vpop.f32.mrb[0].mxu0
  %4018 = vmatprep.mubr.f32.mxu0 0.0
  %4019 = vmatmul.mubr.f32.gmra.mrb[0].mxu0 %v3636
  %v4020 = vpop.f32.mrb[0].mxu0
  %v4021 = vadd.f32 0.0, %v4020
  %v4022 = vpop.f32.mrb[0].mxu0
  %4023 = vmatprep.mubr.f32.mxu0 0.0
  %4024 = vmatmul.mubr.f32.gmra.mrb[0].mxu0 %v3639
  %v4025 = vpop.f32.mrb[0].mxu0
  %v4026 = vadd.f32 0.0, %v4025
  %v4027 = vpop.f32.mrb[0].mxu0
  %4028 = vdwg.mxu0
  %v4029 = vadd.f32 %v3563, %v3711
  %v4030 = vadd.f32 %v3564, %v3716
  %v4031 = vadd.f32 %v3565, %v3721
  %v4032 = vadd.f32 %v3566, %v3726
  %v4033 = vadd.f32 %v3567, %v3731
  %v4034 = vadd.f32 %v3568, %v3736
  %v4035 = vadd.f32 %v3569, %v3741
  %v4036 = vadd.f32 %v3570, %v3746
  %v4037 = vadd.f32 %v3571, %v3751
  %v4038 = vadd.f32 %v3572, %v3756
  %v4039 = vadd.f32 %v3573, %v3761
  %v4040 = vadd.f32 %v3574, %v3766
  %v4041 = vadd.f32 %v3575, %v3771
  %v4042 = vadd.f32 %v3576, %v3776
  %v4043 = vadd.f32 %v3577, %v3781
  %v4044 = vadd.f32 %v3578, %v3786
  %v4045 = vadd.f32 %v3579, %v3791
  %v4046 = vadd.f32 %v3580, %v3796
  %v4047 = vadd.f32 %v3581, %v3801
  %v4048 = vadd.f32 %v3582, %v3806
  %v4049 = vadd.f32 %v3583, %v3811
  %v4050 = vadd.f32 %v3584, %v3816
  %v4051 = vadd.f32 %v3585, %v3821
  %v4052 = vadd.f32 %v3586, %v3826
  %v4053 = vadd.f32 %v3587, %v3831
  %v4054 = vadd.f32 %v3588, %v3836
  %v4055 = vadd.f32 %v3589, %v3841
  %v4056 = vadd.f32 %v3590, %v3846
  %v4057 = vadd.f32 %v3591, %v3851
  %v4058 = vadd.f32 %v3592, %v3856
  %v4059 = vadd.f32 %v3593, %v3861
  %v4060 = vadd.f32 %v3594, %v3866
  %v4061 = vadd.f32 %v3595, %v3871
  %v4062 = vadd.f32 %v3596, %v3876
  %v4063 = vadd.f32 %v3597, %v3881
  %v4064 = vadd.f32 %v3598, %v3886
  %v4065 = vadd.f32 %v3599, %v3891
  %v4066 = vadd.f32 %v3600, %v3896
  %v4067 = vadd.f32 %v3601, %v3901
  %v4068 = vadd.f32 %v3602, %v3906
  %v4069 = vadd.f32 %v3603, %v3911
  %v4070 = vadd.f32 %v3604, %v3916
  %v4071 = vadd.f32 %v3605, %v3921
  %v4072 = vadd.f32 %v3606, %v3926
  %v4073 = vadd.f32 %v3607, %v3931
  %v4074 = vadd.f32 %v3608, %v3936
  %v4075 = vadd.f32 %v3609, %v3941
  %v4076 = vadd.f32 %v3610, %v3946
  %v4077 = vadd.f32 %v3611, %v3951
  %v4078 = vadd.f32 %v3612, %v3956
  %v4079 = vadd.f32 %v3613, %v3961
  %v4080 = vadd.f32 %v3614, %v3966
  %v4081 = vadd.f32 %v3615, %v3971
  %v4082 = vadd.f32 %v3616, %v3976
  %v4083 = vadd.f32 %v3617, %v3981
  %v4084 = vadd.f32 %v3618, %v3986
  %v4085 = vadd.f32 %v3619, %v3991
  %v4086 = vadd.f32 %v3620, %v3996
  %v4087 = vadd.f32 %v3621, %v4001
  %v4088 = vadd.f32 %v3622, %v4006
  %v4089 = vadd.f32 %v3623, %v4011
  %v4090 = vadd.f32 %v3624, %v4016
  %v4091 = vadd.f32 %v3625, %v4021
  %v4092 = vadd.f32 %v3626, %v4026
  %v4095 = vrot.slane %v121, 1
  %v4096 = vrot.slane %v122, 1
  %v4097 = vsel %vm275, %v4095, %v4096
  %v4098 = vrot.slane %v123, 1
  %v4099 = vsel %vm275, %v4096, %v4098
  %v4100 = vrot.slane %v175, 1
  %v4101 = vrot.slane %v176, 1
  %v4102 = vsel %vm275, %v4100, %v4101
  %v4103 = vrot.slane %v177, 1
  %v4104 = vsel %vm275, %v4101, %v4103
  %s4105 = scalar_lea.vmem %s5, 28
  %v4106 = vld [vmem:[%s4105] sm:$0x7]
  %v4107 = vsel %vm438, %v4097, 0
  %v4109 = vsel %vm438, %v4099, 0
  %v4111 = vsel %vm438, %v4102, 0
  %v4113 = vsel %vm438, %v4104, 0
  %v4116 = vsel %vm567, %v4106, 0
  %4118 = vmatprep.subr.mxu0 0.0
  %4119 = vmatpush1.msra.mxu0 %v4116
  %4120 = vmatprep.subr.mxu0 0.0
  %4121 = vmatpush1.msra.mxu0 0.0
  %4122 = vmatprep.subr.mxu0 0.0
  %4123 = vmatpush1.msra.mxu0 0.0
  %4124 = vmatprep.subr.mxu0 0.0
  %4125 = vmatpush1.msra.mxu0 0.0
  %4126 = vmatprep.subr.mxu0 0.0
  %4127 = vmatpush1.msra.mxu0 0.0
  %4128 = vmatprep.subr.mxu0 0.0
  %4129 = vmatpush1.msra.mxu0 0.0
  %4130 = vmatprep.subr.mxu0 0.0
  %4131 = vmatpush1.msra.mxu0 0.0
  %4132 = vmatprep.subr.mxu0 0.0
  %4133 = vmatpush1.msra.mxu0 0.0
  %4134 = vmatprep.subr.mxu0 0.0
  %4135 = vmatpush1.msra.mxu0 0.0
  %4136 = vmatprep.subr.mxu0 0.0
  %4137 = vmatpush1.msra.mxu0 0.0
  %4138 = vmatprep.subr.mxu0 0.0
  %4139 = vmatpush1.msra.mxu0 0.0
  %4140 = vmatprep.subr.mxu0 0.0
  %4141 = vmatpush1.msra.mxu0 0.0
  %4142 = vmatprep.subr.mxu0 0.0
  %4143 = vmatpush1.msra.mxu0 0.0
  %4144 = vmatprep.subr.mxu0 0.0
  %4145 = vmatpush1.msra.mxu0 0.0
  %4146 = vmatprep.subr.mxu0 0.0
  %4147 = vmatpush1.msra.mxu0 0.0
  %4148 = vmatprep.subr.mxu0 0.0
  %4149 = vmatpush1.msra.mxu0 0.0
  %4150 = vmatprep.subr.mxu0 0.0
  %4151 = vmatpush1.msra.mxu0 0.0
  %4152 = vmatprep.subr.mxu0 0.0
  %4153 = vmatpush1.msra.mxu0 0.0
  %4154 = vmatprep.subr.mxu0 0.0
  %4155 = vmatpush1.msra.mxu0 0.0
  %4156 = vmatprep.subr.mxu0 0.0
  %4157 = vmatpush1.msra.mxu0 0.0
  %4158 = vmatprep.subr.mxu0 0.0
  %4159 = vmatpush1.msra.mxu0 0.0
  %4160 = vmatprep.subr.mxu0 0.0
  %4161 = vmatpush1.msra.mxu0 0.0
  %4162 = vmatprep.subr.mxu0 0.0
  %4163 = vmatpush1.msra.mxu0 0.0
  %4164 = vmatprep.subr.mxu0 0.0
  %4165 = vmatpush1.msra.mxu0 0.0
  %4166 = vmatprep.subr.mxu0 0.0
  %4167 = vmatpush1.msra.mxu0 0.0
  %4168 = vmatprep.subr.mxu0 0.0
  %4169 = vmatpush1.msra.mxu0 0.0
  %4170 = vmatprep.subr.mxu0 0.0
  %4171 = vmatpush1.msra.mxu0 0.0
  %4172 = vmatprep.subr.mxu0 0.0
  %4173 = vmatpush1.msra.mxu0 0.0
  %4174 = vmatprep.subr.mxu0 0.0
  %4175 = vmatpush1.msra.mxu0 0.0
  %4176 = vmatprep.subr.mxu0 0.0
  %4177 = vmatpush1.msra.mxu0 0.0
  %4178 = vmatprep.subr.mxu0 0.0
  %4179 = vmatpush1.msra.mxu0 0.0
  %4180 = vmatprep.subr.mxu0 0.0
  %4181 = vmatpush1.msra.mxu0 0.0
  %4182 = vmatprep.mubr.f32.mxu0 0.0
  %4183 = vmatmul.mubr.f32.gmra.mrb[0].mxu0 %v447
  %v4184 = vpop.f32.mrb[0].mxu0
  %v4185 = vadd.f32 0.0, %v4184
  %v4186 = vpop.f32.mrb[0].mxu0
  %4187 = vmatprep.mubr.f32.mxu0 0.0
  %4188 = vmatmul.mubr.f32.gmra.mrb[0].mxu0 %v449
  %v4189 = vpop.f32.mrb[0].mxu0
  %v4190 = vadd.f32 0.0, %v4189
  %v4191 = vpop.f32.mrb[0].mxu0
  %4192 = vmatprep.mubr.f32.mxu0 0.0
  %4193 = vmatmul.mubr.f32.gmra.mrb[0].mxu0 %v451
  %v4194 = vpop.f32.mrb[0].mxu0
  %v4195 = vadd.f32 0.0, %v4194
  %v4196 = vpop.f32.mrb[0].mxu0
  %4197 = vmatprep.mubr.f32.mxu0 0.0
  %4198 = vmatmul.mubr.f32.gmra.mrb[0].mxu0 %v453
  %v4199 = vpop.f32.mrb[0].mxu0
  %v4200 = vadd.f32 0.0, %v4199
  %v4201 = vpop.f32.mrb[0].mxu0
  %4202 = vmatprep.mubr.f32.mxu0 0.0
  %4203 = vmatmul.mubr.f32.gmra.mrb[0].mxu0 %v455
  %v4204 = vpop.f32.mrb[0].mxu0
  %v4205 = vadd.f32 0.0, %v4204
  %v4206 = vpop.f32.mrb[0].mxu0
  %4207 = vmatprep.mubr.f32.mxu0 0.0
  %4208 = vmatmul.mubr.f32.gmra.mrb[0].mxu0 %v457
  %v4209 = vpop.f32.mrb[0].mxu0
  %v4210 = vadd.f32 0.0, %v4209
  %v4211 = vpop.f32.mrb[0].mxu0
  %4212 = vmatprep.mubr.f32.mxu0 0.0
  %4213 = vmatmul.mubr.f32.gmra.mrb[0].mxu0 %v459
  %v4214 = vpop.f32.mrb[0].mxu0
  %v4215 = vadd.f32 0.0, %v4214
  %v4216 = vpop.f32.mrb[0].mxu0
  %4217 = vmatprep.mubr.f32.mxu0 0.0
  %4218 = vmatmul.mubr.f32.gmra.mrb[0].mxu0 %v461
  %v4219 = vpop.f32.mrb[0].mxu0
  %v4220 = vadd.f32 0.0, %v4219
  %v4221 = vpop.f32.mrb[0].mxu0
  %4222 = vmatprep.mubr.f32.mxu0 0.0
  %4223 = vmatmul.mubr.f32.gmra.mrb[0].mxu0 %v463
  %v4224 = vpop.f32.mrb[0].mxu0
  %v4225 = vadd.f32 0.0, %v4224
  %v4226 = vpop.f32.mrb[0].mxu0
  %4227 = vmatprep.mubr.f32.mxu0 0.0
  %4228 = vmatmul.mubr.f32.gmra.mrb[0].mxu0 %v465
  %v4229 = vpop.f32.mrb[0].mxu0
  %v4230 = vadd.f32 0.0, %v4229
  %v4231 = vpop.f32.mrb[0].mxu0
  %4232 = vmatprep.mubr.f32.mxu0 0.0
  %4233 = vmatmul.mubr.f32.gmra.mrb[0].mxu0 %v467
  %v4234 = vpop.f32.mrb[0].mxu0
  %v4235 = vadd.f32 0.0, %v4234
  %v4236 = vpop.f32.mrb[0].mxu0
  %4237 = vmatprep.mubr.f32.mxu0 0.0
  %4238 = vmatmul.mubr.f32.gmra.mrb[0].mxu0 %v469
  %v4239 = vpop.f32.mrb[0].mxu0
  %v4240 = vadd.f32 0.0, %v4239
  %v4241 = vpop.f32.mrb[0].mxu0
  %4242 = vmatprep.mubr.f32.mxu0 0.0
  %4243 = vmatmul.mubr.f32.gmra.mrb[0].mxu0 %v471
  %v4244 = vpop.f32.mrb[0].mxu0
  %v4245 = vadd.f32 0.0, %v4244
  %v4246 = vpop.f32.mrb[0].mxu0
  %4247 = vmatprep.mubr.f32.mxu0 0.0
  %4248 = vmatmul.mubr.f32.gmra.mrb[0].mxu0 %v473
  %v4249 = vpop.f32.mrb[0].mxu0
  %v4250 = vadd.f32 0.0, %v4249
  %v4251 = vpop.f32.mrb[0].mxu0
  %4252 = vmatprep.mubr.f32.mxu0 0.0
  %4253 = vmatmul.mubr.f32.gmra.mrb[0].mxu0 %v475
  %v4254 = vpop.f32.mrb[0].mxu0
  %v4255 = vadd.f32 0.0, %v4254
  %v4256 = vpop.f32.mrb[0].mxu0
  %4257 = vmatprep.mubr.f32.mxu0 0.0
  %4258 = vmatmul.mubr.f32.gmra.mrb[0].mxu0 %v477
  %v4259 = vpop.f32.mrb[0].mxu0
  %v4260 = vadd.f32 0.0, %v4259
  %v4261 = vpop.f32.mrb[0].mxu0
  %4262 = vmatprep.mubr.f32.mxu0 0.0
  %4263 = vmatmul.mubr.f32.gmra.mrb[0].mxu0 %v479
  %v4264 = vpop.f32.mrb[0].mxu0
  %v4265 = vadd.f32 0.0, %v4264
  %v4266 = vpop.f32.mrb[0].mxu0
  %4267 = vmatprep.mubr.f32.mxu0 0.0
  %4268 = vmatmul.mubr.f32.gmra.mrb[0].mxu0 %v481
  %v4269 = vpop.f32.mrb[0].mxu0
  %v4270 = vadd.f32 0.0, %v4269
  %v4271 = vpop.f32.mrb[0].mxu0
  %4272 = vmatprep.mubr.f32.mxu0 0.0
  %4273 = vmatmul.mubr.f32.gmra.mrb[0].mxu0 %v483
  %v4274 = vpop.f32.mrb[0].mxu0
  %v4275 = vadd.f32 0.0, %v4274
  %v4276 = vpop.f32.mrb[0].mxu0
  %4277 = vmatprep.mubr.f32.mxu0 0.0
  %4278 = vmatmul.mubr.f32.gmra.mrb[0].mxu0 %v485
  %v4279 = vpop.f32.mrb[0].mxu0
  %v4280 = vadd.f32 0.0, %v4279
  %v4281 = vpop.f32.mrb[0].mxu0
  %4282 = vmatprep.mubr.f32.mxu0 0.0
  %4283 = vmatmul.mubr.f32.gmra.mrb[0].mxu0 %v487
  %v4284 = vpop.f32.mrb[0].mxu0
  %v4285 = vadd.f32 0.0, %v4284
  %v4286 = vpop.f32.mrb[0].mxu0
  %4287 = vmatprep.mubr.f32.mxu0 0.0
  %4288 = vmatmul.mubr.f32.gmra.mrb[0].mxu0 %v489
  %v4289 = vpop.f32.mrb[0].mxu0
  %v4290 = vadd.f32 0.0, %v4289
  %v4291 = vpop.f32.mrb[0].mxu0
  %4292 = vmatprep.mubr.f32.mxu0 0.0
  %4293 = vmatmul.mubr.f32.gmra.mrb[0].mxu0 %v491
  %v4294 = vpop.f32.mrb[0].mxu0
  %v4295 = vadd.f32 0.0, %v4294
  %v4296 = vpop.f32.mrb[0].mxu0
  %4297 = vmatprep.mubr.f32.mxu0 0.0
  %4298 = vmatmul.mubr.f32.gmra.mrb[0].mxu0 %v493
  %v4299 = vpop.f32.mrb[0].mxu0
  %v4300 = vadd.f32 0.0, %v4299
  %v4301 = vpop.f32.mrb[0].mxu0
  %4302 = vmatprep.mubr.f32.mxu0 0.0
  %4303 = vmatmul.mubr.f32.gmra.mrb[0].mxu0 %v495
  %v4304 = vpop.f32.mrb[0].mxu0
  %v4305 = vadd.f32 0.0, %v4304
  %v4306 = vpop.f32.mrb[0].mxu0
  %4307 = vmatprep.mubr.f32.mxu0 0.0
  %4308 = vmatmul.mubr.f32.gmra.mrb[0].mxu0 %v497
  %v4309 = vpop.f32.mrb[0].mxu0
  %v4310 = vadd.f32 0.0, %v4309
  %v4311 = vpop.f32.mrb[0].mxu0
  %4312 = vmatprep.mubr.f32.mxu0 0.0
  %4313 = vmatmul.mubr.f32.gmra.mrb[0].mxu0 %v499
  %v4314 = vpop.f32.mrb[0].mxu0
  %v4315 = vadd.f32 0.0, %v4314
  %v4316 = vpop.f32.mrb[0].mxu0
  %4317 = vmatprep.mubr.f32.mxu0 0.0
  %4318 = vmatmul.mubr.f32.gmra.mrb[0].mxu0 %v501
  %v4319 = vpop.f32.mrb[0].mxu0
  %v4320 = vadd.f32 0.0, %v4319
  %v4321 = vpop.f32.mrb[0].mxu0
  %4322 = vmatprep.mubr.f32.mxu0 0.0
  %4323 = vmatmul.mubr.f32.gmra.mrb[0].mxu0 %v2695
  %v4324 = vpop.f32.mrb[0].mxu0
  %v4325 = vadd.f32 0.0, %v4324
  %v4326 = vpop.f32.mrb[0].mxu0
  %4327 = vmatprep.mubr.f32.mxu0 0.0
  %4328 = vmatmul.mubr.f32.gmra.mrb[0].mxu0 %v2697
  %v4329 = vpop.f32.mrb[0].mxu0
  %v4330 = vadd.f32 0.0, %v4329
  %v4331 = vpop.f32.mrb[0].mxu0
  %4332 = vmatprep.mubr.f32.mxu0 0.0
  %4333 = vmatmul.mubr.f32.gmra.mrb[0].mxu0 %v4107
  %v4334 = vpop.f32.mrb[0].mxu0
  %v4335 = vadd.f32 0.0, %v4334
  %v4336 = vpop.f32.mrb[0].mxu0
  %4337 = vmatprep.mubr.f32.mxu0 0.0
  %4338 = vmatmul.mubr.f32.gmra.mrb[0].mxu0 %v4109
  %v4339 = vpop.f32.mrb[0].mxu0
  %v4340 = vadd.f32 0.0, %v4339
  %v4341 = vpop.f32.mrb[0].mxu0
  %4342 = vmatprep.mubr.f32.mxu0 0.0
  %4343 = vmatmul.mubr.f32.gmra.mrb[0].mxu0 %v511
  %v4344 = vpop.f32.mrb[0].mxu0
  %v4345 = vadd.f32 0.0, %v4344
  %v4346 = vpop.f32.mrb[0].mxu0
  %4347 = vmatprep.mubr.f32.mxu0 0.0
  %4348 = vmatmul.mubr.f32.gmra.mrb[0].mxu0 %v513
  %v4349 = vpop.f32.mrb[0].mxu0
  %v4350 = vadd.f32 0.0, %v4349
  %v4351 = vpop.f32.mrb[0].mxu0
  %4352 = vmatprep.mubr.f32.mxu0 0.0
  %4353 = vmatmul.mubr.f32.gmra.mrb[0].mxu0 %v515
  %v4354 = vpop.f32.mrb[0].mxu0
  %v4355 = vadd.f32 0.0, %v4354
  %v4356 = vpop.f32.mrb[0].mxu0
  %4357 = vmatprep.mubr.f32.mxu0 0.0
  %4358 = vmatmul.mubr.f32.gmra.mrb[0].mxu0 %v517
  %v4359 = vpop.f32.mrb[0].mxu0
  %v4360 = vadd.f32 0.0, %v4359
  %v4361 = vpop.f32.mrb[0].mxu0
  %4362 = vmatprep.mubr.f32.mxu0 0.0
  %4363 = vmatmul.mubr.f32.gmra.mrb[0].mxu0 %v519
  %v4364 = vpop.f32.mrb[0].mxu0
  %v4365 = vadd.f32 0.0, %v4364
  %v4366 = vpop.f32.mrb[0].mxu0
  %4367 = vmatprep.mubr.f32.mxu0 0.0
  %4368 = vmatmul.mubr.f32.gmra.mrb[0].mxu0 %v521
  %v4369 = vpop.f32.mrb[0].mxu0
  %v4370 = vadd.f32 0.0, %v4369
  %v4371 = vpop.f32.mrb[0].mxu0
  %4372 = vmatprep.mubr.f32.mxu0 0.0
  %4373 = vmatmul.mubr.f32.gmra.mrb[0].mxu0 %v523
  %v4374 = vpop.f32.mrb[0].mxu0
  %v4375 = vadd.f32 0.0, %v4374
  %v4376 = vpop.f32.mrb[0].mxu0
  %4377 = vmatprep.mubr.f32.mxu0 0.0
  %4378 = vmatmul.mubr.f32.gmra.mrb[0].mxu0 %v525
  %v4379 = vpop.f32.mrb[0].mxu0
  %v4380 = vadd.f32 0.0, %v4379
  %v4381 = vpop.f32.mrb[0].mxu0
  %4382 = vmatprep.mubr.f32.mxu0 0.0
  %4383 = vmatmul.mubr.f32.gmra.mrb[0].mxu0 %v527
  %v4384 = vpop.f32.mrb[0].mxu0
  %v4385 = vadd.f32 0.0, %v4384
  %v4386 = vpop.f32.mrb[0].mxu0
  %4387 = vmatprep.mubr.f32.mxu0 0.0
  %4388 = vmatmul.mubr.f32.gmra.mrb[0].mxu0 %v529
  %v4389 = vpop.f32.mrb[0].mxu0
  %v4390 = vadd.f32 0.0, %v4389
  %v4391 = vpop.f32.mrb[0].mxu0
  %4392 = vmatprep.mubr.f32.mxu0 0.0
  %4393 = vmatmul.mubr.f32.gmra.mrb[0].mxu0 %v531
  %v4394 = vpop.f32.mrb[0].mxu0
  %v4395 = vadd.f32 0.0, %v4394
  %v4396 = vpop.f32.mrb[0].mxu0
  %4397 = vmatprep.mubr.f32.mxu0 0.0
  %4398 = vmatmul.mubr.f32.gmra.mrb[0].mxu0 %v533
  %v4399 = vpop.f32.mrb[0].mxu0
  %v4400 = vadd.f32 0.0, %v4399
  %v4401 = vpop.f32.mrb[0].mxu0
  %4402 = vmatprep.mubr.f32.mxu0 0.0
  %4403 = vmatmul.mubr.f32.gmra.mrb[0].mxu0 %v535
  %v4404 = vpop.f32.mrb[0].mxu0
  %v4405 = vadd.f32 0.0, %v4404
  %v4406 = vpop.f32.mrb[0].mxu0
  %4407 = vmatprep.mubr.f32.mxu0 0.0
  %4408 = vmatmul.mubr.f32.gmra.mrb[0].mxu0 %v537
  %v4409 = vpop.f32.mrb[0].mxu0
  %v4410 = vadd.f32 0.0, %v4409
  %v4411 = vpop.f32.mrb[0].mxu0
  %4412 = vmatprep.mubr.f32.mxu0 0.0
  %4413 = vmatmul.mubr.f32.gmra.mrb[0].mxu0 %v539
  %v4414 = vpop.f32.mrb[0].mxu0
  %v4415 = vadd.f32 0.0, %v4414
  %v4416 = vpop.f32.mrb[0].mxu0
  %4417 = vmatprep.mubr.f32.mxu0 0.0
  %4418 = vmatmul.mubr.f32.gmra.mrb[0].mxu0 %v541
  %v4419 = vpop.f32.mrb[0].mxu0
  %v4420 = vadd.f32 0.0, %v4419
  %v4421 = vpop.f32.mrb[0].mxu0
  %4422 = vmatprep.mubr.f32.mxu0 0.0
  %4423 = vmatmul.mubr.f32.gmra.mrb[0].mxu0 %v543
  %v4424 = vpop.f32.mrb[0].mxu0
  %v4425 = vadd.f32 0.0, %v4424
  %v4426 = vpop.f32.mrb[0].mxu0
  %4427 = vmatprep.mubr.f32.mxu0 0.0
  %4428 = vmatmul.mubr.f32.gmra.mrb[0].mxu0 %v545
  %v4429 = vpop.f32.mrb[0].mxu0
  %v4430 = vadd.f32 0.0, %v4429
  %v4431 = vpop.f32.mrb[0].mxu0
  %4432 = vmatprep.mubr.f32.mxu0 0.0
  %4433 = vmatmul.mubr.f32.gmra.mrb[0].mxu0 %v547
  %v4434 = vpop.f32.mrb[0].mxu0
  %v4435 = vadd.f32 0.0, %v4434
  %v4436 = vpop.f32.mrb[0].mxu0
  %4437 = vmatprep.mubr.f32.mxu0 0.0
  %4438 = vmatmul.mubr.f32.gmra.mrb[0].mxu0 %v549
  %v4439 = vpop.f32.mrb[0].mxu0
  %v4440 = vadd.f32 0.0, %v4439
  %v4441 = vpop.f32.mrb[0].mxu0
  %4442 = vmatprep.mubr.f32.mxu0 0.0
  %4443 = vmatmul.mubr.f32.gmra.mrb[0].mxu0 %v551
  %v4444 = vpop.f32.mrb[0].mxu0
  %v4445 = vadd.f32 0.0, %v4444
  %v4446 = vpop.f32.mrb[0].mxu0
  %4447 = vmatprep.mubr.f32.mxu0 0.0
  %4448 = vmatmul.mubr.f32.gmra.mrb[0].mxu0 %v553
  %v4449 = vpop.f32.mrb[0].mxu0
  %v4450 = vadd.f32 0.0, %v4449
  %v4451 = vpop.f32.mrb[0].mxu0
  %4452 = vmatprep.mubr.f32.mxu0 0.0
  %4453 = vmatmul.mubr.f32.gmra.mrb[0].mxu0 %v555
  %v4454 = vpop.f32.mrb[0].mxu0
  %v4455 = vadd.f32 0.0, %v4454
  %v4456 = vpop.f32.mrb[0].mxu0
  %4457 = vmatprep.mubr.f32.mxu0 0.0
  %4458 = vmatmul.mubr.f32.gmra.mrb[0].mxu0 %v557
  %v4459 = vpop.f32.mrb[0].mxu0
  %v4460 = vadd.f32 0.0, %v4459
  %v4461 = vpop.f32.mrb[0].mxu0
  %4462 = vmatprep.mubr.f32.mxu0 0.0
  %4463 = vmatmul.mubr.f32.gmra.mrb[0].mxu0 %v559
  %v4464 = vpop.f32.mrb[0].mxu0
  %v4465 = vadd.f32 0.0, %v4464
  %v4466 = vpop.f32.mrb[0].mxu0
  %4467 = vmatprep.mubr.f32.mxu0 0.0
  %4468 = vmatmul.mubr.f32.gmra.mrb[0].mxu0 %v561
  %v4469 = vpop.f32.mrb[0].mxu0
  %v4470 = vadd.f32 0.0, %v4469
  %v4471 = vpop.f32.mrb[0].mxu0
  %4472 = vmatprep.mubr.f32.mxu0 0.0
  %4473 = vmatmul.mubr.f32.gmra.mrb[0].mxu0 %v563
  %v4474 = vpop.f32.mrb[0].mxu0
  %v4475 = vadd.f32 0.0, %v4474
  %v4476 = vpop.f32.mrb[0].mxu0
  %4477 = vmatprep.mubr.f32.mxu0 0.0
  %4478 = vmatmul.mubr.f32.gmra.mrb[0].mxu0 %v565
  %v4479 = vpop.f32.mrb[0].mxu0
  %v4480 = vadd.f32 0.0, %v4479
  %v4481 = vpop.f32.mrb[0].mxu0
  %4482 = vmatprep.mubr.f32.mxu0 0.0
  %4483 = vmatmul.mubr.f32.gmra.mrb[0].mxu0 %v2699
  %v4484 = vpop.f32.mrb[0].mxu0
  %v4485 = vadd.f32 0.0, %v4484
  %v4486 = vpop.f32.mrb[0].mxu0
  %4487 = vmatprep.mubr.f32.mxu0 0.0
  %4488 = vmatmul.mubr.f32.gmra.mrb[0].mxu0 %v2701
  %v4489 = vpop.f32.mrb[0].mxu0
  %v4490 = vadd.f32 0.0, %v4489
  %v4491 = vpop.f32.mrb[0].mxu0
  %4492 = vmatprep.mubr.f32.mxu0 0.0
  %4493 = vmatmul.mubr.f32.gmra.mrb[0].mxu0 %v4111
  %v4494 = vpop.f32.mrb[0].mxu0
  %v4495 = vadd.f32 0.0, %v4494
  %v4496 = vpop.f32.mrb[0].mxu0
  %4497 = vmatprep.mubr.f32.mxu0 0.0
  %4498 = vmatmul.mubr.f32.gmra.mrb[0].mxu0 %v4113
  %v4499 = vpop.f32.mrb[0].mxu0
  %v4500 = vadd.f32 0.0, %v4499
  %v4501 = vpop.f32.mrb[0].mxu0
  %4502 = vdwg.mxu0
  %v4503 = vadd.f32 %v4029, %v4185
  %v4504 = vadd.f32 %v4030, %v4190
  %v4505 = vadd.f32 %v4031, %v4195
  %v4506 = vadd.f32 %v4032, %v4200
  %v4507 = vadd.f32 %v4033, %v4205
  %v4508 = vadd.f32 %v4034, %v4210
  %v4509 = vadd.f32 %v4035, %v4215
  %v4510 = vadd.f32 %v4036, %v4220
  %v4511 = vadd.f32 %v4037, %v4225
  %v4512 = vadd.f32 %v4038, %v4230
  %v4513 = vadd.f32 %v4039, %v4235
  %v4514 = vadd.f32 %v4040, %v4240
  %v4515 = vadd.f32 %v4041, %v4245
  %v4516 = vadd.f32 %v4042, %v4250
  %v4517 = vadd.f32 %v4043, %v4255
  %v4518 = vadd.f32 %v4044, %v4260
  %v4519 = vadd.f32 %v4045, %v4265
  %v4520 = vadd.f32 %v4046, %v4270
  %v4521 = vadd.f32 %v4047, %v4275
  %v4522 = vadd.f32 %v4048, %v4280
  %v4523 = vadd.f32 %v4049, %v4285
  %v4524 = vadd.f32 %v4050, %v4290
  %v4525 = vadd.f32 %v4051, %v4295
  %v4526 = vadd.f32 %v4052, %v4300
  %v4527 = vadd.f32 %v4053, %v4305
  %v4528 = vadd.f32 %v4054, %v4310
  %v4529 = vadd.f32 %v4055, %v4315
  %v4530 = vadd.f32 %v4056, %v4320
  %v4531 = vadd.f32 %v4057, %v4325
  %v4532 = vadd.f32 %v4058, %v4330
  %v4533 = vadd.f32 %v4059, %v4335
  %v4534 = vadd.f32 %v4060, %v4340
  %v4535 = vadd.f32 %v4061, %v4345
  %v4536 = vadd.f32 %v4062, %v4350
  %v4537 = vadd.f32 %v4063, %v4355
  %v4538 = vadd.f32 %v4064, %v4360
  %v4539 = vadd.f32 %v4065, %v4365
  %v4540 = vadd.f32 %v4066, %v4370
  %v4541 = vadd.f32 %v4067, %v4375
  %v4542 = vadd.f32 %v4068, %v4380
  %v4543 = vadd.f32 %v4069, %v4385
  %v4544 = vadd.f32 %v4070, %v4390
  %v4545 = vadd.f32 %v4071, %v4395
  %v4546 = vadd.f32 %v4072, %v4400
  %v4547 = vadd.f32 %v4073, %v4405
  %v4548 = vadd.f32 %v4074, %v4410
  %v4549 = vadd.f32 %v4075, %v4415
  %v4550 = vadd.f32 %v4076, %v4420
  %v4551 = vadd.f32 %v4077, %v4425
  %v4552 = vadd.f32 %v4078, %v4430
  %v4553 = vadd.f32 %v4079, %v4435
  %v4554 = vadd.f32 %v4080, %v4440
  %v4555 = vadd.f32 %v4081, %v4445
  %v4556 = vadd.f32 %v4082, %v4450
  %v4557 = vadd.f32 %v4083, %v4455
  %v4558 = vadd.f32 %v4084, %v4460
  %v4559 = vadd.f32 %v4085, %v4465
  %v4560 = vadd.f32 %v4086, %v4470
  %v4561 = vadd.f32 %v4087, %v4475
  %v4562 = vadd.f32 %v4088, %v4480
  %v4563 = vadd.f32 %v4089, %v4485
  %v4564 = vadd.f32 %v4090, %v4490
  %v4565 = vadd.f32 %v4091, %v4495
  %v4566 = vadd.f32 %v4092, %v4500
  %v4567 = vrot.slane %v121, 2
  %v4568 = vrot.slane %v122, 2
  %v4569 = vsel %vm1472, %v4567, %v4568
  %v4570 = vrot.slane %v123, 2
  %v4571 = vsel %vm1472, %v4568, %v4570
  %v4572 = vrot.slane %v175, 2
  %v4573 = vrot.slane %v176, 2
  %v4574 = vsel %vm1472, %v4572, %v4573
  %v4575 = vrot.slane %v177, 2
  %v4576 = vsel %vm1472, %v4573, %v4575
  %s4577 = scalar_lea.vmem %s5, 32
  %v4578 = vld [vmem:[%s4577] sm:$0x7]
  %v4579 = vsel %vm438, %v4569, 0
  %v4581 = vsel %vm438, %v4571, 0
  %v4583 = vsel %vm438, %v4574, 0
  %v4585 = vsel %vm438, %v4576, 0
  %v4588 = vsel %vm567, %v4578, 0
  %4590 = vmatprep.subr.mxu0 0.0
  %4591 = vmatpush1.msra.mxu0 %v4588
  %4592 = vmatprep.subr.mxu0 0.0
  %4593 = vmatpush1.msra.mxu0 0.0
  %4594 = vmatprep.subr.mxu0 0.0
  %4595 = vmatpush1.msra.mxu0 0.0
  %4596 = vmatprep.subr.mxu0 0.0
  %4597 = vmatpush1.msra.mxu0 0.0
  %4598 = vmatprep.subr.mxu0 0.0
  %4599 = vmatpush1.msra.mxu0 0.0
  %4600 = vmatprep.subr.mxu0 0.0
  %4601 = vmatpush1.msra.mxu0 0.0
  %4602 = vmatprep.subr.mxu0 0.0
  %4603 = vmatpush1.msra.mxu0 0.0
  %4604 = vmatprep.subr.mxu0 0.0
  %4605 = vmatpush1.msra.mxu0 0.0
  %4606 = vmatprep.subr.mxu0 0.0
  %4607 = vmatpush1.msra.mxu0 0.0
  %4608 = vmatprep.subr.mxu0 0.0
  %4609 = vmatpush1.msra.mxu0 0.0
  %4610 = vmatprep.subr.mxu0 0.0
  %4611 = vmatpush1.msra.mxu0 0.0
  %4612 = vmatprep.subr.mxu0 0.0
  %4613 = vmatpush1.msra.mxu0 0.0
  %4614 = vmatprep.subr.mxu0 0.0
  %4615 = vmatpush1.msra.mxu0 0.0
  %4616 = vmatprep.subr.mxu0 0.0
  %4617 = vmatpush1.msra.mxu0 0.0
  %4618 = vmatprep.subr.mxu0 0.0
  %4619 = vmatpush1.msra.mxu0 0.0
  %4620 = vmatprep.subr.mxu0 0.0
  %4621 = vmatpush1.msra.mxu0 0.0
  %4622 = vmatprep.subr.mxu0 0.0
  %4623 = vmatpush1.msra.mxu0 0.0
  %4624 = vmatprep.subr.mxu0 0.0
  %4625 = vmatpush1.msra.mxu0 0.0
  %4626 = vmatprep.subr.mxu0 0.0
  %4627 = vmatpush1.msra.mxu0 0.0
  %4628 = vmatprep.subr.mxu0 0.0
  %4629 = vmatpush1.msra.mxu0 0.0
  %4630 = vmatprep.subr.mxu0 0.0
  %4631 = vmatpush1.msra.mxu0 0.0
  %4632 = vmatprep.subr.mxu0 0.0
  %4633 = vmatpush1.msra.mxu0 0.0
  %4634 = vmatprep.subr.mxu0 0.0
  %4635 = vmatpush1.msra.mxu0 0.0
  %4636 = vmatprep.subr.mxu0 0.0
  %4637 = vmatpush1.msra.mxu0 0.0
  %4638 = vmatprep.subr.mxu0 0.0
  %4639 = vmatpush1.msra.mxu0 0.0
  %4640 = vmatprep.subr.mxu0 0.0
  %4641 = vmatpush1.msra.mxu0 0.0
  %4642 = vmatprep.subr.mxu0 0.0
  %4643 = vmatpush1.msra.mxu0 0.0
  %4644 = vmatprep.subr.mxu0 0.0
  %4645 = vmatpush1.msra.mxu0 0.0
  %4646 = vmatprep.subr.mxu0 0.0
  %4647 = vmatpush1.msra.mxu0 0.0
  %4648 = vmatprep.subr.mxu0 0.0
  %4649 = vmatpush1.msra.mxu0 0.0
  %4650 = vmatprep.subr.mxu0 0.0
  %4651 = vmatpush1.msra.mxu0 0.0
  %4652 = vmatprep.subr.mxu0 0.0
  %4653 = vmatpush1.msra.mxu0 0.0
  %4654 = vmatprep.mubr.f32.mxu0 0.0
  %4655 = vmatmul.mubr.f32.gmra.mrb[0].mxu0 %v1643
  %v4656 = vpop.f32.mrb[0].mxu0
  %v4657 = vadd.f32 0.0, %v4656
  %v4658 = vpop.f32.mrb[0].mxu0
  %4659 = vmatprep.mubr.f32.mxu0 0.0
  %4660 = vmatmul.mubr.f32.gmra.mrb[0].mxu0 %v1645
  %v4661 = vpop.f32.mrb[0].mxu0
  %v4662 = vadd.f32 0.0, %v4661
  %v4663 = vpop.f32.mrb[0].mxu0
  %4664 = vmatprep.mubr.f32.mxu0 0.0
  %4665 = vmatmul.mubr.f32.gmra.mrb[0].mxu0 %v1647
  %v4666 = vpop.f32.mrb[0].mxu0
  %v4667 = vadd.f32 0.0, %v4666
  %v4668 = vpop.f32.mrb[0].mxu0
  %4669 = vmatprep.mubr.f32.mxu0 0.0
  %4670 = vmatmul.mubr.f32.gmra.mrb[0].mxu0 %v1649
  %v4671 = vpop.f32.mrb[0].mxu0
  %v4672 = vadd.f32 0.0, %v4671
  %v4673 = vpop.f32.mrb[0].mxu0
  %4674 = vmatprep.mubr.f32.mxu0 0.0
  %4675 = vmatmul.mubr.f32.gmra.mrb[0].mxu0 %v1651
  %v4676 = vpop.f32.mrb[0].mxu0
  %v4677 = vadd.f32 0.0, %v4676
  %v4678 = vpop.f32.mrb[0].mxu0
  %4679 = vmatprep.mubr.f32.mxu0 0.0
  %4680 = vmatmul.mubr.f32.gmra.mrb[0].mxu0 %v1653
  %v4681 = vpop.f32.mrb[0].mxu0
  %v4682 = vadd.f32 0.0, %v4681
  %v4683 = vpop.f32.mrb[0].mxu0
  %4684 = vmatprep.mubr.f32.mxu0 0.0
  %4685 = vmatmul.mubr.f32.gmra.mrb[0].mxu0 %v1655
  %v4686 = vpop.f32.mrb[0].mxu0
  %v4687 = vadd.f32 0.0, %v4686
  %v4688 = vpop.f32.mrb[0].mxu0
  %4689 = vmatprep.mubr.f32.mxu0 0.0
  %4690 = vmatmul.mubr.f32.gmra.mrb[0].mxu0 %v1657
  %v4691 = vpop.f32.mrb[0].mxu0
  %v4692 = vadd.f32 0.0, %v4691
  %v4693 = vpop.f32.mrb[0].mxu0
  %4694 = vmatprep.mubr.f32.mxu0 0.0
  %4695 = vmatmul.mubr.f32.gmra.mrb[0].mxu0 %v1659
  %v4696 = vpop.f32.mrb[0].mxu0
  %v4697 = vadd.f32 0.0, %v4696
  %v4698 = vpop.f32.mrb[0].mxu0
  %4699 = vmatprep.mubr.f32.mxu0 0.0
  %4700 = vmatmul.mubr.f32.gmra.mrb[0].mxu0 %v1661
  %v4701 = vpop.f32.mrb[0].mxu0
  %v4702 = vadd.f32 0.0, %v4701
  %v4703 = vpop.f32.mrb[0].mxu0
  %4704 = vmatprep.mubr.f32.mxu0 0.0
  %4705 = vmatmul.mubr.f32.gmra.mrb[0].mxu0 %v1663
  %v4706 = vpop.f32.mrb[0].mxu0
  %v4707 = vadd.f32 0.0, %v4706
  %v4708 = vpop.f32.mrb[0].mxu0
  %4709 = vmatprep.mubr.f32.mxu0 0.0
  %4710 = vmatmul.mubr.f32.gmra.mrb[0].mxu0 %v1665
  %v4711 = vpop.f32.mrb[0].mxu0
  %v4712 = vadd.f32 0.0, %v4711
  %v4713 = vpop.f32.mrb[0].mxu0
  %4714 = vmatprep.mubr.f32.mxu0 0.0
  %4715 = vmatmul.mubr.f32.gmra.mrb[0].mxu0 %v1667
  %v4716 = vpop.f32.mrb[0].mxu0
  %v4717 = vadd.f32 0.0, %v4716
  %v4718 = vpop.f32.mrb[0].mxu0
  %4719 = vmatprep.mubr.f32.mxu0 0.0
  %4720 = vmatmul.mubr.f32.gmra.mrb[0].mxu0 %v1669
  %v4721 = vpop.f32.mrb[0].mxu0
  %v4722 = vadd.f32 0.0, %v4721
  %v4723 = vpop.f32.mrb[0].mxu0
  %4724 = vmatprep.mubr.f32.mxu0 0.0
  %4725 = vmatmul.mubr.f32.gmra.mrb[0].mxu0 %v1671
  %v4726 = vpop.f32.mrb[0].mxu0
  %v4727 = vadd.f32 0.0, %v4726
  %v4728 = vpop.f32.mrb[0].mxu0
  %4729 = vmatprep.mubr.f32.mxu0 0.0
  %4730 = vmatmul.mubr.f32.gmra.mrb[0].mxu0 %v1673
  %v4731 = vpop.f32.mrb[0].mxu0
  %v4732 = vadd.f32 0.0, %v4731
  %v4733 = vpop.f32.mrb[0].mxu0
  %4734 = vmatprep.mubr.f32.mxu0 0.0
  %4735 = vmatmul.mubr.f32.gmra.mrb[0].mxu0 %v1675
  %v4736 = vpop.f32.mrb[0].mxu0
  %v4737 = vadd.f32 0.0, %v4736
  %v4738 = vpop.f32.mrb[0].mxu0
  %4739 = vmatprep.mubr.f32.mxu0 0.0
  %4740 = vmatmul.mubr.f32.gmra.mrb[0].mxu0 %v1677
  %v4741 = vpop.f32.mrb[0].mxu0
  %v4742 = vadd.f32 0.0, %v4741
  %v4743 = vpop.f32.mrb[0].mxu0
  %4744 = vmatprep.mubr.f32.mxu0 0.0
  %4745 = vmatmul.mubr.f32.gmra.mrb[0].mxu0 %v1679
  %v4746 = vpop.f32.mrb[0].mxu0
  %v4747 = vadd.f32 0.0, %v4746
  %v4748 = vpop.f32.mrb[0].mxu0
  %4749 = vmatprep.mubr.f32.mxu0 0.0
  %4750 = vmatmul.mubr.f32.gmra.mrb[0].mxu0 %v1681
  %v4751 = vpop.f32.mrb[0].mxu0
  %v4752 = vadd.f32 0.0, %v4751
  %v4753 = vpop.f32.mrb[0].mxu0
  %4754 = vmatprep.mubr.f32.mxu0 0.0
  %4755 = vmatmul.mubr.f32.gmra.mrb[0].mxu0 %v1683
  %v4756 = vpop.f32.mrb[0].mxu0
  %v4757 = vadd.f32 0.0, %v4756
  %v4758 = vpop.f32.mrb[0].mxu0
  %4759 = vmatprep.mubr.f32.mxu0 0.0
  %4760 = vmatmul.mubr.f32.gmra.mrb[0].mxu0 %v1685
  %v4761 = vpop.f32.mrb[0].mxu0
  %v4762 = vadd.f32 0.0, %v4761
  %v4763 = vpop.f32.mrb[0].mxu0
  %4764 = vmatprep.mubr.f32.mxu0 0.0
  %4765 = vmatmul.mubr.f32.gmra.mrb[0].mxu0 %v1687
  %v4766 = vpop.f32.mrb[0].mxu0
  %v4767 = vadd.f32 0.0, %v4766
  %v4768 = vpop.f32.mrb[0].mxu0
  %4769 = vmatprep.mubr.f32.mxu0 0.0
  %4770 = vmatmul.mubr.f32.gmra.mrb[0].mxu0 %v1689
  %v4771 = vpop.f32.mrb[0].mxu0
  %v4772 = vadd.f32 0.0, %v4771
  %v4773 = vpop.f32.mrb[0].mxu0
  %4774 = vmatprep.mubr.f32.mxu0 0.0
  %4775 = vmatmul.mubr.f32.gmra.mrb[0].mxu0 %v1691
  %v4776 = vpop.f32.mrb[0].mxu0
  %v4777 = vadd.f32 0.0, %v4776
  %v4778 = vpop.f32.mrb[0].mxu0
  %4779 = vmatprep.mubr.f32.mxu0 0.0
  %4780 = vmatmul.mubr.f32.gmra.mrb[0].mxu0 %v1693
  %v4781 = vpop.f32.mrb[0].mxu0
  %v4782 = vadd.f32 0.0, %v4781
  %v4783 = vpop.f32.mrb[0].mxu0
  %4784 = vmatprep.mubr.f32.mxu0 0.0
  %4785 = vmatmul.mubr.f32.gmra.mrb[0].mxu0 %v1695
  %v4786 = vpop.f32.mrb[0].mxu0
  %v4787 = vadd.f32 0.0, %v4786
  %v4788 = vpop.f32.mrb[0].mxu0
  %4789 = vmatprep.mubr.f32.mxu0 0.0
  %4790 = vmatmul.mubr.f32.gmra.mrb[0].mxu0 %v1697
  %v4791 = vpop.f32.mrb[0].mxu0
  %v4792 = vadd.f32 0.0, %v4791
  %v4793 = vpop.f32.mrb[0].mxu0
  %4794 = vmatprep.mubr.f32.mxu0 0.0
  %4795 = vmatmul.mubr.f32.gmra.mrb[0].mxu0 %v3167
  %v4796 = vpop.f32.mrb[0].mxu0
  %v4797 = vadd.f32 0.0, %v4796
  %v4798 = vpop.f32.mrb[0].mxu0
  %4799 = vmatprep.mubr.f32.mxu0 0.0
  %4800 = vmatmul.mubr.f32.gmra.mrb[0].mxu0 %v3169
  %v4801 = vpop.f32.mrb[0].mxu0
  %v4802 = vadd.f32 0.0, %v4801
  %v4803 = vpop.f32.mrb[0].mxu0
  %4804 = vmatprep.mubr.f32.mxu0 0.0
  %4805 = vmatmul.mubr.f32.gmra.mrb[0].mxu0 %v4579
  %v4806 = vpop.f32.mrb[0].mxu0
  %v4807 = vadd.f32 0.0, %v4806
  %v4808 = vpop.f32.mrb[0].mxu0
  %4809 = vmatprep.mubr.f32.mxu0 0.0
  %4810 = vmatmul.mubr.f32.gmra.mrb[0].mxu0 %v4581
  %v4811 = vpop.f32.mrb[0].mxu0
  %v4812 = vadd.f32 0.0, %v4811
  %v4813 = vpop.f32.mrb[0].mxu0
  %4814 = vmatprep.mubr.f32.mxu0 0.0
  %4815 = vmatmul.mubr.f32.gmra.mrb[0].mxu0 %v1707
  %v4816 = vpop.f32.mrb[0].mxu0
  %v4817 = vadd.f32 0.0, %v4816
  %v4818 = vpop.f32.mrb[0].mxu0
  %4819 = vmatprep.mubr.f32.mxu0 0.0
  %4820 = vmatmul.mubr.f32.gmra.mrb[0].mxu0 %v1709
  %v4821 = vpop.f32.mrb[0].mxu0
  %v4822 = vadd.f32 0.0, %v4821
  %v4823 = vpop.f32.mrb[0].mxu0
  %4824 = vmatprep.mubr.f32.mxu0 0.0
  %4825 = vmatmul.mubr.f32.gmra.mrb[0].mxu0 %v1711
  %v4826 = vpop.f32.mrb[0].mxu0
  %v4827 = vadd.f32 0.0, %v4826
  %v4828 = vpop.f32.mrb[0].mxu0
  %4829 = vmatprep.mubr.f32.mxu0 0.0
  %4830 = vmatmul.mubr.f32.gmra.mrb[0].mxu0 %v1713
  %v4831 = vpop.f32.mrb[0].mxu0
  %v4832 = vadd.f32 0.0, %v4831
  %v4833 = vpop.f32.mrb[0].mxu0
  %4834 = vmatprep.mubr.f32.mxu0 0.0
  %4835 = vmatmul.mubr.f32.gmra.mrb[0].mxu0 %v1715
  %v4836 = vpop.f32.mrb[0].mxu0
  %v4837 = vadd.f32 0.0, %v4836
  %v4838 = vpop.f32.mrb[0].mxu0
  %4839 = vmatprep.mubr.f32.mxu0 0.0
  %4840 = vmatmul.mubr.f32.gmra.mrb[0].mxu0 %v1717
  %v4841 = vpop.f32.mrb[0].mxu0
  %v4842 = vadd.f32 0.0, %v4841
  %v4843 = vpop.f32.mrb[0].mxu0
  %4844 = vmatprep.mubr.f32.mxu0 0.0
  %4845 = vmatmul.mubr.f32.gmra.mrb[0].mxu0 %v1719
  %v4846 = vpop.f32.mrb[0].mxu0
  %v4847 = vadd.f32 0.0, %v4846
  %v4848 = vpop.f32.mrb[0].mxu0
  %4849 = vmatprep.mubr.f32.mxu0 0.0
  %4850 = vmatmul.mubr.f32.gmra.mrb[0].mxu0 %v1721
  %v4851 = vpop.f32.mrb[0].mxu0
  %v4852 = vadd.f32 0.0, %v4851
  %v4853 = vpop.f32.mrb[0].mxu0
  %4854 = vmatprep.mubr.f32.mxu0 0.0
  %4855 = vmatmul.mubr.f32.gmra.mrb[0].mxu0 %v1723
  %v4856 = vpop.f32.mrb[0].mxu0
  %v4857 = vadd.f32 0.0, %v4856
  %v4858 = vpop.f32.mrb[0].mxu0
  %4859 = vmatprep.mubr.f32.mxu0 0.0
  %4860 = vmatmul.mubr.f32.gmra.mrb[0].mxu0 %v1725
  %v4861 = vpop.f32.mrb[0].mxu0
  %v4862 = vadd.f32 0.0, %v4861
  %v4863 = vpop.f32.mrb[0].mxu0
  %4864 = vmatprep.mubr.f32.mxu0 0.0
  %4865 = vmatmul.mubr.f32.gmra.mrb[0].mxu0 %v1727
  %v4866 = vpop.f32.mrb[0].mxu0
  %v4867 = vadd.f32 0.0, %v4866
  %v4868 = vpop.f32.mrb[0].mxu0
  %4869 = vmatprep.mubr.f32.mxu0 0.0
  %4870 = vmatmul.mubr.f32.gmra.mrb[0].mxu0 %v1729
  %v4871 = vpop.f32.mrb[0].mxu0
  %v4872 = vadd.f32 0.0, %v4871
  %v4873 = vpop.f32.mrb[0].mxu0
  %4874 = vmatprep.mubr.f32.mxu0 0.0
  %4875 = vmatmul.mubr.f32.gmra.mrb[0].mxu0 %v1731
  %v4876 = vpop.f32.mrb[0].mxu0
  %v4877 = vadd.f32 0.0, %v4876
  %v4878 = vpop.f32.mrb[0].mxu0
  %4879 = vmatprep.mubr.f32.mxu0 0.0
  %4880 = vmatmul.mubr.f32.gmra.mrb[0].mxu0 %v1733
  %v4881 = vpop.f32.mrb[0].mxu0
  %v4882 = vadd.f32 0.0, %v4881
  %v4883 = vpop.f32.mrb[0].mxu0
  %4884 = vmatprep.mubr.f32.mxu0 0.0
  %4885 = vmatmul.mubr.f32.gmra.mrb[0].mxu0 %v1735
  %v4886 = vpop.f32.mrb[0].mxu0
  %v4887 = vadd.f32 0.0, %v4886
  %v4888 = vpop.f32.mrb[0].mxu0
  %4889 = vmatprep.mubr.f32.mxu0 0.0
  %4890 = vmatmul.mubr.f32.gmra.mrb[0].mxu0 %v1737
  %v4891 = vpop.f32.mrb[0].mxu0
  %v4892 = vadd.f32 0.0, %v4891
  %v4893 = vpop.f32.mrb[0].mxu0
  %4894 = vmatprep.mubr.f32.mxu0 0.0
  %4895 = vmatmul.mubr.f32.gmra.mrb[0].mxu0 %v1739
  %v4896 = vpop.f32.mrb[0].mxu0
  %v4897 = vadd.f32 0.0, %v4896
  %v4898 = vpop.f32.mrb[0].mxu0
  %4899 = vmatprep.mubr.f32.mxu0 0.0
  %4900 = vmatmul.mubr.f32.gmra.mrb[0].mxu0 %v1741
  %v4901 = vpop.f32.mrb[0].mxu0
  %v4902 = vadd.f32 0.0, %v4901
  %v4903 = vpop.f32.mrb[0].mxu0
  %4904 = vmatprep.mubr.f32.mxu0 0.0
  %4905 = vmatmul.mubr.f32.gmra.mrb[0].mxu0 %v1743
  %v4906 = vpop.f32.mrb[0].mxu0
  %v4907 = vadd.f32 0.0, %v4906
  %v4908 = vpop.f32.mrb[0].mxu0
  %4909 = vmatprep.mubr.f32.mxu0 0.0
  %4910 = vmatmul.mubr.f32.gmra.mrb[0].mxu0 %v1745
  %v4911 = vpop.f32.mrb[0].mxu0
  %v4912 = vadd.f32 0.0, %v4911
  %v4913 = vpop.f32.mrb[0].mxu0
  %4914 = vmatprep.mubr.f32.mxu0 0.0
  %4915 = vmatmul.mubr.f32.gmra.mrb[0].mxu0 %v1747
  %v4916 = vpop.f32.mrb[0].mxu0
  %v4917 = vadd.f32 0.0, %v4916
  %v4918 = vpop.f32.mrb[0].mxu0
  %4919 = vmatprep.mubr.f32.mxu0 0.0
  %4920 = vmatmul.mubr.f32.gmra.mrb[0].mxu0 %v1749
  %v4921 = vpop.f32.mrb[0].mxu0
  %v4922 = vadd.f32 0.0, %v4921
  %v4923 = vpop.f32.mrb[0].mxu0
  %4924 = vmatprep.mubr.f32.mxu0 0.0
  %4925 = vmatmul.mubr.f32.gmra.mrb[0].mxu0 %v1751
  %v4926 = vpop.f32.mrb[0].mxu0
  %v4927 = vadd.f32 0.0, %v4926
  %v4928 = vpop.f32.mrb[0].mxu0
  %4929 = vmatprep.mubr.f32.mxu0 0.0
  %4930 = vmatmul.mubr.f32.gmra.mrb[0].mxu0 %v1753
  %v4931 = vpop.f32.mrb[0].mxu0
  %v4932 = vadd.f32 0.0, %v4931
  %v4933 = vpop.f32.mrb[0].mxu0
  %4934 = vmatprep.mubr.f32.mxu0 0.0
  %4935 = vmatmul.mubr.f32.gmra.mrb[0].mxu0 %v1755
  %v4936 = vpop.f32.mrb[0].mxu0
  %v4937 = vadd.f32 0.0, %v4936
  %v4938 = vpop.f32.mrb[0].mxu0
  %4939 = vmatprep.mubr.f32.mxu0 0.0
  %4940 = vmatmul.mubr.f32.gmra.mrb[0].mxu0 %v1757
  %v4941 = vpop.f32.mrb[0].mxu0
  %v4942 = vadd.f32 0.0, %v4941
  %v4943 = vpop.f32.mrb[0].mxu0
  %4944 = vmatprep.mubr.f32.mxu0 0.0
  %4945 = vmatmul.mubr.f32.gmra.mrb[0].mxu0 %v1759
  %v4946 = vpop.f32.mrb[0].mxu0
  %v4947 = vadd.f32 0.0, %v4946
  %v4948 = vpop.f32.mrb[0].mxu0
  %4949 = vmatprep.mubr.f32.mxu0 0.0
  %4950 = vmatmul.mubr.f32.gmra.mrb[0].mxu0 %v1761
  %v4951 = vpop.f32.mrb[0].mxu0
  %v4952 = vadd.f32 0.0, %v4951
  %v4953 = vpop.f32.mrb[0].mxu0
  %4954 = vmatprep.mubr.f32.mxu0 0.0
  %4955 = vmatmul.mubr.f32.gmra.mrb[0].mxu0 %v3171
  %v4956 = vpop.f32.mrb[0].mxu0
  %v4957 = vadd.f32 0.0, %v4956
  %v4958 = vpop.f32.mrb[0].mxu0
  %4959 = vmatprep.mubr.f32.mxu0 0.0
  %4960 = vmatmul.mubr.f32.gmra.mrb[0].mxu0 %v3173
  %v4961 = vpop.f32.mrb[0].mxu0
  %v4962 = vadd.f32 0.0, %v4961
  %v4963 = vpop.f32.mrb[0].mxu0
  %4964 = vmatprep.mubr.f32.mxu0 0.0
  %4965 = vmatmul.mubr.f32.gmra.mrb[0].mxu0 %v4583
  %v4966 = vpop.f32.mrb[0].mxu0
  %v4967 = vadd.f32 0.0, %v4966
  %v4968 = vpop.f32.mrb[0].mxu0
  %4969 = vmatprep.mubr.f32.mxu0 0.0
  %4970 = vmatmul.mubr.f32.gmra.mrb[0].mxu0 %v4585
  %v4971 = vpop.f32.mrb[0].mxu0
  %v4972 = vadd.f32 0.0, %v4971
  %v4973 = vpop.f32.mrb[0].mxu0
  %4974 = vdwg.mxu0
  %v4975 = vadd.f32 %v4503, %v4657
  %v4976 = vadd.f32 %v4504, %v4662
  %v4977 = vadd.f32 %v4505, %v4667
  %v4978 = vadd.f32 %v4506, %v4672
  %v4979 = vadd.f32 %v4507, %v4677
  %v4980 = vadd.f32 %v4508, %v4682
  %v4981 = vadd.f32 %v4509, %v4687
  %v4982 = vadd.f32 %v4510, %v4692
  %v4983 = vadd.f32 %v4511, %v4697
  %v4984 = vadd.f32 %v4512, %v4702
  %v4985 = vadd.f32 %v4513, %v4707
  %v4986 = vadd.f32 %v4514, %v4712
  %v4987 = vadd.f32 %v4515, %v4717
  %v4988 = vadd.f32 %v4516, %v4722
  %v4989 = vadd.f32 %v4517, %v4727
  %v4990 = vadd.f32 %v4518, %v4732
  %v4991 = vadd.f32 %v4519, %v4737
  %v4992 = vadd.f32 %v4520, %v4742
  %v4993 = vadd.f32 %v4521, %v4747
  %v4994 = vadd.f32 %v4522, %v4752
  %v4995 = vadd.f32 %v4523, %v4757
  %v4996 = vadd.f32 %v4524, %v4762
  %v4997 = vadd.f32 %v4525, %v4767
  %v4998 = vadd.f32 %v4526, %v4772
  %v4999 = vadd.f32 %v4527, %v4777
  %v5000 = vadd.f32 %v4528, %v4782
  %v5001 = vadd.f32 %v4529, %v4787
  %v5002 = vadd.f32 %v4530, %v4792
  %v5003 = vadd.f32 %v4531, %v4797
  %v5004 = vadd.f32 %v4532, %v4802
  %v5005 = vadd.f32 %v4533, %v4807
  %v5006 = vadd.f32 %v4534, %v4812
  %v5007 = vadd.f32 %v4535, %v4817
  %v5008 = vadd.f32 %v4536, %v4822
  %v5009 = vadd.f32 %v4537, %v4827
  %v5010 = vadd.f32 %v4538, %v4832
  %v5011 = vadd.f32 %v4539, %v4837
  %v5012 = vadd.f32 %v4540, %v4842
  %v5013 = vadd.f32 %v4541, %v4847
  %v5014 = vadd.f32 %v4542, %v4852
  %v5015 = vadd.f32 %v4543, %v4857
  %v5016 = vadd.f32 %v4544, %v4862
  %v5017 = vadd.f32 %v4545, %v4867
  %v5018 = vadd.f32 %v4546, %v4872
  %v5019 = vadd.f32 %v4547, %v4877
  %v5020 = vadd.f32 %v4548, %v4882
  %v5021 = vadd.f32 %v4549, %v4887
  %v5022 = vadd.f32 %v4550, %v4892
  %v5023 = vadd.f32 %v4551, %v4897
  %v5024 = vadd.f32 %v4552, %v4902
  %v5025 = vadd.f32 %v4553, %v4907
  %v5026 = vadd.f32 %v4554, %v4912
  %v5027 = vadd.f32 %v4555, %v4917
  %v5028 = vadd.f32 %v4556, %v4922
  %v5029 = vadd.f32 %v4557, %v4927
  %v5030 = vadd.f32 %v4558, %v4932
  %v5031 = vadd.f32 %v4559, %v4937
  %v5032 = vadd.f32 %v4560, %v4942
  %v5033 = vadd.f32 %v4561, %v4947
  %v5034 = vadd.f32 %v4562, %v4952
  %v5035 = vadd.f32 %v4563, %v4957
  %v5036 = vadd.f32 %v4564, %v4962
  %v5037 = vadd.f32 %v4565, %v4967
  %v5038 = vadd.f32 %v4566, %v4972
  %v5039 = vld [vmem:[%s1] sm:$0xff]
  %v5040 = vld [vmem:[%s1 + $0x8] sm:$0xff]
  %v5041 = vld [vmem:[%s1 + $0x10] sm:$0xff]
  %v5042 = vld [vmem:[%s1 + $0x18] sm:$0xff]
  %v5043 = vld [vmem:[%s1 + $0x20] sm:$0xff]
  %v5044 = vld [vmem:[%s1 + $0x28] sm:$0xff]
  %v5045 = vld [vmem:[%s1 + $0x30] sm:$0xff]
  %v5046 = vld [vmem:[%s1 + $0x38] sm:$0xff]
  %v5047 = vld [vmem:[%s1 + $0x40] sm:$0xff]
  %v5048 = vld [vmem:[%s1 + $0x48] sm:$0xff]
  %v5049 = vld [vmem:[%s1 + $0x50] sm:$0xff]
  %v5050 = vld [vmem:[%s1 + $0x58] sm:$0xff]
  %v5051 = vld [vmem:[%s1 + $0x60] sm:$0xff]
  %v5052 = vld [vmem:[%s1 + $0x68] sm:$0xff]
  %v5053 = vld [vmem:[%s1 + $0x70] sm:$0xff]
  %v5054 = vld [vmem:[%s1 + $0x78] sm:$0xff]
  %v5055 = vld [vmem:[%s1 + $0x80] sm:$0xff]
  %v5056 = vld [vmem:[%s1 + $0x88] sm:$0xff]
  %v5057 = vld [vmem:[%s1 + $0x90] sm:$0xff]
  %v5058 = vld [vmem:[%s1 + $0x98] sm:$0xff]
  %v5059 = vld [vmem:[%s1 + $0xa0] sm:$0xff]
  %v5060 = vld [vmem:[%s1 + $0xa8] sm:$0xff]
  %v5061 = vld [vmem:[%s1 + $0xb0] sm:$0xff]
  %v5062 = vld [vmem:[%s1 + $0xb8] sm:$0xff]
  %v5063 = vld [vmem:[%s1 + $0xc0] sm:$0xff]
  %v5064 = vld [vmem:[%s1 + $0xc8] sm:$0xff]
  %v5065 = vld [vmem:[%s1 + $0xd0] sm:$0xff]
  %v5066 = vld [vmem:[%s1 + $0xd8] sm:$0xff]
  %v5067 = vld [vmem:[%s1 + $0xe0] sm:$0xff]
  %v5068 = vld [vmem:[%s1 + $0xe8] sm:$0xff]
  %v5069 = vld [vmem:[%s1 + $0xf0] sm:$0xff]
  %v5070 = vld [vmem:[%s1 + $0xf8] sm:$0xff]
  %v5071 = vld [vmem:[%s1 + $0x100] sm:$0xff]
  %v5072 = vld [vmem:[%s1 + $0x108] sm:$0xff]
  %v5073 = vld [vmem:[%s1 + $0x110] sm:$0xff]
  %v5074 = vld [vmem:[%s1 + $0x118] sm:$0xff]
  %v5075 = vld [vmem:[%s1 + $0x120] sm:$0xff]
  %v5076 = vld [vmem:[%s1 + $0x128] sm:$0xff]
  %v5077 = vld [vmem:[%s1 + $0x130] sm:$0xff]
  %v5078 = vld [vmem:[%s1 + $0x138] sm:$0xff]
  %v5079 = vld [vmem:[%s1 + $0x140] sm:$0xff]
  %v5080 = vld [vmem:[%s1 + $0x148] sm:$0xff]
  %v5081 = vld [vmem:[%s1 + $0x150] sm:$0xff]
  %v5082 = vld [vmem:[%s1 + $0x158] sm:$0xff]
  %v5083 = vld [vmem:[%s1 + $0x160] sm:$0xff]
  %v5084 = vld [vmem:[%s1 + $0x168] sm:$0xff]
  %v5085 = vld [vmem:[%s1 + $0x170] sm:$0xff]
  %v5086 = vld [vmem:[%s1 + $0x178] sm:$0xff]
  %v5087 = vld [vmem:[%s1 + $0x180] sm:$0xff]
  %v5088 = vld [vmem:[%s1 + $0x188] sm:$0xff]
  %v5089 = vld [vmem:[%s1 + $0x190] sm:$0xff]
  %v5090 = vld [vmem:[%s1 + $0x198] sm:$0xff]
  %v5091 = vld [vmem:[%s1 + $0x1a0] sm:$0xff]
  %v5092 = vld [vmem:[%s1 + $0x1a8] sm:$0xff]
  %v5093 = vld [vmem:[%s1 + $0x1b0] sm:$0xff]
  %v5094 = vld [vmem:[%s1 + $0x1b8] sm:$0xff]
  %v5095 = vld [vmem:[%s1 + $0x1c0] sm:$0xff]
  %v5096 = vld [vmem:[%s1 + $0x1c8] sm:$0xff]
  %v5097 = vld [vmem:[%s1 + $0x1d0] sm:$0xff]
  %v5098 = vld [vmem:[%s1 + $0x1d8] sm:$0xff]
  %v5099 = vld [vmem:[%s1 + $0x1e0] sm:$0xff]
  %v5100 = vld [vmem:[%s1 + $0x1e8] sm:$0xff]
  %v5101 = vld [vmem:[%s1 + $0x1f0] sm:$0xff]
  %v5102 = vld [vmem:[%s1 + $0x1f8] sm:$0xff]
  %v5103 = vld [vmem:[%s6] sm:$0x1]
  %v5105 = vlaneseq
  %v5106 = vshrl.u32 %v5105, 7
  %v5107 = vsub.s32 0, %v5106
  %v5108 = vrot.slane %v5103, %v5107
  %5110 = vmatprep.subr.mxu0 0.0
  %5111 = vmatpush1.msra.mxu0 %v4975
  %5112 = vmatprep.subr.mxu0 0.0
  %5113 = vmatpush1.msra.mxu0 %v4976
  %5114 = vmatprep.subr.mxu0 0.0
  %5115 = vmatpush1.msra.mxu0 %v4977
  %5116 = vmatprep.subr.mxu0 0.0
  %5117 = vmatpush1.msra.mxu0 %v4978
  %5118 = vmatprep.subr.mxu0 0.0
  %5119 = vmatpush1.msra.mxu0 %v4979
  %5120 = vmatprep.subr.mxu0 0.0
  %5121 = vmatpush1.msra.mxu0 %v4980
  %5122 = vmatprep.subr.mxu0 0.0
  %5123 = vmatpush1.msra.mxu0 %v4981
  %5124 = vmatprep.subr.mxu0 0.0
  %5125 = vmatpush1.msra.mxu0 %v4982
  %5126 = vmatprep.subr.mxu0 0.0
  %5127 = vmatpush1.msra.mxu0 %v4983
  %5128 = vmatprep.subr.mxu0 0.0
  %5129 = vmatpush1.msra.mxu0 %v4984
  %5130 = vmatprep.subr.mxu0 0.0
  %5131 = vmatpush1.msra.mxu0 %v4985
  %5132 = vmatprep.subr.mxu0 0.0
  %5133 = vmatpush1.msra.mxu0 %v4986
  %5134 = vmatprep.subr.mxu0 0.0
  %5135 = vmatpush1.msra.mxu0 %v4987
  %5136 = vmatprep.subr.mxu0 0.0
  %5137 = vmatpush1.msra.mxu0 %v4988
  %5138 = vmatprep.subr.mxu0 0.0
  %5139 = vmatpush1.msra.mxu0 %v4989
  %5140 = vmatprep.subr.mxu0 0.0
  %5141 = vmatpush1.msra.mxu0 %v4990
  %5142 = vmatprep.subr.mxu0 0.0
  %5143 = vmatpush1.msra.mxu0 %v4991
  %5144 = vmatprep.subr.mxu0 0.0
  %5145 = vmatpush1.msra.mxu0 %v4992
  %5146 = vmatprep.subr.mxu0 0.0
  %5147 = vmatpush1.msra.mxu0 %v4993
  %5148 = vmatprep.subr.mxu0 0.0
  %5149 = vmatpush1.msra.mxu0 %v4994
  %5150 = vmatprep.subr.mxu0 0.0
  %5151 = vmatpush1.msra.mxu0 %v4995
  %5152 = vmatprep.subr.mxu0 0.0
  %5153 = vmatpush1.msra.mxu0 %v4996
  %5154 = vmatprep.subr.mxu0 0.0
  %5155 = vmatpush1.msra.mxu0 %v4997
  %5156 = vmatprep.subr.mxu0 0.0
  %5157 = vmatpush1.msra.mxu0 %v4998
  %5158 = vmatprep.subr.mxu0 0.0
  %5159 = vmatpush1.msra.mxu0 %v4999
  %5160 = vmatprep.subr.mxu0 0.0
  %5161 = vmatpush1.msra.mxu0 %v5000
  %5162 = vmatprep.subr.mxu0 0.0
  %5163 = vmatpush1.msra.mxu0 %v5001
  %5164 = vmatprep.subr.mxu0 0.0
  %5165 = vmatpush1.msra.mxu0 %v5002
  %5166 = vmatprep.subr.mxu0 0.0
  %5167 = vmatpush1.msra.mxu0 %v5003
  %5168 = vmatprep.subr.mxu0 0.0
  %5169 = vmatpush1.msra.mxu0 %v5004
  %5170 = vmatprep.subr.mxu0 0.0
  %5171 = vmatpush1.msra.mxu0 %v5005
  %5172 = vmatprep.subr.mxu0 0.0
  %5173 = vmatpush1.msra.mxu0 %v5006
  %5174 = vmatprep.mubr.f32.mxu0 %v5040
  %5175 = vmatmul.mubr.f32.gmra.mrb[0].mxu0 %v5039
  %v5176 = vpop.f32.mrb[0].mxu0
  %v5177 = vadd.f32 %v5108, %v5176
  %v5178 = vpop.f32.mrb[0].mxu0
  %5179 = vmatprep.mubr.f32.mxu0 %v5044
  %5180 = vmatmul.mubr.f32.gmra.mrb[0].mxu0 %v5043
  %v5181 = vpop.f32.mrb[0].mxu0
  %v5182 = vadd.f32 %v5108, %v5181
  %v5183 = vpop.f32.mrb[0].mxu0
  %5184 = vmatprep.mubr.f32.mxu0 %v5048
  %5185 = vmatmul.mubr.f32.gmra.mrb[0].mxu0 %v5047
  %v5186 = vpop.f32.mrb[0].mxu0
  %v5187 = vadd.f32 %v5108, %v5186
  %v5188 = vpop.f32.mrb[0].mxu0
  %5189 = vmatprep.mubr.f32.mxu0 %v5052
  %5190 = vmatmul.mubr.f32.gmra.mrb[0].mxu0 %v5051
  %v5191 = vpop.f32.mrb[0].mxu0
  %v5192 = vadd.f32 %v5108, %v5191
  %v5193 = vpop.f32.mrb[0].mxu0
  %5194 = vmatprep.mubr.f32.mxu0 %v5056
  %5195 = vmatmul.mubr.f32.gmra.mrb[0].mxu0 %v5055
  %v5196 = vpop.f32.mrb[0].mxu0
  %v5197 = vadd.f32 %v5108, %v5196
  %v5198 = vpop.f32.mrb[0].mxu0
  %5199 = vmatprep.mubr.f32.mxu0 %v5060
  %5200 = vmatmul.mubr.f32.gmra.mrb[0].mxu0 %v5059
  %v5201 = vpop.f32.mrb[0].mxu0
  %v5202 = vadd.f32 %v5108, %v5201
  %v5203 = vpop.f32.mrb[0].mxu0
  %5204 = vmatprep.mubr.f32.mxu0 %v5064
  %5205 = vmatmul.mubr.f32.gmra.mrb[0].mxu0 %v5063
  %v5206 = vpop.f32.mrb[0].mxu0
  %v5207 = vadd.f32 %v5108, %v5206
  %v5208 = vpop.f32.mrb[0].mxu0
  %5209 = vmatprep.mubr.f32.mxu0 %v5068
  %5210 = vmatmul.mubr.f32.gmra.mrb[0].mxu0 %v5067
  %v5211 = vpop.f32.mrb[0].mxu0
  %v5212 = vadd.f32 %v5108, %v5211
  %v5213 = vpop.f32.mrb[0].mxu0
  %5214 = vmatprep.mubr.f32.mxu0 %v5072
  %5215 = vmatmul.mubr.f32.gmra.mrb[0].mxu0 %v5071
  %v5216 = vpop.f32.mrb[0].mxu0
  %v5217 = vadd.f32 %v5108, %v5216
  %v5218 = vpop.f32.mrb[0].mxu0
  %5219 = vmatprep.mubr.f32.mxu0 %v5076
  %5220 = vmatmul.mubr.f32.gmra.mrb[0].mxu0 %v5075
  %v5221 = vpop.f32.mrb[0].mxu0
  %v5222 = vadd.f32 %v5108, %v5221
  %v5223 = vpop.f32.mrb[0].mxu0
  %5224 = vmatprep.mubr.f32.mxu0 %v5080
  %5225 = vmatmul.mubr.f32.gmra.mrb[0].mxu0 %v5079
  %v5226 = vpop.f32.mrb[0].mxu0
  %v5227 = vadd.f32 %v5108, %v5226
  %v5228 = vpop.f32.mrb[0].mxu0
  %5229 = vmatprep.mubr.f32.mxu0 %v5084
  %5230 = vmatmul.mubr.f32.gmra.mrb[0].mxu0 %v5083
  %v5231 = vpop.f32.mrb[0].mxu0
  %v5232 = vadd.f32 %v5108, %v5231
  %v5233 = vpop.f32.mrb[0].mxu0
  %5234 = vmatprep.mubr.f32.mxu0 %v5088
  %5235 = vmatmul.mubr.f32.gmra.mrb[0].mxu0 %v5087
  %v5236 = vpop.f32.mrb[0].mxu0
  %v5237 = vadd.f32 %v5108, %v5236
  %v5238 = vpop.f32.mrb[0].mxu0
  %5239 = vmatprep.mubr.f32.mxu0 %v5092
  %5240 = vmatmul.mubr.f32.gmra.mrb[0].mxu0 %v5091
  %v5241 = vpop.f32.mrb[0].mxu0
  %v5242 = vadd.f32 %v5108, %v5241
  %v5243 = vpop.f32.mrb[0].mxu0
  %5244 = vmatprep.mubr.f32.mxu0 %v5096
  %5245 = vmatmul.mubr.f32.gmra.mrb[0].mxu0 %v5095
  %v5246 = vpop.f32.mrb[0].mxu0
  %v5247 = vadd.f32 %v5108, %v5246
  %v5248 = vpop.f32.mrb[0].mxu0
  %5249 = vmatprep.mubr.f32.mxu0 %v5100
  %5250 = vmatmul.mubr.f32.gmra.mrb[0].mxu0 %v5099
  %v5251 = vpop.f32.mrb[0].mxu0
  %v5252 = vadd.f32 %v5108, %v5251
  %v5253 = vpop.f32.mrb[0].mxu0
  %5254 = vdwg.mxu0
  %5255 = vmatprep.subr.mxu0 0.0
  %5256 = vmatpush1.msra.mxu0 %v5007
  %5257 = vmatprep.subr.mxu0 0.0
  %5258 = vmatpush1.msra.mxu0 %v5008
  %5259 = vmatprep.subr.mxu0 0.0
  %5260 = vmatpush1.msra.mxu0 %v5009
  %5261 = vmatprep.subr.mxu0 0.0
  %5262 = vmatpush1.msra.mxu0 %v5010
  %5263 = vmatprep.subr.mxu0 0.0
  %5264 = vmatpush1.msra.mxu0 %v5011
  %5265 = vmatprep.subr.mxu0 0.0
  %5266 = vmatpush1.msra.mxu0 %v5012
  %5267 = vmatprep.subr.mxu0 0.0
  %5268 = vmatpush1.msra.mxu0 %v5013
  %5269 = vmatprep.subr.mxu0 0.0
  %5270 = vmatpush1.msra.mxu0 %v5014
  %5271 = vmatprep.subr.mxu0 0.0
  %5272 = vmatpush1.msra.mxu0 %v5015
  %5273 = vmatprep.subr.mxu0 0.0
  %5274 = vmatpush1.msra.mxu0 %v5016
  %5275 = vmatprep.subr.mxu0 0.0
  %5276 = vmatpush1.msra.mxu0 %v5017
  %5277 = vmatprep.subr.mxu0 0.0
  %5278 = vmatpush1.msra.mxu0 %v5018
  %5279 = vmatprep.subr.mxu0 0.0
  %5280 = vmatpush1.msra.mxu0 %v5019
  %5281 = vmatprep.subr.mxu0 0.0
  %5282 = vmatpush1.msra.mxu0 %v5020
  %5283 = vmatprep.subr.mxu0 0.0
  %5284 = vmatpush1.msra.mxu0 %v5021
  %5285 = vmatprep.subr.mxu0 0.0
  %5286 = vmatpush1.msra.mxu0 %v5022
  %5287 = vmatprep.subr.mxu0 0.0
  %5288 = vmatpush1.msra.mxu0 %v5023
  %5289 = vmatprep.subr.mxu0 0.0
  %5290 = vmatpush1.msra.mxu0 %v5024
  %5291 = vmatprep.subr.mxu0 0.0
  %5292 = vmatpush1.msra.mxu0 %v5025
  %5293 = vmatprep.subr.mxu0 0.0
  %5294 = vmatpush1.msra.mxu0 %v5026
  %5295 = vmatprep.subr.mxu0 0.0
  %5296 = vmatpush1.msra.mxu0 %v5027
  %5297 = vmatprep.subr.mxu0 0.0
  %5298 = vmatpush1.msra.mxu0 %v5028
  %5299 = vmatprep.subr.mxu0 0.0
  %5300 = vmatpush1.msra.mxu0 %v5029
  %5301 = vmatprep.subr.mxu0 0.0
  %5302 = vmatpush1.msra.mxu0 %v5030
  %5303 = vmatprep.subr.mxu0 0.0
  %5304 = vmatpush1.msra.mxu0 %v5031
  %5305 = vmatprep.subr.mxu0 0.0
  %5306 = vmatpush1.msra.mxu0 %v5032
  %5307 = vmatprep.subr.mxu0 0.0
  %5308 = vmatpush1.msra.mxu0 %v5033
  %5309 = vmatprep.subr.mxu0 0.0
  %5310 = vmatpush1.msra.mxu0 %v5034
  %5311 = vmatprep.subr.mxu0 0.0
  %5312 = vmatpush1.msra.mxu0 %v5035
  %5313 = vmatprep.subr.mxu0 0.0
  %5314 = vmatpush1.msra.mxu0 %v5036
  %5315 = vmatprep.subr.mxu0 0.0
  %5316 = vmatpush1.msra.mxu0 %v5037
  %5317 = vmatprep.subr.mxu0 0.0
  %5318 = vmatpush1.msra.mxu0 %v5038
  %5319 = vmatprep.mubr.f32.mxu0 %v5042
  %5320 = vmatmul.mubr.f32.gmra.mrb[0].mxu0 %v5041
  %v5321 = vpop.f32.mrb[0].mxu0
  %v5322 = vadd.f32 %v5177, %v5321
  %v5323 = vpop.f32.mrb[0].mxu0
  %5324 = vmatprep.mubr.f32.mxu0 %v5046
  %5325 = vmatmul.mubr.f32.gmra.mrb[0].mxu0 %v5045
  %v5326 = vpop.f32.mrb[0].mxu0
  %v5327 = vadd.f32 %v5182, %v5326
  %v5328 = vpop.f32.mrb[0].mxu0
  %5329 = vmatprep.mubr.f32.mxu0 %v5050
  %5330 = vmatmul.mubr.f32.gmra.mrb[0].mxu0 %v5049
  %v5331 = vpop.f32.mrb[0].mxu0
  %v5332 = vadd.f32 %v5187, %v5331
  %v5333 = vpop.f32.mrb[0].mxu0
  %5334 = vmatprep.mubr.f32.mxu0 %v5054
  %5335 = vmatmul.mubr.f32.gmra.mrb[0].mxu0 %v5053
  %v5336 = vpop.f32.mrb[0].mxu0
  %v5337 = vadd.f32 %v5192, %v5336
  %v5338 = vpop.f32.mrb[0].mxu0
  %5339 = vmatprep.mubr.f32.mxu0 %v5058
  %5340 = vmatmul.mubr.f32.gmra.mrb[0].mxu0 %v5057
  %v5341 = vpop.f32.mrb[0].mxu0
  %v5342 = vadd.f32 %v5197, %v5341
  %v5343 = vpop.f32.mrb[0].mxu0
  %5344 = vmatprep.mubr.f32.mxu0 %v5062
  %5345 = vmatmul.mubr.f32.gmra.mrb[0].mxu0 %v5061
  %v5346 = vpop.f32.mrb[0].mxu0
  %v5347 = vadd.f32 %v5202, %v5346
  %v5348 = vpop.f32.mrb[0].mxu0
  %5349 = vmatprep.mubr.f32.mxu0 %v5066
  %5350 = vmatmul.mubr.f32.gmra.mrb[0].mxu0 %v5065
  %v5351 = vpop.f32.mrb[0].mxu0
  %v5352 = vadd.f32 %v5207, %v5351
  %v5353 = vpop.f32.mrb[0].mxu0
  %5354 = vmatprep.mubr.f32.mxu0 %v5070
  %5355 = vmatmul.mubr.f32.gmra.mrb[0].mxu0 %v5069
  %v5356 = vpop.f32.mrb[0].mxu0
  %v5357 = vadd.f32 %v5212, %v5356
  %v5358 = vpop.f32.mrb[0].mxu0
  %5359 = vmatprep.mubr.f32.mxu0 %v5074
  %5360 = vmatmul.mubr.f32.gmra.mrb[0].mxu0 %v5073
  %v5361 = vpop.f32.mrb[0].mxu0
  %v5362 = vadd.f32 %v5217, %v5361
  %v5363 = vpop.f32.mrb[0].mxu0
  %5364 = vmatprep.mubr.f32.mxu0 %v5078
  %5365 = vmatmul.mubr.f32.gmra.mrb[0].mxu0 %v5077
  %v5366 = vpop.f32.mrb[0].mxu0
  %v5367 = vadd.f32 %v5222, %v5366
  %v5368 = vpop.f32.mrb[0].mxu0
  %5369 = vmatprep.mubr.f32.mxu0 %v5082
  %5370 = vmatmul.mubr.f32.gmra.mrb[0].mxu0 %v5081
  %v5371 = vpop.f32.mrb[0].mxu0
  %v5372 = vadd.f32 %v5227, %v5371
  %v5373 = vpop.f32.mrb[0].mxu0
  %5374 = vmatprep.mubr.f32.mxu0 %v5086
  %5375 = vmatmul.mubr.f32.gmra.mrb[0].mxu0 %v5085
  %v5376 = vpop.f32.mrb[0].mxu0
  %v5377 = vadd.f32 %v5232, %v5376
  %v5378 = vpop.f32.mrb[0].mxu0
  %5379 = vmatprep.mubr.f32.mxu0 %v5090
  %5380 = vmatmul.mubr.f32.gmra.mrb[0].mxu0 %v5089
  %v5381 = vpop.f32.mrb[0].mxu0
  %v5382 = vadd.f32 %v5237, %v5381
  %v5383 = vpop.f32.mrb[0].mxu0
  %5384 = vmatprep.mubr.f32.mxu0 %v5094
  %5385 = vmatmul.mubr.f32.gmra.mrb[0].mxu0 %v5093
  %v5386 = vpop.f32.mrb[0].mxu0
  %v5387 = vadd.f32 %v5242, %v5386
  %v5388 = vpop.f32.mrb[0].mxu0
  %5389 = vmatprep.mubr.f32.mxu0 %v5098
  %5390 = vmatmul.mubr.f32.gmra.mrb[0].mxu0 %v5097
  %v5391 = vpop.f32.mrb[0].mxu0
  %v5392 = vadd.f32 %v5247, %v5391
  %v5393 = vpop.f32.mrb[0].mxu0
  %5394 = vmatprep.mubr.f32.mxu0 %v5102
  %5395 = vmatmul.mubr.f32.gmra.mrb[0].mxu0 %v5101
  %v5396 = vpop.f32.mrb[0].mxu0
  %v5397 = vadd.f32 %v5252, %v5396
  %v5398 = vpop.f32.mrb[0].mxu0
  %5399 = vdwg.mxu0
  %vm5400 = vcmp.ge.f32.partialorder %v5322, 0.0
  %vm5401 = vcmp.ge.f32.partialorder %v5327, 0.0
  %vm5402 = vcmp.ge.f32.partialorder %v5332, 0.0
  %vm5403 = vcmp.ge.f32.partialorder %v5337, 0.0
  %vm5404 = vcmp.ge.f32.partialorder %v5342, 0.0
  %vm5405 = vcmp.ge.f32.partialorder %v5347, 0.0
  %vm5406 = vcmp.ge.f32.partialorder %v5352, 0.0
  %vm5407 = vcmp.ge.f32.partialorder %v5357, 0.0
  %vm5408 = vcmp.ge.f32.partialorder %v5362, 0.0
  %vm5409 = vcmp.ge.f32.partialorder %v5367, 0.0
  %vm5410 = vcmp.ge.f32.partialorder %v5372, 0.0
  %vm5411 = vcmp.ge.f32.partialorder %v5377, 0.0
  %vm5412 = vcmp.ge.f32.partialorder %v5382, 0.0
  %vm5413 = vcmp.ge.f32.partialorder %v5387, 0.0
  %vm5414 = vcmp.ge.f32.partialorder %v5392, 0.0
  %vm5415 = vcmp.ge.f32.partialorder %v5397, 0.0
  %v5416 = vmul.f32 %v5322, 0.2
  %v5417 = vmul.f32 %v5327, 0.2
  %v5418 = vmul.f32 %v5332, 0.2
  %v5419 = vmul.f32 %v5337, 0.2
  %v5420 = vmul.f32 %v5342, 0.2
  %v5421 = vmul.f32 %v5347, 0.2
  %v5422 = vmul.f32 %v5352, 0.2
  %v5423 = vmul.f32 %v5357, 0.2
  %v5424 = vmul.f32 %v5362, 0.2
  %v5425 = vmul.f32 %v5367, 0.2
  %v5426 = vmul.f32 %v5372, 0.2
  %v5427 = vmul.f32 %v5377, 0.2
  %v5428 = vmul.f32 %v5382, 0.2
  %v5429 = vmul.f32 %v5387, 0.2
  %v5430 = vmul.f32 %v5392, 0.2
  %v5431 = vmul.f32 %v5397, 0.2
  %v5432 = vsel %vm5400, %v5322, %v5416
  %v5433 = vsel %vm5401, %v5327, %v5417
  %v5434 = vsel %vm5402, %v5332, %v5418
  %v5435 = vsel %vm5403, %v5337, %v5419
  %v5436 = vsel %vm5404, %v5342, %v5420
  %v5437 = vsel %vm5405, %v5347, %v5421
  %v5438 = vsel %vm5406, %v5352, %v5422
  %v5439 = vsel %vm5407, %v5357, %v5423
  %v5440 = vsel %vm5408, %v5362, %v5424
  %v5441 = vsel %vm5409, %v5367, %v5425
  %v5442 = vsel %vm5410, %v5372, %v5426
  %v5443 = vsel %vm5411, %v5377, %v5427
  %v5444 = vsel %vm5412, %v5382, %v5428
  %v5445 = vsel %vm5413, %v5387, %v5429
  %v5446 = vsel %vm5414, %v5392, %v5430
  %v5447 = vsel %vm5415, %v5397, %v5431
  %v5448 = vld [vmem:[%s2] sm:$0xff]
  %v5449 = vld [vmem:[%s2 + $0x8] sm:$0xff]
  %v5450 = vld [vmem:[%s2 + $0x10] sm:$0xff]
  %v5451 = vld [vmem:[%s2 + $0x18] sm:$0xff]
  %5452 = vmatprep.subr.mxu0 0.0
  %5453 = vmatpush1.msra.mxu0 %v5432
  %5454 = vmatprep.subr.mxu0 0.0
  %5455 = vmatpush1.msra.mxu0 %v5433
  %5456 = vmatprep.subr.mxu0 0.0
  %5457 = vmatpush1.msra.mxu0 %v5434
  %5458 = vmatprep.subr.mxu0 0.0
  %5459 = vmatpush1.msra.mxu0 %v5435
  %5460 = vmatprep.subr.mxu0 0.0
  %5461 = vmatpush1.msra.mxu0 %v5436
  %5462 = vmatprep.subr.mxu0 0.0
  %5463 = vmatpush1.msra.mxu0 %v5437
  %5464 = vmatprep.subr.mxu0 0.0
  %5465 = vmatpush1.msra.mxu0 %v5438
  %5466 = vmatprep.subr.mxu0 0.0
  %5467 = vmatpush1.msra.mxu0 %v5439
  %5468 = vmatprep.subr.mxu0 0.0
  %5469 = vmatpush1.msra.mxu0 %v5440
  %5470 = vmatprep.subr.mxu0 0.0
  %5471 = vmatpush1.msra.mxu0 %v5441
  %5472 = vmatprep.subr.mxu0 0.0
  %5473 = vmatpush1.msra.mxu0 %v5442
  %5474 = vmatprep.subr.mxu0 0.0
  %5475 = vmatpush1.msra.mxu0 %v5443
  %5476 = vmatprep.subr.mxu0 0.0
  %5477 = vmatpush1.msra.mxu0 %v5444
  %5478 = vmatprep.subr.mxu0 0.0
  %5479 = vmatpush1.msra.mxu0 %v5445
  %5480 = vmatprep.subr.mxu0 0.0
  %5481 = vmatpush1.msra.mxu0 %v5446
  %5482 = vmatprep.subr.mxu0 0.0
  %5483 = vmatpush1.msra.mxu0 %v5447
  %5484 = vmatprep.subr.mxu0 0.0
  %5485 = vmatpush1.msra.mxu0 0.0
  %5486 = vmatprep.subr.mxu0 0.0
  %5487 = vmatpush1.msra.mxu0 0.0
  %5488 = vmatprep.subr.mxu0 0.0
  %5489 = vmatpush1.msra.mxu0 0.0
  %5490 = vmatprep.subr.mxu0 0.0
  %5491 = vmatpush1.msra.mxu0 0.0
  %5492 = vmatprep.subr.mxu0 0.0
  %5493 = vmatpush1.msra.mxu0 0.0
  %5494 = vmatprep.subr.mxu0 0.0
  %5495 = vmatpush1.msra.mxu0 0.0
  %5496 = vmatprep.subr.mxu0 0.0
  %5497 = vmatpush1.msra.mxu0 0.0
  %5498 = vmatprep.subr.mxu0 0.0
  %5499 = vmatpush1.msra.mxu0 0.0
  %5500 = vmatprep.subr.mxu0 0.0
  %5501 = vmatpush1.msra.mxu0 0.0
  %5502 = vmatprep.subr.mxu0 0.0
  %5503 = vmatpush1.msra.mxu0 0.0
  %5504 = vmatprep.subr.mxu0 0.0
  %5505 = vmatpush1.msra.mxu0 0.0
  %5506 = vmatprep.subr.mxu0 0.0
  %5507 = vmatpush1.msra.mxu0 0.0
  %5508 = vmatprep.subr.mxu0 0.0
  %5509 = vmatpush1.msra.mxu0 0.0
  %5510 = vmatprep.subr.mxu0 0.0
  %5511 = vmatpush1.msra.mxu0 0.0
  %5512 = vmatprep.subr.mxu0 0.0
  %5513 = vmatpush1.msra.mxu0 0.0
  %5514 = vmatprep.subr.mxu0 0.0
  %5515 = vmatpush1.msra.mxu0 0.0
  %5516 = vmatprep.mubr.f32.mxu0 0.0
  %5517 = vmatmul.mubr.f32.gmra.mrb[0].mxu0 %v5448
  %v5518 = vpop.f32.mrb[0].mxu0
  %v5519 = vadd.f32 0.0, %v5518
  %v5520 = vpop.f32.mrb[0].mxu0
  %5521 = vmatprep.mubr.f32.mxu0 0.0
  %5522 = vmatmul.mubr.f32.gmra.mrb[0].mxu0 %v5449
  %v5523 = vpop.f32.mrb[0].mxu0
  %v5524 = vadd.f32 0.0, %v5523
  %v5525 = vpop.f32.mrb[0].mxu0
  %5526 = vmatprep.mubr.f32.mxu0 0.0
  %5527 = vmatmul.mubr.f32.gmra.mrb[0].mxu0 %v5450
  %v5528 = vpop.f32.mrb[0].mxu0
  %v5529 = vadd.f32 0.0, %v5528
  %v5530 = vpop.f32.mrb[0].mxu0
  %5531 = vmatprep.mubr.f32.mxu0 0.0
  %5532 = vmatmul.mubr.f32.gmra.mrb[0].mxu0 %v5451
  %v5533 = vpop.f32.mrb[0].mxu0
  %v5534 = vadd.f32 0.0, %v5533
  %v5535 = vpop.f32.mrb[0].mxu0
  %5536 = vdwg.mxu0
  %v5537 = vld [vmem:[%s7] sm:$0xff]
  %v5538 = vld [vmem:[%s7 + $0x8] sm:$0xff]
  %s5539 = scalar_lea.vmem %s2, 32
  %v5540 = vld [vmem:[%s5539] sm:$0xff]
  %v5541 = vld [vmem:[%s5539 + $0x8] sm:$0xff]
  %v5542 = vld [vmem:[%s5539 + $0x10] sm:$0xff]
  %v5543 = vld [vmem:[%s5539 + $0x18] sm:$0xff]
  %5544 = vmatprep.subr.mxu0 0.0
  %5545 = vmatpush1.msra.mxu0 %v5432
  %5546 = vmatprep.subr.mxu0 0.0
  %5547 = vmatpush1.msra.mxu0 %v5433
  %5548 = vmatprep.subr.mxu0 0.0
  %5549 = vmatpush1.msra.mxu0 %v5434
  %5550 = vmatprep.subr.mxu0 0.0
  %5551 = vmatpush1.msra.mxu0 %v5435
  %5552 = vmatprep.subr.mxu0 0.0
  %5553 = vmatpush1.msra.mxu0 %v5436
  %5554 = vmatprep.subr.mxu0 0.0
  %5555 = vmatpush1.msra.mxu0 %v5437
  %5556 = vmatprep.subr.mxu0 0.0
  %5557 = vmatpush1.msra.mxu0 %v5438
  %5558 = vmatprep.subr.mxu0 0.0
  %5559 = vmatpush1.msra.mxu0 %v5439
  %5560 = vmatprep.subr.mxu0 0.0
  %5561 = vmatpush1.msra.mxu0 %v5440
  %5562 = vmatprep.subr.mxu0 0.0
  %5563 = vmatpush1.msra.mxu0 %v5441
  %5564 = vmatprep.subr.mxu0 0.0
  %5565 = vmatpush1.msra.mxu0 %v5442
  %5566 = vmatprep.subr.mxu0 0.0
  %5567 = vmatpush1.msra.mxu0 %v5443
  %5568 = vmatprep.subr.mxu0 0.0
  %5569 = vmatpush1.msra.mxu0 %v5444
  %5570 = vmatprep.subr.mxu0 0.0
  %5571 = vmatpush1.msra.mxu0 %v5445
  %5572 = vmatprep.subr.mxu0 0.0
  %5573 = vmatpush1.msra.mxu0 %v5446
  %5574 = vmatprep.subr.mxu0 0.0
  %5575 = vmatpush1.msra.mxu0 %v5447
  %5576 = vmatprep.subr.mxu0 0.0
  %5577 = vmatpush1.msra.mxu0 0.0
  %5578 = vmatprep.subr.mxu0 0.0
  %5579 = vmatpush1.msra.mxu0 0.0
  %5580 = vmatprep.subr.mxu0 0.0
  %5581 = vmatpush1.msra.mxu0 0.0
  %5582 = vmatprep.subr.mxu0 0.0
  %5583 = vmatpush1.msra.mxu0 0.0
  %5584 = vmatprep.subr.mxu0 0.0
  %5585 = vmatpush1.msra.mxu0 0.0
  %5586 = vmatprep.subr.mxu0 0.0
  %5587 = vmatpush1.msra.mxu0 0.0
  %5588 = vmatprep.subr.mxu0 0.0
  %5589 = vmatpush1.msra.mxu0 0.0
  %5590 = vmatprep.subr.mxu0 0.0
  %5591 = vmatpush1.msra.mxu0 0.0
  %5592 = vmatprep.subr.mxu0 0.0
  %5593 = vmatpush1.msra.mxu0 0.0
  %5594 = vmatprep.subr.mxu0 0.0
  %5595 = vmatpush1.msra.mxu0 0.0
  %5596 = vmatprep.subr.mxu0 0.0
  %5597 = vmatpush1.msra.mxu0 0.0
  %5598 = vmatprep.subr.mxu0 0.0
  %5599 = vmatpush1.msra.mxu0 0.0
  %5600 = vmatprep.subr.mxu0 0.0
  %5601 = vmatpush1.msra.mxu0 0.0
  %5602 = vmatprep.subr.mxu0 0.0
  %5603 = vmatpush1.msra.mxu0 0.0
  %5604 = vmatprep.subr.mxu0 0.0
  %5605 = vmatpush1.msra.mxu0 0.0
  %5606 = vmatprep.subr.mxu0 0.0
  %5607 = vmatpush1.msra.mxu0 0.0
  %5608 = vmatprep.mubr.f32.mxu0 0.0
  %5609 = vmatmul.mubr.f32.gmra.mrb[0].mxu0 %v5540
  %v5610 = vpop.f32.mrb[0].mxu0
  %v5611 = vadd.f32 0.0, %v5610
  %v5612 = vpop.f32.mrb[0].mxu0
  %5613 = vmatprep.mubr.f32.mxu0 0.0
  %5614 = vmatmul.mubr.f32.gmra.mrb[0].mxu0 %v5541
  %v5615 = vpop.f32.mrb[0].mxu0
  %v5616 = vadd.f32 0.0, %v5615
  %v5617 = vpop.f32.mrb[0].mxu0
  %5618 = vmatprep.mubr.f32.mxu0 0.0
  %5619 = vmatmul.mubr.f32.gmra.mrb[0].mxu0 %v5542
  %v5620 = vpop.f32.mrb[0].mxu0
  %v5621 = vadd.f32 0.0, %v5620
  %v5622 = vpop.f32.mrb[0].mxu0
  %5623 = vmatprep.mubr.f32.mxu0 0.0
  %5624 = vmatmul.mubr.f32.gmra.mrb[0].mxu0 %v5543
  %v5625 = vpop.f32.mrb[0].mxu0
  %v5626 = vadd.f32 0.0, %v5625
  %v5627 = vpop.f32.mrb[0].mxu0
  %5628 = vdwg.mxu0
  %s5629 = scalar_lea.vmem %s7, 16
  %v5630 = vld [vmem:[%s5629] sm:$0xff]
  %v5631 = vld [vmem:[%s5629 + $0x8] sm:$0xff]
  %vm5632 = vcmask 130048
  %v5634 = vsel %vm5632, %v5611, 0
  %v5637 = vsel %vm5632, %v5616, 0
  %v5640 = vsel %vm5632, %v5621, 0
  %v5643 = vsel %vm5632, %v5626, 0
  %5645 = vmatprep.subr.mxu0 0.0
  %5646 = vmatpush1.msra.mxu0 %v5630
  %5647 = vmatprep.subr.mxu0 0.0
  %5648 = vmatpush1.msra.mxu0 %v5631
  %5649 = vmatprep.subr.mxu0 0.0
  %5650 = vmatpush1.msra.mxu0 0.0
  %5651 = vmatprep.subr.mxu0 0.0
  %5652 = vmatpush1.msra.mxu0 0.0
  %5653 = vmatprep.subr.mxu0 0.0
  %5654 = vmatpush1.msra.mxu0 0.0
  %5655 = vmatprep.subr.mxu0 0.0
  %5656 = vmatpush1.msra.mxu0 0.0
  %5657 = vmatprep.subr.mxu0 0.0
  %5658 = vmatpush1.msra.mxu0 0.0
  %5659 = vmatprep.subr.mxu0 0.0
  %5660 = vmatpush1.msra.mxu0 0.0
  %5661 = vmatprep.subr.mxu0 0.0
  %5662 = vmatpush1.msra.mxu0 0.0
  %5663 = vmatprep.subr.mxu0 0.0
  %5664 = vmatpush1.msra.mxu0 0.0
  %5665 = vmatprep.subr.mxu0 0.0
  %5666 = vmatpush1.msra.mxu0 0.0
  %5667 = vmatprep.subr.mxu0 0.0
  %5668 = vmatpush1.msra.mxu0 0.0
  %5669 = vmatprep.subr.mxu0 0.0
  %5670 = vmatpush1.msra.mxu0 0.0
  %5671 = vmatprep.subr.mxu0 0.0
  %5672 = vmatpush1.msra.mxu0 0.0
  %5673 = vmatprep.subr.mxu0 0.0
  %5674 = vmatpush1.msra.mxu0 0.0
  %5675 = vmatprep.subr.mxu0 0.0
  %5676 = vmatpush1.msra.mxu0 0.0
  %5677 = vmatprep.subr.mxu0 0.0
  %5678 = vmatpush1.msra.mxu0 0.0
  %5679 = vmatprep.subr.mxu0 0.0
  %5680 = vmatpush1.msra.mxu0 0.0
  %5681 = vmatprep.subr.mxu0 0.0
  %5682 = vmatpush1.msra.mxu0 0.0
  %5683 = vmatprep.subr.mxu0 0.0
  %5684 = vmatpush1.msra.mxu0 0.0
  %5685 = vmatprep.subr.mxu0 0.0
  %5686 = vmatpush1.msra.mxu0 0.0
  %5687 = vmatprep.subr.mxu0 0.0
  %5688 = vmatpush1.msra.mxu0 0.0
  %5689 = vmatprep.subr.mxu0 0.0
  %5690 = vmatpush1.msra.mxu0 0.0
  %5691 = vmatprep.subr.mxu0 0.0
  %5692 = vmatpush1.msra.mxu0 0.0
  %5693 = vmatprep.subr.mxu0 0.0
  %5694 = vmatpush1.msra.mxu0 0.0
  %5695 = vmatprep.subr.mxu0 0.0
  %5696 = vmatpush1.msra.mxu0 0.0
  %5697 = vmatprep.subr.mxu0 0.0
  %5698 = vmatpush1.msra.mxu0 0.0
  %5699 = vmatprep.subr.mxu0 0.0
  %5700 = vmatpush1.msra.mxu0 0.0
  %5701 = vmatprep.subr.mxu0 0.0
  %5702 = vmatpush1.msra.mxu0 0.0
  %5703 = vmatprep.subr.mxu0 0.0
  %5704 = vmatpush1.msra.mxu0 0.0
  %5705 = vmatprep.subr.mxu0 0.0
  %5706 = vmatpush1.msra.mxu0 0.0
  %5707 = vmatprep.subr.mxu0 0.0
  %5708 = vmatpush1.msra.mxu0 0.0
  %5709 = vmatprep.mubr.f32.mxu0 0.0
  %5710 = vmatmul.mubr.f32.gmra.mrb[0].mxu0 %v5634
  %v5711 = vpop.f32.mrb[0].mxu0
  %v5712 = vadd.f32 0.0, %v5711
  %v5713 = vpop.f32.mrb[0].mxu0
  %5714 = vmatprep.mubr.f32.mxu0 0.0
  %5715 = vmatmul.mubr.f32.gmra.mrb[0].mxu0 %v5637
  %v5716 = vpop.f32.mrb[0].mxu0
  %v5717 = vadd.f32 0.0, %v5716
  %v5718 = vpop.f32.mrb[0].mxu0
  %5719 = vmatprep.mubr.f32.mxu0 0.0
  %5720 = vmatmul.mubr.f32.gmra.mrb[0].mxu0 %v5640
  %v5721 = vpop.f32.mrb[0].mxu0
  %v5722 = vadd.f32 0.0, %v5721
  %v5723 = vpop.f32.mrb[0].mxu0
  %5724 = vmatprep.mubr.f32.mxu0 0.0
  %5725 = vmatmul.mubr.f32.gmra.mrb[0].mxu0 %v5643
  %v5726 = vpop.f32.mrb[0].mxu0
  %v5727 = vadd.f32 0.0, %v5726
  %v5728 = vpop.f32.mrb[0].mxu0
  %5729 = vdwg.mxu0
  %v5731 = vsel %vm5632, %v5519, 0
  %v5734 = vsel %vm5632, %v5524, 0
  %v5737 = vsel %vm5632, %v5529, 0
  %v5740 = vsel %vm5632, %v5534, 0
  %5742 = vmatprep.subr.mxu0 0.0
  %5743 = vmatpush1.msra.mxu0 %v5537
  %5744 = vmatprep.subr.mxu0 0.0
  %5745 = vmatpush1.msra.mxu0 %v5538
  %5746 = vmatprep.subr.mxu0 0.0
  %5747 = vmatpush1.msra.mxu0 0.0
  %5748 = vmatprep.subr.mxu0 0.0
  %5749 = vmatpush1.msra.mxu0 0.0
  %5750 = vmatprep.subr.mxu0 0.0
  %5751 = vmatpush1.msra.mxu0 0.0
  %5752 = vmatprep.subr.mxu0 0.0
  %5753 = vmatpush1.msra.mxu0 0.0
  %5754 = vmatprep.subr.mxu0 0.0
  %5755 = vmatpush1.msra.mxu0 0.0
  %5756 = vmatprep.subr.mxu0 0.0
  %5757 = vmatpush1.msra.mxu0 0.0
  %5758 = vmatprep.subr.mxu0 0.0
  %5759 = vmatpush1.msra.mxu0 0.0
  %5760 = vmatprep.subr.mxu0 0.0
  %5761 = vmatpush1.msra.mxu0 0.0
  %5762 = vmatprep.subr.mxu0 0.0
  %5763 = vmatpush1.msra.mxu0 0.0
  %5764 = vmatprep.subr.mxu0 0.0
  %5765 = vmatpush1.msra.mxu0 0.0
  %5766 = vmatprep.subr.mxu0 0.0
  %5767 = vmatpush1.msra.mxu0 0.0
  %5768 = vmatprep.subr.mxu0 0.0
  %5769 = vmatpush1.msra.mxu0 0.0
  %5770 = vmatprep.subr.mxu0 0.0
  %5771 = vmatpush1.msra.mxu0 0.0
  %5772 = vmatprep.subr.mxu0 0.0
  %5773 = vmatpush1.msra.mxu0 0.0
  %5774 = vmatprep.subr.mxu0 0.0
  %5775 = vmatpush1.msra.mxu0 0.0
  %5776 = vmatprep.subr.mxu0 0.0
  %5777 = vmatpush1.msra.mxu0 0.0
  %5778 = vmatprep.subr.mxu0 0.0
  %5779 = vmatpush1.msra.mxu0 0.0
  %5780 = vmatprep.subr.mxu0 0.0
  %5781 = vmatpush1.msra.mxu0 0.0
  %5782 = vmatprep.subr.mxu0 0.0
  %5783 = vmatpush1.msra.mxu0 0.0
  %5784 = vmatprep.subr.mxu0 0.0
  %5785 = vmatpush1.msra.mxu0 0.0
  %5786 = vmatprep.subr.mxu0 0.0
  %5787 = vmatpush1.msra.mxu0 0.0
  %5788 = vmatprep.subr.mxu0 0.0
  %5789 = vmatpush1.msra.mxu0 0.0
  %5790 = vmatprep.subr.mxu0 0.0
  %5791 = vmatpush1.msra.mxu0 0.0
  %5792 = vmatprep.subr.mxu0 0.0
  %5793 = vmatpush1.msra.mxu0 0.0
  %5794 = vmatprep.subr.mxu0 0.0
  %5795 = vmatpush1.msra.mxu0 0.0
  %5796 = vmatprep.subr.mxu0 0.0
  %5797 = vmatpush1.msra.mxu0 0.0
  %5798 = vmatprep.subr.mxu0 0.0
  %5799 = vmatpush1.msra.mxu0 0.0
  %5800 = vmatprep.subr.mxu0 0.0
  %5801 = vmatpush1.msra.mxu0 0.0
  %5802 = vmatprep.subr.mxu0 0.0
  %5803 = vmatpush1.msra.mxu0 0.0
  %5804 = vmatprep.subr.mxu0 0.0
  %5805 = vmatpush1.msra.mxu0 0.0
  %5806 = vmatprep.mubr.f32.mxu0 0.0
  %5807 = vmatmul.mubr.f32.gmra.mrb[0].mxu0 %v5731
  %v5808 = vpop.f32.mrb[0].mxu0
  %v5809 = vadd.f32 %v5712, %v5808
  %v5810 = vpop.f32.mrb[0].mxu0
  %5811 = vmatprep.mubr.f32.mxu0 0.0
  %5812 = vmatmul.mubr.f32.gmra.mrb[0].mxu0 %v5734
  %v5813 = vpop.f32.mrb[0].mxu0
  %v5814 = vadd.f32 %v5717, %v5813
  %v5815 = vpop.f32.mrb[0].mxu0
  %5816 = vmatprep.mubr.f32.mxu0 0.0
  %5817 = vmatmul.mubr.f32.gmra.mrb[0].mxu0 %v5737
  %v5818 = vpop.f32.mrb[0].mxu0
  %v5819 = vadd.f32 %v5722, %v5818
  %v5820 = vpop.f32.mrb[0].mxu0
  %5821 = vmatprep.mubr.f32.mxu0 0.0
  %5822 = vmatmul.mubr.f32.gmra.mrb[0].mxu0 %v5740
  %v5823 = vpop.f32.mrb[0].mxu0
  %v5824 = vadd.f32 %v5727, %v5823
  %v5825 = vpop.f32.mrb[0].mxu0
  %5826 = vdwg.mxu0
  %s5827 = scalar_lea.vmem %s2, 64
  %v5828 = vld [vmem:[%s5827] sm:$0xff]
  %v5829 = vld [vmem:[%s5827 + $0x8] sm:$0xff]
  %v5830 = vld [vmem:[%s5827 + $0x10] sm:$0xff]
  %v5831 = vld [vmem:[%s5827 + $0x18] sm:$0xff]
  %5832 = vmatprep.subr.mxu0 0.0
  %5833 = vmatpush1.msra.mxu0 %v5432
  %5834 = vmatprep.subr.mxu0 0.0
  %5835 = vmatpush1.msra.mxu0 %v5433
  %5836 = vmatprep.subr.mxu0 0.0
  %5837 = vmatpush1.msra.mxu0 %v5434
  %5838 = vmatprep.subr.mxu0 0.0
  %5839 = vmatpush1.msra.mxu0 %v5435
  %5840 = vmatprep.subr.mxu0 0.0
  %5841 = vmatpush1.msra.mxu0 %v5436
  %5842 = vmatprep.subr.mxu0 0.0
  %5843 = vmatpush1.msra.mxu0 %v5437
  %5844 = vmatprep.subr.mxu0 0.0
  %5845 = vmatpush1.msra.mxu0 %v5438
  %5846 = vmatprep.subr.mxu0 0.0
  %5847 = vmatpush1.msra.mxu0 %v5439
  %5848 = vmatprep.subr.mxu0 0.0
  %5849 = vmatpush1.msra.mxu0 %v5440
  %5850 = vmatprep.subr.mxu0 0.0
  %5851 = vmatpush1.msra.mxu0 %v5441
  %5852 = vmatprep.subr.mxu0 0.0
  %5853 = vmatpush1.msra.mxu0 %v5442
  %5854 = vmatprep.subr.mxu0 0.0
  %5855 = vmatpush1.msra.mxu0 %v5443
  %5856 = vmatprep.subr.mxu0 0.0
  %5857 = vmatpush1.msra.mxu0 %v5444
  %5858 = vmatprep.subr.mxu0 0.0
  %5859 = vmatpush1.msra.mxu0 %v5445
  %5860 = vmatprep.subr.mxu0 0.0
  %5861 = vmatpush1.msra.mxu0 %v5446
  %5862 = vmatprep.subr.mxu0 0.0
  %5863 = vmatpush1.msra.mxu0 %v5447
  %5864 = vmatprep.subr.mxu0 0.0
  %5865 = vmatpush1.msra.mxu0 0.0
  %5866 = vmatprep.subr.mxu0 0.0
  %5867 = vmatpush1.msra.mxu0 0.0
  %5868 = vmatprep.subr.mxu0 0.0
  %5869 = vmatpush1.msra.mxu0 0.0
  %5870 = vmatprep.subr.mxu0 0.0
  %5871 = vmatpush1.msra.mxu0 0.0
  %5872 = vmatprep.subr.mxu0 0.0
  %5873 = vmatpush1.msra.mxu0 0.0
  %5874 = vmatprep.subr.mxu0 0.0
  %5875 = vmatpush1.msra.mxu0 0.0
  %5876 = vmatprep.subr.mxu0 0.0
  %5877 = vmatpush1.msra.mxu0 0.0
  %5878 = vmatprep.subr.mxu0 0.0
  %5879 = vmatpush1.msra.mxu0 0.0
  %5880 = vmatprep.subr.mxu0 0.0
  %5881 = vmatpush1.msra.mxu0 0.0
  %5882 = vmatprep.subr.mxu0 0.0
  %5883 = vmatpush1.msra.mxu0 0.0
  %5884 = vmatprep.subr.mxu0 0.0
  %5885 = vmatpush1.msra.mxu0 0.0
  %5886 = vmatprep.subr.mxu0 0.0
  %5887 = vmatpush1.msra.mxu0 0.0
  %5888 = vmatprep.subr.mxu0 0.0
  %5889 = vmatpush1.msra.mxu0 0.0
  %5890 = vmatprep.subr.mxu0 0.0
  %5891 = vmatpush1.msra.mxu0 0.0
  %5892 = vmatprep.subr.mxu0 0.0
  %5893 = vmatpush1.msra.mxu0 0.0
  %5894 = vmatprep.subr.mxu0 0.0
  %5895 = vmatpush1.msra.mxu0 0.0
  %5896 = vmatprep.mubr.f32.mxu0 0.0
  %5897 = vmatmul.mubr.f32.gmra.mrb[0].mxu0 %v5828
  %v5898 = vpop.f32.mrb[0].mxu0
  %v5899 = vadd.f32 0.0, %v5898
  %v5900 = vpop.f32.mrb[0].mxu0
  %5901 = vmatprep.mubr.f32.mxu0 0.0
  %5902 = vmatmul.mubr.f32.gmra.mrb[0].mxu0 %v5829
  %v5903 = vpop.f32.mrb[0].mxu0
  %v5904 = vadd.f32 0.0, %v5903
  %v5905 = vpop.f32.mrb[0].mxu0
  %5906 = vmatprep.mubr.f32.mxu0 0.0
  %5907 = vmatmul.mubr.f32.gmra.mrb[0].mxu0 %v5830
  %v5908 = vpop.f32.mrb[0].mxu0
  %v5909 = vadd.f32 0.0, %v5908
  %v5910 = vpop.f32.mrb[0].mxu0
  %5911 = vmatprep.mubr.f32.mxu0 0.0
  %5912 = vmatmul.mubr.f32.gmra.mrb[0].mxu0 %v5831
  %v5913 = vpop.f32.mrb[0].mxu0
  %v5914 = vadd.f32 0.0, %v5913
  %v5915 = vpop.f32.mrb[0].mxu0
  %5916 = vdwg.mxu0
  %s5917 = scalar_lea.vmem %s7, 32
  %v5918 = vld [vmem:[%s5917] sm:$0xff]
  %v5919 = vld [vmem:[%s5917 + $0x8] sm:$0xff]
  %v5921 = vsel %vm5632, %v5899, 0
  %v5924 = vsel %vm5632, %v5904, 0
  %v5927 = vsel %vm5632, %v5909, 0
  %v5930 = vsel %vm5632, %v5914, 0
  %5932 = vmatprep.subr.mxu0 0.0
  %5933 = vmatpush1.msra.mxu0 %v5918
  %5934 = vmatprep.subr.mxu0 0.0
  %5935 = vmatpush1.msra.mxu0 %v5919
  %5936 = vmatprep.subr.mxu0 0.0
  %5937 = vmatpush1.msra.mxu0 0.0
  %5938 = vmatprep.subr.mxu0 0.0
  %5939 = vmatpush1.msra.mxu0 0.0
  %5940 = vmatprep.subr.mxu0 0.0
  %5941 = vmatpush1.msra.mxu0 0.0
  %5942 = vmatprep.subr.mxu0 0.0
  %5943 = vmatpush1.msra.mxu0 0.0
  %5944 = vmatprep.subr.mxu0 0.0
  %5945 = vmatpush1.msra.mxu0 0.0
  %5946 = vmatprep.subr.mxu0 0.0
  %5947 = vmatpush1.msra.mxu0 0.0
  %5948 = vmatprep.subr.mxu0 0.0
  %5949 = vmatpush1.msra.mxu0 0.0
  %5950 = vmatprep.subr.mxu0 0.0
  %5951 = vmatpush1.msra.mxu0 0.0
  %5952 = vmatprep.subr.mxu0 0.0
  %5953 = vmatpush1.msra.mxu0 0.0
  %5954 = vmatprep.subr.mxu0 0.0
  %5955 = vmatpush1.msra.mxu0 0.0
  %5956 = vmatprep.subr.mxu0 0.0
  %5957 = vmatpush1.msra.mxu0 0.0
  %5958 = vmatprep.subr.mxu0 0.0
  %5959 = vmatpush1.msra.mxu0 0.0
  %5960 = vmatprep.subr.mxu0 0.0
  %5961 = vmatpush1.msra.mxu0 0.0
  %5962 = vmatprep.subr.mxu0 0.0
  %5963 = vmatpush1.msra.mxu0 0.0
  %5964 = vmatprep.subr.mxu0 0.0
  %5965 = vmatpush1.msra.mxu0 0.0
  %5966 = vmatprep.subr.mxu0 0.0
  %5967 = vmatpush1.msra.mxu0 0.0
  %5968 = vmatprep.subr.mxu0 0.0
  %5969 = vmatpush1.msra.mxu0 0.0
  %5970 = vmatprep.subr.mxu0 0.0
  %5971 = vmatpush1.msra.mxu0 0.0
  %5972 = vmatprep.subr.mxu0 0.0
  %5973 = vmatpush1.msra.mxu0 0.0
  %5974 = vmatprep.subr.mxu0 0.0
  %5975 = vmatpush1.msra.mxu0 0.0
  %5976 = vmatprep.subr.mxu0 0.0
  %5977 = vmatpush1.msra.mxu0 0.0
  %5978 = vmatprep.subr.mxu0 0.0
  %5979 = vmatpush1.msra.mxu0 0.0
  %5980 = vmatprep.subr.mxu0 0.0
  %5981 = vmatpush1.msra.mxu0 0.0
  %5982 = vmatprep.subr.mxu0 0.0
  %5983 = vmatpush1.msra.mxu0 0.0
  %5984 = vmatprep.subr.mxu0 0.0
  %5985 = vmatpush1.msra.mxu0 0.0
  %5986 = vmatprep.subr.mxu0 0.0
  %5987 = vmatpush1.msra.mxu0 0.0
  %5988 = vmatprep.subr.mxu0 0.0
  %5989 = vmatpush1.msra.mxu0 0.0
  %5990 = vmatprep.subr.mxu0 0.0
  %5991 = vmatpush1.msra.mxu0 0.0
  %5992 = vmatprep.subr.mxu0 0.0
  %5993 = vmatpush1.msra.mxu0 0.0
  %5994 = vmatprep.subr.mxu0 0.0
  %5995 = vmatpush1.msra.mxu0 0.0
  %5996 = vmatprep.mubr.f32.mxu0 0.0
  %5997 = vmatmul.mubr.f32.gmra.mrb[0].mxu0 %v5921
  %v5998 = vpop.f32.mrb[0].mxu0
  %v5999 = vadd.f32 0.0, %v5998
  %v6000 = vpop.f32.mrb[0].mxu0
  %6001 = vmatprep.mubr.f32.mxu0 0.0
  %6002 = vmatmul.mubr.f32.gmra.mrb[0].mxu0 %v5924
  %v6003 = vpop.f32.mrb[0].mxu0
  %v6004 = vadd.f32 0.0, %v6003
  %v6005 = vpop.f32.mrb[0].mxu0
  %6006 = vmatprep.mubr.f32.mxu0 0.0
  %6007 = vmatmul.mubr.f32.gmra.mrb[0].mxu0 %v5927
  %v6008 = vpop.f32.mrb[0].mxu0
  %v6009 = vadd.f32 0.0, %v6008
  %v6010 = vpop.f32.mrb[0].mxu0
  %6011 = vmatprep.mubr.f32.mxu0 0.0
  %6012 = vmatmul.mubr.f32.gmra.mrb[0].mxu0 %v5930
  %v6013 = vpop.f32.mrb[0].mxu0
  %v6014 = vadd.f32 0.0, %v6013
  %v6015 = vpop.f32.mrb[0].mxu0
  %6016 = vdwg.mxu0
  %v6017 = vadd.f32 %v5809, %v5999
  %v6018 = vadd.f32 %v5814, %v6004
  %v6019 = vadd.f32 %v5819, %v6009
  %v6020 = vadd.f32 %v5824, %v6014
  %s6021 = scalar_lea.vmem %s2, 96
  %v6022 = vld [vmem:[%s6021] sm:$0xff]
  %v6023 = vld [vmem:[%s6021 + $0x8] sm:$0xff]
  %v6024 = vld [vmem:[%s6021 + $0x10] sm:$0xff]
  %v6025 = vld [vmem:[%s6021 + $0x18] sm:$0xff]
  %6026 = vmatprep.subr.mxu0 0.0
  %6027 = vmatpush1.msra.mxu0 %v5432
  %6028 = vmatprep.subr.mxu0 0.0
  %6029 = vmatpush1.msra.mxu0 %v5433
  %6030 = vmatprep.subr.mxu0 0.0
  %6031 = vmatpush1.msra.mxu0 %v5434
  %6032 = vmatprep.subr.mxu0 0.0
  %6033 = vmatpush1.msra.mxu0 %v5435
  %6034 = vmatprep.subr.mxu0 0.0
  %6035 = vmatpush1.msra.mxu0 %v5436
  %6036 = vmatprep.subr.mxu0 0.0
  %6037 = vmatpush1.msra.mxu0 %v5437
  %6038 = vmatprep.subr.mxu0 0.0
  %6039 = vmatpush1.msra.mxu0 %v5438
  %6040 = vmatprep.subr.mxu0 0.0
  %6041 = vmatpush1.msra.mxu0 %v5439
  %6042 = vmatprep.subr.mxu0 0.0
  %6043 = vmatpush1.msra.mxu0 %v5440
  %6044 = vmatprep.subr.mxu0 0.0
  %6045 = vmatpush1.msra.mxu0 %v5441
  %6046 = vmatprep.subr.mxu0 0.0
  %6047 = vmatpush1.msra.mxu0 %v5442
  %6048 = vmatprep.subr.mxu0 0.0
  %6049 = vmatpush1.msra.mxu0 %v5443
  %6050 = vmatprep.subr.mxu0 0.0
  %6051 = vmatpush1.msra.mxu0 %v5444
  %6052 = vmatprep.subr.mxu0 0.0
  %6053 = vmatpush1.msra.mxu0 %v5445
  %6054 = vmatprep.subr.mxu0 0.0
  %6055 = vmatpush1.msra.mxu0 %v5446
  %6056 = vmatprep.subr.mxu0 0.0
  %6057 = vmatpush1.msra.mxu0 %v5447
  %6058 = vmatprep.subr.mxu0 0.0
  %6059 = vmatpush1.msra.mxu0 0.0
  %6060 = vmatprep.subr.mxu0 0.0
  %6061 = vmatpush1.msra.mxu0 0.0
  %6062 = vmatprep.subr.mxu0 0.0
  %6063 = vmatpush1.msra.mxu0 0.0
  %6064 = vmatprep.subr.mxu0 0.0
  %6065 = vmatpush1.msra.mxu0 0.0
  %6066 = vmatprep.subr.mxu0 0.0
  %6067 = vmatpush1.msra.mxu0 0.0
  %6068 = vmatprep.subr.mxu0 0.0
  %6069 = vmatpush1.msra.mxu0 0.0
  %6070 = vmatprep.subr.mxu0 0.0
  %6071 = vmatpush1.msra.mxu0 0.0
  %6072 = vmatprep.subr.mxu0 0.0
  %6073 = vmatpush1.msra.mxu0 0.0
  %6074 = vmatprep.subr.mxu0 0.0
  %6075 = vmatpush1.msra.mxu0 0.0
  %6076 = vmatprep.subr.mxu0 0.0
  %6077 = vmatpush1.msra.mxu0 0.0
  %6078 = vmatprep.subr.mxu0 0.0
  %6079 = vmatpush1.msra.mxu0 0.0
  %6080 = vmatprep.subr.mxu0 0.0
  %6081 = vmatpush1.msra.mxu0 0.0
  %6082 = vmatprep.subr.mxu0 0.0
  %6083 = vmatpush1.msra.mxu0 0.0
  %6084 = vmatprep.subr.mxu0 0.0
  %6085 = vmatpush1.msra.mxu0 0.0
  %6086 = vmatprep.subr.mxu0 0.0
  %6087 = vmatpush1.msra.mxu0 0.0
  %6088 = vmatprep.subr.mxu0 0.0
  %6089 = vmatpush1.msra.mxu0 0.0
  %6090 = vmatprep.mubr.f32.mxu0 0.0
  %6091 = vmatmul.mubr.f32.gmra.mrb[0].mxu0 %v6022
  %v6092 = vpop.f32.mrb[0].mxu0
  %v6093 = vadd.f32 0.0, %v6092
  %v6094 = vpop.f32.mrb[0].mxu0
  %6095 = vmatprep.mubr.f32.mxu0 0.0
  %6096 = vmatmul.mubr.f32.gmra.mrb[0].mxu0 %v6023
  %v6097 = vpop.f32.mrb[0].mxu0
  %v6098 = vadd.f32 0.0, %v6097
  %v6099 = vpop.f32.mrb[0].mxu0
  %6100 = vmatprep.mubr.f32.mxu0 0.0
  %6101 = vmatmul.mubr.f32.gmra.mrb[0].mxu0 %v6024
  %v6102 = vpop.f32.mrb[0].mxu0
  %v6103 = vadd.f32 0.0, %v6102
  %v6104 = vpop.f32.mrb[0].mxu0
  %6105 = vmatprep.mubr.f32.mxu0 0.0
  %6106 = vmatmul.mubr.f32.gmra.mrb[0].mxu0 %v6025
  %v6107 = vpop.f32.mrb[0].mxu0
  %v6108 = vadd.f32 0.0, %v6107
  %v6109 = vpop.f32.mrb[0].mxu0
  %6110 = vdwg.mxu0
  %s6111 = scalar_lea.vmem %s7, 48
  %v6112 = vld [vmem:[%s6111] sm:$0xff]
  %v6113 = vld [vmem:[%s6111 + $0x8] sm:$0xff]
  %v6115 = vsel %vm5632, %v6093, 0
  %v6118 = vsel %vm5632, %v6098, 0
  %v6121 = vsel %vm5632, %v6103, 0
  %v6124 = vsel %vm5632, %v6108, 0
  %6126 = vmatprep.subr.mxu0 0.0
  %6127 = vmatpush1.msra.mxu0 %v6112
  %6128 = vmatprep.subr.mxu0 0.0
  %6129 = vmatpush1.msra.mxu0 %v6113
  %6130 = vmatprep.subr.mxu0 0.0
  %6131 = vmatpush1.msra.mxu0 0.0
  %6132 = vmatprep.subr.mxu0 0.0
  %6133 = vmatpush1.msra.mxu0 0.0
  %6134 = vmatprep.subr.mxu0 0.0
  %6135 = vmatpush1.msra.mxu0 0.0
  %6136 = vmatprep.subr.mxu0 0.0
  %6137 = vmatpush1.msra.mxu0 0.0
  %6138 = vmatprep.subr.mxu0 0.0
  %6139 = vmatpush1.msra.mxu0 0.0
  %6140 = vmatprep.subr.mxu0 0.0
  %6141 = vmatpush1.msra.mxu0 0.0
  %6142 = vmatprep.subr.mxu0 0.0
  %6143 = vmatpush1.msra.mxu0 0.0
  %6144 = vmatprep.subr.mxu0 0.0
  %6145 = vmatpush1.msra.mxu0 0.0
  %6146 = vmatprep.subr.mxu0 0.0
  %6147 = vmatpush1.msra.mxu0 0.0
  %6148 = vmatprep.subr.mxu0 0.0
  %6149 = vmatpush1.msra.mxu0 0.0
  %6150 = vmatprep.subr.mxu0 0.0
  %6151 = vmatpush1.msra.mxu0 0.0
  %6152 = vmatprep.subr.mxu0 0.0
  %6153 = vmatpush1.msra.mxu0 0.0
  %6154 = vmatprep.subr.mxu0 0.0
  %6155 = vmatpush1.msra.mxu0 0.0
  %6156 = vmatprep.subr.mxu0 0.0
  %6157 = vmatpush1.msra.mxu0 0.0
  %6158 = vmatprep.subr.mxu0 0.0
  %6159 = vmatpush1.msra.mxu0 0.0
  %6160 = vmatprep.subr.mxu0 0.0
  %6161 = vmatpush1.msra.mxu0 0.0
  %6162 = vmatprep.subr.mxu0 0.0
  %6163 = vmatpush1.msra.mxu0 0.0
  %6164 = vmatprep.subr.mxu0 0.0
  %6165 = vmatpush1.msra.mxu0 0.0
  %6166 = vmatprep.subr.mxu0 0.0
  %6167 = vmatpush1.msra.mxu0 0.0
  %6168 = vmatprep.subr.mxu0 0.0
  %6169 = vmatpush1.msra.mxu0 0.0
  %6170 = vmatprep.subr.mxu0 0.0
  %6171 = vmatpush1.msra.mxu0 0.0
  %6172 = vmatprep.subr.mxu0 0.0
  %6173 = vmatpush1.msra.mxu0 0.0
  %6174 = vmatprep.subr.mxu0 0.0
  %6175 = vmatpush1.msra.mxu0 0.0
  %6176 = vmatprep.subr.mxu0 0.0
  %6177 = vmatpush1.msra.mxu0 0.0
  %6178 = vmatprep.subr.mxu0 0.0
  %6179 = vmatpush1.msra.mxu0 0.0
  %6180 = vmatprep.subr.mxu0 0.0
  %6181 = vmatpush1.msra.mxu0 0.0
  %6182 = vmatprep.subr.mxu0 0.0
  %6183 = vmatpush1.msra.mxu0 0.0
  %6184 = vmatprep.subr.mxu0 0.0
  %6185 = vmatpush1.msra.mxu0 0.0
  %6186 = vmatprep.subr.mxu0 0.0
  %6187 = vmatpush1.msra.mxu0 0.0
  %6188 = vmatprep.subr.mxu0 0.0
  %6189 = vmatpush1.msra.mxu0 0.0
  %6190 = vmatprep.mubr.f32.mxu0 0.0
  %6191 = vmatmul.mubr.f32.gmra.mrb[0].mxu0 %v6115
  %v6192 = vpop.f32.mrb[0].mxu0
  %v6193 = vadd.f32 0.0, %v6192
  %v6194 = vpop.f32.mrb[0].mxu0
  %6195 = vmatprep.mubr.f32.mxu0 0.0
  %6196 = vmatmul.mubr.f32.gmra.mrb[0].mxu0 %v6118
  %v6197 = vpop.f32.mrb[0].mxu0
  %v6198 = vadd.f32 0.0, %v6197
  %v6199 = vpop.f32.mrb[0].mxu0
  %6200 = vmatprep.mubr.f32.mxu0 0.0
  %6201 = vmatmul.mubr.f32.gmra.mrb[0].mxu0 %v6121
  %v6202 = vpop.f32.mrb[0].mxu0
  %v6203 = vadd.f32 0.0, %v6202
  %v6204 = vpop.f32.mrb[0].mxu0
  %6205 = vmatprep.mubr.f32.mxu0 0.0
  %6206 = vmatmul.mubr.f32.gmra.mrb[0].mxu0 %v6124
  %v6207 = vpop.f32.mrb[0].mxu0
  %v6208 = vadd.f32 0.0, %v6207
  %v6209 = vpop.f32.mrb[0].mxu0
  %6210 = vdwg.mxu0
  %v6211 = vadd.f32 %v6017, %v6193
  %v6212 = vadd.f32 %v6018, %v6198
  %v6213 = vadd.f32 %v6019, %v6203
  %v6214 = vadd.f32 %v6020, %v6208
  %s6215 = scalar_lea.vmem %s2, 128
  %v6216 = vld [vmem:[%s6215] sm:$0xff]
  %v6217 = vld [vmem:[%s6215 + $0x8] sm:$0xff]
  %v6218 = vld [vmem:[%s6215 + $0x10] sm:$0xff]
  %v6219 = vld [vmem:[%s6215 + $0x18] sm:$0xff]
  %6220 = vmatprep.subr.mxu0 0.0
  %6221 = vmatpush1.msra.mxu0 %v5432
  %6222 = vmatprep.subr.mxu0 0.0
  %6223 = vmatpush1.msra.mxu0 %v5433
  %6224 = vmatprep.subr.mxu0 0.0
  %6225 = vmatpush1.msra.mxu0 %v5434
  %6226 = vmatprep.subr.mxu0 0.0
  %6227 = vmatpush1.msra.mxu0 %v5435
  %6228 = vmatprep.subr.mxu0 0.0
  %6229 = vmatpush1.msra.mxu0 %v5436
  %6230 = vmatprep.subr.mxu0 0.0
  %6231 = vmatpush1.msra.mxu0 %v5437
  %6232 = vmatprep.subr.mxu0 0.0
  %6233 = vmatpush1.msra.mxu0 %v5438
  %6234 = vmatprep.subr.mxu0 0.0
  %6235 = vmatpush1.msra.mxu0 %v5439
  %6236 = vmatprep.subr.mxu0 0.0
  %6237 = vmatpush1.msra.mxu0 %v5440
  %6238 = vmatprep.subr.mxu0 0.0
  %6239 = vmatpush1.msra.mxu0 %v5441
  %6240 = vmatprep.subr.mxu0 0.0
  %6241 = vmatpush1.msra.mxu0 %v5442
  %6242 = vmatprep.subr.mxu0 0.0
  %6243 = vmatpush1.msra.mxu0 %v5443
  %6244 = vmatprep.subr.mxu0 0.0
  %6245 = vmatpush1.msra.mxu0 %v5444
  %6246 = vmatprep.subr.mxu0 0.0
  %6247 = vmatpush1.msra.mxu0 %v5445
  %6248 = vmatprep.subr.mxu0 0.0
  %6249 = vmatpush1.msra.mxu0 %v5446
  %6250 = vmatprep.subr.mxu0 0.0
  %6251 = vmatpush1.msra.mxu0 %v5447
  %6252 = vmatprep.subr.mxu0 0.0
  %6253 = vmatpush1.msra.mxu0 0.0
  %6254 = vmatprep.subr.mxu0 0.0
  %6255 = vmatpush1.msra.mxu0 0.0
  %6256 = vmatprep.subr.mxu0 0.0
  %6257 = vmatpush1.msra.mxu0 0.0
  %6258 = vmatprep.subr.mxu0 0.0
  %6259 = vmatpush1.msra.mxu0 0.0
  %6260 = vmatprep.subr.mxu0 0.0
  %6261 = vmatpush1.msra.mxu0 0.0
  %6262 = vmatprep.subr.mxu0 0.0
  %6263 = vmatpush1.msra.mxu0 0.0
  %6264 = vmatprep.subr.mxu0 0.0
  %6265 = vmatpush1.msra.mxu0 0.0
  %6266 = vmatprep.subr.mxu0 0.0
  %6267 = vmatpush1.msra.mxu0 0.0
  %6268 = vmatprep.subr.mxu0 0.0
  %6269 = vmatpush1.msra.mxu0 0.0
  %6270 = vmatprep.subr.mxu0 0.0
  %6271 = vmatpush1.msra.mxu0 0.0
  %6272 = vmatprep.subr.mxu0 0.0
  %6273 = vmatpush1.msra.mxu0 0.0
  %6274 = vmatprep.subr.mxu0 0.0
  %6275 = vmatpush1.msra.mxu0 0.0
  %6276 = vmatprep.subr.mxu0 0.0
  %6277 = vmatpush1.msra.mxu0 0.0
  %6278 = vmatprep.subr.mxu0 0.0
  %6279 = vmatpush1.msra.mxu0 0.0
  %6280 = vmatprep.subr.mxu0 0.0
  %6281 = vmatpush1.msra.mxu0 0.0
  %6282 = vmatprep.subr.mxu0 0.0
  %6283 = vmatpush1.msra.mxu0 0.0
  %6284 = vmatprep.mubr.f32.mxu0 0.0
  %6285 = vmatmul.mubr.f32.gmra.mrb[0].mxu0 %v6216
  %v6286 = vpop.f32.mrb[0].mxu0
  %v6287 = vadd.f32 0.0, %v6286
  %v6288 = vpop.f32.mrb[0].mxu0
  %6289 = vmatprep.mubr.f32.mxu0 0.0
  %6290 = vmatmul.mubr.f32.gmra.mrb[0].mxu0 %v6217
  %v6291 = vpop.f32.mrb[0].mxu0
  %v6292 = vadd.f32 0.0, %v6291
  %v6293 = vpop.f32.mrb[0].mxu0
  %6294 = vmatprep.mubr.f32.mxu0 0.0
  %6295 = vmatmul.mubr.f32.gmra.mrb[0].mxu0 %v6218
  %v6296 = vpop.f32.mrb[0].mxu0
  %v6297 = vadd.f32 0.0, %v6296
  %v6298 = vpop.f32.mrb[0].mxu0
  %6299 = vmatprep.mubr.f32.mxu0 0.0
  %6300 = vmatmul.mubr.f32.gmra.mrb[0].mxu0 %v6219
  %v6301 = vpop.f32.mrb[0].mxu0
  %v6302 = vadd.f32 0.0, %v6301
  %v6303 = vpop.f32.mrb[0].mxu0
  %6304 = vdwg.mxu0
  %s6305 = scalar_lea.vmem %s7, 64
  %v6306 = vld [vmem:[%s6305] sm:$0xff]
  %v6307 = vld [vmem:[%s6305 + $0x8] sm:$0xff]
  %v6309 = vsel %vm5632, %v6287, 0
  %v6312 = vsel %vm5632, %v6292, 0
  %v6315 = vsel %vm5632, %v6297, 0
  %v6318 = vsel %vm5632, %v6302, 0
  %6320 = vmatprep.subr.mxu0 0.0
  %6321 = vmatpush1.msra.mxu0 %v6306
  %6322 = vmatprep.subr.mxu0 0.0
  %6323 = vmatpush1.msra.mxu0 %v6307
  %6324 = vmatprep.subr.mxu0 0.0
  %6325 = vmatpush1.msra.mxu0 0.0
  %6326 = vmatprep.subr.mxu0 0.0
  %6327 = vmatpush1.msra.mxu0 0.0
  %6328 = vmatprep.subr.mxu0 0.0
  %6329 = vmatpush1.msra.mxu0 0.0
  %6330 = vmatprep.subr.mxu0 0.0
  %6331 = vmatpush1.msra.mxu0 0.0
  %6332 = vmatprep.subr.mxu0 0.0
  %6333 = vmatpush1.msra.mxu0 0.0
  %6334 = vmatprep.subr.mxu0 0.0
  %6335 = vmatpush1.msra.mxu0 0.0
  %6336 = vmatprep.subr.mxu0 0.0
  %6337 = vmatpush1.msra.mxu0 0.0
  %6338 = vmatprep.subr.mxu0 0.0
  %6339 = vmatpush1.msra.mxu0 0.0
  %6340 = vmatprep.subr.mxu0 0.0
  %6341 = vmatpush1.msra.mxu0 0.0
  %6342 = vmatprep.subr.mxu0 0.0
  %6343 = vmatpush1.msra.mxu0 0.0
  %6344 = vmatprep.subr.mxu0 0.0
  %6345 = vmatpush1.msra.mxu0 0.0
  %6346 = vmatprep.subr.mxu0 0.0
  %6347 = vmatpush1.msra.mxu0 0.0
  %6348 = vmatprep.subr.mxu0 0.0
  %6349 = vmatpush1.msra.mxu0 0.0
  %6350 = vmatprep.subr.mxu0 0.0
  %6351 = vmatpush1.msra.mxu0 0.0
  %6352 = vmatprep.subr.mxu0 0.0
  %6353 = vmatpush1.msra.mxu0 0.0
  %6354 = vmatprep.subr.mxu0 0.0
  %6355 = vmatpush1.msra.mxu0 0.0
  %6356 = vmatprep.subr.mxu0 0.0
  %6357 = vmatpush1.msra.mxu0 0.0
  %6358 = vmatprep.subr.mxu0 0.0
  %6359 = vmatpush1.msra.mxu0 0.0
  %6360 = vmatprep.subr.mxu0 0.0
  %6361 = vmatpush1.msra.mxu0 0.0
  %6362 = vmatprep.subr.mxu0 0.0
  %6363 = vmatpush1.msra.mxu0 0.0
  %6364 = vmatprep.subr.mxu0 0.0
  %6365 = vmatpush1.msra.mxu0 0.0
  %6366 = vmatprep.subr.mxu0 0.0
  %6367 = vmatpush1.msra.mxu0 0.0
  %6368 = vmatprep.subr.mxu0 0.0
  %6369 = vmatpush1.msra.mxu0 0.0
  %6370 = vmatprep.subr.mxu0 0.0
  %6371 = vmatpush1.msra.mxu0 0.0
  %6372 = vmatprep.subr.mxu0 0.0
  %6373 = vmatpush1.msra.mxu0 0.0
  %6374 = vmatprep.subr.mxu0 0.0
  %6375 = vmatpush1.msra.mxu0 0.0
  %6376 = vmatprep.subr.mxu0 0.0
  %6377 = vmatpush1.msra.mxu0 0.0
  %6378 = vmatprep.subr.mxu0 0.0
  %6379 = vmatpush1.msra.mxu0 0.0
  %6380 = vmatprep.subr.mxu0 0.0
  %6381 = vmatpush1.msra.mxu0 0.0
  %6382 = vmatprep.subr.mxu0 0.0
  %6383 = vmatpush1.msra.mxu0 0.0
  %6384 = vmatprep.mubr.f32.mxu0 0.0
  %6385 = vmatmul.mubr.f32.gmra.mrb[0].mxu0 %v6309
  %v6386 = vpop.f32.mrb[0].mxu0
  %v6387 = vadd.f32 0.0, %v6386
  %v6388 = vpop.f32.mrb[0].mxu0
  %6389 = vmatprep.mubr.f32.mxu0 0.0
  %6390 = vmatmul.mubr.f32.gmra.mrb[0].mxu0 %v6312
  %v6391 = vpop.f32.mrb[0].mxu0
  %v6392 = vadd.f32 0.0, %v6391
  %v6393 = vpop.f32.mrb[0].mxu0
  %6394 = vmatprep.mubr.f32.mxu0 0.0
  %6395 = vmatmul.mubr.f32.gmra.mrb[0].mxu0 %v6315
  %v6396 = vpop.f32.mrb[0].mxu0
  %v6397 = vadd.f32 0.0, %v6396
  %v6398 = vpop.f32.mrb[0].mxu0
  %6399 = vmatprep.mubr.f32.mxu0 0.0
  %6400 = vmatmul.mubr.f32.gmra.mrb[0].mxu0 %v6318
  %v6401 = vpop.f32.mrb[0].mxu0
  %v6402 = vadd.f32 0.0, %v6401
  %v6403 = vpop.f32.mrb[0].mxu0
  %6404 = vdwg.mxu0
  %v6405 = vadd.f32 %v6211, %v6387
  %v6406 = vadd.f32 %v6212, %v6392
  %v6407 = vadd.f32 %v6213, %v6397
  %v6408 = vadd.f32 %v6214, %v6402
  %s6409 = scalar_lea.vmem %s2, 160
  %v6410 = vld [vmem:[%s6409] sm:$0xff]
  %v6411 = vld [vmem:[%s6409 + $0x8] sm:$0xff]
  %v6412 = vld [vmem:[%s6409 + $0x10] sm:$0xff]
  %v6413 = vld [vmem:[%s6409 + $0x18] sm:$0xff]
  %6414 = vmatprep.subr.mxu0 0.0
  %6415 = vmatpush1.msra.mxu0 %v5432
  %6416 = vmatprep.subr.mxu0 0.0
  %6417 = vmatpush1.msra.mxu0 %v5433
  %6418 = vmatprep.subr.mxu0 0.0
  %6419 = vmatpush1.msra.mxu0 %v5434
  %6420 = vmatprep.subr.mxu0 0.0
  %6421 = vmatpush1.msra.mxu0 %v5435
  %6422 = vmatprep.subr.mxu0 0.0
  %6423 = vmatpush1.msra.mxu0 %v5436
  %6424 = vmatprep.subr.mxu0 0.0
  %6425 = vmatpush1.msra.mxu0 %v5437
  %6426 = vmatprep.subr.mxu0 0.0
  %6427 = vmatpush1.msra.mxu0 %v5438
  %6428 = vmatprep.subr.mxu0 0.0
  %6429 = vmatpush1.msra.mxu0 %v5439
  %6430 = vmatprep.subr.mxu0 0.0
  %6431 = vmatpush1.msra.mxu0 %v5440
  %6432 = vmatprep.subr.mxu0 0.0
  %6433 = vmatpush1.msra.mxu0 %v5441
  %6434 = vmatprep.subr.mxu0 0.0
  %6435 = vmatpush1.msra.mxu0 %v5442
  %6436 = vmatprep.subr.mxu0 0.0
  %6437 = vmatpush1.msra.mxu0 %v5443
  %6438 = vmatprep.subr.mxu0 0.0
  %6439 = vmatpush1.msra.mxu0 %v5444
  %6440 = vmatprep.subr.mxu0 0.0
  %6441 = vmatpush1.msra.mxu0 %v5445
  %6442 = vmatprep.subr.mxu0 0.0
  %6443 = vmatpush1.msra.mxu0 %v5446
  %6444 = vmatprep.subr.mxu0 0.0
  %6445 = vmatpush1.msra.mxu0 %v5447
  %6446 = vmatprep.subr.mxu0 0.0
  %6447 = vmatpush1.msra.mxu0 0.0
  %6448 = vmatprep.subr.mxu0 0.0
  %6449 = vmatpush1.msra.mxu0 0.0
  %6450 = vmatprep.subr.mxu0 0.0
  %6451 = vmatpush1.msra.mxu0 0.0
  %6452 = vmatprep.subr.mxu0 0.0
  %6453 = vmatpush1.msra.mxu0 0.0
  %6454 = vmatprep.subr.mxu0 0.0
  %6455 = vmatpush1.msra.mxu0 0.0
  %6456 = vmatprep.subr.mxu0 0.0
  %6457 = vmatpush1.msra.mxu0 0.0
  %6458 = vmatprep.subr.mxu0 0.0
  %6459 = vmatpush1.msra.mxu0 0.0
  %6460 = vmatprep.subr.mxu0 0.0
  %6461 = vmatpush1.msra.mxu0 0.0
  %6462 = vmatprep.subr.mxu0 0.0
  %6463 = vmatpush1.msra.mxu0 0.0
  %6464 = vmatprep.subr.mxu0 0.0
  %6465 = vmatpush1.msra.mxu0 0.0
  %6466 = vmatprep.subr.mxu0 0.0
  %6467 = vmatpush1.msra.mxu0 0.0
  %6468 = vmatprep.subr.mxu0 0.0
  %6469 = vmatpush1.msra.mxu0 0.0
  %6470 = vmatprep.subr.mxu0 0.0
  %6471 = vmatpush1.msra.mxu0 0.0
  %6472 = vmatprep.subr.mxu0 0.0
  %6473 = vmatpush1.msra.mxu0 0.0
  %6474 = vmatprep.subr.mxu0 0.0
  %6475 = vmatpush1.msra.mxu0 0.0
  %6476 = vmatprep.subr.mxu0 0.0
  %6477 = vmatpush1.msra.mxu0 0.0
  %6478 = vmatprep.mubr.f32.mxu0 0.0
  %6479 = vmatmul.mubr.f32.gmra.mrb[0].mxu0 %v6410
  %v6480 = vpop.f32.mrb[0].mxu0
  %v6481 = vadd.f32 0.0, %v6480
  %v6482 = vpop.f32.mrb[0].mxu0
  %6483 = vmatprep.mubr.f32.mxu0 0.0
  %6484 = vmatmul.mubr.f32.gmra.mrb[0].mxu0 %v6411
  %v6485 = vpop.f32.mrb[0].mxu0
  %v6486 = vadd.f32 0.0, %v6485
  %v6487 = vpop.f32.mrb[0].mxu0
  %6488 = vmatprep.mubr.f32.mxu0 0.0
  %6489 = vmatmul.mubr.f32.gmra.mrb[0].mxu0 %v6412
  %v6490 = vpop.f32.mrb[0].mxu0
  %v6491 = vadd.f32 0.0, %v6490
  %v6492 = vpop.f32.mrb[0].mxu0
  %6493 = vmatprep.mubr.f32.mxu0 0.0
  %6494 = vmatmul.mubr.f32.gmra.mrb[0].mxu0 %v6413
  %v6495 = vpop.f32.mrb[0].mxu0
  %v6496 = vadd.f32 0.0, %v6495
  %v6497 = vpop.f32.mrb[0].mxu0
  %6498 = vdwg.mxu0
  %s6499 = scalar_lea.vmem %s7, 80
  %v6500 = vld [vmem:[%s6499] sm:$0xff]
  %v6501 = vld [vmem:[%s6499 + $0x8] sm:$0xff]
  %v6503 = vsel %vm5632, %v6481, 0
  %v6506 = vsel %vm5632, %v6486, 0
  %v6509 = vsel %vm5632, %v6491, 0
  %v6512 = vsel %vm5632, %v6496, 0
  %6514 = vmatprep.subr.mxu0 0.0
  %6515 = vmatpush1.msra.mxu0 %v6500
  %6516 = vmatprep.subr.mxu0 0.0
  %6517 = vmatpush1.msra.mxu0 %v6501
  %6518 = vmatprep.subr.mxu0 0.0
  %6519 = vmatpush1.msra.mxu0 0.0
  %6520 = vmatprep.subr.mxu0 0.0
  %6521 = vmatpush1.msra.mxu0 0.0
  %6522 = vmatprep.subr.mxu0 0.0
  %6523 = vmatpush1.msra.mxu0 0.0
  %6524 = vmatprep.subr.mxu0 0.0
  %6525 = vmatpush1.msra.mxu0 0.0
  %6526 = vmatprep.subr.mxu0 0.0
  %6527 = vmatpush1.msra.mxu0 0.0
  %6528 = vmatprep.subr.mxu0 0.0
  %6529 = vmatpush1.msra.mxu0 0.0
  %6530 = vmatprep.subr.mxu0 0.0
  %6531 = vmatpush1.msra.mxu0 0.0
  %6532 = vmatprep.subr.mxu0 0.0
  %6533 = vmatpush1.msra.mxu0 0.0
  %6534 = vmatprep.subr.mxu0 0.0
  %6535 = vmatpush1.msra.mxu0 0.0
  %6536 = vmatprep.subr.mxu0 0.0
  %6537 = vmatpush1.msra.mxu0 0.0
  %6538 = vmatprep.subr.mxu0 0.0
  %6539 = vmatpush1.msra.mxu0 0.0
  %6540 = vmatprep.subr.mxu0 0.0
  %6541 = vmatpush1.msra.mxu0 0.0
  %6542 = vmatprep.subr.mxu0 0.0
  %6543 = vmatpush1.msra.mxu0 0.0
  %6544 = vmatprep.subr.mxu0 0.0
  %6545 = vmatpush1.msra.mxu0 0.0
  %6546 = vmatprep.subr.mxu0 0.0
  %6547 = vmatpush1.msra.mxu0 0.0
  %6548 = vmatprep.subr.mxu0 0.0
  %6549 = vmatpush1.msra.mxu0 0.0
  %6550 = vmatprep.subr.mxu0 0.0
  %6551 = vmatpush1.msra.mxu0 0.0
  %6552 = vmatprep.subr.mxu0 0.0
  %6553 = vmatpush1.msra.mxu0 0.0
  %6554 = vmatprep.subr.mxu0 0.0
  %6555 = vmatpush1.msra.mxu0 0.0
  %6556 = vmatprep.subr.mxu0 0.0
  %6557 = vmatpush1.msra.mxu0 0.0
  %6558 = vmatprep.subr.mxu0 0.0
  %6559 = vmatpush1.msra.mxu0 0.0
  %6560 = vmatprep.subr.mxu0 0.0
  %6561 = vmatpush1.msra.mxu0 0.0
  %6562 = vmatprep.subr.mxu0 0.0
  %6563 = vmatpush1.msra.mxu0 0.0
  %6564 = vmatprep.subr.mxu0 0.0
  %6565 = vmatpush1.msra.mxu0 0.0
  %6566 = vmatprep.subr.mxu0 0.0
  %6567 = vmatpush1.msra.mxu0 0.0
  %6568 = vmatprep.subr.mxu0 0.0
  %6569 = vmatpush1.msra.mxu0 0.0
  %6570 = vmatprep.subr.mxu0 0.0
  %6571 = vmatpush1.msra.mxu0 0.0
  %6572 = vmatprep.subr.mxu0 0.0
  %6573 = vmatpush1.msra.mxu0 0.0
  %6574 = vmatprep.subr.mxu0 0.0
  %6575 = vmatpush1.msra.mxu0 0.0
  %6576 = vmatprep.subr.mxu0 0.0
  %6577 = vmatpush1.msra.mxu0 0.0
  %6578 = vmatprep.mubr.f32.mxu0 0.0
  %6579 = vmatmul.mubr.f32.gmra.mrb[0].mxu0 %v6503
  %v6580 = vpop.f32.mrb[0].mxu0
  %v6581 = vadd.f32 0.0, %v6580
  %v6582 = vpop.f32.mrb[0].mxu0
  %6583 = vmatprep.mubr.f32.mxu0 0.0
  %6584 = vmatmul.mubr.f32.gmra.mrb[0].mxu0 %v6506
  %v6585 = vpop.f32.mrb[0].mxu0
  %v6586 = vadd.f32 0.0, %v6585
  %v6587 = vpop.f32.mrb[0].mxu0
  %6588 = vmatprep.mubr.f32.mxu0 0.0
  %6589 = vmatmul.mubr.f32.gmra.mrb[0].mxu0 %v6509
  %v6590 = vpop.f32.mrb[0].mxu0
  %v6591 = vadd.f32 0.0, %v6590
  %v6592 = vpop.f32.mrb[0].mxu0
  %6593 = vmatprep.mubr.f32.mxu0 0.0
  %6594 = vmatmul.mubr.f32.gmra.mrb[0].mxu0 %v6512
  %v6595 = vpop.f32.mrb[0].mxu0
  %v6596 = vadd.f32 0.0, %v6595
  %v6597 = vpop.f32.mrb[0].mxu0
  %6598 = vdwg.mxu0
  %v6599 = vadd.f32 %v6405, %v6581
  %v6600 = vadd.f32 %v6406, %v6586
  %v6601 = vadd.f32 %v6407, %v6591
  %v6602 = vadd.f32 %v6408, %v6596
  %s6603 = scalar_lea.vmem %s2, 192
  %v6604 = vld [vmem:[%s6603] sm:$0xff]
  %v6605 = vld [vmem:[%s6603 + $0x8] sm:$0xff]
  %v6606 = vld [vmem:[%s6603 + $0x10] sm:$0xff]
  %v6607 = vld [vmem:[%s6603 + $0x18] sm:$0xff]
  %6608 = vmatprep.subr.mxu0 0.0
  %6609 = vmatpush1.msra.mxu0 %v5432
  %6610 = vmatprep.subr.mxu0 0.0
  %6611 = vmatpush1.msra.mxu0 %v5433
  %6612 = vmatprep.subr.mxu0 0.0
  %6613 = vmatpush1.msra.mxu0 %v5434
  %6614 = vmatprep.subr.mxu0 0.0
  %6615 = vmatpush1.msra.mxu0 %v5435
  %6616 = vmatprep.subr.mxu0 0.0
  %6617 = vmatpush1.msra.mxu0 %v5436
  %6618 = vmatprep.subr.mxu0 0.0
  %6619 = vmatpush1.msra.mxu0 %v5437
  %6620 = vmatprep.subr.mxu0 0.0
  %6621 = vmatpush1.msra.mxu0 %v5438
  %6622 = vmatprep.subr.mxu0 0.0
  %6623 = vmatpush1.msra.mxu0 %v5439
  %6624 = vmatprep.subr.mxu0 0.0
  %6625 = vmatpush1.msra.mxu0 %v5440
  %6626 = vmatprep.subr.mxu0 0.0
  %6627 = vmatpush1.msra.mxu0 %v5441
  %6628 = vmatprep.subr.mxu0 0.0
  %6629 = vmatpush1.msra.mxu0 %v5442
  %6630 = vmatprep.subr.mxu0 0.0
  %6631 = vmatpush1.msra.mxu0 %v5443
  %6632 = vmatprep.subr.mxu0 0.0
  %6633 = vmatpush1.msra.mxu0 %v5444
  %6634 = vmatprep.subr.mxu0 0.0
  %6635 = vmatpush1.msra.mxu0 %v5445
  %6636 = vmatprep.subr.mxu0 0.0
  %6637 = vmatpush1.msra.mxu0 %v5446
  %6638 = vmatprep.subr.mxu0 0.0
  %6639 = vmatpush1.msra.mxu0 %v5447
  %6640 = vmatprep.subr.mxu0 0.0
  %6641 = vmatpush1.msra.mxu0 0.0
  %6642 = vmatprep.subr.mxu0 0.0
  %6643 = vmatpush1.msra.mxu0 0.0
  %6644 = vmatprep.subr.mxu0 0.0
  %6645 = vmatpush1.msra.mxu0 0.0
  %6646 = vmatprep.subr.mxu0 0.0
  %6647 = vmatpush1.msra.mxu0 0.0
  %6648 = vmatprep.subr.mxu0 0.0
  %6649 = vmatpush1.msra.mxu0 0.0
  %6650 = vmatprep.subr.mxu0 0.0
  %6651 = vmatpush1.msra.mxu0 0.0
  %6652 = vmatprep.subr.mxu0 0.0
  %6653 = vmatpush1.msra.mxu0 0.0
  %6654 = vmatprep.subr.mxu0 0.0
  %6655 = vmatpush1.msra.mxu0 0.0
  %6656 = vmatprep.subr.mxu0 0.0
  %6657 = vmatpush1.msra.mxu0 0.0
  %6658 = vmatprep.subr.mxu0 0.0
  %6659 = vmatpush1.msra.mxu0 0.0
  %6660 = vmatprep.subr.mxu0 0.0
  %6661 = vmatpush1.msra.mxu0 0.0
  %6662 = vmatprep.subr.mxu0 0.0
  %6663 = vmatpush1.msra.mxu0 0.0
  %6664 = vmatprep.subr.mxu0 0.0
  %6665 = vmatpush1.msra.mxu0 0.0
  %6666 = vmatprep.subr.mxu0 0.0
  %6667 = vmatpush1.msra.mxu0 0.0
  %6668 = vmatprep.subr.mxu0 0.0
  %6669 = vmatpush1.msra.mxu0 0.0
  %6670 = vmatprep.subr.mxu0 0.0
  %6671 = vmatpush1.msra.mxu0 0.0
  %6672 = vmatprep.mubr.f32.mxu0 0.0
  %6673 = vmatmul.mubr.f32.gmra.mrb[0].mxu0 %v6604
  %v6674 = vpop.f32.mrb[0].mxu0
  %v6675 = vadd.f32 0.0, %v6674
  %v6676 = vpop.f32.mrb[0].mxu0
  %6677 = vmatprep.mubr.f32.mxu0 0.0
  %6678 = vmatmul.mubr.f32.gmra.mrb[0].mxu0 %v6605
  %v6679 = vpop.f32.mrb[0].mxu0
  %v6680 = vadd.f32 0.0, %v6679
  %v6681 = vpop.f32.mrb[0].mxu0
  %6682 = vmatprep.mubr.f32.mxu0 0.0
  %6683 = vmatmul.mubr.f32.gmra.mrb[0].mxu0 %v6606
  %v6684 = vpop.f32.mrb[0].mxu0
  %v6685 = vadd.f32 0.0, %v6684
  %v6686 = vpop.f32.mrb[0].mxu0
  %6687 = vmatprep.mubr.f32.mxu0 0.0
  %6688 = vmatmul.mubr.f32.gmra.mrb[0].mxu0 %v6607
  %v6689 = vpop.f32.mrb[0].mxu0
  %v6690 = vadd.f32 0.0, %v6689
  %v6691 = vpop.f32.mrb[0].mxu0
  %6692 = vdwg.mxu0
  %s6693 = scalar_lea.vmem %s7, 96
  %v6694 = vld [vmem:[%s6693] sm:$0xff]
  %v6695 = vld [vmem:[%s6693 + $0x8] sm:$0xff]
  %v6697 = vsel %vm5632, %v6675, 0
  %v6700 = vsel %vm5632, %v6680, 0
  %v6703 = vsel %vm5632, %v6685, 0
  %v6706 = vsel %vm5632, %v6690, 0
  %6708 = vmatprep.subr.mxu0 0.0
  %6709 = vmatpush1.msra.mxu0 %v6694
  %6710 = vmatprep.subr.mxu0 0.0
  %6711 = vmatpush1.msra.mxu0 %v6695
  %6712 = vmatprep.subr.mxu0 0.0
  %6713 = vmatpush1.msra.mxu0 0.0
  %6714 = vmatprep.subr.mxu0 0.0
  %6715 = vmatpush1.msra.mxu0 0.0
  %6716 = vmatprep.subr.mxu0 0.0
  %6717 = vmatpush1.msra.mxu0 0.0
  %6718 = vmatprep.subr.mxu0 0.0
  %6719 = vmatpush1.msra.mxu0 0.0
  %6720 = vmatprep.subr.mxu0 0.0
  %6721 = vmatpush1.msra.mxu0 0.0
  %6722 = vmatprep.subr.mxu0 0.0
  %6723 = vmatpush1.msra.mxu0 0.0
  %6724 = vmatprep.subr.mxu0 0.0
  %6725 = vmatpush1.msra.mxu0 0.0
  %6726 = vmatprep.subr.mxu0 0.0
  %6727 = vmatpush1.msra.mxu0 0.0
  %6728 = vmatprep.subr.mxu0 0.0
  %6729 = vmatpush1.msra.mxu0 0.0
  %6730 = vmatprep.subr.mxu0 0.0
  %6731 = vmatpush1.msra.mxu0 0.0
  %6732 = vmatprep.subr.mxu0 0.0
  %6733 = vmatpush1.msra.mxu0 0.0
  %6734 = vmatprep.subr.mxu0 0.0
  %6735 = vmatpush1.msra.mxu0 0.0
  %6736 = vmatprep.subr.mxu0 0.0
  %6737 = vmatpush1.msra.mxu0 0.0
  %6738 = vmatprep.subr.mxu0 0.0
  %6739 = vmatpush1.msra.mxu0 0.0
  %6740 = vmatprep.subr.mxu0 0.0
  %6741 = vmatpush1.msra.mxu0 0.0
  %6742 = vmatprep.subr.mxu0 0.0
  %6743 = vmatpush1.msra.mxu0 0.0
  %6744 = vmatprep.subr.mxu0 0.0
  %6745 = vmatpush1.msra.mxu0 0.0
  %6746 = vmatprep.subr.mxu0 0.0
  %6747 = vmatpush1.msra.mxu0 0.0
  %6748 = vmatprep.subr.mxu0 0.0
  %6749 = vmatpush1.msra.mxu0 0.0
  %6750 = vmatprep.subr.mxu0 0.0
  %6751 = vmatpush1.msra.mxu0 0.0
  %6752 = vmatprep.subr.mxu0 0.0
  %6753 = vmatpush1.msra.mxu0 0.0
  %6754 = vmatprep.subr.mxu0 0.0
  %6755 = vmatpush1.msra.mxu0 0.0
  %6756 = vmatprep.subr.mxu0 0.0
  %6757 = vmatpush1.msra.mxu0 0.0
  %6758 = vmatprep.subr.mxu0 0.0
  %6759 = vmatpush1.msra.mxu0 0.0
  %6760 = vmatprep.subr.mxu0 0.0
  %6761 = vmatpush1.msra.mxu0 0.0
  %6762 = vmatprep.subr.mxu0 0.0
  %6763 = vmatpush1.msra.mxu0 0.0
  %6764 = vmatprep.subr.mxu0 0.0
  %6765 = vmatpush1.msra.mxu0 0.0
  %6766 = vmatprep.subr.mxu0 0.0
  %6767 = vmatpush1.msra.mxu0 0.0
  %6768 = vmatprep.subr.mxu0 0.0
  %6769 = vmatpush1.msra.mxu0 0.0
  %6770 = vmatprep.subr.mxu0 0.0
  %6771 = vmatpush1.msra.mxu0 0.0
  %6772 = vmatprep.mubr.f32.mxu0 0.0
  %6773 = vmatmul.mubr.f32.gmra.mrb[0].mxu0 %v6697
  %v6774 = vpop.f32.mrb[0].mxu0
  %v6775 = vadd.f32 0.0, %v6774
  %v6776 = vpop.f32.mrb[0].mxu0
  %6777 = vmatprep.mubr.f32.mxu0 0.0
  %6778 = vmatmul.mubr.f32.gmra.mrb[0].mxu0 %v6700
  %v6779 = vpop.f32.mrb[0].mxu0
  %v6780 = vadd.f32 0.0, %v6779
  %v6781 = vpop.f32.mrb[0].mxu0
  %6782 = vmatprep.mubr.f32.mxu0 0.0
  %6783 = vmatmul.mubr.f32.gmra.mrb[0].mxu0 %v6703
  %v6784 = vpop.f32.mrb[0].mxu0
  %v6785 = vadd.f32 0.0, %v6784
  %v6786 = vpop.f32.mrb[0].mxu0
  %6787 = vmatprep.mubr.f32.mxu0 0.0
  %6788 = vmatmul.mubr.f32.gmra.mrb[0].mxu0 %v6706
  %v6789 = vpop.f32.mrb[0].mxu0
  %v6790 = vadd.f32 0.0, %v6789
  %v6791 = vpop.f32.mrb[0].mxu0
  %6792 = vdwg.mxu0
  %v6793 = vadd.f32 %v6599, %v6775
  %v6794 = vadd.f32 %v6600, %v6780
  %v6795 = vadd.f32 %v6601, %v6785
  %v6796 = vadd.f32 %v6602, %v6790
  %s6797 = scalar_lea.vmem %s2, 224
  %v6798 = vld [vmem:[%s6797] sm:$0xff]
  %v6799 = vld [vmem:[%s6797 + $0x8] sm:$0xff]
  %v6800 = vld [vmem:[%s6797 + $0x10] sm:$0xff]
  %v6801 = vld [vmem:[%s6797 + $0x18] sm:$0xff]
  %6802 = vmatprep.subr.mxu0 0.0
  %6803 = vmatpush1.msra.mxu0 %v5432
  %6804 = vmatprep.subr.mxu0 0.0
  %6805 = vmatpush1.msra.mxu0 %v5433
  %6806 = vmatprep.subr.mxu0 0.0
  %6807 = vmatpush1.msra.mxu0 %v5434
  %6808 = vmatprep.subr.mxu0 0.0
  %6809 = vmatpush1.msra.mxu0 %v5435
  %6810 = vmatprep.subr.mxu0 0.0
  %6811 = vmatpush1.msra.mxu0 %v5436
  %6812 = vmatprep.subr.mxu0 0.0
  %6813 = vmatpush1.msra.mxu0 %v5437
  %6814 = vmatprep.subr.mxu0 0.0
  %6815 = vmatpush1.msra.mxu0 %v5438
  %6816 = vmatprep.subr.mxu0 0.0
  %6817 = vmatpush1.msra.mxu0 %v5439
  %6818 = vmatprep.subr.mxu0 0.0
  %6819 = vmatpush1.msra.mxu0 %v5440
  %6820 = vmatprep.subr.mxu0 0.0
  %6821 = vmatpush1.msra.mxu0 %v5441
  %6822 = vmatprep.subr.mxu0 0.0
  %6823 = vmatpush1.msra.mxu0 %v5442
  %6824 = vmatprep.subr.mxu0 0.0
  %6825 = vmatpush1.msra.mxu0 %v5443
  %6826 = vmatprep.subr.mxu0 0.0
  %6827 = vmatpush1.msra.mxu0 %v5444
  %6828 = vmatprep.subr.mxu0 0.0
  %6829 = vmatpush1.msra.mxu0 %v5445
  %6830 = vmatprep.subr.mxu0 0.0
  %6831 = vmatpush1.msra.mxu0 %v5446
  %6832 = vmatprep.subr.mxu0 0.0
  %6833 = vmatpush1.msra.mxu0 %v5447
  %6834 = vmatprep.subr.mxu0 0.0
  %6835 = vmatpush1.msra.mxu0 0.0
  %6836 = vmatprep.subr.mxu0 0.0
  %6837 = vmatpush1.msra.mxu0 0.0
  %6838 = vmatprep.subr.mxu0 0.0
  %6839 = vmatpush1.msra.mxu0 0.0
  %6840 = vmatprep.subr.mxu0 0.0
  %6841 = vmatpush1.msra.mxu0 0.0
  %6842 = vmatprep.subr.mxu0 0.0
  %6843 = vmatpush1.msra.mxu0 0.0
  %6844 = vmatprep.subr.mxu0 0.0
  %6845 = vmatpush1.msra.mxu0 0.0
  %6846 = vmatprep.subr.mxu0 0.0
  %6847 = vmatpush1.msra.mxu0 0.0
  %6848 = vmatprep.subr.mxu0 0.0
  %6849 = vmatpush1.msra.mxu0 0.0
  %6850 = vmatprep.subr.mxu0 0.0
  %6851 = vmatpush1.msra.mxu0 0.0
  %6852 = vmatprep.subr.mxu0 0.0
  %6853 = vmatpush1.msra.mxu0 0.0
  %6854 = vmatprep.subr.mxu0 0.0
  %6855 = vmatpush1.msra.mxu0 0.0
  %6856 = vmatprep.subr.mxu0 0.0
  %6857 = vmatpush1.msra.mxu0 0.0
  %6858 = vmatprep.subr.mxu0 0.0
  %6859 = vmatpush1.msra.mxu0 0.0
  %6860 = vmatprep.subr.mxu0 0.0
  %6861 = vmatpush1.msra.mxu0 0.0
  %6862 = vmatprep.subr.mxu0 0.0
  %6863 = vmatpush1.msra.mxu0 0.0
  %6864 = vmatprep.subr.mxu0 0.0
  %6865 = vmatpush1.msra.mxu0 0.0
  %6866 = vmatprep.mubr.f32.mxu0 0.0
  %6867 = vmatmul.mubr.f32.gmra.mrb[0].mxu0 %v6798
  %v6868 = vpop.f32.mrb[0].mxu0
  %v6869 = vadd.f32 0.0, %v6868
  %v6870 = vpop.f32.mrb[0].mxu0
  %6871 = vmatprep.mubr.f32.mxu0 0.0
  %6872 = vmatmul.mubr.f32.gmra.mrb[0].mxu0 %v6799
  %v6873 = vpop.f32.mrb[0].mxu0
  %v6874 = vadd.f32 0.0, %v6873
  %v6875 = vpop.f32.mrb[0].mxu0
  %6876 = vmatprep.mubr.f32.mxu0 0.0
  %6877 = vmatmul.mubr.f32.gmra.mrb[0].mxu0 %v6800
  %v6878 = vpop.f32.mrb[0].mxu0
  %v6879 = vadd.f32 0.0, %v6878
  %v6880 = vpop.f32.mrb[0].mxu0
  %6881 = vmatprep.mubr.f32.mxu0 0.0
  %6882 = vmatmul.mubr.f32.gmra.mrb[0].mxu0 %v6801
  %v6883 = vpop.f32.mrb[0].mxu0
  %v6884 = vadd.f32 0.0, %v6883
  %v6885 = vpop.f32.mrb[0].mxu0
  %6886 = vdwg.mxu0
  %s6887 = scalar_lea.vmem %s7, 112
  %v6888 = vld [vmem:[%s6887] sm:$0xff]
  %v6889 = vld [vmem:[%s6887 + $0x8] sm:$0xff]
  %v6891 = vsel %vm5632, %v6869, 0
  %v6894 = vsel %vm5632, %v6874, 0
  %v6897 = vsel %vm5632, %v6879, 0
  %v6900 = vsel %vm5632, %v6884, 0
  %6902 = vmatprep.subr.mxu0 0.0
  %6903 = vmatpush1.msra.mxu0 %v6888
  %6904 = vmatprep.subr.mxu0 0.0
  %6905 = vmatpush1.msra.mxu0 %v6889
  %6906 = vmatprep.subr.mxu0 0.0
  %6907 = vmatpush1.msra.mxu0 0.0
  %6908 = vmatprep.subr.mxu0 0.0
  %6909 = vmatpush1.msra.mxu0 0.0
  %6910 = vmatprep.subr.mxu0 0.0
  %6911 = vmatpush1.msra.mxu0 0.0
  %6912 = vmatprep.subr.mxu0 0.0
  %6913 = vmatpush1.msra.mxu0 0.0
  %6914 = vmatprep.subr.mxu0 0.0
  %6915 = vmatpush1.msra.mxu0 0.0
  %6916 = vmatprep.subr.mxu0 0.0
  %6917 = vmatpush1.msra.mxu0 0.0
  %6918 = vmatprep.subr.mxu0 0.0
  %6919 = vmatpush1.msra.mxu0 0.0
  %6920 = vmatprep.subr.mxu0 0.0
  %6921 = vmatpush1.msra.mxu0 0.0
  %6922 = vmatprep.subr.mxu0 0.0
  %6923 = vmatpush1.msra.mxu0 0.0
  %6924 = vmatprep.subr.mxu0 0.0
  %6925 = vmatpush1.msra.mxu0 0.0
  %6926 = vmatprep.subr.mxu0 0.0
  %6927 = vmatpush1.msra.mxu0 0.0
  %6928 = vmatprep.subr.mxu0 0.0
  %6929 = vmatpush1.msra.mxu0 0.0
  %6930 = vmatprep.subr.mxu0 0.0
  %6931 = vmatpush1.msra.mxu0 0.0
  %6932 = vmatprep.subr.mxu0 0.0
  %6933 = vmatpush1.msra.mxu0 0.0
  %6934 = vmatprep.subr.mxu0 0.0
  %6935 = vmatpush1.msra.mxu0 0.0
  %6936 = vmatprep.subr.mxu0 0.0
  %6937 = vmatpush1.msra.mxu0 0.0
  %6938 = vmatprep.subr.mxu0 0.0
  %6939 = vmatpush1.msra.mxu0 0.0
  %6940 = vmatprep.subr.mxu0 0.0
  %6941 = vmatpush1.msra.mxu0 0.0
  %6942 = vmatprep.subr.mxu0 0.0
  %6943 = vmatpush1.msra.mxu0 0.0
  %6944 = vmatprep.subr.mxu0 0.0
  %6945 = vmatpush1.msra.mxu0 0.0
  %6946 = vmatprep.subr.mxu0 0.0
  %6947 = vmatpush1.msra.mxu0 0.0
  %6948 = vmatprep.subr.mxu0 0.0
  %6949 = vmatpush1.msra.mxu0 0.0
  %6950 = vmatprep.subr.mxu0 0.0
  %6951 = vmatpush1.msra.mxu0 0.0
  %6952 = vmatprep.subr.mxu0 0.0
  %6953 = vmatpush1.msra.mxu0 0.0
  %6954 = vmatprep.subr.mxu0 0.0
  %6955 = vmatpush1.msra.mxu0 0.0
  %6956 = vmatprep.subr.mxu0 0.0
  %6957 = vmatpush1.msra.mxu0 0.0
  %6958 = vmatprep.subr.mxu0 0.0
  %6959 = vmatpush1.msra.mxu0 0.0
  %6960 = vmatprep.subr.mxu0 0.0
  %6961 = vmatpush1.msra.mxu0 0.0
  %6962 = vmatprep.subr.mxu0 0.0
  %6963 = vmatpush1.msra.mxu0 0.0
  %6964 = vmatprep.subr.mxu0 0.0
  %6965 = vmatpush1.msra.mxu0 0.0
  %6966 = vmatprep.mubr.f32.mxu0 0.0
  %6967 = vmatmul.mubr.f32.gmra.mrb[0].mxu0 %v6891
  %v6968 = vpop.f32.mrb[0].mxu0
  %v6969 = vadd.f32 0.0, %v6968
  %v6970 = vpop.f32.mrb[0].mxu0
  %6971 = vmatprep.mubr.f32.mxu0 0.0
  %6972 = vmatmul.mubr.f32.gmra.mrb[0].mxu0 %v6894
  %v6973 = vpop.f32.mrb[0].mxu0
  %v6974 = vadd.f32 0.0, %v6973
  %v6975 = vpop.f32.mrb[0].mxu0
  %6976 = vmatprep.mubr.f32.mxu0 0.0
  %6977 = vmatmul.mubr.f32.gmra.mrb[0].mxu0 %v6897
  %v6978 = vpop.f32.mrb[0].mxu0
  %v6979 = vadd.f32 0.0, %v6978
  %v6980 = vpop.f32.mrb[0].mxu0
  %6981 = vmatprep.mubr.f32.mxu0 0.0
  %6982 = vmatmul.mubr.f32.gmra.mrb[0].mxu0 %v6900
  %v6983 = vpop.f32.mrb[0].mxu0
  %v6984 = vadd.f32 0.0, %v6983
  %v6985 = vpop.f32.mrb[0].mxu0
  %6986 = vdwg.mxu0
  %v6987 = vadd.f32 %v6793, %v6969
  %v6988 = vadd.f32 %v6794, %v6974
  %v6989 = vadd.f32 %v6795, %v6979
  %v6990 = vadd.f32 %v6796, %v6984
  %s6991 = scalar_lea.vmem %s2, 256
  %v6992 = vld [vmem:[%s6991] sm:$0xff]
  %v6993 = vld [vmem:[%s6991 + $0x8] sm:$0xff]
  %v6994 = vld [vmem:[%s6991 + $0x10] sm:$0xff]
  %v6995 = vld [vmem:[%s6991 + $0x18] sm:$0xff]
  %6996 = vmatprep.subr.mxu0 0.0
  %6997 = vmatpush1.msra.mxu0 %v5432
  %6998 = vmatprep.subr.mxu0 0.0
  %6999 = vmatpush1.msra.mxu0 %v5433
  %7000 = vmatprep.subr.mxu0 0.0
  %7001 = vmatpush1.msra.mxu0 %v5434
  %7002 = vmatprep.subr.mxu0 0.0
  %7003 = vmatpush1.msra.mxu0 %v5435
  %7004 = vmatprep.subr.mxu0 0.0
  %7005 = vmatpush1.msra.mxu0 %v5436
  %7006 = vmatprep.subr.mxu0 0.0
  %7007 = vmatpush1.msra.mxu0 %v5437
  %7008 = vmatprep.subr.mxu0 0.0
  %7009 = vmatpush1.msra.mxu0 %v5438
  %7010 = vmatprep.subr.mxu0 0.0
  %7011 = vmatpush1.msra.mxu0 %v5439
  %7012 = vmatprep.subr.mxu0 0.0
  %7013 = vmatpush1.msra.mxu0 %v5440
  %7014 = vmatprep.subr.mxu0 0.0
  %7015 = vmatpush1.msra.mxu0 %v5441
  %7016 = vmatprep.subr.mxu0 0.0
  %7017 = vmatpush1.msra.mxu0 %v5442
  %7018 = vmatprep.subr.mxu0 0.0
  %7019 = vmatpush1.msra.mxu0 %v5443
  %7020 = vmatprep.subr.mxu0 0.0
  %7021 = vmatpush1.msra.mxu0 %v5444
  %7022 = vmatprep.subr.mxu0 0.0
  %7023 = vmatpush1.msra.mxu0 %v5445
  %7024 = vmatprep.subr.mxu0 0.0
  %7025 = vmatpush1.msra.mxu0 %v5446
  %7026 = vmatprep.subr.mxu0 0.0
  %7027 = vmatpush1.msra.mxu0 %v5447
  %7028 = vmatprep.subr.mxu0 0.0
  %7029 = vmatpush1.msra.mxu0 0.0
  %7030 = vmatprep.subr.mxu0 0.0
  %7031 = vmatpush1.msra.mxu0 0.0
  %7032 = vmatprep.subr.mxu0 0.0
  %7033 = vmatpush1.msra.mxu0 0.0
  %7034 = vmatprep.subr.mxu0 0.0
  %7035 = vmatpush1.msra.mxu0 0.0
  %7036 = vmatprep.subr.mxu0 0.0
  %7037 = vmatpush1.msra.mxu0 0.0
  %7038 = vmatprep.subr.mxu0 0.0
  %7039 = vmatpush1.msra.mxu0 0.0
  %7040 = vmatprep.subr.mxu0 0.0
  %7041 = vmatpush1.msra.mxu0 0.0
  %7042 = vmatprep.subr.mxu0 0.0
  %7043 = vmatpush1.msra.mxu0 0.0
  %7044 = vmatprep.subr.mxu0 0.0
  %7045 = vmatpush1.msra.mxu0 0.0
  %7046 = vmatprep.subr.mxu0 0.0
  %7047 = vmatpush1.msra.mxu0 0.0
  %7048 = vmatprep.subr.mxu0 0.0
  %7049 = vmatpush1.msra.mxu0 0.0
  %7050 = vmatprep.subr.mxu0 0.0
  %7051 = vmatpush1.msra.mxu0 0.0
  %7052 = vmatprep.subr.mxu0 0.0
  %7053 = vmatpush1.msra.mxu0 0.0
  %7054 = vmatprep.subr.mxu0 0.0
  %7055 = vmatpush1.msra.mxu0 0.0
  %7056 = vmatprep.subr.mxu0 0.0
  %7057 = vmatpush1.msra.mxu0 0.0
  %7058 = vmatprep.subr.mxu0 0.0
  %7059 = vmatpush1.msra.mxu0 0.0
  %7060 = vmatprep.mubr.f32.mxu0 0.0
  %7061 = vmatmul.mubr.f32.gmra.mrb[0].mxu0 %v6992
  %v7062 = vpop.f32.mrb[0].mxu0
  %v7063 = vadd.f32 0.0, %v7062
  %v7064 = vpop.f32.mrb[0].mxu0
  %7065 = vmatprep.mubr.f32.mxu0 0.0
  %7066 = vmatmul.mubr.f32.gmra.mrb[0].mxu0 %v6993
  %v7067 = vpop.f32.mrb[0].mxu0
  %v7068 = vadd.f32 0.0, %v7067
  %v7069 = vpop.f32.mrb[0].mxu0
  %7070 = vmatprep.mubr.f32.mxu0 0.0
  %7071 = vmatmul.mubr.f32.gmra.mrb[0].mxu0 %v6994
  %v7072 = vpop.f32.mrb[0].mxu0
  %v7073 = vadd.f32 0.0, %v7072
  %v7074 = vpop.f32.mrb[0].mxu0
  %7075 = vmatprep.mubr.f32.mxu0 0.0
  %7076 = vmatmul.mubr.f32.gmra.mrb[0].mxu0 %v6995
  %v7077 = vpop.f32.mrb[0].mxu0
  %v7078 = vadd.f32 0.0, %v7077
  %v7079 = vpop.f32.mrb[0].mxu0
  %7080 = vdwg.mxu0
  %s7081 = scalar_lea.vmem %s7, 128
  %v7082 = vld [vmem:[%s7081] sm:$0xff]
  %v7083 = vld [vmem:[%s7081 + $0x8] sm:$0xff]
  %v7085 = vsel %vm5632, %v7063, 0
  %v7088 = vsel %vm5632, %v7068, 0
  %v7091 = vsel %vm5632, %v7073, 0
  %v7094 = vsel %vm5632, %v7078, 0
  %7096 = vmatprep.subr.mxu0 0.0
  %7097 = vmatpush1.msra.mxu0 %v7082
  %7098 = vmatprep.subr.mxu0 0.0
  %7099 = vmatpush1.msra.mxu0 %v7083
  %7100 = vmatprep.subr.mxu0 0.0
  %7101 = vmatpush1.msra.mxu0 0.0
  %7102 = vmatprep.subr.mxu0 0.0
  %7103 = vmatpush1.msra.mxu0 0.0
  %7104 = vmatprep.subr.mxu0 0.0
  %7105 = vmatpush1.msra.mxu0 0.0
  %7106 = vmatprep.subr.mxu0 0.0
  %7107 = vmatpush1.msra.mxu0 0.0
  %7108 = vmatprep.subr.mxu0 0.0
  %7109 = vmatpush1.msra.mxu0 0.0
  %7110 = vmatprep.subr.mxu0 0.0
  %7111 = vmatpush1.msra.mxu0 0.0
  %7112 = vmatprep.subr.mxu0 0.0
  %7113 = vmatpush1.msra.mxu0 0.0
  %7114 = vmatprep.subr.mxu0 0.0
  %7115 = vmatpush1.msra.mxu0 0.0
  %7116 = vmatprep.subr.mxu0 0.0
  %7117 = vmatpush1.msra.mxu0 0.0
  %7118 = vmatprep.subr.mxu0 0.0
  %7119 = vmatpush1.msra.mxu0 0.0
  %7120 = vmatprep.subr.mxu0 0.0
  %7121 = vmatpush1.msra.mxu0 0.0
  %7122 = vmatprep.subr.mxu0 0.0
  %7123 = vmatpush1.msra.mxu0 0.0
  %7124 = vmatprep.subr.mxu0 0.0
  %7125 = vmatpush1.msra.mxu0 0.0
  %7126 = vmatprep.subr.mxu0 0.0
  %7127 = vmatpush1.msra.mxu0 0.0
  %7128 = vmatprep.subr.mxu0 0.0
  %7129 = vmatpush1.msra.mxu0 0.0
  %7130 = vmatprep.subr.mxu0 0.0
  %7131 = vmatpush1.msra.mxu0 0.0
  %7132 = vmatprep.subr.mxu0 0.0
  %7133 = vmatpush1.msra.mxu0 0.0
  %7134 = vmatprep.subr.mxu0 0.0
  %7135 = vmatpush1.msra.mxu0 0.0
  %7136 = vmatprep.subr.mxu0 0.0
  %7137 = vmatpush1.msra.mxu0 0.0
  %7138 = vmatprep.subr.mxu0 0.0
  %7139 = vmatpush1.msra.mxu0 0.0
  %7140 = vmatprep.subr.mxu0 0.0
  %7141 = vmatpush1.msra.mxu0 0.0
  %7142 = vmatprep.subr.mxu0 0.0
  %7143 = vmatpush1.msra.mxu0 0.0
  %7144 = vmatprep.subr.mxu0 0.0
  %7145 = vmatpush1.msra.mxu0 0.0
  %7146 = vmatprep.subr.mxu0 0.0
  %7147 = vmatpush1.msra.mxu0 0.0
  %7148 = vmatprep.subr.mxu0 0.0
  %7149 = vmatpush1.msra.mxu0 0.0
  %7150 = vmatprep.subr.mxu0 0.0
  %7151 = vmatpush1.msra.mxu0 0.0
  %7152 = vmatprep.subr.mxu0 0.0
  %7153 = vmatpush1.msra.mxu0 0.0
  %7154 = vmatprep.subr.mxu0 0.0
  %7155 = vmatpush1.msra.mxu0 0.0
  %7156 = vmatprep.subr.mxu0 0.0
  %7157 = vmatpush1.msra.mxu0 0.0
  %7158 = vmatprep.subr.mxu0 0.0
  %7159 = vmatpush1.msra.mxu0 0.0
  %7160 = vmatprep.mubr.f32.mxu0 0.0
  %7161 = vmatmul.mubr.f32.gmra.mrb[0].mxu0 %v7085
  %v7162 = vpop.f32.mrb[0].mxu0
  %v7163 = vadd.f32 0.0, %v7162
  %v7164 = vpop.f32.mrb[0].mxu0
  %7165 = vmatprep.mubr.f32.mxu0 0.0
  %7166 = vmatmul.mubr.f32.gmra.mrb[0].mxu0 %v7088
  %v7167 = vpop.f32.mrb[0].mxu0
  %v7168 = vadd.f32 0.0, %v7167
  %v7169 = vpop.f32.mrb[0].mxu0
  %7170 = vmatprep.mubr.f32.mxu0 0.0
  %7171 = vmatmul.mubr.f32.gmra.mrb[0].mxu0 %v7091
  %v7172 = vpop.f32.mrb[0].mxu0
  %v7173 = vadd.f32 0.0, %v7172
  %v7174 = vpop.f32.mrb[0].mxu0
  %7175 = vmatprep.mubr.f32.mxu0 0.0
  %7176 = vmatmul.mubr.f32.gmra.mrb[0].mxu0 %v7094
  %v7177 = vpop.f32.mrb[0].mxu0
  %v7178 = vadd.f32 0.0, %v7177
  %v7179 = vpop.f32.mrb[0].mxu0
  %7180 = vdwg.mxu0
  %v7181 = vadd.f32 %v6987, %v7163
  %v7182 = vadd.f32 %v6988, %v7168
  %v7183 = vadd.f32 %v6989, %v7173
  %v7184 = vadd.f32 %v6990, %v7178
  %v7185 = vld [vmem:[%s8] sm:$0x1]
  %v7187 = vlaneseq
  %v7188 = vshrl.u32 %v7187, 7
  %v7189 = vsub.s32 0, %v7188
  %v7190 = vrot.slane %v7185, %v7189
  %v7192 = vadd.f32 %v7181, %v7190
  %v7193 = vadd.f32 %v7182, %v7190
  %v7194 = vadd.f32 %v7183, %v7190
  %v7195 = vadd.f32 %v7184, %v7190
  %vm7196 = vcmp.ge.f32.partialorder %v7192, 0.0
  %vm7197 = vcmp.ge.f32.partialorder %v7193, 0.0
  %vm7198 = vcmp.ge.f32.partialorder %v7194, 0.0
  %vm7199 = vcmp.ge.f32.partialorder %v7195, 0.0
  %v7200 = vmul.f32 %v7192, 0.2
  %v7201 = vmul.f32 %v7193, 0.2
  %v7202 = vmul.f32 %v7194, 0.2
  %v7203 = vmul.f32 %v7195, 0.2
  %v7204 = vsel %vm7196, %v7192, %v7200
  %v7205 = vsel %vm7197, %v7193, %v7201
  %v7206 = vsel %vm7198, %v7194, %v7202
  %v7207 = vsel %vm7199, %v7195, %v7203
  %vm7208 = vcmask 261120
  %v7209 = vsel %vm7208, %v7204, 0.0
  %v7210 = vsel %vm7208, %v7205, 0.0
  %v7211 = vadd.f32 %v7209, %v7210
  %v7212 = vsel %vm7208, %v7206, 0.0
  %v7213 = vadd.f32 %v7211, %v7212
  %v7214 = vsel %vm7208, %v7207, 0.0
  %v7215 = vadd.f32 %v7213, %v7214
  %v7216 = vrot.slane %v7215, 4
  %v7217 = vadd.f32 %v7215, %v7216
  %v7218 = vrot.slane %v7217, 2
  %v7219 = vadd.f32 %v7217, %v7218
  %v7220 = vrot.slane %v7219, 1
  %v7221 = vadd.f32 %v7219, %v7220
  %v7222 = vrcp.pop 32.0
  %v7223 = vmul.f32 %v7221, %v7222
  %v7224 = vmul.f32 %v7204, %v7204
  %v7225 = vmul.f32 %v7205, %v7205
  %v7226 = vmul.f32 %v7206, %v7206
  %v7227 = vmul.f32 %v7207, %v7207
  %v7228 = vsel %vm7208, %v7224, 0.0
  %v7229 = vsel %vm7208, %v7225, 0.0
  %v7230 = vadd.f32 %v7228, %v7229
  %v7231 = vsel %vm7208, %v7226, 0.0
  %v7232 = vadd.f32 %v7230, %v7231
  %v7233 = vsel %vm7208, %v7227, 0.0
  %v7234 = vadd.f32 %v7232, %v7233
  %v7235 = vrot.slane %v7234, 4
  %v7236 = vadd.f32 %v7234, %v7235
  %v7237 = vrot.slane %v7236, 2
  %v7238 = vadd.f32 %v7236, %v7237
  %v7239 = vrot.slane %v7238, 1
  %v7240 = vadd.f32 %v7238, %v7239
  %v7241 = vmul.f32 %v7240, %v7222
  %v7242 = vmul.f32 %v7223, %v7223
  %v7243 = vsub.f32 %v7241, %v7242
  %v7244 = vsub.f32 %v7204, %v7223
  %v7245 = vsub.f32 %v7205, %v7223
  %v7246 = vsub.f32 %v7206, %v7223
  %v7247 = vsub.f32 %v7207, %v7223
  %v7248 = vadd.f32 %v7243, 0.8
  %v7249 = vrsqrt.pop %v7248
  %v7250 = vmul.f32 %v7244, %v7249
  %v7251 = vmul.f32 %v7245, %v7249
  %v7252 = vmul.f32 %v7246, %v7249
  %v7253 = vmul.f32 %v7247, %v7249
  %v7254 = vld [vmem:[%s9] sm:$0x1]
  %v7256 = vlaneseq
  %v7257 = vshrl.u32 %v7256, 7
  %v7258 = vsub.s32 0, %v7257
  %v7259 = vrot.slane %v7254, %v7258
  %v7261 = vmul.f32 %v7250, %v7259
  %v7262 = vmul.f32 %v7251, %v7259
  %v7263 = vmul.f32 %v7252, %v7259
  %v7264 = vmul.f32 %v7253, %v7259
  %v7265 = vld [vmem:[%s10] sm:$0x1]
  %v7267 = vlaneseq
  %v7268 = vshrl.u32 %v7267, 7
  %v7269 = vsub.s32 0, %v7268
  %v7270 = vrot.slane %v7265, %v7269
  %v7272 = vadd.f32 %v7261, %v7270
  %v7273 = vadd.f32 %v7262, %v7270
  %v7274 = vadd.f32 %v7263, %v7270
  %v7275 = vadd.f32 %v7264, %v7270
  %v7276 = vld [vmem:[%s3] sm:$0xff]
  %v7278 = vsel %vm7208, %v7276, 0
  %7280 = vmatprep.subr.mxu0 0.0
  %7281 = vmatpush1.msra.mxu0 %v7272
  %7282 = vmatprep.subr.mxu0 0.0
  %7283 = vmatpush1.msra.mxu0 %v7273
  %7284 = vmatprep.subr.mxu0 0.0
  %7285 = vmatpush1.msra.mxu0 %v7274
  %7286 = vmatprep.subr.mxu0 0.0
  %7287 = vmatpush1.msra.mxu0 %v7275
  %7288 = vmatprep.subr.mxu0 0.0
  %7289 = vmatpush1.msra.mxu0 0.0
  %7290 = vmatprep.subr.mxu0 0.0
  %7291 = vmatpush1.msra.mxu0 0.0
  %7292 = vmatprep.subr.mxu0 0.0
  %7293 = vmatpush1.msra.mxu0 0.0
  %7294 = vmatprep.subr.mxu0 0.0
  %7295 = vmatpush1.msra.mxu0 0.0
  %7296 = vmatprep.subr.mxu0 0.0
  %7297 = vmatpush1.msra.mxu0 0.0
  %7298 = vmatprep.subr.mxu0 0.0
  %7299 = vmatpush1.msra.mxu0 0.0
  %7300 = vmatprep.subr.mxu0 0.0
  %7301 = vmatpush1.msra.mxu0 0.0
  %7302 = vmatprep.subr.mxu0 0.0
  %7303 = vmatpush1.msra.mxu0 0.0
  %7304 = vmatprep.subr.mxu0 0.0
  %7305 = vmatpush1.msra.mxu0 0.0
  %7306 = vmatprep.subr.mxu0 0.0
  %7307 = vmatpush1.msra.mxu0 0.0
  %7308 = vmatprep.subr.mxu0 0.0
  %7309 = vmatpush1.msra.mxu0 0.0
  %7310 = vmatprep.subr.mxu0 0.0
  %7311 = vmatpush1.msra.mxu0 0.0
  %7312 = vmatprep.subr.mxu0 0.0
  %7313 = vmatpush1.msra.mxu0 0.0
  %7314 = vmatprep.subr.mxu0 0.0
  %7315 = vmatpush1.msra.mxu0 0.0
  %7316 = vmatprep.subr.mxu0 0.0
  %7317 = vmatpush1.msra.mxu0 0.0
  %7318 = vmatprep.subr.mxu0 0.0
  %7319 = vmatpush1.msra.mxu0 0.0
  %7320 = vmatprep.subr.mxu0 0.0
  %7321 = vmatpush1.msra.mxu0 0.0
  %7322 = vmatprep.subr.mxu0 0.0
  %7323 = vmatpush1.msra.mxu0 0.0
  %7324 = vmatprep.subr.mxu0 0.0
  %7325 = vmatpush1.msra.mxu0 0.0
  %7326 = vmatprep.subr.mxu0 0.0
  %7327 = vmatpush1.msra.mxu0 0.0
  %7328 = vmatprep.subr.mxu0 0.0
  %7329 = vmatpush1.msra.mxu0 0.0
  %7330 = vmatprep.subr.mxu0 0.0
  %7331 = vmatpush1.msra.mxu0 0.0
  %7332 = vmatprep.subr.mxu0 0.0
  %7333 = vmatpush1.msra.mxu0 0.0
  %7334 = vmatprep.subr.mxu0 0.0
  %7335 = vmatpush1.msra.mxu0 0.0
  %7336 = vmatprep.subr.mxu0 0.0
  %7337 = vmatpush1.msra.mxu0 0.0
  %7338 = vmatprep.subr.mxu0 0.0
  %7339 = vmatpush1.msra.mxu0 0.0
  %7340 = vmatprep.subr.mxu0 0.0
  %7341 = vmatpush1.msra.mxu0 0.0
  %7342 = vmatprep.subr.mxu0 0.0
  %7343 = vmatpush1.msra.mxu0 0.0
  %7344 = vmatprep.mubr.f32.mxu0 0.0
  %7345 = vmatmul.mubr.f32.gmra.mrb[0].mxu0 %v7278
  %v7346 = vpop.f32.mrb[0].mxu0
  %v7347 = vadd.f32 0.0, %v7346
  %v7348 = vpop.f32.mrb[0].mxu0
  %7349 = vdwg.mxu0
  %v7350 = vld [vmem:[%s11] sm:$0xff]
  %v7351 = vld [vmem:[%s11 + $0x8] sm:$0xff]
  %v7352 = vld [vmem:[%s11 + $0x10] sm:$0xff]
  %v7353 = vld [vmem:[%s11 + $0x18] sm:$0xff]
  %s7354 = scalar_lea.vmem %s3, 8
  %v7355 = vld [vmem:[%s7354] sm:$0xff]
  %v7357 = vsel %vm7208, %v7355, 0
  %7359 = vmatprep.subr.mxu0 0.0
  %7360 = vmatpush1.msra.mxu0 %v7272
  %7361 = vmatprep.subr.mxu0 0.0
  %7362 = vmatpush1.msra.mxu0 %v7273
  %7363 = vmatprep.subr.mxu0 0.0
  %7364 = vmatpush1.msra.mxu0 %v7274
  %7365 = vmatprep.subr.mxu0 0.0
  %7366 = vmatpush1.msra.mxu0 %v7275
  %7367 = vmatprep.subr.mxu0 0.0
  %7368 = vmatpush1.msra.mxu0 0.0
  %7369 = vmatprep.subr.mxu0 0.0
  %7370 = vmatpush1.msra.mxu0 0.0
  %7371 = vmatprep.subr.mxu0 0.0
  %7372 = vmatpush1.msra.mxu0 0.0
  %7373 = vmatprep.subr.mxu0 0.0
  %7374 = vmatpush1.msra.mxu0 0.0
  %7375 = vmatprep.subr.mxu0 0.0
  %7376 = vmatpush1.msra.mxu0 0.0
  %7377 = vmatprep.subr.mxu0 0.0
  %7378 = vmatpush1.msra.mxu0 0.0
  %7379 = vmatprep.subr.mxu0 0.0
  %7380 = vmatpush1.msra.mxu0 0.0
  %7381 = vmatprep.subr.mxu0 0.0
  %7382 = vmatpush1.msra.mxu0 0.0
  %7383 = vmatprep.subr.mxu0 0.0
  %7384 = vmatpush1.msra.mxu0 0.0
  %7385 = vmatprep.subr.mxu0 0.0
  %7386 = vmatpush1.msra.mxu0 0.0
  %7387 = vmatprep.subr.mxu0 0.0
  %7388 = vmatpush1.msra.mxu0 0.0
  %7389 = vmatprep.subr.mxu0 0.0
  %7390 = vmatpush1.msra.mxu0 0.0
  %7391 = vmatprep.subr.mxu0 0.0
  %7392 = vmatpush1.msra.mxu0 0.0
  %7393 = vmatprep.subr.mxu0 0.0
  %7394 = vmatpush1.msra.mxu0 0.0
  %7395 = vmatprep.subr.mxu0 0.0
  %7396 = vmatpush1.msra.mxu0 0.0
  %7397 = vmatprep.subr.mxu0 0.0
  %7398 = vmatpush1.msra.mxu0 0.0
  %7399 = vmatprep.subr.mxu0 0.0
  %7400 = vmatpush1.msra.mxu0 0.0
  %7401 = vmatprep.subr.mxu0 0.0
  %7402 = vmatpush1.msra.mxu0 0.0
  %7403 = vmatprep.subr.mxu0 0.0
  %7404 = vmatpush1.msra.mxu0 0.0
  %7405 = vmatprep.subr.mxu0 0.0
  %7406 = vmatpush1.msra.mxu0 0.0
  %7407 = vmatprep.subr.mxu0 0.0
  %7408 = vmatpush1.msra.mxu0 0.0
  %7409 = vmatprep.subr.mxu0 0.0
  %7410 = vmatpush1.msra.mxu0 0.0
  %7411 = vmatprep.subr.mxu0 0.0
  %7412 = vmatpush1.msra.mxu0 0.0
  %7413 = vmatprep.subr.mxu0 0.0
  %7414 = vmatpush1.msra.mxu0 0.0
  %7415 = vmatprep.subr.mxu0 0.0
  %7416 = vmatpush1.msra.mxu0 0.0
  %7417 = vmatprep.subr.mxu0 0.0
  %7418 = vmatpush1.msra.mxu0 0.0
  %7419 = vmatprep.subr.mxu0 0.0
  %7420 = vmatpush1.msra.mxu0 0.0
  %7421 = vmatprep.subr.mxu0 0.0
  %7422 = vmatpush1.msra.mxu0 0.0
  %7423 = vmatprep.mubr.f32.mxu0 0.0
  %7424 = vmatmul.mubr.f32.gmra.mrb[0].mxu0 %v7357
  %v7425 = vpop.f32.mrb[0].mxu0
  %v7426 = vadd.f32 0.0, %v7425
  %v7427 = vpop.f32.mrb[0].mxu0
  %7428 = vdwg.mxu0
  %s7429 = scalar_lea.vmem %s11, 32
  %v7430 = vld [vmem:[%s7429] sm:$0xff]
  %v7431 = vld [vmem:[%s7429 + $0x8] sm:$0xff]
  %v7432 = vld [vmem:[%s7429 + $0x10] sm:$0xff]
  %v7433 = vld [vmem:[%s7429 + $0x18] sm:$0xff]
  %v7435 = vsel %vm7208, %v7426, 0
  %7437 = vmatprep.subr.mxu0 0.0
  %7438 = vmatpush1.msra.mxu0 %v7430
  %7439 = vmatprep.subr.mxu0 0.0
  %7440 = vmatpush1.msra.mxu0 %v7431
  %7441 = vmatprep.subr.mxu0 0.0
  %7442 = vmatpush1.msra.mxu0 %v7432
  %7443 = vmatprep.subr.mxu0 0.0
  %7444 = vmatpush1.msra.mxu0 %v7433
  %7445 = vmatprep.subr.mxu0 0.0
  %7446 = vmatpush1.msra.mxu0 0.0
  %7447 = vmatprep.subr.mxu0 0.0
  %7448 = vmatpush1.msra.mxu0 0.0
  %7449 = vmatprep.subr.mxu0 0.0
  %7450 = vmatpush1.msra.mxu0 0.0
  %7451 = vmatprep.subr.mxu0 0.0
  %7452 = vmatpush1.msra.mxu0 0.0
  %7453 = vmatprep.subr.mxu0 0.0
  %7454 = vmatpush1.msra.mxu0 0.0
  %7455 = vmatprep.subr.mxu0 0.0
  %7456 = vmatpush1.msra.mxu0 0.0
  %7457 = vmatprep.subr.mxu0 0.0
  %7458 = vmatpush1.msra.mxu0 0.0
  %7459 = vmatprep.subr.mxu0 0.0
  %7460 = vmatpush1.msra.mxu0 0.0
  %7461 = vmatprep.subr.mxu0 0.0
  %7462 = vmatpush1.msra.mxu0 0.0
  %7463 = vmatprep.subr.mxu0 0.0
  %7464 = vmatpush1.msra.mxu0 0.0
  %7465 = vmatprep.subr.mxu0 0.0
  %7466 = vmatpush1.msra.mxu0 0.0
  %7467 = vmatprep.subr.mxu0 0.0
  %7468 = vmatpush1.msra.mxu0 0.0
  %7469 = vmatprep.subr.mxu0 0.0
  %7470 = vmatpush1.msra.mxu0 0.0
  %7471 = vmatprep.subr.mxu0 0.0
  %7472 = vmatpush1.msra.mxu0 0.0
  %7473 = vmatprep.subr.mxu0 0.0
  %7474 = vmatpush1.msra.mxu0 0.0
  %7475 = vmatprep.subr.mxu0 0.0
  %7476 = vmatpush1.msra.mxu0 0.0
  %7477 = vmatprep.subr.mxu0 0.0
  %7478 = vmatpush1.msra.mxu0 0.0
  %7479 = vmatprep.subr.mxu0 0.0
  %7480 = vmatpush1.msra.mxu0 0.0
  %7481 = vmatprep.subr.mxu0 0.0
  %7482 = vmatpush1.msra.mxu0 0.0
  %7483 = vmatprep.subr.mxu0 0.0
  %7484 = vmatpush1.msra.mxu0 0.0
  %7485 = vmatprep.subr.mxu0 0.0
  %7486 = vmatpush1.msra.mxu0 0.0
  %7487 = vmatprep.subr.mxu0 0.0
  %7488 = vmatpush1.msra.mxu0 0.0
  %7489 = vmatprep.subr.mxu0 0.0
  %7490 = vmatpush1.msra.mxu0 0.0
  %7491 = vmatprep.subr.mxu0 0.0
  %7492 = vmatpush1.msra.mxu0 0.0
  %7493 = vmatprep.subr.mxu0 0.0
  %7494 = vmatpush1.msra.mxu0 0.0
  %7495 = vmatprep.subr.mxu0 0.0
  %7496 = vmatpush1.msra.mxu0 0.0
  %7497 = vmatprep.subr.mxu0 0.0
  %7498 = vmatpush1.msra.mxu0 0.0
  %7499 = vmatprep.subr.mxu0 0.0
  %7500 = vmatpush1.msra.mxu0 0.0
  %7501 = vmatprep.mubr.f32.mxu0 0.0
  %7502 = vmatmul.mubr.f32.gmra.mrb[0].mxu0 %v7435
  %v7503 = vpop.f32.mrb[0].mxu0
  %v7504 = vadd.f32 0.0, %v7503
  %v7505 = vpop.f32.mrb[0].mxu0
  %7506 = vdwg.mxu0
  %v7508 = vsel %vm7208, %v7347, 0
  %7510 = vmatprep.subr.mxu0 0.0
  %7511 = vmatpush1.msra.mxu0 %v7350
  %7512 = vmatprep.subr.mxu0 0.0
  %7513 = vmatpush1.msra.mxu0 %v7351
  %7514 = vmatprep.subr.mxu0 0.0
  %7515 = vmatpush1.msra.mxu0 %v7352
  %7516 = vmatprep.subr.mxu0 0.0
  %7517 = vmatpush1.msra.mxu0 %v7353
  %7518 = vmatprep.subr.mxu0 0.0
  %7519 = vmatpush1.msra.mxu0 0.0
  %7520 = vmatprep.subr.mxu0 0.0
  %7521 = vmatpush1.msra.mxu0 0.0
  %7522 = vmatprep.subr.mxu0 0.0
  %7523 = vmatpush1.msra.mxu0 0.0
  %7524 = vmatprep.subr.mxu0 0.0
  %7525 = vmatpush1.msra.mxu0 0.0
  %7526 = vmatprep.subr.mxu0 0.0
  %7527 = vmatpush1.msra.mxu0 0.0
  %7528 = vmatprep.subr.mxu0 0.0
  %7529 = vmatpush1.msra.mxu0 0.0
  %7530 = vmatprep.subr.mxu0 0.0
  %7531 = vmatpush1.msra.mxu0 0.0
  %7532 = vmatprep.subr.mxu0 0.0
  %7533 = vmatpush1.msra.mxu0 0.0
  %7534 = vmatprep.subr.mxu0 0.0
  %7535 = vmatpush1.msra.mxu0 0.0
  %7536 = vmatprep.subr.mxu0 0.0
  %7537 = vmatpush1.msra.mxu0 0.0
  %7538 = vmatprep.subr.mxu0 0.0
  %7539 = vmatpush1.msra.mxu0 0.0
  %7540 = vmatprep.subr.mxu0 0.0
  %7541 = vmatpush1.msra.mxu0 0.0
  %7542 = vmatprep.subr.mxu0 0.0
  %7543 = vmatpush1.msra.mxu0 0.0
  %7544 = vmatprep.subr.mxu0 0.0
  %7545 = vmatpush1.msra.mxu0 0.0
  %7546 = vmatprep.subr.mxu0 0.0
  %7547 = vmatpush1.msra.mxu0 0.0
  %7548 = vmatprep.subr.mxu0 0.0
  %7549 = vmatpush1.msra.mxu0 0.0
  %7550 = vmatprep.subr.mxu0 0.0
  %7551 = vmatpush1.msra.mxu0 0.0
  %7552 = vmatprep.subr.mxu0 0.0
  %7553 = vmatpush1.msra.mxu0 0.0
  %7554 = vmatprep.subr.mxu0 0.0
  %7555 = vmatpush1.msra.mxu0 0.0
  %7556 = vmatprep.subr.mxu0 0.0
  %7557 = vmatpush1.msra.mxu0 0.0
  %7558 = vmatprep.subr.mxu0 0.0
  %7559 = vmatpush1.msra.mxu0 0.0
  %7560 = vmatprep.subr.mxu0 0.0
  %7561 = vmatpush1.msra.mxu0 0.0
  %7562 = vmatprep.subr.mxu0 0.0
  %7563 = vmatpush1.msra.mxu0 0.0
  %7564 = vmatprep.subr.mxu0 0.0
  %7565 = vmatpush1.msra.mxu0 0.0
  %7566 = vmatprep.subr.mxu0 0.0
  %7567 = vmatpush1.msra.mxu0 0.0
  %7568 = vmatprep.subr.mxu0 0.0
  %7569 = vmatpush1.msra.mxu0 0.0
  %7570 = vmatprep.subr.mxu0 0.0
  %7571 = vmatpush1.msra.mxu0 0.0
  %7572 = vmatprep.subr.mxu0 0.0
  %7573 = vmatpush1.msra.mxu0 0.0
  %7574 = vmatprep.mubr.f32.mxu0 0.0
  %7575 = vmatmul.mubr.f32.gmra.mrb[0].mxu0 %v7508
  %v7576 = vpop.f32.mrb[0].mxu0
  %v7577 = vadd.f32 %v7504, %v7576
  %v7578 = vpop.f32.mrb[0].mxu0
  %7579 = vdwg.mxu0
  %s7580 = scalar_lea.vmem %s3, 16
  %v7581 = vld [vmem:[%s7580] sm:$0xff]
  %v7583 = vsel %vm7208, %v7581, 0
  %7585 = vmatprep.subr.mxu0 0.0
  %7586 = vmatpush1.msra.mxu0 %v7272
  %7587 = vmatprep.subr.mxu0 0.0
  %7588 = vmatpush1.msra.mxu0 %v7273
  %7589 = vmatprep.subr.mxu0 0.0
  %7590 = vmatpush1.msra.mxu0 %v7274
  %7591 = vmatprep.subr.mxu0 0.0
  %7592 = vmatpush1.msra.mxu0 %v7275
  %7593 = vmatprep.subr.mxu0 0.0
  %7594 = vmatpush1.msra.mxu0 0.0
  %7595 = vmatprep.subr.mxu0 0.0
  %7596 = vmatpush1.msra.mxu0 0.0
  %7597 = vmatprep.subr.mxu0 0.0
  %7598 = vmatpush1.msra.mxu0 0.0
  %7599 = vmatprep.subr.mxu0 0.0
  %7600 = vmatpush1.msra.mxu0 0.0
  %7601 = vmatprep.subr.mxu0 0.0
  %7602 = vmatpush1.msra.mxu0 0.0
  %7603 = vmatprep.subr.mxu0 0.0
  %7604 = vmatpush1.msra.mxu0 0.0
  %7605 = vmatprep.subr.mxu0 0.0
  %7606 = vmatpush1.msra.mxu0 0.0
  %7607 = vmatprep.subr.mxu0 0.0
  %7608 = vmatpush1.msra.mxu0 0.0
  %7609 = vmatprep.subr.mxu0 0.0
  %7610 = vmatpush1.msra.mxu0 0.0
  %7611 = vmatprep.subr.mxu0 0.0
  %7612 = vmatpush1.msra.mxu0 0.0
  %7613 = vmatprep.subr.mxu0 0.0
  %7614 = vmatpush1.msra.mxu0 0.0
  %7615 = vmatprep.subr.mxu0 0.0
  %7616 = vmatpush1.msra.mxu0 0.0
  %7617 = vmatprep.subr.mxu0 0.0
  %7618 = vmatpush1.msra.mxu0 0.0
  %7619 = vmatprep.subr.mxu0 0.0
  %7620 = vmatpush1.msra.mxu0 0.0
  %7621 = vmatprep.subr.mxu0 0.0
  %7622 = vmatpush1.msra.mxu0 0.0
  %7623 = vmatprep.subr.mxu0 0.0
  %7624 = vmatpush1.msra.mxu0 0.0
  %7625 = vmatprep.subr.mxu0 0.0
  %7626 = vmatpush1.msra.mxu0 0.0
  %7627 = vmatprep.subr.mxu0 0.0
  %7628 = vmatpush1.msra.mxu0 0.0
  %7629 = vmatprep.subr.mxu0 0.0
  %7630 = vmatpush1.msra.mxu0 0.0
  %7631 = vmatprep.subr.mxu0 0.0
  %7632 = vmatpush1.msra.mxu0 0.0
  %7633 = vmatprep.subr.mxu0 0.0
  %7634 = vmatpush1.msra.mxu0 0.0
  %7635 = vmatprep.subr.mxu0 0.0
  %7636 = vmatpush1.msra.mxu0 0.0
  %7637 = vmatprep.subr.mxu0 0.0
  %7638 = vmatpush1.msra.mxu0 0.0
  %7639 = vmatprep.subr.mxu0 0.0
  %7640 = vmatpush1.msra.mxu0 0.0
  %7641 = vmatprep.subr.mxu0 0.0
  %7642 = vmatpush1.msra.mxu0 0.0
  %7643 = vmatprep.subr.mxu0 0.0
  %7644 = vmatpush1.msra.mxu0 0.0
  %7645 = vmatprep.subr.mxu0 0.0
  %7646 = vmatpush1.msra.mxu0 0.0
  %7647 = vmatprep.subr.mxu0 0.0
  %7648 = vmatpush1.msra.mxu0 0.0
  %7649 = vmatprep.mubr.f32.mxu0 0.0
  %7650 = vmatmul.mubr.f32.gmra.mrb[0].mxu0 %v7583
  %v7651 = vpop.f32.mrb[0].mxu0
  %v7652 = vadd.f32 0.0, %v7651
  %v7653 = vpop.f32.mrb[0].mxu0
  %7654 = vdwg.mxu0
  %s7655 = scalar_lea.vmem %s11, 64
  %v7656 = vld [vmem:[%s7655] sm:$0xff]
  %v7657 = vld [vmem:[%s7655 + $0x8] sm:$0xff]
  %v7658 = vld [vmem:[%s7655 + $0x10] sm:$0xff]
  %v7659 = vld [vmem:[%s7655 + $0x18] sm:$0xff]
  %v7661 = vsel %vm7208, %v7652, 0
  %7663 = vmatprep.subr.mxu0 0.0
  %7664 = vmatpush1.msra.mxu0 %v7656
  %7665 = vmatprep.subr.mxu0 0.0
  %7666 = vmatpush1.msra.mxu0 %v7657
  %7667 = vmatprep.subr.mxu0 0.0
  %7668 = vmatpush1.msra.mxu0 %v7658
  %7669 = vmatprep.subr.mxu0 0.0
  %7670 = vmatpush1.msra.mxu0 %v7659
  %7671 = vmatprep.subr.mxu0 0.0
  %7672 = vmatpush1.msra.mxu0 0.0
  %7673 = vmatprep.subr.mxu0 0.0
  %7674 = vmatpush1.msra.mxu0 0.0
  %7675 = vmatprep.subr.mxu0 0.0
  %7676 = vmatpush1.msra.mxu0 0.0
  %7677 = vmatprep.subr.mxu0 0.0
  %7678 = vmatpush1.msra.mxu0 0.0
  %7679 = vmatprep.subr.mxu0 0.0
  %7680 = vmatpush1.msra.mxu0 0.0
  %7681 = vmatprep.subr.mxu0 0.0
  %7682 = vmatpush1.msra.mxu0 0.0
  %7683 = vmatprep.subr.mxu0 0.0
  %7684 = vmatpush1.msra.mxu0 0.0
  %7685 = vmatprep.subr.mxu0 0.0
  %7686 = vmatpush1.msra.mxu0 0.0
  %7687 = vmatprep.subr.mxu0 0.0
  %7688 = vmatpush1.msra.mxu0 0.0
  %7689 = vmatprep.subr.mxu0 0.0
  %7690 = vmatpush1.msra.mxu0 0.0
  %7691 = vmatprep.subr.mxu0 0.0
  %7692 = vmatpush1.msra.mxu0 0.0
  %7693 = vmatprep.subr.mxu0 0.0
  %7694 = vmatpush1.msra.mxu0 0.0
  %7695 = vmatprep.subr.mxu0 0.0
  %7696 = vmatpush1.msra.mxu0 0.0
  %7697 = vmatprep.subr.mxu0 0.0
  %7698 = vmatpush1.msra.mxu0 0.0
  %7699 = vmatprep.subr.mxu0 0.0
  %7700 = vmatpush1.msra.mxu0 0.0
  %7701 = vmatprep.subr.mxu0 0.0
  %7702 = vmatpush1.msra.mxu0 0.0
  %7703 = vmatprep.subr.mxu0 0.0
  %7704 = vmatpush1.msra.mxu0 0.0
  %7705 = vmatprep.subr.mxu0 0.0
  %7706 = vmatpush1.msra.mxu0 0.0
  %7707 = vmatprep.subr.mxu0 0.0
  %7708 = vmatpush1.msra.mxu0 0.0
  %7709 = vmatprep.subr.mxu0 0.0
  %7710 = vmatpush1.msra.mxu0 0.0
  %7711 = vmatprep.subr.mxu0 0.0
  %7712 = vmatpush1.msra.mxu0 0.0
  %7713 = vmatprep.subr.mxu0 0.0
  %7714 = vmatpush1.msra.mxu0 0.0
  %7715 = vmatprep.subr.mxu0 0.0
  %7716 = vmatpush1.msra.mxu0 0.0
  %7717 = vmatprep.subr.mxu0 0.0
  %7718 = vmatpush1.msra.mxu0 0.0
  %7719 = vmatprep.subr.mxu0 0.0
  %7720 = vmatpush1.msra.mxu0 0.0
  %7721 = vmatprep.subr.mxu0 0.0
  %7722 = vmatpush1.msra.mxu0 0.0
  %7723 = vmatprep.subr.mxu0 0.0
  %7724 = vmatpush1.msra.mxu0 0.0
  %7725 = vmatprep.subr.mxu0 0.0
  %7726 = vmatpush1.msra.mxu0 0.0
  %7727 = vmatprep.mubr.f32.mxu0 0.0
  %7728 = vmatmul.mubr.f32.gmra.mrb[0].mxu0 %v7661
  %v7729 = vpop.f32.mrb[0].mxu0
  %v7730 = vadd.f32 0.0, %v7729
  %v7731 = vpop.f32.mrb[0].mxu0
  %7732 = vdwg.mxu0
  %v7733 = vadd.f32 %v7577, %v7730
  %s7734 = scalar_lea.vmem %s3, 24
  %v7735 = vld [vmem:[%s7734] sm:$0xff]
  %v7737 = vsel %vm7208, %v7735, 0
  %7739 = vmatprep.subr.mxu0 0.0
  %7740 = vmatpush1.msra.mxu0 %v7272
  %7741 = vmatprep.subr.mxu0 0.0
  %7742 = vmatpush1.msra.mxu0 %v7273
  %7743 = vmatprep.subr.mxu0 0.0
  %7744 = vmatpush1.msra.mxu0 %v7274
  %7745 = vmatprep.subr.mxu0 0.0
  %7746 = vmatpush1.msra.mxu0 %v7275
  %7747 = vmatprep.subr.mxu0 0.0
  %7748 = vmatpush1.msra.mxu0 0.0
  %7749 = vmatprep.subr.mxu0 0.0
  %7750 = vmatpush1.msra.mxu0 0.0
  %7751 = vmatprep.subr.mxu0 0.0
  %7752 = vmatpush1.msra.mxu0 0.0
  %7753 = vmatprep.subr.mxu0 0.0
  %7754 = vmatpush1.msra.mxu0 0.0
  %7755 = vmatprep.subr.mxu0 0.0
  %7756 = vmatpush1.msra.mxu0 0.0
  %7757 = vmatprep.subr.mxu0 0.0
  %7758 = vmatpush1.msra.mxu0 0.0
  %7759 = vmatprep.subr.mxu0 0.0
  %7760 = vmatpush1.msra.mxu0 0.0
  %7761 = vmatprep.subr.mxu0 0.0
  %7762 = vmatpush1.msra.mxu0 0.0
  %7763 = vmatprep.subr.mxu0 0.0
  %7764 = vmatpush1.msra.mxu0 0.0
  %7765 = vmatprep.subr.mxu0 0.0
  %7766 = vmatpush1.msra.mxu0 0.0
  %7767 = vmatprep.subr.mxu0 0.0
  %7768 = vmatpush1.msra.mxu0 0.0
  %7769 = vmatprep.subr.mxu0 0.0
  %7770 = vmatpush1.msra.mxu0 0.0
  %7771 = vmatprep.subr.mxu0 0.0
  %7772 = vmatpush1.msra.mxu0 0.0
  %7773 = vmatprep.subr.mxu0 0.0
  %7774 = vmatpush1.msra.mxu0 0.0
  %7775 = vmatprep.subr.mxu0 0.0
  %7776 = vmatpush1.msra.mxu0 0.0
  %7777 = vmatprep.subr.mxu0 0.0
  %7778 = vmatpush1.msra.mxu0 0.0
  %7779 = vmatprep.subr.mxu0 0.0
  %7780 = vmatpush1.msra.mxu0 0.0
  %7781 = vmatprep.subr.mxu0 0.0
  %7782 = vmatpush1.msra.mxu0 0.0
  %7783 = vmatprep.subr.mxu0 0.0
  %7784 = vmatpush1.msra.mxu0 0.0
  %7785 = vmatprep.subr.mxu0 0.0
  %7786 = vmatpush1.msra.mxu0 0.0
  %7787 = vmatprep.subr.mxu0 0.0
  %7788 = vmatpush1.msra.mxu0 0.0
  %7789 = vmatprep.subr.mxu0 0.0
  %7790 = vmatpush1.msra.mxu0 0.0
  %7791 = vmatprep.subr.mxu0 0.0
  %7792 = vmatpush1.msra.mxu0 0.0
  %7793 = vmatprep.subr.mxu0 0.0
  %7794 = vmatpush1.msra.mxu0 0.0
  %7795 = vmatprep.subr.mxu0 0.0
  %7796 = vmatpush1.msra.mxu0 0.0
  %7797 = vmatprep.subr.mxu0 0.0
  %7798 = vmatpush1.msra.mxu0 0.0
  %7799 = vmatprep.subr.mxu0 0.0
  %7800 = vmatpush1.msra.mxu0 0.0
  %7801 = vmatprep.subr.mxu0 0.0
  %7802 = vmatpush1.msra.mxu0 0.0
  %7803 = vmatprep.mubr.f32.mxu0 0.0
  %7804 = vmatmul.mubr.f32.gmra.mrb[0].mxu0 %v7737
  %v7805 = vpop.f32.mrb[0].mxu0
  %v7806 = vadd.f32 0.0, %v7805
  %v7807 = vpop.f32.mrb[0].mxu0
  %7808 = vdwg.mxu0
  %s7809 = scalar_lea.vmem %s11, 96
  %v7810 = vld [vmem:[%s7809] sm:$0xff]
  %v7811 = vld [vmem:[%s7809 + $0x8] sm:$0xff]
  %v7812 = vld [vmem:[%s7809 + $0x10] sm:$0xff]
  %v7813 = vld [vmem:[%s7809 + $0x18] sm:$0xff]
  %v7815 = vsel %vm7208, %v7806, 0
  %7817 = vmatprep.subr.mxu0 0.0
  %7818 = vmatpush1.msra.mxu0 %v7810
  %7819 = vmatprep.subr.mxu0 0.0
  %7820 = vmatpush1.msra.mxu0 %v7811
  %7821 = vmatprep.subr.mxu0 0.0
  %7822 = vmatpush1.msra.mxu0 %v7812
  %7823 = vmatprep.subr.mxu0 0.0
  %7824 = vmatpush1.msra.mxu0 %v7813
  %7825 = vmatprep.subr.mxu0 0.0
  %7826 = vmatpush1.msra.mxu0 0.0
  %7827 = vmatprep.subr.mxu0 0.0
  %7828 = vmatpush1.msra.mxu0 0.0
  %7829 = vmatprep.subr.mxu0 0.0
  %7830 = vmatpush1.msra.mxu0 0.0
  %7831 = vmatprep.subr.mxu0 0.0
  %7832 = vmatpush1.msra.mxu0 0.0
  %7833 = vmatprep.subr.mxu0 0.0
  %7834 = vmatpush1.msra.mxu0 0.0
  %7835 = vmatprep.subr.mxu0 0.0
  %7836 = vmatpush1.msra.mxu0 0.0
  %7837 = vmatprep.subr.mxu0 0.0
  %7838 = vmatpush1.msra.mxu0 0.0
  %7839 = vmatprep.subr.mxu0 0.0
  %7840 = vmatpush1.msra.mxu0 0.0
  %7841 = vmatprep.subr.mxu0 0.0
  %7842 = vmatpush1.msra.mxu0 0.0
  %7843 = vmatprep.subr.mxu0 0.0
  %7844 = vmatpush1.msra.mxu0 0.0
  %7845 = vmatprep.subr.mxu0 0.0
  %7846 = vmatpush1.msra.mxu0 0.0
  %7847 = vmatprep.subr.mxu0 0.0
  %7848 = vmatpush1.msra.mxu0 0.0
  %7849 = vmatprep.subr.mxu0 0.0
  %7850 = vmatpush1.msra.mxu0 0.0
  %7851 = vmatprep.subr.mxu0 0.0
  %7852 = vmatpush1.msra.mxu0 0.0
  %7853 = vmatprep.subr.mxu0 0.0
  %7854 = vmatpush1.msra.mxu0 0.0
  %7855 = vmatprep.subr.mxu0 0.0
  %7856 = vmatpush1.msra.mxu0 0.0
  %7857 = vmatprep.subr.mxu0 0.0
  %7858 = vmatpush1.msra.mxu0 0.0
  %7859 = vmatprep.subr.mxu0 0.0
  %7860 = vmatpush1.msra.mxu0 0.0
  %7861 = vmatprep.subr.mxu0 0.0
  %7862 = vmatpush1.msra.mxu0 0.0
  %7863 = vmatprep.subr.mxu0 0.0
  %7864 = vmatpush1.msra.mxu0 0.0
  %7865 = vmatprep.subr.mxu0 0.0
  %7866 = vmatpush1.msra.mxu0 0.0
  %7867 = vmatprep.subr.mxu0 0.0
  %7868 = vmatpush1.msra.mxu0 0.0
  %7869 = vmatprep.subr.mxu0 0.0
  %7870 = vmatpush1.msra.mxu0 0.0
  %7871 = vmatprep.subr.mxu0 0.0
  %7872 = vmatpush1.msra.mxu0 0.0
  %7873 = vmatprep.subr.mxu0 0.0
  %7874 = vmatpush1.msra.mxu0 0.0
  %7875 = vmatprep.subr.mxu0 0.0
  %7876 = vmatpush1.msra.mxu0 0.0
  %7877 = vmatprep.subr.mxu0 0.0
  %7878 = vmatpush1.msra.mxu0 0.0
  %7879 = vmatprep.subr.mxu0 0.0
  %7880 = vmatpush1.msra.mxu0 0.0
  %7881 = vmatprep.mubr.f32.mxu0 0.0
  %7882 = vmatmul.mubr.f32.gmra.mrb[0].mxu0 %v7815
  %v7883 = vpop.f32.mrb[0].mxu0
  %v7884 = vadd.f32 0.0, %v7883
  %v7885 = vpop.f32.mrb[0].mxu0
  %7886 = vdwg.mxu0
  %v7887 = vadd.f32 %v7733, %v7884
  %s7888 = scalar_lea.vmem %s3, 32
  %v7889 = vld [vmem:[%s7888] sm:$0xff]
  %v7891 = vsel %vm7208, %v7889, 0
  %7893 = vmatprep.subr.mxu0 0.0
  %7894 = vmatpush1.msra.mxu0 %v7272
  %7895 = vmatprep.subr.mxu0 0.0
  %7896 = vmatpush1.msra.mxu0 %v7273
  %7897 = vmatprep.subr.mxu0 0.0
  %7898 = vmatpush1.msra.mxu0 %v7274
  %7899 = vmatprep.subr.mxu0 0.0
  %7900 = vmatpush1.msra.mxu0 %v7275
  %7901 = vmatprep.subr.mxu0 0.0
  %7902 = vmatpush1.msra.mxu0 0.0
  %7903 = vmatprep.subr.mxu0 0.0
  %7904 = vmatpush1.msra.mxu0 0.0
  %7905 = vmatprep.subr.mxu0 0.0
  %7906 = vmatpush1.msra.mxu0 0.0
  %7907 = vmatprep.subr.mxu0 0.0
  %7908 = vmatpush1.msra.mxu0 0.0
  %7909 = vmatprep.subr.mxu0 0.0
  %7910 = vmatpush1.msra.mxu0 0.0
  %7911 = vmatprep.subr.mxu0 0.0
  %7912 = vmatpush1.msra.mxu0 0.0
  %7913 = vmatprep.subr.mxu0 0.0
  %7914 = vmatpush1.msra.mxu0 0.0
  %7915 = vmatprep.subr.mxu0 0.0
  %7916 = vmatpush1.msra.mxu0 0.0
  %7917 = vmatprep.subr.mxu0 0.0
  %7918 = vmatpush1.msra.mxu0 0.0
  %7919 = vmatprep.subr.mxu0 0.0
  %7920 = vmatpush1.msra.mxu0 0.0
  %7921 = vmatprep.subr.mxu0 0.0
  %7922 = vmatpush1.msra.mxu0 0.0
  %7923 = vmatprep.subr.mxu0 0.0
  %7924 = vmatpush1.msra.mxu0 0.0
  %7925 = vmatprep.subr.mxu0 0.0
  %7926 = vmatpush1.msra.mxu0 0.0
  %7927 = vmatprep.subr.mxu0 0.0
  %7928 = vmatpush1.msra.mxu0 0.0
  %7929 = vmatprep.subr.mxu0 0.0
  %7930 = vmatpush1.msra.mxu0 0.0
  %7931 = vmatprep.subr.mxu0 0.0
  %7932 = vmatpush1.msra.mxu0 0.0
  %7933 = vmatprep.subr.mxu0 0.0
  %7934 = vmatpush1.msra.mxu0 0.0
  %7935 = vmatprep.subr.mxu0 0.0
  %7936 = vmatpush1.msra.mxu0 0.0
  %7937 = vmatprep.subr.mxu0 0.0
  %7938 = vmatpush1.msra.mxu0 0.0
  %7939 = vmatprep.subr.mxu0 0.0
  %7940 = vmatpush1.msra.mxu0 0.0
  %7941 = vmatprep.subr.mxu0 0.0
  %7942 = vmatpush1.msra.mxu0 0.0
  %7943 = vmatprep.subr.mxu0 0.0
  %7944 = vmatpush1.msra.mxu0 0.0
  %7945 = vmatprep.subr.mxu0 0.0
  %7946 = vmatpush1.msra.mxu0 0.0
  %7947 = vmatprep.subr.mxu0 0.0
  %7948 = vmatpush1.msra.mxu0 0.0
  %7949 = vmatprep.subr.mxu0 0.0
  %7950 = vmatpush1.msra.mxu0 0.0
  %7951 = vmatprep.subr.mxu0 0.0
  %7952 = vmatpush1.msra.mxu0 0.0
  %7953 = vmatprep.subr.mxu0 0.0
  %7954 = vmatpush1.msra.mxu0 0.0
  %7955 = vmatprep.subr.mxu0 0.0
  %7956 = vmatpush1.msra.mxu0 0.0
  %7957 = vmatprep.mubr.f32.mxu0 0.0
  %7958 = vmatmul.mubr.f32.gmra.mrb[0].mxu0 %v7891
  %v7959 = vpop.f32.mrb[0].mxu0
  %v7960 = vadd.f32 0.0, %v7959
  %v7961 = vpop.f32.mrb[0].mxu0
  %7962 = vdwg.mxu0
  %s7963 = scalar_lea.vmem %s11, 128
  %v7964 = vld [vmem:[%s7963] sm:$0xff]
  %v7965 = vld [vmem:[%s7963 + $0x8] sm:$0xff]
  %v7966 = vld [vmem:[%s7963 + $0x10] sm:$0xff]
  %v7967 = vld [vmem:[%s7963 + $0x18] sm:$0xff]
  %v7969 = vsel %vm7208, %v7960, 0
  %7971 = vmatprep.subr.mxu0 0.0
  %7972 = vmatpush1.msra.mxu0 %v7964
  %7973 = vmatprep.subr.mxu0 0.0
  %7974 = vmatpush1.msra.mxu0 %v7965
  %7975 = vmatprep.subr.mxu0 0.0
  %7976 = vmatpush1.msra.mxu0 %v7966
  %7977 = vmatprep.subr.mxu0 0.0
  %7978 = vmatpush1.msra.mxu0 %v7967
  %7979 = vmatprep.subr.mxu0 0.0
  %7980 = vmatpush1.msra.mxu0 0.0
  %7981 = vmatprep.subr.mxu0 0.0
  %7982 = vmatpush1.msra.mxu0 0.0
  %7983 = vmatprep.subr.mxu0 0.0
  %7984 = vmatpush1.msra.mxu0 0.0
  %7985 = vmatprep.subr.mxu0 0.0
  %7986 = vmatpush1.msra.mxu0 0.0
  %7987 = vmatprep.subr.mxu0 0.0
  %7988 = vmatpush1.msra.mxu0 0.0
  %7989 = vmatprep.subr.mxu0 0.0
  %7990 = vmatpush1.msra.mxu0 0.0
  %7991 = vmatprep.subr.mxu0 0.0
  %7992 = vmatpush1.msra.mxu0 0.0
  %7993 = vmatprep.subr.mxu0 0.0
  %7994 = vmatpush1.msra.mxu0 0.0
  %7995 = vmatprep.subr.mxu0 0.0
  %7996 = vmatpush1.msra.mxu0 0.0
  %7997 = vmatprep.subr.mxu0 0.0
  %7998 = vmatpush1.msra.mxu0 0.0
  %7999 = vmatprep.subr.mxu0 0.0
  %8000 = vmatpush1.msra.mxu0 0.0
  %8001 = vmatprep.subr.mxu0 0.0
  %8002 = vmatpush1.msra.mxu0 0.0
  %8003 = vmatprep.subr.mxu0 0.0
  %8004 = vmatpush1.msra.mxu0 0.0
  %8005 = vmatprep.subr.mxu0 0.0
  %8006 = vmatpush1.msra.mxu0 0.0
  %8007 = vmatprep.subr.mxu0 0.0
  %8008 = vmatpush1.msra.mxu0 0.0
  %8009 = vmatprep.subr.mxu0 0.0
  %8010 = vmatpush1.msra.mxu0 0.0
  %8011 = vmatprep.subr.mxu0 0.0
  %8012 = vmatpush1.msra.mxu0 0.0
  %8013 = vmatprep.subr.mxu0 0.0
  %8014 = vmatpush1.msra.mxu0 0.0
  %8015 = vmatprep.subr.mxu0 0.0
  %8016 = vmatpush1.msra.mxu0 0.0
  %8017 = vmatprep.subr.mxu0 0.0
  %8018 = vmatpush1.msra.mxu0 0.0
  %8019 = vmatprep.subr.mxu0 0.0
  %8020 = vmatpush1.msra.mxu0 0.0
  %8021 = vmatprep.subr.mxu0 0.0
  %8022 = vmatpush1.msra.mxu0 0.0
  %8023 = vmatprep.subr.mxu0 0.0
  %8024 = vmatpush1.msra.mxu0 0.0
  %8025 = vmatprep.subr.mxu0 0.0
  %8026 = vmatpush1.msra.mxu0 0.0
  %8027 = vmatprep.subr.mxu0 0.0
  %8028 = vmatpush1.msra.mxu0 0.0
  %8029 = vmatprep.subr.mxu0 0.0
  %8030 = vmatpush1.msra.mxu0 0.0
  %8031 = vmatprep.subr.mxu0 0.0
  %8032 = vmatpush1.msra.mxu0 0.0
  %8033 = vmatprep.subr.mxu0 0.0
  %8034 = vmatpush1.msra.mxu0 0.0
  %8035 = vmatprep.mubr.f32.mxu0 0.0
  %8036 = vmatmul.mubr.f32.gmra.mrb[0].mxu0 %v7969
  %v8037 = vpop.f32.mrb[0].mxu0
  %v8038 = vadd.f32 0.0, %v8037
  %v8039 = vpop.f32.mrb[0].mxu0
  %8040 = vdwg.mxu0
  %v8041 = vadd.f32 %v7887, %v8038
  %s8042 = scalar_lea.vmem %s3, 40
  %v8043 = vld [vmem:[%s8042] sm:$0xff]
  %v8045 = vsel %vm7208, %v8043, 0
  %8047 = vmatprep.subr.mxu0 0.0
  %8048 = vmatpush1.msra.mxu0 %v7272
  %8049 = vmatprep.subr.mxu0 0.0
  %8050 = vmatpush1.msra.mxu0 %v7273
  %8051 = vmatprep.subr.mxu0 0.0
  %8052 = vmatpush1.msra.mxu0 %v7274
  %8053 = vmatprep.subr.mxu0 0.0
  %8054 = vmatpush1.msra.mxu0 %v7275
  %8055 = vmatprep.subr.mxu0 0.0
  %8056 = vmatpush1.msra.mxu0 0.0
  %8057 = vmatprep.subr.mxu0 0.0
  %8058 = vmatpush1.msra.mxu0 0.0
  %8059 = vmatprep.subr.mxu0 0.0
  %8060 = vmatpush1.msra.mxu0 0.0
  %8061 = vmatprep.subr.mxu0 0.0
  %8062 = vmatpush1.msra.mxu0 0.0
  %8063 = vmatprep.subr.mxu0 0.0
  %8064 = vmatpush1.msra.mxu0 0.0
  %8065 = vmatprep.subr.mxu0 0.0
  %8066 = vmatpush1.msra.mxu0 0.0
  %8067 = vmatprep.subr.mxu0 0.0
  %8068 = vmatpush1.msra.mxu0 0.0
  %8069 = vmatprep.subr.mxu0 0.0
  %8070 = vmatpush1.msra.mxu0 0.0
  %8071 = vmatprep.subr.mxu0 0.0
  %8072 = vmatpush1.msra.mxu0 0.0
  %8073 = vmatprep.subr.mxu0 0.0
  %8074 = vmatpush1.msra.mxu0 0.0
  %8075 = vmatprep.subr.mxu0 0.0
  %8076 = vmatpush1.msra.mxu0 0.0
  %8077 = vmatprep.subr.mxu0 0.0
  %8078 = vmatpush1.msra.mxu0 0.0
  %8079 = vmatprep.subr.mxu0 0.0
  %8080 = vmatpush1.msra.mxu0 0.0
  %8081 = vmatprep.subr.mxu0 0.0
  %8082 = vmatpush1.msra.mxu0 0.0
  %8083 = vmatprep.subr.mxu0 0.0
  %8084 = vmatpush1.msra.mxu0 0.0
  %8085 = vmatprep.subr.mxu0 0.0
  %8086 = vmatpush1.msra.mxu0 0.0
  %8087 = vmatprep.subr.mxu0 0.0
  %8088 = vmatpush1.msra.mxu0 0.0
  %8089 = vmatprep.subr.mxu0 0.0
  %8090 = vmatpush1.msra.mxu0 0.0
  %8091 = vmatprep.subr.mxu0 0.0
  %8092 = vmatpush1.msra.mxu0 0.0
  %8093 = vmatprep.subr.mxu0 0.0
  %8094 = vmatpush1.msra.mxu0 0.0
  %8095 = vmatprep.subr.mxu0 0.0
  %8096 = vmatpush1.msra.mxu0 0.0
  %8097 = vmatprep.subr.mxu0 0.0
  %8098 = vmatpush1.msra.mxu0 0.0
  %8099 = vmatprep.subr.mxu0 0.0
  %8100 = vmatpush1.msra.mxu0 0.0
  %8101 = vmatprep.subr.mxu0 0.0
  %8102 = vmatpush1.msra.mxu0 0.0
  %8103 = vmatprep.subr.mxu0 0.0
  %8104 = vmatpush1.msra.mxu0 0.0
  %8105 = vmatprep.subr.mxu0 0.0
  %8106 = vmatpush1.msra.mxu0 0.0
  %8107 = vmatprep.subr.mxu0 0.0
  %8108 = vmatpush1.msra.mxu0 0.0
  %8109 = vmatprep.subr.mxu0 0.0
  %8110 = vmatpush1.msra.mxu0 0.0
  %8111 = vmatprep.mubr.f32.mxu0 0.0
  %8112 = vmatmul.mubr.f32.gmra.mrb[0].mxu0 %v8045
  %v8113 = vpop.f32.mrb[0].mxu0
  %v8114 = vadd.f32 0.0, %v8113
  %v8115 = vpop.f32.mrb[0].mxu0
  %8116 = vdwg.mxu0
  %s8117 = scalar_lea.vmem %s11, 160
  %v8118 = vld [vmem:[%s8117] sm:$0xff]
  %v8119 = vld [vmem:[%s8117 + $0x8] sm:$0xff]
  %v8120 = vld [vmem:[%s8117 + $0x10] sm:$0xff]
  %v8121 = vld [vmem:[%s8117 + $0x18] sm:$0xff]
  %v8123 = vsel %vm7208, %v8114, 0
  %8125 = vmatprep.subr.mxu0 0.0
  %8126 = vmatpush1.msra.mxu0 %v8118
  %8127 = vmatprep.subr.mxu0 0.0
  %8128 = vmatpush1.msra.mxu0 %v8119
  %8129 = vmatprep.subr.mxu0 0.0
  %8130 = vmatpush1.msra.mxu0 %v8120
  %8131 = vmatprep.subr.mxu0 0.0
  %8132 = vmatpush1.msra.mxu0 %v8121
  %8133 = vmatprep.subr.mxu0 0.0
  %8134 = vmatpush1.msra.mxu0 0.0
  %8135 = vmatprep.subr.mxu0 0.0
  %8136 = vmatpush1.msra.mxu0 0.0
  %8137 = vmatprep.subr.mxu0 0.0
  %8138 = vmatpush1.msra.mxu0 0.0
  %8139 = vmatprep.subr.mxu0 0.0
  %8140 = vmatpush1.msra.mxu0 0.0
  %8141 = vmatprep.subr.mxu0 0.0
  %8142 = vmatpush1.msra.mxu0 0.0
  %8143 = vmatprep.subr.mxu0 0.0
  %8144 = vmatpush1.msra.mxu0 0.0
  %8145 = vmatprep.subr.mxu0 0.0
  %8146 = vmatpush1.msra.mxu0 0.0
  %8147 = vmatprep.subr.mxu0 0.0
  %8148 = vmatpush1.msra.mxu0 0.0
  %8149 = vmatprep.subr.mxu0 0.0
  %8150 = vmatpush1.msra.mxu0 0.0
  %8151 = vmatprep.subr.mxu0 0.0
  %8152 = vmatpush1.msra.mxu0 0.0
  %8153 = vmatprep.subr.mxu0 0.0
  %8154 = vmatpush1.msra.mxu0 0.0
  %8155 = vmatprep.subr.mxu0 0.0
  %8156 = vmatpush1.msra.mxu0 0.0
  %8157 = vmatprep.subr.mxu0 0.0
  %8158 = vmatpush1.msra.mxu0 0.0
  %8159 = vmatprep.subr.mxu0 0.0
  %8160 = vmatpush1.msra.mxu0 0.0
  %8161 = vmatprep.subr.mxu0 0.0
  %8162 = vmatpush1.msra.mxu0 0.0
  %8163 = vmatprep.subr.mxu0 0.0
  %8164 = vmatpush1.msra.mxu0 0.0
  %8165 = vmatprep.subr.mxu0 0.0
  %8166 = vmatpush1.msra.mxu0 0.0
  %8167 = vmatprep.subr.mxu0 0.0
  %8168 = vmatpush1.msra.mxu0 0.0
  %8169 = vmatprep.subr.mxu0 0.0
  %8170 = vmatpush1.msra.mxu0 0.0
  %8171 = vmatprep.subr.mxu0 0.0
  %8172 = vmatpush1.msra.mxu0 0.0
  %8173 = vmatprep.subr.mxu0 0.0
  %8174 = vmatpush1.msra.mxu0 0.0
  %8175 = vmatprep.subr.mxu0 0.0
  %8176 = vmatpush1.msra.mxu0 0.0
  %8177 = vmatprep.subr.mxu0 0.0
  %8178 = vmatpush1.msra.mxu0 0.0
  %8179 = vmatprep.subr.mxu0 0.0
  %8180 = vmatpush1.msra.mxu0 0.0
  %8181 = vmatprep.subr.mxu0 0.0
  %8182 = vmatpush1.msra.mxu0 0.0
  %8183 = vmatprep.subr.mxu0 0.0
  %8184 = vmatpush1.msra.mxu0 0.0
  %8185 = vmatprep.subr.mxu0 0.0
  %8186 = vmatpush1.msra.mxu0 0.0
  %8187 = vmatprep.subr.mxu0 0.0
  %8188 = vmatpush1.msra.mxu0 0.0
  %8189 = vmatprep.mubr.f32.mxu0 0.0
  %8190 = vmatmul.mubr.f32.gmra.mrb[0].mxu0 %v8123
  %v8191 = vpop.f32.mrb[0].mxu0
  %v8192 = vadd.f32 0.0, %v8191
  %v8193 = vpop.f32.mrb[0].mxu0
  %8194 = vdwg.mxu0
  %v8195 = vadd.f32 %v8041, %v8192
  %s8196 = scalar_lea.vmem %s3, 48
  %v8197 = vld [vmem:[%s8196] sm:$0xff]
  %v8199 = vsel %vm7208, %v8197, 0
  %8201 = vmatprep.subr.mxu0 0.0
  %8202 = vmatpush1.msra.mxu0 %v7272
  %8203 = vmatprep.subr.mxu0 0.0
  %8204 = vmatpush1.msra.mxu0 %v7273
  %8205 = vmatprep.subr.mxu0 0.0
  %8206 = vmatpush1.msra.mxu0 %v7274
  %8207 = vmatprep.subr.mxu0 0.0
  %8208 = vmatpush1.msra.mxu0 %v7275
  %8209 = vmatprep.subr.mxu0 0.0
  %8210 = vmatpush1.msra.mxu0 0.0
  %8211 = vmatprep.subr.mxu0 0.0
  %8212 = vmatpush1.msra.mxu0 0.0
  %8213 = vmatprep.subr.mxu0 0.0
  %8214 = vmatpush1.msra.mxu0 0.0
  %8215 = vmatprep.subr.mxu0 0.0
  %8216 = vmatpush1.msra.mxu0 0.0
  %8217 = vmatprep.subr.mxu0 0.0
  %8218 = vmatpush1.msra.mxu0 0.0
  %8219 = vmatprep.subr.mxu0 0.0
  %8220 = vmatpush1.msra.mxu0 0.0
  %8221 = vmatprep.subr.mxu0 0.0
  %8222 = vmatpush1.msra.mxu0 0.0
  %8223 = vmatprep.subr.mxu0 0.0
  %8224 = vmatpush1.msra.mxu0 0.0
  %8225 = vmatprep.subr.mxu0 0.0
  %8226 = vmatpush1.msra.mxu0 0.0
  %8227 = vmatprep.subr.mxu0 0.0
  %8228 = vmatpush1.msra.mxu0 0.0
  %8229 = vmatprep.subr.mxu0 0.0
  %8230 = vmatpush1.msra.mxu0 0.0
  %8231 = vmatprep.subr.mxu0 0.0
  %8232 = vmatpush1.msra.mxu0 0.0
  %8233 = vmatprep.subr.mxu0 0.0
  %8234 = vmatpush1.msra.mxu0 0.0
  %8235 = vmatprep.subr.mxu0 0.0
  %8236 = vmatpush1.msra.mxu0 0.0
  %8237 = vmatprep.subr.mxu0 0.0
  %8238 = vmatpush1.msra.mxu0 0.0
  %8239 = vmatprep.subr.mxu0 0.0
  %8240 = vmatpush1.msra.mxu0 0.0
  %8241 = vmatprep.subr.mxu0 0.0
  %8242 = vmatpush1.msra.mxu0 0.0
  %8243 = vmatprep.subr.mxu0 0.0
  %8244 = vmatpush1.msra.mxu0 0.0
  %8245 = vmatprep.subr.mxu0 0.0
  %8246 = vmatpush1.msra.mxu0 0.0
  %8247 = vmatprep.subr.mxu0 0.0
  %8248 = vmatpush1.msra.mxu0 0.0
  %8249 = vmatprep.subr.mxu0 0.0
  %8250 = vmatpush1.msra.mxu0 0.0
  %8251 = vmatprep.subr.mxu0 0.0
  %8252 = vmatpush1.msra.mxu0 0.0
  %8253 = vmatprep.subr.mxu0 0.0
  %8254 = vmatpush1.msra.mxu0 0.0
  %8255 = vmatprep.subr.mxu0 0.0
  %8256 = vmatpush1.msra.mxu0 0.0
  %8257 = vmatprep.subr.mxu0 0.0
  %8258 = vmatpush1.msra.mxu0 0.0
  %8259 = vmatprep.subr.mxu0 0.0
  %8260 = vmatpush1.msra.mxu0 0.0
  %8261 = vmatprep.subr.mxu0 0.0
  %8262 = vmatpush1.msra.mxu0 0.0
  %8263 = vmatprep.subr.mxu0 0.0
  %8264 = vmatpush1.msra.mxu0 0.0
  %8265 = vmatprep.mubr.f32.mxu0 0.0
  %8266 = vmatmul.mubr.f32.gmra.mrb[0].mxu0 %v8199
  %v8267 = vpop.f32.mrb[0].mxu0
  %v8268 = vadd.f32 0.0, %v8267
  %v8269 = vpop.f32.mrb[0].mxu0
  %8270 = vdwg.mxu0
  %s8271 = scalar_lea.vmem %s11, 192
  %v8272 = vld [vmem:[%s8271] sm:$0xff]
  %v8273 = vld [vmem:[%s8271 + $0x8] sm:$0xff]
  %v8274 = vld [vmem:[%s8271 + $0x10] sm:$0xff]
  %v8275 = vld [vmem:[%s8271 + $0x18] sm:$0xff]
  %v8277 = vsel %vm7208, %v8268, 0
  %8279 = vmatprep.subr.mxu0 0.0
  %8280 = vmatpush1.msra.mxu0 %v8272
  %8281 = vmatprep.subr.mxu0 0.0
  %8282 = vmatpush1.msra.mxu0 %v8273
  %8283 = vmatprep.subr.mxu0 0.0
  %8284 = vmatpush1.msra.mxu0 %v8274
  %8285 = vmatprep.subr.mxu0 0.0
  %8286 = vmatpush1.msra.mxu0 %v8275
  %8287 = vmatprep.subr.mxu0 0.0
  %8288 = vmatpush1.msra.mxu0 0.0
  %8289 = vmatprep.subr.mxu0 0.0
  %8290 = vmatpush1.msra.mxu0 0.0
  %8291 = vmatprep.subr.mxu0 0.0
  %8292 = vmatpush1.msra.mxu0 0.0
  %8293 = vmatprep.subr.mxu0 0.0
  %8294 = vmatpush1.msra.mxu0 0.0
  %8295 = vmatprep.subr.mxu0 0.0
  %8296 = vmatpush1.msra.mxu0 0.0
  %8297 = vmatprep.subr.mxu0 0.0
  %8298 = vmatpush1.msra.mxu0 0.0
  %8299 = vmatprep.subr.mxu0 0.0
  %8300 = vmatpush1.msra.mxu0 0.0
  %8301 = vmatprep.subr.mxu0 0.0
  %8302 = vmatpush1.msra.mxu0 0.0
  %8303 = vmatprep.subr.mxu0 0.0
  %8304 = vmatpush1.msra.mxu0 0.0
  %8305 = vmatprep.subr.mxu0 0.0
  %8306 = vmatpush1.msra.mxu0 0.0
  %8307 = vmatprep.subr.mxu0 0.0
  %8308 = vmatpush1.msra.mxu0 0.0
  %8309 = vmatprep.subr.mxu0 0.0
  %8310 = vmatpush1.msra.mxu0 0.0
  %8311 = vmatprep.subr.mxu0 0.0
  %8312 = vmatpush1.msra.mxu0 0.0
  %8313 = vmatprep.subr.mxu0 0.0
  %8314 = vmatpush1.msra.mxu0 0.0
  %8315 = vmatprep.subr.mxu0 0.0
  %8316 = vmatpush1.msra.mxu0 0.0
  %8317 = vmatprep.subr.mxu0 0.0
  %8318 = vmatpush1.msra.mxu0 0.0
  %8319 = vmatprep.subr.mxu0 0.0
  %8320 = vmatpush1.msra.mxu0 0.0
  %8321 = vmatprep.subr.mxu0 0.0
  %8322 = vmatpush1.msra.mxu0 0.0
  %8323 = vmatprep.subr.mxu0 0.0
  %8324 = vmatpush1.msra.mxu0 0.0
  %8325 = vmatprep.subr.mxu0 0.0
  %8326 = vmatpush1.msra.mxu0 0.0
  %8327 = vmatprep.subr.mxu0 0.0
  %8328 = vmatpush1.msra.mxu0 0.0
  %8329 = vmatprep.subr.mxu0 0.0
  %8330 = vmatpush1.msra.mxu0 0.0
  %8331 = vmatprep.subr.mxu0 0.0
  %8332 = vmatpush1.msra.mxu0 0.0
  %8333 = vmatprep.subr.mxu0 0.0
  %8334 = vmatpush1.msra.mxu0 0.0
  %8335 = vmatprep.subr.mxu0 0.0
  %8336 = vmatpush1.msra.mxu0 0.0
  %8337 = vmatprep.subr.mxu0 0.0
  %8338 = vmatpush1.msra.mxu0 0.0
  %8339 = vmatprep.subr.mxu0 0.0
  %8340 = vmatpush1.msra.mxu0 0.0
  %8341 = vmatprep.subr.mxu0 0.0
  %8342 = vmatpush1.msra.mxu0 0.0
  %8343 = vmatprep.mubr.f32.mxu0 0.0
  %8344 = vmatmul.mubr.f32.gmra.mrb[0].mxu0 %v8277
  %v8345 = vpop.f32.mrb[0].mxu0
  %v8346 = vadd.f32 0.0, %v8345
  %v8347 = vpop.f32.mrb[0].mxu0
  %8348 = vdwg.mxu0
  %v8349 = vadd.f32 %v8195, %v8346
  %s8350 = scalar_lea.vmem %s3, 56
  %v8351 = vld [vmem:[%s8350] sm:$0xff]
  %v8353 = vsel %vm7208, %v8351, 0
  %8355 = vmatprep.subr.mxu0 0.0
  %8356 = vmatpush1.msra.mxu0 %v7272
  %8357 = vmatprep.subr.mxu0 0.0
  %8358 = vmatpush1.msra.mxu0 %v7273
  %8359 = vmatprep.subr.mxu0 0.0
  %8360 = vmatpush1.msra.mxu0 %v7274
  %8361 = vmatprep.subr.mxu0 0.0
  %8362 = vmatpush1.msra.mxu0 %v7275
  %8363 = vmatprep.subr.mxu0 0.0
  %8364 = vmatpush1.msra.mxu0 0.0
  %8365 = vmatprep.subr.mxu0 0.0
  %8366 = vmatpush1.msra.mxu0 0.0
  %8367 = vmatprep.subr.mxu0 0.0
  %8368 = vmatpush1.msra.mxu0 0.0
  %8369 = vmatprep.subr.mxu0 0.0
  %8370 = vmatpush1.msra.mxu0 0.0
  %8371 = vmatprep.subr.mxu0 0.0
  %8372 = vmatpush1.msra.mxu0 0.0
  %8373 = vmatprep.subr.mxu0 0.0
  %8374 = vmatpush1.msra.mxu0 0.0
  %8375 = vmatprep.subr.mxu0 0.0
  %8376 = vmatpush1.msra.mxu0 0.0
  %8377 = vmatprep.subr.mxu0 0.0
  %8378 = vmatpush1.msra.mxu0 0.0
  %8379 = vmatprep.subr.mxu0 0.0
  %8380 = vmatpush1.msra.mxu0 0.0
  %8381 = vmatprep.subr.mxu0 0.0
  %8382 = vmatpush1.msra.mxu0 0.0
  %8383 = vmatprep.subr.mxu0 0.0
  %8384 = vmatpush1.msra.mxu0 0.0
  %8385 = vmatprep.subr.mxu0 0.0
  %8386 = vmatpush1.msra.mxu0 0.0
  %8387 = vmatprep.subr.mxu0 0.0
  %8388 = vmatpush1.msra.mxu0 0.0
  %8389 = vmatprep.subr.mxu0 0.0
  %8390 = vmatpush1.msra.mxu0 0.0
  %8391 = vmatprep.subr.mxu0 0.0
  %8392 = vmatpush1.msra.mxu0 0.0
  %8393 = vmatprep.subr.mxu0 0.0
  %8394 = vmatpush1.msra.mxu0 0.0
  %8395 = vmatprep.subr.mxu0 0.0
  %8396 = vmatpush1.msra.mxu0 0.0
  %8397 = vmatprep.subr.mxu0 0.0
  %8398 = vmatpush1.msra.mxu0 0.0
  %8399 = vmatprep.subr.mxu0 0.0
  %8400 = vmatpush1.msra.mxu0 0.0
  %8401 = vmatprep.subr.mxu0 0.0
  %8402 = vmatpush1.msra.mxu0 0.0
  %8403 = vmatprep.subr.mxu0 0.0
  %8404 = vmatpush1.msra.mxu0 0.0
  %8405 = vmatprep.subr.mxu0 0.0
  %8406 = vmatpush1.msra.mxu0 0.0
  %8407 = vmatprep.subr.mxu0 0.0
  %8408 = vmatpush1.msra.mxu0 0.0
  %8409 = vmatprep.subr.mxu0 0.0
  %8410 = vmatpush1.msra.mxu0 0.0
  %8411 = vmatprep.subr.mxu0 0.0
  %8412 = vmatpush1.msra.mxu0 0.0
  %8413 = vmatprep.subr.mxu0 0.0
  %8414 = vmatpush1.msra.mxu0 0.0
  %8415 = vmatprep.subr.mxu0 0.0
  %8416 = vmatpush1.msra.mxu0 0.0
  %8417 = vmatprep.subr.mxu0 0.0
  %8418 = vmatpush1.msra.mxu0 0.0
  %8419 = vmatprep.mubr.f32.mxu0 0.0
  %8420 = vmatmul.mubr.f32.gmra.mrb[0].mxu0 %v8353
  %v8421 = vpop.f32.mrb[0].mxu0
  %v8422 = vadd.f32 0.0, %v8421
  %v8423 = vpop.f32.mrb[0].mxu0
  %8424 = vdwg.mxu0
  %s8425 = scalar_lea.vmem %s11, 224
  %v8426 = vld [vmem:[%s8425] sm:$0xff]
  %v8427 = vld [vmem:[%s8425 + $0x8] sm:$0xff]
  %v8428 = vld [vmem:[%s8425 + $0x10] sm:$0xff]
  %v8429 = vld [vmem:[%s8425 + $0x18] sm:$0xff]
  %v8431 = vsel %vm7208, %v8422, 0
  %8433 = vmatprep.subr.mxu0 0.0
  %8434 = vmatpush1.msra.mxu0 %v8426
  %8435 = vmatprep.subr.mxu0 0.0
  %8436 = vmatpush1.msra.mxu0 %v8427
  %8437 = vmatprep.subr.mxu0 0.0
  %8438 = vmatpush1.msra.mxu0 %v8428
  %8439 = vmatprep.subr.mxu0 0.0
  %8440 = vmatpush1.msra.mxu0 %v8429
  %8441 = vmatprep.subr.mxu0 0.0
  %8442 = vmatpush1.msra.mxu0 0.0
  %8443 = vmatprep.subr.mxu0 0.0
  %8444 = vmatpush1.msra.mxu0 0.0
  %8445 = vmatprep.subr.mxu0 0.0
  %8446 = vmatpush1.msra.mxu0 0.0
  %8447 = vmatprep.subr.mxu0 0.0
  %8448 = vmatpush1.msra.mxu0 0.0
  %8449 = vmatprep.subr.mxu0 0.0
  %8450 = vmatpush1.msra.mxu0 0.0
  %8451 = vmatprep.subr.mxu0 0.0
  %8452 = vmatpush1.msra.mxu0 0.0
  %8453 = vmatprep.subr.mxu0 0.0
  %8454 = vmatpush1.msra.mxu0 0.0
  %8455 = vmatprep.subr.mxu0 0.0
  %8456 = vmatpush1.msra.mxu0 0.0
  %8457 = vmatprep.subr.mxu0 0.0
  %8458 = vmatpush1.msra.mxu0 0.0
  %8459 = vmatprep.subr.mxu0 0.0
  %8460 = vmatpush1.msra.mxu0 0.0
  %8461 = vmatprep.subr.mxu0 0.0
  %8462 = vmatpush1.msra.mxu0 0.0
  %8463 = vmatprep.subr.mxu0 0.0
  %8464 = vmatpush1.msra.mxu0 0.0
  %8465 = vmatprep.subr.mxu0 0.0
  %8466 = vmatpush1.msra.mxu0 0.0
  %8467 = vmatprep.subr.mxu0 0.0
  %8468 = vmatpush1.msra.mxu0 0.0
  %8469 = vmatprep.subr.mxu0 0.0
  %8470 = vmatpush1.msra.mxu0 0.0
  %8471 = vmatprep.subr.mxu0 0.0
  %8472 = vmatpush1.msra.mxu0 0.0
  %8473 = vmatprep.subr.mxu0 0.0
  %8474 = vmatpush1.msra.mxu0 0.0
  %8475 = vmatprep.subr.mxu0 0.0
  %8476 = vmatpush1.msra.mxu0 0.0
  %8477 = vmatprep.subr.mxu0 0.0
  %8478 = vmatpush1.msra.mxu0 0.0
  %8479 = vmatprep.subr.mxu0 0.0
  %8480 = vmatpush1.msra.mxu0 0.0
  %8481 = vmatprep.subr.mxu0 0.0
  %8482 = vmatpush1.msra.mxu0 0.0
  %8483 = vmatprep.subr.mxu0 0.0
  %8484 = vmatpush1.msra.mxu0 0.0
  %8485 = vmatprep.subr.mxu0 0.0
  %8486 = vmatpush1.msra.mxu0 0.0
  %8487 = vmatprep.subr.mxu0 0.0
  %8488 = vmatpush1.msra.mxu0 0.0
  %8489 = vmatprep.subr.mxu0 0.0
  %8490 = vmatpush1.msra.mxu0 0.0
  %8491 = vmatprep.subr.mxu0 0.0
  %8492 = vmatpush1.msra.mxu0 0.0
  %8493 = vmatprep.subr.mxu0 0.0
  %8494 = vmatpush1.msra.mxu0 0.0
  %8495 = vmatprep.subr.mxu0 0.0
  %8496 = vmatpush1.msra.mxu0 0.0
  %8497 = vmatprep.mubr.f32.mxu0 0.0
  %8498 = vmatmul.mubr.f32.gmra.mrb[0].mxu0 %v8431
  %v8499 = vpop.f32.mrb[0].mxu0
  %v8500 = vadd.f32 0.0, %v8499
  %v8501 = vpop.f32.mrb[0].mxu0
  %8502 = vdwg.mxu0
  %v8503 = vadd.f32 %v8349, %v8500
  %s8504 = scalar_lea.vmem %s3, 64
  %v8505 = vld [vmem:[%s8504] sm:$0xff]
  %v8507 = vsel %vm7208, %v8505, 0
  %8509 = vmatprep.subr.mxu0 0.0
  %8510 = vmatpush1.msra.mxu0 %v7272
  %8511 = vmatprep.subr.mxu0 0.0
  %8512 = vmatpush1.msra.mxu0 %v7273
  %8513 = vmatprep.subr.mxu0 0.0
  %8514 = vmatpush1.msra.mxu0 %v7274
  %8515 = vmatprep.subr.mxu0 0.0
  %8516 = vmatpush1.msra.mxu0 %v7275
  %8517 = vmatprep.subr.mxu0 0.0
  %8518 = vmatpush1.msra.mxu0 0.0
  %8519 = vmatprep.subr.mxu0 0.0
  %8520 = vmatpush1.msra.mxu0 0.0
  %8521 = vmatprep.subr.mxu0 0.0
  %8522 = vmatpush1.msra.mxu0 0.0
  %8523 = vmatprep.subr.mxu0 0.0
  %8524 = vmatpush1.msra.mxu0 0.0
  %8525 = vmatprep.subr.mxu0 0.0
  %8526 = vmatpush1.msra.mxu0 0.0
  %8527 = vmatprep.subr.mxu0 0.0
  %8528 = vmatpush1.msra.mxu0 0.0
  %8529 = vmatprep.subr.mxu0 0.0
  %8530 = vmatpush1.msra.mxu0 0.0
  %8531 = vmatprep.subr.mxu0 0.0
  %8532 = vmatpush1.msra.mxu0 0.0
  %8533 = vmatprep.subr.mxu0 0.0
  %8534 = vmatpush1.msra.mxu0 0.0
  %8535 = vmatprep.subr.mxu0 0.0
  %8536 = vmatpush1.msra.mxu0 0.0
  %8537 = vmatprep.subr.mxu0 0.0
  %8538 = vmatpush1.msra.mxu0 0.0
  %8539 = vmatprep.subr.mxu0 0.0
  %8540 = vmatpush1.msra.mxu0 0.0
  %8541 = vmatprep.subr.mxu0 0.0
  %8542 = vmatpush1.msra.mxu0 0.0
  %8543 = vmatprep.subr.mxu0 0.0
  %8544 = vmatpush1.msra.mxu0 0.0
  %8545 = vmatprep.subr.mxu0 0.0
  %8546 = vmatpush1.msra.mxu0 0.0
  %8547 = vmatprep.subr.mxu0 0.0
  %8548 = vmatpush1.msra.mxu0 0.0
  %8549 = vmatprep.subr.mxu0 0.0
  %8550 = vmatpush1.msra.mxu0 0.0
  %8551 = vmatprep.subr.mxu0 0.0
  %8552 = vmatpush1.msra.mxu0 0.0
  %8553 = vmatprep.subr.mxu0 0.0
  %8554 = vmatpush1.msra.mxu0 0.0
  %8555 = vmatprep.subr.mxu0 0.0
  %8556 = vmatpush1.msra.mxu0 0.0
  %8557 = vmatprep.subr.mxu0 0.0
  %8558 = vmatpush1.msra.mxu0 0.0
  %8559 = vmatprep.subr.mxu0 0.0
  %8560 = vmatpush1.msra.mxu0 0.0
  %8561 = vmatprep.subr.mxu0 0.0
  %8562 = vmatpush1.msra.mxu0 0.0
  %8563 = vmatprep.subr.mxu0 0.0
  %8564 = vmatpush1.msra.mxu0 0.0
  %8565 = vmatprep.subr.mxu0 0.0
  %8566 = vmatpush1.msra.mxu0 0.0
  %8567 = vmatprep.subr.mxu0 0.0
  %8568 = vmatpush1.msra.mxu0 0.0
  %8569 = vmatprep.subr.mxu0 0.0
  %8570 = vmatpush1.msra.mxu0 0.0
  %8571 = vmatprep.subr.mxu0 0.0
  %8572 = vmatpush1.msra.mxu0 0.0
  %8573 = vmatprep.mubr.f32.mxu0 0.0
  %8574 = vmatmul.mubr.f32.gmra.mrb[0].mxu0 %v8507
  %v8575 = vpop.f32.mrb[0].mxu0
  %v8576 = vadd.f32 0.0, %v8575
  %v8577 = vpop.f32.mrb[0].mxu0
  %8578 = vdwg.mxu0
  %s8579 = scalar_lea.vmem %s11, 256
  %v8580 = vld [vmem:[%s8579] sm:$0xff]
  %v8581 = vld [vmem:[%s8579 + $0x8] sm:$0xff]
  %v8582 = vld [vmem:[%s8579 + $0x10] sm:$0xff]
  %v8583 = vld [vmem:[%s8579 + $0x18] sm:$0xff]
  %v8585 = vsel %vm7208, %v8576, 0
  %8587 = vmatprep.subr.mxu0 0.0
  %8588 = vmatpush1.msra.mxu0 %v8580
  %8589 = vmatprep.subr.mxu0 0.0
  %8590 = vmatpush1.msra.mxu0 %v8581
  %8591 = vmatprep.subr.mxu0 0.0
  %8592 = vmatpush1.msra.mxu0 %v8582
  %8593 = vmatprep.subr.mxu0 0.0
  %8594 = vmatpush1.msra.mxu0 %v8583
  %8595 = vmatprep.subr.mxu0 0.0
  %8596 = vmatpush1.msra.mxu0 0.0
  %8597 = vmatprep.subr.mxu0 0.0
  %8598 = vmatpush1.msra.mxu0 0.0
  %8599 = vmatprep.subr.mxu0 0.0
  %8600 = vmatpush1.msra.mxu0 0.0
  %8601 = vmatprep.subr.mxu0 0.0
  %8602 = vmatpush1.msra.mxu0 0.0
  %8603 = vmatprep.subr.mxu0 0.0
  %8604 = vmatpush1.msra.mxu0 0.0
  %8605 = vmatprep.subr.mxu0 0.0
  %8606 = vmatpush1.msra.mxu0 0.0
  %8607 = vmatprep.subr.mxu0 0.0
  %8608 = vmatpush1.msra.mxu0 0.0
  %8609 = vmatprep.subr.mxu0 0.0
  %8610 = vmatpush1.msra.mxu0 0.0
  %8611 = vmatprep.subr.mxu0 0.0
  %8612 = vmatpush1.msra.mxu0 0.0
  %8613 = vmatprep.subr.mxu0 0.0
  %8614 = vmatpush1.msra.mxu0 0.0
  %8615 = vmatprep.subr.mxu0 0.0
  %8616 = vmatpush1.msra.mxu0 0.0
  %8617 = vmatprep.subr.mxu0 0.0
  %8618 = vmatpush1.msra.mxu0 0.0
  %8619 = vmatprep.subr.mxu0 0.0
  %8620 = vmatpush1.msra.mxu0 0.0
  %8621 = vmatprep.subr.mxu0 0.0
  %8622 = vmatpush1.msra.mxu0 0.0
  %8623 = vmatprep.subr.mxu0 0.0
  %8624 = vmatpush1.msra.mxu0 0.0
  %8625 = vmatprep.subr.mxu0 0.0
  %8626 = vmatpush1.msra.mxu0 0.0
  %8627 = vmatprep.subr.mxu0 0.0
  %8628 = vmatpush1.msra.mxu0 0.0
  %8629 = vmatprep.subr.mxu0 0.0
  %8630 = vmatpush1.msra.mxu0 0.0
  %8631 = vmatprep.subr.mxu0 0.0
  %8632 = vmatpush1.msra.mxu0 0.0
  %8633 = vmatprep.subr.mxu0 0.0
  %8634 = vmatpush1.msra.mxu0 0.0
  %8635 = vmatprep.subr.mxu0 0.0
  %8636 = vmatpush1.msra.mxu0 0.0
  %8637 = vmatprep.subr.mxu0 0.0
  %8638 = vmatpush1.msra.mxu0 0.0
  %8639 = vmatprep.subr.mxu0 0.0
  %8640 = vmatpush1.msra.mxu0 0.0
  %8641 = vmatprep.subr.mxu0 0.0
  %8642 = vmatpush1.msra.mxu0 0.0
  %8643 = vmatprep.subr.mxu0 0.0
  %8644 = vmatpush1.msra.mxu0 0.0
  %8645 = vmatprep.subr.mxu0 0.0
  %8646 = vmatpush1.msra.mxu0 0.0
  %8647 = vmatprep.subr.mxu0 0.0
  %8648 = vmatpush1.msra.mxu0 0.0
  %8649 = vmatprep.subr.mxu0 0.0
  %8650 = vmatpush1.msra.mxu0 0.0
  %8651 = vmatprep.mubr.f32.mxu0 0.0
  %8652 = vmatmul.mubr.f32.gmra.mrb[0].mxu0 %v8585
  %v8653 = vpop.f32.mrb[0].mxu0
  %v8654 = vadd.f32 0.0, %v8653
  %v8655 = vpop.f32.mrb[0].mxu0
  %8656 = vdwg.mxu0
  %v8657 = vadd.f32 %v8503, %v8654
  %v8658 = vld [vmem:[%s12] sm:$0x1]
  %v8660 = vlaneseq
  %v8661 = vshrl.u32 %v8660, 7
  %v8662 = vsub.s32 0, %v8661
  %v8663 = vrot.slane %v8658, %v8662
  %v8665 = vadd.f32 %v8657, %v8663
  %vm8666 = vcmp.ge.f32.partialorder %v8665, 0.0
  %v8667 = vmul.f32 %v8665, 0.2
  %v8668 = vsel %vm8666, %v8665, %v8667
  %vm8669 = vcmask 523264
  %v8670 = vsel %vm8669, %v8668, 0.0
  %v8671 = vrot.slane %v8670, 4
  %v8672 = vadd.f32 %v8670, %v8671
  %v8673 = vrot.slane %v8672, 2
  %v8674 = vadd.f32 %v8672, %v8673
  %v8675 = vrot.slane %v8674, 1
  %v8676 = vadd.f32 %v8674, %v8675
  %v8677 = vrcp.pop 8.0
  %v8678 = vmul.f32 %v8676, %v8677
  %v8679 = vmul.f32 %v8668, %v8668
  %v8680 = vsel %vm8669, %v8679, 0.0
  %v8681 = vrot.slane %v8680, 4
  %v8682 = vadd.f32 %v8680, %v8681
  %v8683 = vrot.slane %v8682, 2
  %v8684 = vadd.f32 %v8682, %v8683
  %v8685 = vrot.slane %v8684, 1
  %v8686 = vadd.f32 %v8684, %v8685
  %v8687 = vmul.f32 %v8686, %v8677
  %v8688 = vmul.f32 %v8678, %v8678
  %v8689 = vsub.f32 %v8687, %v8688
  %v8690 = vsub.f32 %v8668, %v8678
  %v8691 = vadd.f32 %v8689, 0.8
  %v8692 = vrsqrt.pop %v8691
  %v8693 = vmul.f32 %v8690, %v8692
  %v8694 = vld [vmem:[%s13] sm:$0x1]
  %v8696 = vlaneseq
  %v8697 = vshrl.u32 %v8696, 7
  %v8698 = vsub.s32 0, %v8697
  %v8699 = vrot.slane %v8694, %v8698
  %v8701 = vmul.f32 %v8693, %v8699
  %v8702 = vld [vmem:[%s14] sm:$0x1]
  %v8704 = vlaneseq
  %v8705 = vshrl.u32 %v8704, 7
  %v8706 = vsub.s32 0, %v8705
  %v8707 = vrot.slane %v8702, %v8706
  %v8709 = vadd.f32 %v8701, %v8707
  %v8710 = vld [vmem:[%s4] sm:$0x3]
  %vm8711 = vcmask 64512
  %v8713 = vsel %vm8711, %v8710, 0
  %8715 = vmatprep.subr.mxu0 0.0
  %8716 = vmatpush1.msra.mxu0 %v8709
  %8717 = vmatprep.subr.mxu0 0.0
  %8718 = vmatpush1.msra.mxu0 0.0
  %8719 = vmatprep.subr.mxu0 0.0
  %8720 = vmatpush1.msra.mxu0 0.0
  %8721 = vmatprep.subr.mxu0 0.0
  %8722 = vmatpush1.msra.mxu0 0.0
  %8723 = vmatprep.subr.mxu0 0.0
  %8724 = vmatpush1.msra.mxu0 0.0
  %8725 = vmatprep.subr.mxu0 0.0
  %8726 = vmatpush1.msra.mxu0 0.0
  %8727 = vmatprep.subr.mxu0 0.0
  %8728 = vmatpush1.msra.mxu0 0.0
  %8729 = vmatprep.subr.mxu0 0.0
  %8730 = vmatpush1.msra.mxu0 0.0
  %8731 = vmatprep.subr.mxu0 0.0
  %8732 = vmatpush1.msra.mxu0 0.0
  %8733 = vmatprep.subr.mxu0 0.0
  %8734 = vmatpush1.msra.mxu0 0.0
  %8735 = vmatprep.subr.mxu0 0.0
  %8736 = vmatpush1.msra.mxu0 0.0
  %8737 = vmatprep.subr.mxu0 0.0
  %8738 = vmatpush1.msra.mxu0 0.0
  %8739 = vmatprep.subr.mxu0 0.0
  %8740 = vmatpush1.msra.mxu0 0.0
  %8741 = vmatprep.subr.mxu0 0.0
  %8742 = vmatpush1.msra.mxu0 0.0
  %8743 = vmatprep.subr.mxu0 0.0
  %8744 = vmatpush1.msra.mxu0 0.0
  %8745 = vmatprep.subr.mxu0 0.0
  %8746 = vmatpush1.msra.mxu0 0.0
  %8747 = vmatprep.subr.mxu0 0.0
  %8748 = vmatpush1.msra.mxu0 0.0
  %8749 = vmatprep.subr.mxu0 0.0
  %8750 = vmatpush1.msra.mxu0 0.0
  %8751 = vmatprep.subr.mxu0 0.0
  %8752 = vmatpush1.msra.mxu0 0.0
  %8753 = vmatprep.subr.mxu0 0.0
  %8754 = vmatpush1.msra.mxu0 0.0
  %8755 = vmatprep.subr.mxu0 0.0
  %8756 = vmatpush1.msra.mxu0 0.0
  %8757 = vmatprep.subr.mxu0 0.0
  %8758 = vmatpush1.msra.mxu0 0.0
  %8759 = vmatprep.subr.mxu0 0.0
  %8760 = vmatpush1.msra.mxu0 0.0
  %8761 = vmatprep.subr.mxu0 0.0
  %8762 = vmatpush1.msra.mxu0 0.0
  %8763 = vmatprep.subr.mxu0 0.0
  %8764 = vmatpush1.msra.mxu0 0.0
  %8765 = vmatprep.subr.mxu0 0.0
  %8766 = vmatpush1.msra.mxu0 0.0
  %8767 = vmatprep.subr.mxu0 0.0
  %8768 = vmatpush1.msra.mxu0 0.0
  %8769 = vmatprep.subr.mxu0 0.0
  %8770 = vmatpush1.msra.mxu0 0.0
  %8771 = vmatprep.subr.mxu0 0.0
  %8772 = vmatpush1.msra.mxu0 0.0
  %8773 = vmatprep.subr.mxu0 0.0
  %8774 = vmatpush1.msra.mxu0 0.0
  %8775 = vmatprep.subr.mxu0 0.0
  %8776 = vmatpush1.msra.mxu0 0.0
  %8777 = vmatprep.subr.mxu0 0.0
  %8778 = vmatpush1.msra.mxu0 0.0
  %8779 = vmatprep.mubr.f32.mxu0 0.0
  %8780 = vmatmul.mubr.f32.gmra.mrb[0].mxu0 %v8713
  %v8781 = vpop.f32.mrb[0].mxu0
  %v8782 = vadd.f32 0.0, %v8781
  %v8783 = vpop.f32.mrb[0].mxu0
  %8784 = vdwg.mxu0
  %v8785 = vld [vmem:[%s15] sm:$0xff]
  %v8786 = vld [vmem:[%s15 + $0x8] sm:$0xff]
  %v8787 = vld [vmem:[%s15 + $0x10] sm:$0xff]
  %v8788 = vld [vmem:[%s15 + $0x18] sm:$0xff]
  %v8789 = vld [vmem:[%s15 + $0x20] sm:$0xff]
  %v8790 = vld [vmem:[%s15 + $0x28] sm:$0xff]
  %v8791 = vld [vmem:[%s15 + $0x30] sm:$0xff]
  %v8792 = vld [vmem:[%s15 + $0x38] sm:$0xff]
  %s8793 = scalar_lea.vmem %s4, 2
  %v8794 = vld [vmem:[%s8793] sm:$0x3]
  %v8796 = vsel %vm8711, %v8794, 0
  %8798 = vmatprep.subr.mxu0 0.0
  %8799 = vmatpush1.msra.mxu0 %v8709
  %8800 = vmatprep.subr.mxu0 0.0
  %8801 = vmatpush1.msra.mxu0 0.0
  %8802 = vmatprep.subr.mxu0 0.0
  %8803 = vmatpush1.msra.mxu0 0.0
  %8804 = vmatprep.subr.mxu0 0.0
  %8805 = vmatpush1.msra.mxu0 0.0
  %8806 = vmatprep.subr.mxu0 0.0
  %8807 = vmatpush1.msra.mxu0 0.0
  %8808 = vmatprep.subr.mxu0 0.0
  %8809 = vmatpush1.msra.mxu0 0.0
  %8810 = vmatprep.subr.mxu0 0.0
  %8811 = vmatpush1.msra.mxu0 0.0
  %8812 = vmatprep.subr.mxu0 0.0
  %8813 = vmatpush1.msra.mxu0 0.0
  %8814 = vmatprep.subr.mxu0 0.0
  %8815 = vmatpush1.msra.mxu0 0.0
  %8816 = vmatprep.subr.mxu0 0.0
  %8817 = vmatpush1.msra.mxu0 0.0
  %8818 = vmatprep.subr.mxu0 0.0
  %8819 = vmatpush1.msra.mxu0 0.0
  %8820 = vmatprep.subr.mxu0 0.0
  %8821 = vmatpush1.msra.mxu0 0.0
  %8822 = vmatprep.subr.mxu0 0.0
  %8823 = vmatpush1.msra.mxu0 0.0
  %8824 = vmatprep.subr.mxu0 0.0
  %8825 = vmatpush1.msra.mxu0 0.0
  %8826 = vmatprep.subr.mxu0 0.0
  %8827 = vmatpush1.msra.mxu0 0.0
  %8828 = vmatprep.subr.mxu0 0.0
  %8829 = vmatpush1.msra.mxu0 0.0
  %8830 = vmatprep.subr.mxu0 0.0
  %8831 = vmatpush1.msra.mxu0 0.0
  %8832 = vmatprep.subr.mxu0 0.0
  %8833 = vmatpush1.msra.mxu0 0.0
  %8834 = vmatprep.subr.mxu0 0.0
  %8835 = vmatpush1.msra.mxu0 0.0
  %8836 = vmatprep.subr.mxu0 0.0
  %8837 = vmatpush1.msra.mxu0 0.0
  %8838 = vmatprep.subr.mxu0 0.0
  %8839 = vmatpush1.msra.mxu0 0.0
  %8840 = vmatprep.subr.mxu0 0.0
  %8841 = vmatpush1.msra.mxu0 0.0
  %8842 = vmatprep.subr.mxu0 0.0
  %8843 = vmatpush1.msra.mxu0 0.0
  %8844 = vmatprep.subr.mxu0 0.0
  %8845 = vmatpush1.msra.mxu0 0.0
  %8846 = vmatprep.subr.mxu0 0.0
  %8847 = vmatpush1.msra.mxu0 0.0
  %8848 = vmatprep.subr.mxu0 0.0
  %8849 = vmatpush1.msra.mxu0 0.0
  %8850 = vmatprep.subr.mxu0 0.0
  %8851 = vmatpush1.msra.mxu0 0.0
  %8852 = vmatprep.subr.mxu0 0.0
  %8853 = vmatpush1.msra.mxu0 0.0
  %8854 = vmatprep.subr.mxu0 0.0
  %8855 = vmatpush1.msra.mxu0 0.0
  %8856 = vmatprep.subr.mxu0 0.0
  %8857 = vmatpush1.msra.mxu0 0.0
  %8858 = vmatprep.subr.mxu0 0.0
  %8859 = vmatpush1.msra.mxu0 0.0
  %8860 = vmatprep.subr.mxu0 0.0
  %8861 = vmatpush1.msra.mxu0 0.0
  %8862 = vmatprep.mubr.f32.mxu0 0.0
  %8863 = vmatmul.mubr.f32.gmra.mrb[0].mxu0 %v8796
  %v8864 = vpop.f32.mrb[0].mxu0
  %v8865 = vadd.f32 0.0, %v8864
  %v8866 = vpop.f32.mrb[0].mxu0
  %8867 = vdwg.mxu0
  %s8868 = scalar_lea.vmem %s15, 64
  %v8869 = vld [vmem:[%s8868] sm:$0xff]
  %v8870 = vld [vmem:[%s8868 + $0x8] sm:$0xff]
  %v8871 = vld [vmem:[%s8868 + $0x10] sm:$0xff]
  %v8872 = vld [vmem:[%s8868 + $0x18] sm:$0xff]
  %v8873 = vld [vmem:[%s8868 + $0x20] sm:$0xff]
  %v8874 = vld [vmem:[%s8868 + $0x28] sm:$0xff]
  %v8875 = vld [vmem:[%s8868 + $0x30] sm:$0xff]
  %v8876 = vld [vmem:[%s8868 + $0x38] sm:$0xff]
  %v8878 = vsel %vm8669, %v8865, 0
  %8880 = vmatprep.subr.mxu0 0.0
  %8881 = vmatpush1.msra.mxu0 %v8869
  %8882 = vmatprep.subr.mxu0 0.0
  %8883 = vmatpush1.msra.mxu0 %v8870
  %8884 = vmatprep.subr.mxu0 0.0
  %8885 = vmatpush1.msra.mxu0 %v8871
  %8886 = vmatprep.subr.mxu0 0.0
  %8887 = vmatpush1.msra.mxu0 %v8872
  %8888 = vmatprep.subr.mxu0 0.0
  %8889 = vmatpush1.msra.mxu0 %v8873
  %8890 = vmatprep.subr.mxu0 0.0
  %8891 = vmatpush1.msra.mxu0 %v8874
  %8892 = vmatprep.subr.mxu0 0.0
  %8893 = vmatpush1.msra.mxu0 %v8875
  %8894 = vmatprep.subr.mxu0 0.0
  %8895 = vmatpush1.msra.mxu0 %v8876
  %8896 = vmatprep.subr.mxu0 0.0
  %8897 = vmatpush1.msra.mxu0 0.0
  %8898 = vmatprep.subr.mxu0 0.0
  %8899 = vmatpush1.msra.mxu0 0.0
  %8900 = vmatprep.subr.mxu0 0.0
  %8901 = vmatpush1.msra.mxu0 0.0
  %8902 = vmatprep.subr.mxu0 0.0
  %8903 = vmatpush1.msra.mxu0 0.0
  %8904 = vmatprep.subr.mxu0 0.0
  %8905 = vmatpush1.msra.mxu0 0.0
  %8906 = vmatprep.subr.mxu0 0.0
  %8907 = vmatpush1.msra.mxu0 0.0
  %8908 = vmatprep.subr.mxu0 0.0
  %8909 = vmatpush1.msra.mxu0 0.0
  %8910 = vmatprep.subr.mxu0 0.0
  %8911 = vmatpush1.msra.mxu0 0.0
  %8912 = vmatprep.subr.mxu0 0.0
  %8913 = vmatpush1.msra.mxu0 0.0
  %8914 = vmatprep.subr.mxu0 0.0
  %8915 = vmatpush1.msra.mxu0 0.0
  %8916 = vmatprep.subr.mxu0 0.0
  %8917 = vmatpush1.msra.mxu0 0.0
  %8918 = vmatprep.subr.mxu0 0.0
  %8919 = vmatpush1.msra.mxu0 0.0
  %8920 = vmatprep.subr.mxu0 0.0
  %8921 = vmatpush1.msra.mxu0 0.0
  %8922 = vmatprep.subr.mxu0 0.0
  %8923 = vmatpush1.msra.mxu0 0.0
  %8924 = vmatprep.subr.mxu0 0.0
  %8925 = vmatpush1.msra.mxu0 0.0
  %8926 = vmatprep.subr.mxu0 0.0
  %8927 = vmatpush1.msra.mxu0 0.0
  %8928 = vmatprep.subr.mxu0 0.0
  %8929 = vmatpush1.msra.mxu0 0.0
  %8930 = vmatprep.subr.mxu0 0.0
  %8931 = vmatpush1.msra.mxu0 0.0
  %8932 = vmatprep.subr.mxu0 0.0
  %8933 = vmatpush1.msra.mxu0 0.0
  %8934 = vmatprep.subr.mxu0 0.0
  %8935 = vmatpush1.msra.mxu0 0.0
  %8936 = vmatprep.subr.mxu0 0.0
  %8937 = vmatpush1.msra.mxu0 0.0
  %8938 = vmatprep.subr.mxu0 0.0
  %8939 = vmatpush1.msra.mxu0 0.0
  %8940 = vmatprep.subr.mxu0 0.0
  %8941 = vmatpush1.msra.mxu0 0.0
  %8942 = vmatprep.subr.mxu0 0.0
  %8943 = vmatpush1.msra.mxu0 0.0
  %8944 = vmatprep.mubr.f32.mxu0 0.0
  %8945 = vmatmul.mubr.f32.gmra.mrb[0].mxu0 %v8878
  %v8946 = vpop.f32.mrb[0].mxu0
  %v8947 = vadd.f32 0.0, %v8946
  %v8948 = vpop.f32.mrb[0].mxu0
  %8949 = vdwg.mxu0
  %v8951 = vsel %vm8669, %v8782, 0
  %8953 = vmatprep.subr.mxu0 0.0
  %8954 = vmatpush1.msra.mxu0 %v8785
  %8955 = vmatprep.subr.mxu0 0.0
  %8956 = vmatpush1.msra.mxu0 %v8786
  %8957 = vmatprep.subr.mxu0 0.0
  %8958 = vmatpush1.msra.mxu0 %v8787
  %8959 = vmatprep.subr.mxu0 0.0
  %8960 = vmatpush1.msra.mxu0 %v8788
  %8961 = vmatprep.subr.mxu0 0.0
  %8962 = vmatpush1.msra.mxu0 %v8789
  %8963 = vmatprep.subr.mxu0 0.0
  %8964 = vmatpush1.msra.mxu0 %v8790
  %8965 = vmatprep.subr.mxu0 0.0
  %8966 = vmatpush1.msra.mxu0 %v8791
  %8967 = vmatprep.subr.mxu0 0.0
  %8968 = vmatpush1.msra.mxu0 %v8792
  %8969 = vmatprep.subr.mxu0 0.0
  %8970 = vmatpush1.msra.mxu0 0.0
  %8971 = vmatprep.subr.mxu0 0.0
  %8972 = vmatpush1.msra.mxu0 0.0
  %8973 = vmatprep.subr.mxu0 0.0
  %8974 = vmatpush1.msra.mxu0 0.0
  %8975 = vmatprep.subr.mxu0 0.0
  %8976 = vmatpush1.msra.mxu0 0.0
  %8977 = vmatprep.subr.mxu0 0.0
  %8978 = vmatpush1.msra.mxu0 0.0
  %8979 = vmatprep.subr.mxu0 0.0
  %8980 = vmatpush1.msra.mxu0 0.0
  %8981 = vmatprep.subr.mxu0 0.0
  %8982 = vmatpush1.msra.mxu0 0.0
  %8983 = vmatprep.subr.mxu0 0.0
  %8984 = vmatpush1.msra.mxu0 0.0
  %8985 = vmatprep.subr.mxu0 0.0
  %8986 = vmatpush1.msra.mxu0 0.0
  %8987 = vmatprep.subr.mxu0 0.0
  %8988 = vmatpush1.msra.mxu0 0.0
  %8989 = vmatprep.subr.mxu0 0.0
  %8990 = vmatpush1.msra.mxu0 0.0
  %8991 = vmatprep.subr.mxu0 0.0
  %8992 = vmatpush1.msra.mxu0 0.0
  %8993 = vmatprep.subr.mxu0 0.0
  %8994 = vmatpush1.msra.mxu0 0.0
  %8995 = vmatprep.subr.mxu0 0.0
  %8996 = vmatpush1.msra.mxu0 0.0
  %8997 = vmatprep.subr.mxu0 0.0
  %8998 = vmatpush1.msra.mxu0 0.0
  %8999 = vmatprep.subr.mxu0 0.0
  %9000 = vmatpush1.msra.mxu0 0.0
  %9001 = vmatprep.subr.mxu0 0.0
  %9002 = vmatpush1.msra.mxu0 0.0
  %9003 = vmatprep.subr.mxu0 0.0
  %9004 = vmatpush1.msra.mxu0 0.0
  %9005 = vmatprep.subr.mxu0 0.0
  %9006 = vmatpush1.msra.mxu0 0.0
  %9007 = vmatprep.subr.mxu0 0.0
  %9008 = vmatpush1.msra.mxu0 0.0
  %9009 = vmatprep.subr.mxu0 0.0
  %9010 = vmatpush1.msra.mxu0 0.0
  %9011 = vmatprep.subr.mxu0 0.0
  %9012 = vmatpush1.msra.mxu0 0.0
  %9013 = vmatprep.subr.mxu0 0.0
  %9014 = vmatpush1.msra.mxu0 0.0
  %9015 = vmatprep.subr.mxu0 0.0
  %9016 = vmatpush1.msra.mxu0 0.0
  %9017 = vmatprep.mubr.f32.mxu0 0.0
  %9018 = vmatmul.mubr.f32.gmra.mrb[0].mxu0 %v8951
  %v9019 = vpop.f32.mrb[0].mxu0
  %v9020 = vadd.f32 %v8947, %v9019
  %v9021 = vpop.f32.mrb[0].mxu0
  %9022 = vdwg.mxu0
  %s9023 = scalar_lea.vmem %s4, 4
  %v9024 = vld [vmem:[%s9023] sm:$0x3]
  %v9026 = vsel %vm8711, %v9024, 0
  %9028 = vmatprep.subr.mxu0 0.0
  %9029 = vmatpush1.msra.mxu0 %v8709
  %9030 = vmatprep.subr.mxu0 0.0
  %9031 = vmatpush1.msra.mxu0 0.0
  %9032 = vmatprep.subr.mxu0 0.0
  %9033 = vmatpush1.msra.mxu0 0.0
  %9034 = vmatprep.subr.mxu0 0.0
  %9035 = vmatpush1.msra.mxu0 0.0
  %9036 = vmatprep.subr.mxu0 0.0
  %9037 = vmatpush1.msra.mxu0 0.0
  %9038 = vmatprep.subr.mxu0 0.0
  %9039 = vmatpush1.msra.mxu0 0.0
  %9040 = vmatprep.subr.mxu0 0.0
  %9041 = vmatpush1.msra.mxu0 0.0
  %9042 = vmatprep.subr.mxu0 0.0
  %9043 = vmatpush1.msra.mxu0 0.0
  %9044 = vmatprep.subr.mxu0 0.0
  %9045 = vmatpush1.msra.mxu0 0.0
  %9046 = vmatprep.subr.mxu0 0.0
  %9047 = vmatpush1.msra.mxu0 0.0
  %9048 = vmatprep.subr.mxu0 0.0
  %9049 = vmatpush1.msra.mxu0 0.0
  %9050 = vmatprep.subr.mxu0 0.0
  %9051 = vmatpush1.msra.mxu0 0.0
  %9052 = vmatprep.subr.mxu0 0.0
  %9053 = vmatpush1.msra.mxu0 0.0
  %9054 = vmatprep.subr.mxu0 0.0
  %9055 = vmatpush1.msra.mxu0 0.0
  %9056 = vmatprep.subr.mxu0 0.0
  %9057 = vmatpush1.msra.mxu0 0.0
  %9058 = vmatprep.subr.mxu0 0.0
  %9059 = vmatpush1.msra.mxu0 0.0
  %9060 = vmatprep.subr.mxu0 0.0
  %9061 = vmatpush1.msra.mxu0 0.0
  %9062 = vmatprep.subr.mxu0 0.0
  %9063 = vmatpush1.msra.mxu0 0.0
  %9064 = vmatprep.subr.mxu0 0.0
  %9065 = vmatpush1.msra.mxu0 0.0
  %9066 = vmatprep.subr.mxu0 0.0
  %9067 = vmatpush1.msra.mxu0 0.0
  %9068 = vmatprep.subr.mxu0 0.0
  %9069 = vmatpush1.msra.mxu0 0.0
  %9070 = vmatprep.subr.mxu0 0.0
  %9071 = vmatpush1.msra.mxu0 0.0
  %9072 = vmatprep.subr.mxu0 0.0
  %9073 = vmatpush1.msra.mxu0 0.0
  %9074 = vmatprep.subr.mxu0 0.0
  %9075 = vmatpush1.msra.mxu0 0.0
  %9076 = vmatprep.subr.mxu0 0.0
  %9077 = vmatpush1.msra.mxu0 0.0
  %9078 = vmatprep.subr.mxu0 0.0
  %9079 = vmatpush1.msra.mxu0 0.0
  %9080 = vmatprep.subr.mxu0 0.0
  %9081 = vmatpush1.msra.mxu0 0.0
  %9082 = vmatprep.subr.mxu0 0.0
  %9083 = vmatpush1.msra.mxu0 0.0
  %9084 = vmatprep.subr.mxu0 0.0
  %9085 = vmatpush1.msra.mxu0 0.0
  %9086 = vmatprep.subr.mxu0 0.0
  %9087 = vmatpush1.msra.mxu0 0.0
  %9088 = vmatprep.subr.mxu0 0.0
  %9089 = vmatpush1.msra.mxu0 0.0
  %9090 = vmatprep.subr.mxu0 0.0
  %9091 = vmatpush1.msra.mxu0 0.0
  %9092 = vmatprep.mubr.f32.mxu0 0.0
  %9093 = vmatmul.mubr.f32.gmra.mrb[0].mxu0 %v9026
  %v9094 = vpop.f32.mrb[0].mxu0
  %v9095 = vadd.f32 0.0, %v9094
  %v9096 = vpop.f32.mrb[0].mxu0
  %9097 = vdwg.mxu0
  %s9098 = scalar_lea.vmem %s15, 128
  %v9099 = vld [vmem:[%s9098] sm:$0xff]
  %v9100 = vld [vmem:[%s9098 + $0x8] sm:$0xff]
  %v9101 = vld [vmem:[%s9098 + $0x10] sm:$0xff]
  %v9102 = vld [vmem:[%s9098 + $0x18] sm:$0xff]
  %v9103 = vld [vmem:[%s9098 + $0x20] sm:$0xff]
  %v9104 = vld [vmem:[%s9098 + $0x28] sm:$0xff]
  %v9105 = vld [vmem:[%s9098 + $0x30] sm:$0xff]
  %v9106 = vld [vmem:[%s9098 + $0x38] sm:$0xff]
  %v9108 = vsel %vm8669, %v9095, 0
  %9110 = vmatprep.subr.mxu0 0.0
  %9111 = vmatpush1.msra.mxu0 %v9099
  %9112 = vmatprep.subr.mxu0 0.0
  %9113 = vmatpush1.msra.mxu0 %v9100
  %9114 = vmatprep.subr.mxu0 0.0
  %9115 = vmatpush1.msra.mxu0 %v9101
  %9116 = vmatprep.subr.mxu0 0.0
  %9117 = vmatpush1.msra.mxu0 %v9102
  %9118 = vmatprep.subr.mxu0 0.0
  %9119 = vmatpush1.msra.mxu0 %v9103
  %9120 = vmatprep.subr.mxu0 0.0
  %9121 = vmatpush1.msra.mxu0 %v9104
  %9122 = vmatprep.subr.mxu0 0.0
  %9123 = vmatpush1.msra.mxu0 %v9105
  %9124 = vmatprep.subr.mxu0 0.0
  %9125 = vmatpush1.msra.mxu0 %v9106
  %9126 = vmatprep.subr.mxu0 0.0
  %9127 = vmatpush1.msra.mxu0 0.0
  %9128 = vmatprep.subr.mxu0 0.0
  %9129 = vmatpush1.msra.mxu0 0.0
  %9130 = vmatprep.subr.mxu0 0.0
  %9131 = vmatpush1.msra.mxu0 0.0
  %9132 = vmatprep.subr.mxu0 0.0
  %9133 = vmatpush1.msra.mxu0 0.0
  %9134 = vmatprep.subr.mxu0 0.0
  %9135 = vmatpush1.msra.mxu0 0.0
  %9136 = vmatprep.subr.mxu0 0.0
  %9137 = vmatpush1.msra.mxu0 0.0
  %9138 = vmatprep.subr.mxu0 0.0
  %9139 = vmatpush1.msra.mxu0 0.0
  %9140 = vmatprep.subr.mxu0 0.0
  %9141 = vmatpush1.msra.mxu0 0.0
  %9142 = vmatprep.subr.mxu0 0.0
  %9143 = vmatpush1.msra.mxu0 0.0
  %9144 = vmatprep.subr.mxu0 0.0
  %9145 = vmatpush1.msra.mxu0 0.0
  %9146 = vmatprep.subr.mxu0 0.0
  %9147 = vmatpush1.msra.mxu0 0.0
  %9148 = vmatprep.subr.mxu0 0.0
  %9149 = vmatpush1.msra.mxu0 0.0
  %9150 = vmatprep.subr.mxu0 0.0
  %9151 = vmatpush1.msra.mxu0 0.0
  %9152 = vmatprep.subr.mxu0 0.0
  %9153 = vmatpush1.msra.mxu0 0.0
  %9154 = vmatprep.subr.mxu0 0.0
  %9155 = vmatpush1.msra.mxu0 0.0
  %9156 = vmatprep.subr.mxu0 0.0
  %9157 = vmatpush1.msra.mxu0 0.0
  %9158 = vmatprep.subr.mxu0 0.0
  %9159 = vmatpush1.msra.mxu0 0.0
  %9160 = vmatprep.subr.mxu0 0.0
  %9161 = vmatpush1.msra.mxu0 0.0
  %9162 = vmatprep.subr.mxu0 0.0
  %9163 = vmatpush1.msra.mxu0 0.0
  %9164 = vmatprep.subr.mxu0 0.0
  %9165 = vmatpush1.msra.mxu0 0.0
  %9166 = vmatprep.subr.mxu0 0.0
  %9167 = vmatpush1.msra.mxu0 0.0
  %9168 = vmatprep.subr.mxu0 0.0
  %9169 = vmatpush1.msra.mxu0 0.0
  %9170 = vmatprep.subr.mxu0 0.0
  %9171 = vmatpush1.msra.mxu0 0.0
  %9172 = vmatprep.subr.mxu0 0.0
  %9173 = vmatpush1.msra.mxu0 0.0
  %9174 = vmatprep.mubr.f32.mxu0 0.0
  %9175 = vmatmul.mubr.f32.gmra.mrb[0].mxu0 %v9108
  %v9176 = vpop.f32.mrb[0].mxu0
  %v9177 = vadd.f32 0.0, %v9176
  %v9178 = vpop.f32.mrb[0].mxu0
  %9179 = vdwg.mxu0
  %v9180 = vadd.f32 %v9020, %v9177
  %s9181 = scalar_lea.vmem %s4, 6
  %v9182 = vld [vmem:[%s9181] sm:$0x3]
  %v9184 = vsel %vm8711, %v9182, 0
  %9186 = vmatprep.subr.mxu0 0.0
  %9187 = vmatpush1.msra.mxu0 %v8709
  %9188 = vmatprep.subr.mxu0 0.0
  %9189 = vmatpush1.msra.mxu0 0.0
  %9190 = vmatprep.subr.mxu0 0.0
  %9191 = vmatpush1.msra.mxu0 0.0
  %9192 = vmatprep.subr.mxu0 0.0
  %9193 = vmatpush1.msra.mxu0 0.0
  %9194 = vmatprep.subr.mxu0 0.0
  %9195 = vmatpush1.msra.mxu0 0.0
  %9196 = vmatprep.subr.mxu0 0.0
  %9197 = vmatpush1.msra.mxu0 0.0
  %9198 = vmatprep.subr.mxu0 0.0
  %9199 = vmatpush1.msra.mxu0 0.0
  %9200 = vmatprep.subr.mxu0 0.0
  %9201 = vmatpush1.msra.mxu0 0.0
  %9202 = vmatprep.subr.mxu0 0.0
  %9203 = vmatpush1.msra.mxu0 0.0
  %9204 = vmatprep.subr.mxu0 0.0
  %9205 = vmatpush1.msra.mxu0 0.0
  %9206 = vmatprep.subr.mxu0 0.0
  %9207 = vmatpush1.msra.mxu0 0.0
  %9208 = vmatprep.subr.mxu0 0.0
  %9209 = vmatpush1.msra.mxu0 0.0
  %9210 = vmatprep.subr.mxu0 0.0
  %9211 = vmatpush1.msra.mxu0 0.0
  %9212 = vmatprep.subr.mxu0 0.0
  %9213 = vmatpush1.msra.mxu0 0.0
  %9214 = vmatprep.subr.mxu0 0.0
  %9215 = vmatpush1.msra.mxu0 0.0
  %9216 = vmatprep.subr.mxu0 0.0
  %9217 = vmatpush1.msra.mxu0 0.0
  %9218 = vmatprep.subr.mxu0 0.0
  %9219 = vmatpush1.msra.mxu0 0.0
  %9220 = vmatprep.subr.mxu0 0.0
  %9221 = vmatpush1.msra.mxu0 0.0
  %9222 = vmatprep.subr.mxu0 0.0
  %9223 = vmatpush1.msra.mxu0 0.0
  %9224 = vmatprep.subr.mxu0 0.0
  %9225 = vmatpush1.msra.mxu0 0.0
  %9226 = vmatprep.subr.mxu0 0.0
  %9227 = vmatpush1.msra.mxu0 0.0
  %9228 = vmatprep.subr.mxu0 0.0
  %9229 = vmatpush1.msra.mxu0 0.0
  %9230 = vmatprep.subr.mxu0 0.0
  %9231 = vmatpush1.msra.mxu0 0.0
  %9232 = vmatprep.subr.mxu0 0.0
  %9233 = vmatpush1.msra.mxu0 0.0
  %9234 = vmatprep.subr.mxu0 0.0
  %9235 = vmatpush1.msra.mxu0 0.0
  %9236 = vmatprep.subr.mxu0 0.0
  %9237 = vmatpush1.msra.mxu0 0.0
  %9238 = vmatprep.subr.mxu0 0.0
  %9239 = vmatpush1.msra.mxu0 0.0
  %9240 = vmatprep.subr.mxu0 0.0
  %9241 = vmatpush1.msra.mxu0 0.0
  %9242 = vmatprep.subr.mxu0 0.0
  %9243 = vmatpush1.msra.mxu0 0.0
  %9244 = vmatprep.subr.mxu0 0.0
  %9245 = vmatpush1.msra.mxu0 0.0
  %9246 = vmatprep.subr.mxu0 0.0
  %9247 = vmatpush1.msra.mxu0 0.0
  %9248 = vmatprep.subr.mxu0 0.0
  %9249 = vmatpush1.msra.mxu0 0.0
  %9250 = vmatprep.mubr.f32.mxu0 0.0
  %9251 = vmatmul.mubr.f32.gmra.mrb[0].mxu0 %v9184
  %v9252 = vpop.f32.mrb[0].mxu0
  %v9253 = vadd.f32 0.0, %v9252
  %v9254 = vpop.f32.mrb[0].mxu0
  %9255 = vdwg.mxu0
  %s9256 = scalar_lea.vmem %s15, 192
  %v9257 = vld [vmem:[%s9256] sm:$0xff]
  %v9258 = vld [vmem:[%s9256 + $0x8] sm:$0xff]
  %v9259 = vld [vmem:[%s9256 + $0x10] sm:$0xff]
  %v9260 = vld [vmem:[%s9256 + $0x18] sm:$0xff]
  %v9261 = vld [vmem:[%s9256 + $0x20] sm:$0xff]
  %v9262 = vld [vmem:[%s9256 + $0x28] sm:$0xff]
  %v9263 = vld [vmem:[%s9256 + $0x30] sm:$0xff]
  %v9264 = vld [vmem:[%s9256 + $0x38] sm:$0xff]
  %v9266 = vsel %vm8669, %v9253, 0
  %9268 = vmatprep.subr.mxu0 0.0
  %9269 = vmatpush1.msra.mxu0 %v9257
  %9270 = vmatprep.subr.mxu0 0.0
  %9271 = vmatpush1.msra.mxu0 %v9258
  %9272 = vmatprep.subr.mxu0 0.0
  %9273 = vmatpush1.msra.mxu0 %v9259
  %9274 = vmatprep.subr.mxu0 0.0
  %9275 = vmatpush1.msra.mxu0 %v9260
  %9276 = vmatprep.subr.mxu0 0.0
  %9277 = vmatpush1.msra.mxu0 %v9261
  %9278 = vmatprep.subr.mxu0 0.0
  %9279 = vmatpush1.msra.mxu0 %v9262
  %9280 = vmatprep.subr.mxu0 0.0
  %9281 = vmatpush1.msra.mxu0 %v9263
  %9282 = vmatprep.subr.mxu0 0.0
  %9283 = vmatpush1.msra.mxu0 %v9264
  %9284 = vmatprep.subr.mxu0 0.0
  %9285 = vmatpush1.msra.mxu0 0.0
  %9286 = vmatprep.subr.mxu0 0.0
  %9287 = vmatpush1.msra.mxu0 0.0
  %9288 = vmatprep.subr.mxu0 0.0
  %9289 = vmatpush1.msra.mxu0 0.0
  %9290 = vmatprep.subr.mxu0 0.0
  %9291 = vmatpush1.msra.mxu0 0.0
  %9292 = vmatprep.subr.mxu0 0.0
  %9293 = vmatpush1.msra.mxu0 0.0
  %9294 = vmatprep.subr.mxu0 0.0
  %9295 = vmatpush1.msra.mxu0 0.0
  %9296 = vmatprep.subr.mxu0 0.0
  %9297 = vmatpush1.msra.mxu0 0.0
  %9298 = vmatprep.subr.mxu0 0.0
  %9299 = vmatpush1.msra.mxu0 0.0
  %9300 = vmatprep.subr.mxu0 0.0
  %9301 = vmatpush1.msra.mxu0 0.0
  %9302 = vmatprep.subr.mxu0 0.0
  %9303 = vmatpush1.msra.mxu0 0.0
  %9304 = vmatprep.subr.mxu0 0.0
  %9305 = vmatpush1.msra.mxu0 0.0
  %9306 = vmatprep.subr.mxu0 0.0
  %9307 = vmatpush1.msra.mxu0 0.0
  %9308 = vmatprep.subr.mxu0 0.0
  %9309 = vmatpush1.msra.mxu0 0.0
  %9310 = vmatprep.subr.mxu0 0.0
  %9311 = vmatpush1.msra.mxu0 0.0
  %9312 = vmatprep.subr.mxu0 0.0
  %9313 = vmatpush1.msra.mxu0 0.0
  %9314 = vmatprep.subr.mxu0 0.0
  %9315 = vmatpush1.msra.mxu0 0.0
  %9316 = vmatprep.subr.mxu0 0.0
  %9317 = vmatpush1.msra.mxu0 0.0
  %9318 = vmatprep.subr.mxu0 0.0
  %9319 = vmatpush1.msra.mxu0 0.0
  %9320 = vmatprep.subr.mxu0 0.0
  %9321 = vmatpush1.msra.mxu0 0.0
  %9322 = vmatprep.subr.mxu0 0.0
  %9323 = vmatpush1.msra.mxu0 0.0
  %9324 = vmatprep.subr.mxu0 0.0
  %9325 = vmatpush1.msra.mxu0 0.0
  %9326 = vmatprep.subr.mxu0 0.0
  %9327 = vmatpush1.msra.mxu0 0.0
  %9328 = vmatprep.subr.mxu0 0.0
  %9329 = vmatpush1.msra.mxu0 0.0
  %9330 = vmatprep.subr.mxu0 0.0
  %9331 = vmatpush1.msra.mxu0 0.0
  %9332 = vmatprep.mubr.f32.mxu0 0.0
  %9333 = vmatmul.mubr.f32.gmra.mrb[0].mxu0 %v9266
  %v9334 = vpop.f32.mrb[0].mxu0
  %v9335 = vadd.f32 0.0, %v9334
  %v9336 = vpop.f32.mrb[0].mxu0
  %9337 = vdwg.mxu0
  %v9338 = vadd.f32 %v9180, %v9335
  %s9339 = scalar_lea.vmem %s4, 8
  %v9340 = vld [vmem:[%s9339] sm:$0x3]
  %v9342 = vsel %vm8711, %v9340, 0
  %9344 = vmatprep.subr.mxu0 0.0
  %9345 = vmatpush1.msra.mxu0 %v8709
  %9346 = vmatprep.subr.mxu0 0.0
  %9347 = vmatpush1.msra.mxu0 0.0
  %9348 = vmatprep.subr.mxu0 0.0
  %9349 = vmatpush1.msra.mxu0 0.0
  %9350 = vmatprep.subr.mxu0 0.0
  %9351 = vmatpush1.msra.mxu0 0.0
  %9352 = vmatprep.subr.mxu0 0.0
  %9353 = vmatpush1.msra.mxu0 0.0
  %9354 = vmatprep.subr.mxu0 0.0
  %9355 = vmatpush1.msra.mxu0 0.0
  %9356 = vmatprep.subr.mxu0 0.0
  %9357 = vmatpush1.msra.mxu0 0.0
  %9358 = vmatprep.subr.mxu0 0.0
  %9359 = vmatpush1.msra.mxu0 0.0
  %9360 = vmatprep.subr.mxu0 0.0
  %9361 = vmatpush1.msra.mxu0 0.0
  %9362 = vmatprep.subr.mxu0 0.0
  %9363 = vmatpush1.msra.mxu0 0.0
  %9364 = vmatprep.subr.mxu0 0.0
  %9365 = vmatpush1.msra.mxu0 0.0
  %9366 = vmatprep.subr.mxu0 0.0
  %9367 = vmatpush1.msra.mxu0 0.0
  %9368 = vmatprep.subr.mxu0 0.0
  %9369 = vmatpush1.msra.mxu0 0.0
  %9370 = vmatprep.subr.mxu0 0.0
  %9371 = vmatpush1.msra.mxu0 0.0
  %9372 = vmatprep.subr.mxu0 0.0
  %9373 = vmatpush1.msra.mxu0 0.0
  %9374 = vmatprep.subr.mxu0 0.0
  %9375 = vmatpush1.msra.mxu0 0.0
  %9376 = vmatprep.subr.mxu0 0.0
  %9377 = vmatpush1.msra.mxu0 0.0
  %9378 = vmatprep.subr.mxu0 0.0
  %9379 = vmatpush1.msra.mxu0 0.0
  %9380 = vmatprep.subr.mxu0 0.0
  %9381 = vmatpush1.msra.mxu0 0.0
  %9382 = vmatprep.subr.mxu0 0.0
  %9383 = vmatpush1.msra.mxu0 0.0
  %9384 = vmatprep.subr.mxu0 0.0
  %9385 = vmatpush1.msra.mxu0 0.0
  %9386 = vmatprep.subr.mxu0 0.0
  %9387 = vmatpush1.msra.mxu0 0.0
  %9388 = vmatprep.subr.mxu0 0.0
  %9389 = vmatpush1.msra.mxu0 0.0
  %9390 = vmatprep.subr.mxu0 0.0
  %9391 = vmatpush1.msra.mxu0 0.0
  %9392 = vmatprep.subr.mxu0 0.0
  %9393 = vmatpush1.msra.mxu0 0.0
  %9394 = vmatprep.subr.mxu0 0.0
  %9395 = vmatpush1.msra.mxu0 0.0
  %9396 = vmatprep.subr.mxu0 0.0
  %9397 = vmatpush1.msra.mxu0 0.0
  %9398 = vmatprep.subr.mxu0 0.0
  %9399 = vmatpush1.msra.mxu0 0.0
  %9400 = vmatprep.subr.mxu0 0.0
  %9401 = vmatpush1.msra.mxu0 0.0
  %9402 = vmatprep.subr.mxu0 0.0
  %9403 = vmatpush1.msra.mxu0 0.0
  %9404 = vmatprep.subr.mxu0 0.0
  %9405 = vmatpush1.msra.mxu0 0.0
  %9406 = vmatprep.subr.mxu0 0.0
  %9407 = vmatpush1.msra.mxu0 0.0
  %9408 = vmatprep.mubr.f32.mxu0 0.0
  %9409 = vmatmul.mubr.f32.gmra.mrb[0].mxu0 %v9342
  %v9410 = vpop.f32.mrb[0].mxu0
  %v9411 = vadd.f32 0.0, %v9410
  %v9412 = vpop.f32.mrb[0].mxu0
  %9413 = vdwg.mxu0
  %s9414 = scalar_lea.vmem %s15, 256
  %v9415 = vld [vmem:[%s9414] sm:$0xff]
  %v9416 = vld [vmem:[%s9414 + $0x8] sm:$0xff]
  %v9417 = vld [vmem:[%s9414 + $0x10] sm:$0xff]
  %v9418 = vld [vmem:[%s9414 + $0x18] sm:$0xff]
  %v9419 = vld [vmem:[%s9414 + $0x20] sm:$0xff]
  %v9420 = vld [vmem:[%s9414 + $0x28] sm:$0xff]
  %v9421 = vld [vmem:[%s9414 + $0x30] sm:$0xff]
  %v9422 = vld [vmem:[%s9414 + $0x38] sm:$0xff]
  %v9424 = vsel %vm8669, %v9411, 0
  %9426 = vmatprep.subr.mxu0 0.0
  %9427 = vmatpush1.msra.mxu0 %v9415
  %9428 = vmatprep.subr.mxu0 0.0
  %9429 = vmatpush1.msra.mxu0 %v9416
  %9430 = vmatprep.subr.mxu0 0.0
  %9431 = vmatpush1.msra.mxu0 %v9417
  %9432 = vmatprep.subr.mxu0 0.0
  %9433 = vmatpush1.msra.mxu0 %v9418
  %9434 = vmatprep.subr.mxu0 0.0
  %9435 = vmatpush1.msra.mxu0 %v9419
  %9436 = vmatprep.subr.mxu0 0.0
  %9437 = vmatpush1.msra.mxu0 %v9420
  %9438 = vmatprep.subr.mxu0 0.0
  %9439 = vmatpush1.msra.mxu0 %v9421
  %9440 = vmatprep.subr.mxu0 0.0
  %9441 = vmatpush1.msra.mxu0 %v9422
  %9442 = vmatprep.subr.mxu0 0.0
  %9443 = vmatpush1.msra.mxu0 0.0
  %9444 = vmatprep.subr.mxu0 0.0
  %9445 = vmatpush1.msra.mxu0 0.0
  %9446 = vmatprep.subr.mxu0 0.0
  %9447 = vmatpush1.msra.mxu0 0.0
  %9448 = vmatprep.subr.mxu0 0.0
  %9449 = vmatpush1.msra.mxu0 0.0
  %9450 = vmatprep.subr.mxu0 0.0
  %9451 = vmatpush1.msra.mxu0 0.0
  %9452 = vmatprep.subr.mxu0 0.0
  %9453 = vmatpush1.msra.mxu0 0.0
  %9454 = vmatprep.subr.mxu0 0.0
  %9455 = vmatpush1.msra.mxu0 0.0
  %9456 = vmatprep.subr.mxu0 0.0
  %9457 = vmatpush1.msra.mxu0 0.0
  %9458 = vmatprep.subr.mxu0 0.0
  %9459 = vmatpush1.msra.mxu0 0.0
  %9460 = vmatprep.subr.mxu0 0.0
  %9461 = vmatpush1.msra.mxu0 0.0
  %9462 = vmatprep.subr.mxu0 0.0
  %9463 = vmatpush1.msra.mxu0 0.0
  %9464 = vmatprep.subr.mxu0 0.0
  %9465 = vmatpush1.msra.mxu0 0.0
  %9466 = vmatprep.subr.mxu0 0.0
  %9467 = vmatpush1.msra.mxu0 0.0
  %9468 = vmatprep.subr.mxu0 0.0
  %9469 = vmatpush1.msra.mxu0 0.0
  %9470 = vmatprep.subr.mxu0 0.0
  %9471 = vmatpush1.msra.mxu0 0.0
  %9472 = vmatprep.subr.mxu0 0.0
  %9473 = vmatpush1.msra.mxu0 0.0
  %9474 = vmatprep.subr.mxu0 0.0
  %9475 = vmatpush1.msra.mxu0 0.0
  %9476 = vmatprep.subr.mxu0 0.0
  %9477 = vmatpush1.msra.mxu0 0.0
  %9478 = vmatprep.subr.mxu0 0.0
  %9479 = vmatpush1.msra.mxu0 0.0
  %9480 = vmatprep.subr.mxu0 0.0
  %9481 = vmatpush1.msra.mxu0 0.0
  %9482 = vmatprep.subr.mxu0 0.0
  %9483 = vmatpush1.msra.mxu0 0.0
  %9484 = vmatprep.subr.mxu0 0.0
  %9485 = vmatpush1.msra.mxu0 0.0
  %9486 = vmatprep.subr.mxu0 0.0
  %9487 = vmatpush1.msra.mxu0 0.0
  %9488 = vmatprep.subr.mxu0 0.0
  %9489 = vmatpush1.msra.mxu0 0.0
  %9490 = vmatprep.mubr.f32.mxu0 0.0
  %9491 = vmatmul.mubr.f32.gmra.mrb[0].mxu0 %v9424
  %v9492 = vpop.f32.mrb[0].mxu0
  %v9493 = vadd.f32 0.0, %v9492
  %v9494 = vpop.f32.mrb[0].mxu0
  %9495 = vdwg.mxu0
  %v9496 = vadd.f32 %v9338, %v9493
  %s9497 = scalar_lea.vmem %s4, 10
  %v9498 = vld [vmem:[%s9497] sm:$0x3]
  %v9500 = vsel %vm8711, %v9498, 0
  %9502 = vmatprep.subr.mxu0 0.0
  %9503 = vmatpush1.msra.mxu0 %v8709
  %9504 = vmatprep.subr.mxu0 0.0
  %9505 = vmatpush1.msra.mxu0 0.0
  %9506 = vmatprep.subr.mxu0 0.0
  %9507 = vmatpush1.msra.mxu0 0.0
  %9508 = vmatprep.subr.mxu0 0.0
  %9509 = vmatpush1.msra.mxu0 0.0
  %9510 = vmatprep.subr.mxu0 0.0
  %9511 = vmatpush1.msra.mxu0 0.0
  %9512 = vmatprep.subr.mxu0 0.0
  %9513 = vmatpush1.msra.mxu0 0.0
  %9514 = vmatprep.subr.mxu0 0.0
  %9515 = vmatpush1.msra.mxu0 0.0
  %9516 = vmatprep.subr.mxu0 0.0
  %9517 = vmatpush1.msra.mxu0 0.0
  %9518 = vmatprep.subr.mxu0 0.0
  %9519 = vmatpush1.msra.mxu0 0.0
  %9520 = vmatprep.subr.mxu0 0.0
  %9521 = vmatpush1.msra.mxu0 0.0
  %9522 = vmatprep.subr.mxu0 0.0
  %9523 = vmatpush1.msra.mxu0 0.0
  %9524 = vmatprep.subr.mxu0 0.0
  %9525 = vmatpush1.msra.mxu0 0.0
  %9526 = vmatprep.subr.mxu0 0.0
  %9527 = vmatpush1.msra.mxu0 0.0
  %9528 = vmatprep.subr.mxu0 0.0
  %9529 = vmatpush1.msra.mxu0 0.0
  %9530 = vmatprep.subr.mxu0 0.0
  %9531 = vmatpush1.msra.mxu0 0.0
  %9532 = vmatprep.subr.mxu0 0.0
  %9533 = vmatpush1.msra.mxu0 0.0
  %9534 = vmatprep.subr.mxu0 0.0
  %9535 = vmatpush1.msra.mxu0 0.0
  %9536 = vmatprep.subr.mxu0 0.0
  %9537 = vmatpush1.msra.mxu0 0.0
  %9538 = vmatprep.subr.mxu0 0.0
  %9539 = vmatpush1.msra.mxu0 0.0
  %9540 = vmatprep.subr.mxu0 0.0
  %9541 = vmatpush1.msra.mxu0 0.0
  %9542 = vmatprep.subr.mxu0 0.0
  %9543 = vmatpush1.msra.mxu0 0.0
  %9544 = vmatprep.subr.mxu0 0.0
  %9545 = vmatpush1.msra.mxu0 0.0
  %9546 = vmatprep.subr.mxu0 0.0
  %9547 = vmatpush1.msra.mxu0 0.0
  %9548 = vmatprep.subr.mxu0 0.0
  %9549 = vmatpush1.msra.mxu0 0.0
  %9550 = vmatprep.subr.mxu0 0.0
  %9551 = vmatpush1.msra.mxu0 0.0
  %9552 = vmatprep.subr.mxu0 0.0
  %9553 = vmatpush1.msra.mxu0 0.0
  %9554 = vmatprep.subr.mxu0 0.0
  %9555 = vmatpush1.msra.mxu0 0.0
  %9556 = vmatprep.subr.mxu0 0.0
  %9557 = vmatpush1.msra.mxu0 0.0
  %9558 = vmatprep.subr.mxu0 0.0
  %9559 = vmatpush1.msra.mxu0 0.0
  %9560 = vmatprep.subr.mxu0 0.0
  %9561 = vmatpush1.msra.mxu0 0.0
  %9562 = vmatprep.subr.mxu0 0.0
  %9563 = vmatpush1.msra.mxu0 0.0
  %9564 = vmatprep.subr.mxu0 0.0
  %9565 = vmatpush1.msra.mxu0 0.0
  %9566 = vmatprep.mubr.f32.mxu0 0.0
  %9567 = vmatmul.mubr.f32.gmra.mrb[0].mxu0 %v9500
  %v9568 = vpop.f32.mrb[0].mxu0
  %v9569 = vadd.f32 0.0, %v9568
  %v9570 = vpop.f32.mrb[0].mxu0
  %9571 = vdwg.mxu0
  %s9572 = scalar_lea.vmem %s15, 320
  %v9573 = vld [vmem:[%s9572] sm:$0xff]
  %v9574 = vld [vmem:[%s9572 + $0x8] sm:$0xff]
  %v9575 = vld [vmem:[%s9572 + $0x10] sm:$0xff]
  %v9576 = vld [vmem:[%s9572 + $0x18] sm:$0xff]
  %v9577 = vld [vmem:[%s9572 + $0x20] sm:$0xff]
  %v9578 = vld [vmem:[%s9572 + $0x28] sm:$0xff]
  %v9579 = vld [vmem:[%s9572 + $0x30] sm:$0xff]
  %v9580 = vld [vmem:[%s9572 + $0x38] sm:$0xff]
  %v9582 = vsel %vm8669, %v9569, 0
  %9584 = vmatprep.subr.mxu0 0.0
  %9585 = vmatpush1.msra.mxu0 %v9573
  %9586 = vmatprep.subr.mxu0 0.0
  %9587 = vmatpush1.msra.mxu0 %v9574
  %9588 = vmatprep.subr.mxu0 0.0
  %9589 = vmatpush1.msra.mxu0 %v9575
  %9590 = vmatprep.subr.mxu0 0.0
  %9591 = vmatpush1.msra.mxu0 %v9576
  %9592 = vmatprep.subr.mxu0 0.0
  %9593 = vmatpush1.msra.mxu0 %v9577
  %9594 = vmatprep.subr.mxu0 0.0
  %9595 = vmatpush1.msra.mxu0 %v9578
  %9596 = vmatprep.subr.mxu0 0.0
  %9597 = vmatpush1.msra.mxu0 %v9579
  %9598 = vmatprep.subr.mxu0 0.0
  %9599 = vmatpush1.msra.mxu0 %v9580
  %9600 = vmatprep.subr.mxu0 0.0
  %9601 = vmatpush1.msra.mxu0 0.0
  %9602 = vmatprep.subr.mxu0 0.0
  %9603 = vmatpush1.msra.mxu0 0.0
  %9604 = vmatprep.subr.mxu0 0.0
  %9605 = vmatpush1.msra.mxu0 0.0
  %9606 = vmatprep.subr.mxu0 0.0
  %9607 = vmatpush1.msra.mxu0 0.0
  %9608 = vmatprep.subr.mxu0 0.0
  %9609 = vmatpush1.msra.mxu0 0.0
  %9610 = vmatprep.subr.mxu0 0.0
  %9611 = vmatpush1.msra.mxu0 0.0
  %9612 = vmatprep.subr.mxu0 0.0
  %9613 = vmatpush1.msra.mxu0 0.0
  %9614 = vmatprep.subr.mxu0 0.0
  %9615 = vmatpush1.msra.mxu0 0.0
  %9616 = vmatprep.subr.mxu0 0.0
  %9617 = vmatpush1.msra.mxu0 0.0
  %9618 = vmatprep.subr.mxu0 0.0
  %9619 = vmatpush1.msra.mxu0 0.0
  %9620 = vmatprep.subr.mxu0 0.0
  %9621 = vmatpush1.msra.mxu0 0.0
  %9622 = vmatprep.subr.mxu0 0.0
  %9623 = vmatpush1.msra.mxu0 0.0
  %9624 = vmatprep.subr.mxu0 0.0
  %9625 = vmatpush1.msra.mxu0 0.0
  %9626 = vmatprep.subr.mxu0 0.0
  %9627 = vmatpush1.msra.mxu0 0.0
  %9628 = vmatprep.subr.mxu0 0.0
  %9629 = vmatpush1.msra.mxu0 0.0
  %9630 = vmatprep.subr.mxu0 0.0
  %9631 = vmatpush1.msra.mxu0 0.0
  %9632 = vmatprep.subr.mxu0 0.0
  %9633 = vmatpush1.msra.mxu0 0.0
  %9634 = vmatprep.subr.mxu0 0.0
  %9635 = vmatpush1.msra.mxu0 0.0
  %9636 = vmatprep.subr.mxu0 0.0
  %9637 = vmatpush1.msra.mxu0 0.0
  %9638 = vmatprep.subr.mxu0 0.0
  %9639 = vmatpush1.msra.mxu0 0.0
  %9640 = vmatprep.subr.mxu0 0.0
  %9641 = vmatpush1.msra.mxu0 0.0
  %9642 = vmatprep.subr.mxu0 0.0
  %9643 = vmatpush1.msra.mxu0 0.0
  %9644 = vmatprep.subr.mxu0 0.0
  %9645 = vmatpush1.msra.mxu0 0.0
  %9646 = vmatprep.subr.mxu0 0.0
  %9647 = vmatpush1.msra.mxu0 0.0
  %9648 = vmatprep.mubr.f32.mxu0 0.0
  %9649 = vmatmul.mubr.f32.gmra.mrb[0].mxu0 %v9582
  %v9650 = vpop.f32.mrb[0].mxu0
  %v9651 = vadd.f32 0.0, %v9650
  %v9652 = vpop.f32.mrb[0].mxu0
  %9653 = vdwg.mxu0
  %v9654 = vadd.f32 %v9496, %v9651
  %s9655 = scalar_lea.vmem %s4, 12
  %v9656 = vld [vmem:[%s9655] sm:$0x3]
  %v9658 = vsel %vm8711, %v9656, 0
  %9660 = vmatprep.subr.mxu0 0.0
  %9661 = vmatpush1.msra.mxu0 %v8709
  %9662 = vmatprep.subr.mxu0 0.0
  %9663 = vmatpush1.msra.mxu0 0.0
  %9664 = vmatprep.subr.mxu0 0.0
  %9665 = vmatpush1.msra.mxu0 0.0
  %9666 = vmatprep.subr.mxu0 0.0
  %9667 = vmatpush1.msra.mxu0 0.0
  %9668 = vmatprep.subr.mxu0 0.0
  %9669 = vmatpush1.msra.mxu0 0.0
  %9670 = vmatprep.subr.mxu0 0.0
  %9671 = vmatpush1.msra.mxu0 0.0
  %9672 = vmatprep.subr.mxu0 0.0
  %9673 = vmatpush1.msra.mxu0 0.0
  %9674 = vmatprep.subr.mxu0 0.0
  %9675 = vmatpush1.msra.mxu0 0.0
  %9676 = vmatprep.subr.mxu0 0.0
  %9677 = vmatpush1.msra.mxu0 0.0
  %9678 = vmatprep.subr.mxu0 0.0
  %9679 = vmatpush1.msra.mxu0 0.0
  %9680 = vmatprep.subr.mxu0 0.0
  %9681 = vmatpush1.msra.mxu0 0.0
  %9682 = vmatprep.subr.mxu0 0.0
  %9683 = vmatpush1.msra.mxu0 0.0
  %9684 = vmatprep.subr.mxu0 0.0
  %9685 = vmatpush1.msra.mxu0 0.0
  %9686 = vmatprep.subr.mxu0 0.0
  %9687 = vmatpush1.msra.mxu0 0.0
  %9688 = vmatprep.subr.mxu0 0.0
  %9689 = vmatpush1.msra.mxu0 0.0
  %9690 = vmatprep.subr.mxu0 0.0
  %9691 = vmatpush1.msra.mxu0 0.0
  %9692 = vmatprep.subr.mxu0 0.0
  %9693 = vmatpush1.msra.mxu0 0.0
  %9694 = vmatprep.subr.mxu0 0.0
  %9695 = vmatpush1.msra.mxu0 0.0
  %9696 = vmatprep.subr.mxu0 0.0
  %9697 = vmatpush1.msra.mxu0 0.0
  %9698 = vmatprep.subr.mxu0 0.0
  %9699 = vmatpush1.msra.mxu0 0.0
  %9700 = vmatprep.subr.mxu0 0.0
  %9701 = vmatpush1.msra.mxu0 0.0
  %9702 = vmatprep.subr.mxu0 0.0
  %9703 = vmatpush1.msra.mxu0 0.0
  %9704 = vmatprep.subr.mxu0 0.0
  %9705 = vmatpush1.msra.mxu0 0.0
  %9706 = vmatprep.subr.mxu0 0.0
  %9707 = vmatpush1.msra.mxu0 0.0
  %9708 = vmatprep.subr.mxu0 0.0
  %9709 = vmatpush1.msra.mxu0 0.0
  %9710 = vmatprep.subr.mxu0 0.0
  %9711 = vmatpush1.msra.mxu0 0.0
  %9712 = vmatprep.subr.mxu0 0.0
  %9713 = vmatpush1.msra.mxu0 0.0
  %9714 = vmatprep.subr.mxu0 0.0
  %9715 = vmatpush1.msra.mxu0 0.0
  %9716 = vmatprep.subr.mxu0 0.0
  %9717 = vmatpush1.msra.mxu0 0.0
  %9718 = vmatprep.subr.mxu0 0.0
  %9719 = vmatpush1.msra.mxu0 0.0
  %9720 = vmatprep.subr.mxu0 0.0
  %9721 = vmatpush1.msra.mxu0 0.0
  %9722 = vmatprep.subr.mxu0 0.0
  %9723 = vmatpush1.msra.mxu0 0.0
  %9724 = vmatprep.mubr.f32.mxu0 0.0
  %9725 = vmatmul.mubr.f32.gmra.mrb[0].mxu0 %v9658
  %v9726 = vpop.f32.mrb[0].mxu0
  %v9727 = vadd.f32 0.0, %v9726
  %v9728 = vpop.f32.mrb[0].mxu0
  %9729 = vdwg.mxu0
  %s9730 = scalar_lea.vmem %s15, 384
  %v9731 = vld [vmem:[%s9730] sm:$0xff]
  %v9732 = vld [vmem:[%s9730 + $0x8] sm:$0xff]
  %v9733 = vld [vmem:[%s9730 + $0x10] sm:$0xff]
  %v9734 = vld [vmem:[%s9730 + $0x18] sm:$0xff]
  %v9735 = vld [vmem:[%s9730 + $0x20] sm:$0xff]
  %v9736 = vld [vmem:[%s9730 + $0x28] sm:$0xff]
  %v9737 = vld [vmem:[%s9730 + $0x30] sm:$0xff]
  %v9738 = vld [vmem:[%s9730 + $0x38] sm:$0xff]
  %v9740 = vsel %vm8669, %v9727, 0
  %9742 = vmatprep.subr.mxu0 0.0
  %9743 = vmatpush1.msra.mxu0 %v9731
  %9744 = vmatprep.subr.mxu0 0.0
  %9745 = vmatpush1.msra.mxu0 %v9732
  %9746 = vmatprep.subr.mxu0 0.0
  %9747 = vmatpush1.msra.mxu0 %v9733
  %9748 = vmatprep.subr.mxu0 0.0
  %9749 = vmatpush1.msra.mxu0 %v9734
  %9750 = vmatprep.subr.mxu0 0.0
  %9751 = vmatpush1.msra.mxu0 %v9735
  %9752 = vmatprep.subr.mxu0 0.0
  %9753 = vmatpush1.msra.mxu0 %v9736
  %9754 = vmatprep.subr.mxu0 0.0
  %9755 = vmatpush1.msra.mxu0 %v9737
  %9756 = vmatprep.subr.mxu0 0.0
  %9757 = vmatpush1.msra.mxu0 %v9738
  %9758 = vmatprep.subr.mxu0 0.0
  %9759 = vmatpush1.msra.mxu0 0.0
  %9760 = vmatprep.subr.mxu0 0.0
  %9761 = vmatpush1.msra.mxu0 0.0
  %9762 = vmatprep.subr.mxu0 0.0
  %9763 = vmatpush1.msra.mxu0 0.0
  %9764 = vmatprep.subr.mxu0 0.0
  %9765 = vmatpush1.msra.mxu0 0.0
  %9766 = vmatprep.subr.mxu0 0.0
  %9767 = vmatpush1.msra.mxu0 0.0
  %9768 = vmatprep.subr.mxu0 0.0
  %9769 = vmatpush1.msra.mxu0 0.0
  %9770 = vmatprep.subr.mxu0 0.0
  %9771 = vmatpush1.msra.mxu0 0.0
  %9772 = vmatprep.subr.mxu0 0.0
  %9773 = vmatpush1.msra.mxu0 0.0
  %9774 = vmatprep.subr.mxu0 0.0
  %9775 = vmatpush1.msra.mxu0 0.0
  %9776 = vmatprep.subr.mxu0 0.0
  %9777 = vmatpush1.msra.mxu0 0.0
  %9778 = vmatprep.subr.mxu0 0.0
  %9779 = vmatpush1.msra.mxu0 0.0
  %9780 = vmatprep.subr.mxu0 0.0
  %9781 = vmatpush1.msra.mxu0 0.0
  %9782 = vmatprep.subr.mxu0 0.0
  %9783 = vmatpush1.msra.mxu0 0.0
  %9784 = vmatprep.subr.mxu0 0.0
  %9785 = vmatpush1.msra.mxu0 0.0
  %9786 = vmatprep.subr.mxu0 0.0
  %9787 = vmatpush1.msra.mxu0 0.0
  %9788 = vmatprep.subr.mxu0 0.0
  %9789 = vmatpush1.msra.mxu0 0.0
  %9790 = vmatprep.subr.mxu0 0.0
  %9791 = vmatpush1.msra.mxu0 0.0
  %9792 = vmatprep.subr.mxu0 0.0
  %9793 = vmatpush1.msra.mxu0 0.0
  %9794 = vmatprep.subr.mxu0 0.0
  %9795 = vmatpush1.msra.mxu0 0.0
  %9796 = vmatprep.subr.mxu0 0.0
  %9797 = vmatpush1.msra.mxu0 0.0
  %9798 = vmatprep.subr.mxu0 0.0
  %9799 = vmatpush1.msra.mxu0 0.0
  %9800 = vmatprep.subr.mxu0 0.0
  %9801 = vmatpush1.msra.mxu0 0.0
  %9802 = vmatprep.subr.mxu0 0.0
  %9803 = vmatpush1.msra.mxu0 0.0
  %9804 = vmatprep.subr.mxu0 0.0
  %9805 = vmatpush1.msra.mxu0 0.0
  %9806 = vmatprep.mubr.f32.mxu0 0.0
  %9807 = vmatmul.mubr.f32.gmra.mrb[0].mxu0 %v9740
  %v9808 = vpop.f32.mrb[0].mxu0
  %v9809 = vadd.f32 0.0, %v9808
  %v9810 = vpop.f32.mrb[0].mxu0
  %9811 = vdwg.mxu0
  %v9812 = vadd.f32 %v9654, %v9809
  %s9813 = scalar_lea.vmem %s4, 14
  %v9814 = vld [vmem:[%s9813] sm:$0x3]
  %v9816 = vsel %vm8711, %v9814, 0
  %9818 = vmatprep.subr.mxu0 0.0
  %9819 = vmatpush1.msra.mxu0 %v8709
  %9820 = vmatprep.subr.mxu0 0.0
  %9821 = vmatpush1.msra.mxu0 0.0
  %9822 = vmatprep.subr.mxu0 0.0
  %9823 = vmatpush1.msra.mxu0 0.0
  %9824 = vmatprep.subr.mxu0 0.0
  %9825 = vmatpush1.msra.mxu0 0.0
  %9826 = vmatprep.subr.mxu0 0.0
  %9827 = vmatpush1.msra.mxu0 0.0
  %9828 = vmatprep.subr.mxu0 0.0
  %9829 = vmatpush1.msra.mxu0 0.0
  %9830 = vmatprep.subr.mxu0 0.0
  %9831 = vmatpush1.msra.mxu0 0.0
  %9832 = vmatprep.subr.mxu0 0.0
  %9833 = vmatpush1.msra.mxu0 0.0
  %9834 = vmatprep.subr.mxu0 0.0
  %9835 = vmatpush1.msra.mxu0 0.0
  %9836 = vmatprep.subr.mxu0 0.0
  %9837 = vmatpush1.msra.mxu0 0.0
  %9838 = vmatprep.subr.mxu0 0.0
  %9839 = vmatpush1.msra.mxu0 0.0
  %9840 = vmatprep.subr.mxu0 0.0
  %9841 = vmatpush1.msra.mxu0 0.0
  %9842 = vmatprep.subr.mxu0 0.0
  %9843 = vmatpush1.msra.mxu0 0.0
  %9844 = vmatprep.subr.mxu0 0.0
  %9845 = vmatpush1.msra.mxu0 0.0
  %9846 = vmatprep.subr.mxu0 0.0
  %9847 = vmatpush1.msra.mxu0 0.0
  %9848 = vmatprep.subr.mxu0 0.0
  %9849 = vmatpush1.msra.mxu0 0.0
  %9850 = vmatprep.subr.mxu0 0.0
  %9851 = vmatpush1.msra.mxu0 0.0
  %9852 = vmatprep.subr.mxu0 0.0
  %9853 = vmatpush1.msra.mxu0 0.0
  %9854 = vmatprep.subr.mxu0 0.0
  %9855 = vmatpush1.msra.mxu0 0.0
  %9856 = vmatprep.subr.mxu0 0.0
  %9857 = vmatpush1.msra.mxu0 0.0
  %9858 = vmatprep.subr.mxu0 0.0
  %9859 = vmatpush1.msra.mxu0 0.0
  %9860 = vmatprep.subr.mxu0 0.0
  %9861 = vmatpush1.msra.mxu0 0.0
  %9862 = vmatprep.subr.mxu0 0.0
  %9863 = vmatpush1.msra.mxu0 0.0
  %9864 = vmatprep.subr.mxu0 0.0
  %9865 = vmatpush1.msra.mxu0 0.0
  %9866 = vmatprep.subr.mxu0 0.0
  %9867 = vmatpush1.msra.mxu0 0.0
  %9868 = vmatprep.subr.mxu0 0.0
  %9869 = vmatpush1.msra.mxu0 0.0
  %9870 = vmatprep.subr.mxu0 0.0
  %9871 = vmatpush1.msra.mxu0 0.0
  %9872 = vmatprep.subr.mxu0 0.0
  %9873 = vmatpush1.msra.mxu0 0.0
  %9874 = vmatprep.subr.mxu0 0.0
  %9875 = vmatpush1.msra.mxu0 0.0
  %9876 = vmatprep.subr.mxu0 0.0
  %9877 = vmatpush1.msra.mxu0 0.0
  %9878 = vmatprep.subr.mxu0 0.0
  %9879 = vmatpush1.msra.mxu0 0.0
  %9880 = vmatprep.subr.mxu0 0.0
  %9881 = vmatpush1.msra.mxu0 0.0
  %9882 = vmatprep.mubr.f32.mxu0 0.0
  %9883 = vmatmul.mubr.f32.gmra.mrb[0].mxu0 %v9816
  %v9884 = vpop.f32.mrb[0].mxu0
  %v9885 = vadd.f32 0.0, %v9884
  %v9886 = vpop.f32.mrb[0].mxu0
  %9887 = vdwg.mxu0
  %s9888 = scalar_lea.vmem %s15, 448
  %v9889 = vld [vmem:[%s9888] sm:$0xff]
  %v9890 = vld [vmem:[%s9888 + $0x8] sm:$0xff]
  %v9891 = vld [vmem:[%s9888 + $0x10] sm:$0xff]
  %v9892 = vld [vmem:[%s9888 + $0x18] sm:$0xff]
  %v9893 = vld [vmem:[%s9888 + $0x20] sm:$0xff]
  %v9894 = vld [vmem:[%s9888 + $0x28] sm:$0xff]
  %v9895 = vld [vmem:[%s9888 + $0x30] sm:$0xff]
  %v9896 = vld [vmem:[%s9888 + $0x38] sm:$0xff]
  %v9898 = vsel %vm8669, %v9885, 0
  %9900 = vmatprep.subr.mxu0 0.0
  %9901 = vmatpush1.msra.mxu0 %v9889
  %9902 = vmatprep.subr.mxu0 0.0
  %9903 = vmatpush1.msra.mxu0 %v9890
  %9904 = vmatprep.subr.mxu0 0.0
  %9905 = vmatpush1.msra.mxu0 %v9891
  %9906 = vmatprep.subr.mxu0 0.0
  %9907 = vmatpush1.msra.mxu0 %v9892
  %9908 = vmatprep.subr.mxu0 0.0
  %9909 = vmatpush1.msra.mxu0 %v9893
  %9910 = vmatprep.subr.mxu0 0.0
  %9911 = vmatpush1.msra.mxu0 %v9894
  %9912 = vmatprep.subr.mxu0 0.0
  %9913 = vmatpush1.msra.mxu0 %v9895
  %9914 = vmatprep.subr.mxu0 0.0
  %9915 = vmatpush1.msra.mxu0 %v9896
  %9916 = vmatprep.subr.mxu0 0.0
  %9917 = vmatpush1.msra.mxu0 0.0
  %9918 = vmatprep.subr.mxu0 0.0
  %9919 = vmatpush1.msra.mxu0 0.0
  %9920 = vmatprep.subr.mxu0 0.0
  %9921 = vmatpush1.msra.mxu0 0.0
  %9922 = vmatprep.subr.mxu0 0.0
  %9923 = vmatpush1.msra.mxu0 0.0
  %9924 = vmatprep.subr.mxu0 0.0
  %9925 = vmatpush1.msra.mxu0 0.0
  %9926 = vmatprep.subr.mxu0 0.0
  %9927 = vmatpush1.msra.mxu0 0.0
  %9928 = vmatprep.subr.mxu0 0.0
  %9929 = vmatpush1.msra.mxu0 0.0
  %9930 = vmatprep.subr.mxu0 0.0
  %9931 = vmatpush1.msra.mxu0 0.0
  %9932 = vmatprep.subr.mxu0 0.0
  %9933 = vmatpush1.msra.mxu0 0.0
  %9934 = vmatprep.subr.mxu0 0.0
  %9935 = vmatpush1.msra.mxu0 0.0
  %9936 = vmatprep.subr.mxu0 0.0
  %9937 = vmatpush1.msra.mxu0 0.0
  %9938 = vmatprep.subr.mxu0 0.0
  %9939 = vmatpush1.msra.mxu0 0.0
  %9940 = vmatprep.subr.mxu0 0.0
  %9941 = vmatpush1.msra.mxu0 0.0
  %9942 = vmatprep.subr.mxu0 0.0
  %9943 = vmatpush1.msra.mxu0 0.0
  %9944 = vmatprep.subr.mxu0 0.0
  %9945 = vmatpush1.msra.mxu0 0.0
  %9946 = vmatprep.subr.mxu0 0.0
  %9947 = vmatpush1.msra.mxu0 0.0
  %9948 = vmatprep.subr.mxu0 0.0
  %9949 = vmatpush1.msra.mxu0 0.0
  %9950 = vmatprep.subr.mxu0 0.0
  %9951 = vmatpush1.msra.mxu0 0.0
  %9952 = vmatprep.subr.mxu0 0.0
  %9953 = vmatpush1.msra.mxu0 0.0
  %9954 = vmatprep.subr.mxu0 0.0
  %9955 = vmatpush1.msra.mxu0 0.0
  %9956 = vmatprep.subr.mxu0 0.0
  %9957 = vmatpush1.msra.mxu0 0.0
  %9958 = vmatprep.subr.mxu0 0.0
  %9959 = vmatpush1.msra.mxu0 0.0
  %9960 = vmatprep.subr.mxu0 0.0
  %9961 = vmatpush1.msra.mxu0 0.0
  %9962 = vmatprep.subr.mxu0 0.0
  %9963 = vmatpush1.msra.mxu0 0.0
  %9964 = vmatprep.mubr.f32.mxu0 0.0
  %9965 = vmatmul.mubr.f32.gmra.mrb[0].mxu0 %v9898
  %v9966 = vpop.f32.mrb[0].mxu0
  %v9967 = vadd.f32 0.0, %v9966
  %v9968 = vpop.f32.mrb[0].mxu0
  %9969 = vdwg.mxu0
  %v9970 = vadd.f32 %v9812, %v9967
  %s9971 = scalar_lea.vmem %s4, 16
  %v9972 = vld [vmem:[%s9971] sm:$0x3]
  %v9974 = vsel %vm8711, %v9972, 0
  %9976 = vmatprep.subr.mxu0 0.0
  %9977 = vmatpush1.msra.mxu0 %v8709
  %9978 = vmatprep.subr.mxu0 0.0
  %9979 = vmatpush1.msra.mxu0 0.0
  %9980 = vmatprep.subr.mxu0 0.0
  %9981 = vmatpush1.msra.mxu0 0.0
  %9982 = vmatprep.subr.mxu0 0.0
  %9983 = vmatpush1.msra.mxu0 0.0
  %9984 = vmatprep.subr.mxu0 0.0
  %9985 = vmatpush1.msra.mxu0 0.0
  %9986 = vmatprep.subr.mxu0 0.0
  %9987 = vmatpush1.msra.mxu0 0.0
  %9988 = vmatprep.subr.mxu0 0.0
  %9989 = vmatpush1.msra.mxu0 0.0
  %9990 = vmatprep.subr.mxu0 0.0
  %9991 = vmatpush1.msra.mxu0 0.0
  %9992 = vmatprep.subr.mxu0 0.0
  %9993 = vmatpush1.msra.mxu0 0.0
  %9994 = vmatprep.subr.mxu0 0.0
  %9995 = vmatpush1.msra.mxu0 0.0
  %9996 = vmatprep.subr.mxu0 0.0
  %9997 = vmatpush1.msra.mxu0 0.0
  %9998 = vmatprep.subr.mxu0 0.0
  %9999 = vmatpush1.msra.mxu0 0.0
  %10000 = vmatprep.subr.mxu0 0.0
  %10001 = vmatpush1.msra.mxu0 0.0
  %10002 = vmatprep.subr.mxu0 0.0
  %10003 = vmatpush1.msra.mxu0 0.0
  %10004 = vmatprep.subr.mxu0 0.0
  %10005 = vmatpush1.msra.mxu0 0.0
  %10006 = vmatprep.subr.mxu0 0.0
  %10007 = vmatpush1.msra.mxu0 0.0
  %10008 = vmatprep.subr.mxu0 0.0
  %10009 = vmatpush1.msra.mxu0 0.0
  %10010 = vmatprep.subr.mxu0 0.0
  %10011 = vmatpush1.msra.mxu0 0.0
  %10012 = vmatprep.subr.mxu0 0.0
  %10013 = vmatpush1.msra.mxu0 0.0
  %10014 = vmatprep.subr.mxu0 0.0
  %10015 = vmatpush1.msra.mxu0 0.0
  %10016 = vmatprep.subr.mxu0 0.0
  %10017 = vmatpush1.msra.mxu0 0.0
  %10018 = vmatprep.subr.mxu0 0.0
  %10019 = vmatpush1.msra.mxu0 0.0
  %10020 = vmatprep.subr.mxu0 0.0
  %10021 = vmatpush1.msra.mxu0 0.0
  %10022 = vmatprep.subr.mxu0 0.0
  %10023 = vmatpush1.msra.mxu0 0.0
  %10024 = vmatprep.subr.mxu0 0.0
  %10025 = vmatpush1.msra.mxu0 0.0
  %10026 = vmatprep.subr.mxu0 0.0
  %10027 = vmatpush1.msra.mxu0 0.0
  %10028 = vmatprep.subr.mxu0 0.0
  %10029 = vmatpush1.msra.mxu0 0.0
  %10030 = vmatprep.subr.mxu0 0.0
  %10031 = vmatpush1.msra.mxu0 0.0
  %10032 = vmatprep.subr.mxu0 0.0
  %10033 = vmatpush1.msra.mxu0 0.0
  %10034 = vmatprep.subr.mxu0 0.0
  %10035 = vmatpush1.msra.mxu0 0.0
  %10036 = vmatprep.subr.mxu0 0.0
  %10037 = vmatpush1.msra.mxu0 0.0
  %10038 = vmatprep.subr.mxu0 0.0
  %10039 = vmatpush1.msra.mxu0 0.0
  %10040 = vmatprep.mubr.f32.mxu0 0.0
  %10041 = vmatmul.mubr.f32.gmra.mrb[0].mxu0 %v9974
  %v10042 = vpop.f32.mrb[0].mxu0
  %v10043 = vadd.f32 0.0, %v10042
  %v10044 = vpop.f32.mrb[0].mxu0
  %10045 = vdwg.mxu0
  %s10046 = scalar_lea.vmem %s15, 512
  %v10047 = vld [vmem:[%s10046] sm:$0xff]
  %v10048 = vld [vmem:[%s10046 + $0x8] sm:$0xff]
  %v10049 = vld [vmem:[%s10046 + $0x10] sm:$0xff]
  %v10050 = vld [vmem:[%s10046 + $0x18] sm:$0xff]
  %v10051 = vld [vmem:[%s10046 + $0x20] sm:$0xff]
  %v10052 = vld [vmem:[%s10046 + $0x28] sm:$0xff]
  %v10053 = vld [vmem:[%s10046 + $0x30] sm:$0xff]
  %v10054 = vld [vmem:[%s10046 + $0x38] sm:$0xff]
  %v10056 = vsel %vm8669, %v10043, 0
  %10058 = vmatprep.subr.mxu0 0.0
  %10059 = vmatpush1.msra.mxu0 %v10047
  %10060 = vmatprep.subr.mxu0 0.0
  %10061 = vmatpush1.msra.mxu0 %v10048
  %10062 = vmatprep.subr.mxu0 0.0
  %10063 = vmatpush1.msra.mxu0 %v10049
  %10064 = vmatprep.subr.mxu0 0.0
  %10065 = vmatpush1.msra.mxu0 %v10050
  %10066 = vmatprep.subr.mxu0 0.0
  %10067 = vmatpush1.msra.mxu0 %v10051
  %10068 = vmatprep.subr.mxu0 0.0
  %10069 = vmatpush1.msra.mxu0 %v10052
  %10070 = vmatprep.subr.mxu0 0.0
  %10071 = vmatpush1.msra.mxu0 %v10053
  %10072 = vmatprep.subr.mxu0 0.0
  %10073 = vmatpush1.msra.mxu0 %v10054
  %10074 = vmatprep.subr.mxu0 0.0
  %10075 = vmatpush1.msra.mxu0 0.0
  %10076 = vmatprep.subr.mxu0 0.0
  %10077 = vmatpush1.msra.mxu0 0.0
  %10078 = vmatprep.subr.mxu0 0.0
  %10079 = vmatpush1.msra.mxu0 0.0
  %10080 = vmatprep.subr.mxu0 0.0
  %10081 = vmatpush1.msra.mxu0 0.0
  %10082 = vmatprep.subr.mxu0 0.0
  %10083 = vmatpush1.msra.mxu0 0.0
  %10084 = vmatprep.subr.mxu0 0.0
  %10085 = vmatpush1.msra.mxu0 0.0
  %10086 = vmatprep.subr.mxu0 0.0
  %10087 = vmatpush1.msra.mxu0 0.0
  %10088 = vmatprep.subr.mxu0 0.0
  %10089 = vmatpush1.msra.mxu0 0.0
  %10090 = vmatprep.subr.mxu0 0.0
  %10091 = vmatpush1.msra.mxu0 0.0
  %10092 = vmatprep.subr.mxu0 0.0
  %10093 = vmatpush1.msra.mxu0 0.0
  %10094 = vmatprep.subr.mxu0 0.0
  %10095 = vmatpush1.msra.mxu0 0.0
  %10096 = vmatprep.subr.mxu0 0.0
  %10097 = vmatpush1.msra.mxu0 0.0
  %10098 = vmatprep.subr.mxu0 0.0
  %10099 = vmatpush1.msra.mxu0 0.0
  %10100 = vmatprep.subr.mxu0 0.0
  %10101 = vmatpush1.msra.mxu0 0.0
  %10102 = vmatprep.subr.mxu0 0.0
  %10103 = vmatpush1.msra.mxu0 0.0
  %10104 = vmatprep.subr.mxu0 0.0
  %10105 = vmatpush1.msra.mxu0 0.0
  %10106 = vmatprep.subr.mxu0 0.0
  %10107 = vmatpush1.msra.mxu0 0.0
  %10108 = vmatprep.subr.mxu0 0.0
  %10109 = vmatpush1.msra.mxu0 0.0
  %10110 = vmatprep.subr.mxu0 0.0
  %10111 = vmatpush1.msra.mxu0 0.0
  %10112 = vmatprep.subr.mxu0 0.0
  %10113 = vmatpush1.msra.mxu0 0.0
  %10114 = vmatprep.subr.mxu0 0.0
  %10115 = vmatpush1.msra.mxu0 0.0
  %10116 = vmatprep.subr.mxu0 0.0
  %10117 = vmatpush1.msra.mxu0 0.0
  %10118 = vmatprep.subr.mxu0 0.0
  %10119 = vmatpush1.msra.mxu0 0.0
  %10120 = vmatprep.subr.mxu0 0.0
  %10121 = vmatpush1.msra.mxu0 0.0
  %10122 = vmatprep.mubr.f32.mxu0 0.0
  %10123 = vmatmul.mubr.f32.gmra.mrb[0].mxu0 %v10056
  %v10124 = vpop.f32.mrb[0].mxu0
  %v10125 = vadd.f32 0.0, %v10124
  %v10126 = vpop.f32.mrb[0].mxu0
  %10127 = vdwg.mxu0
  %v10128 = vadd.f32 %v9970, %v10125
  %v10129 = vld [vmem:[%s16] sm:$0x1]
  %v10131 = vlaneseq
  %v10132 = vshrl.u32 %v10131, 7
  %v10133 = vsub.s32 0, %v10132
  %v10134 = vrot.slane %v10129, %v10133
  %v10136 = vadd.f32 %v10128, %v10134
  %vm10137 = vcmp.ge.f32.partialorder %v10136, 0.0
  %v10138 = vmul.f32 %v10136, 0.2
  %v10139 = vsel %vm10137, %v10136, %v10138
  %vm10140 = vcmask 1041408
  %v10141 = vsel %vm10140, %v10139, 0.0
  %v10142 = vrot.slane %v10141, 4
  %v10143 = vadd.f32 %v10141, %v10142
  %v10144 = vrot.slane %v10143, 2
  %v10145 = vadd.f32 %v10143, %v10144
  %v10146 = vrot.slane %v10145, 1
  %v10147 = vadd.f32 %v10145, %v10146
  %v10148 = vrcp.pop 2.0
  %v10149 = vmul.f32 %v10147, %v10148
  %v10150 = vmul.f32 %v10139, %v10139
  %v10151 = vsel %vm10140, %v10150, 0.0
  %v10152 = vrot.slane %v10151, 4
  %v10153 = vadd.f32 %v10151, %v10152
  %v10154 = vrot.slane %v10153, 2
  %v10155 = vadd.f32 %v10153, %v10154
  %v10156 = vrot.slane %v10155, 1
  %v10157 = vadd.f32 %v10155, %v10156
  %v10158 = vmul.f32 %v10157, %v10148
  %v10159 = vmul.f32 %v10149, %v10149
  %v10160 = vsub.f32 %v10158, %v10159
  %v10161 = vsub.f32 %v10139, %v10149
  %v10162 = vadd.f32 %v10160, 0.8
  %v10163 = vrsqrt.pop %v10162
  %v10164 = vmul.f32 %v10161, %v10163
  %v10165 = vld [vmem:[%s17] sm:$0x1]
  %v10167 = vlaneseq
  %v10168 = vshrl.u32 %v10167, 7
  %v10169 = vsub.s32 0, %v10168
  %v10170 = vrot.slane %v10165, %v10169
  %v10172 = vmul.f32 %v10164, %v10170
  %v10173 = vld [vmem:[%s18] sm:$0x1]
  %v10175 = vlaneseq
  %v10176 = vshrl.u32 %v10175, 7
  %v10177 = vsub.s32 0, %v10176
  %v10178 = vrot.slane %v10173, %v10177
  %v10180 = vadd.f32 %v10172, %v10178
  %v10181 = vld [vmem:[%s19] sm:$0xff]
  %v10182 = vld [vmem:[%s19 + $0x8] sm:$0xff]
  %v10183 = vld [vmem:[%s19 + $0x10] sm:$0xff]
  %v10184 = vld [vmem:[%s19 + $0x18] sm:$0xff]
  %v10185 = vld [vmem:[%s19 + $0x20] sm:$0xff]
  %v10186 = vld [vmem:[%s19 + $0x28] sm:$0xff]
  %v10187 = vld [vmem:[%s19 + $0x30] sm:$0xff]
  %v10188 = vld [vmem:[%s19 + $0x38] sm:$0xff]
  %v10189 = vld [vmem:[%s19 + $0x40] sm:$0xff]
  %v10190 = vld [vmem:[%s19 + $0x48] sm:$0xff]
  %v10191 = vld [vmem:[%s19 + $0x50] sm:$0xff]
  %v10192 = vld [vmem:[%s19 + $0x58] sm:$0xff]
  %v10193 = vld [vmem:[%s19 + $0x60] sm:$0xff]
  %v10194 = vld [vmem:[%s19 + $0x68] sm:$0xff]
  %v10195 = vld [vmem:[%s19 + $0x70] sm:$0xff]
  %v10196 = vld [vmem:[%s19 + $0x78] sm:$0xff]
  %v10197 = vld [vmem:[#allocation2] sm:$0x1]
  %v10199 = vlaneseq
  %v10200 = vshrl.u32 %v10199, 7
  %v10201 = vsub.s32 0, %v10200
  %v10202 = vrot.slane %v10197, %v10201
  %10204 = vmatprep.subr.mxu0 0.0
  %10205 = vmatpush1.msra.mxu0 %v10181
  %10206 = vmatprep.subr.mxu0 0.0
  %10207 = vmatpush1.msra.mxu0 %v10182
  %10208 = vmatprep.subr.mxu0 0.0
  %10209 = vmatpush1.msra.mxu0 %v10183
  %10210 = vmatprep.subr.mxu0 0.0
  %10211 = vmatpush1.msra.mxu0 %v10184
  %10212 = vmatprep.subr.mxu0 0.0
  %10213 = vmatpush1.msra.mxu0 %v10185
  %10214 = vmatprep.subr.mxu0 0.0
  %10215 = vmatpush1.msra.mxu0 %v10186
  %10216 = vmatprep.subr.mxu0 0.0
  %10217 = vmatpush1.msra.mxu0 %v10187
  %10218 = vmatprep.subr.mxu0 0.0
  %10219 = vmatpush1.msra.mxu0 %v10188
  %10220 = vmatprep.subr.mxu0 0.0
  %10221 = vmatpush1.msra.mxu0 %v10189
  %10222 = vmatprep.subr.mxu0 0.0
  %10223 = vmatpush1.msra.mxu0 %v10190
  %10224 = vmatprep.subr.mxu0 0.0
  %10225 = vmatpush1.msra.mxu0 %v10191
  %10226 = vmatprep.subr.mxu0 0.0
  %10227 = vmatpush1.msra.mxu0 %v10192
  %10228 = vmatprep.subr.mxu0 0.0
  %10229 = vmatpush1.msra.mxu0 %v10193
  %10230 = vmatprep.subr.mxu0 0.0
  %10231 = vmatpush1.msra.mxu0 %v10194
  %10232 = vmatprep.subr.mxu0 0.0
  %10233 = vmatpush1.msra.mxu0 %v10195
  %10234 = vmatprep.subr.mxu0 0.0
  %10235 = vmatpush1.msra.mxu0 %v10196
  %10236 = vmatprep.subr.mxu0 0.0
  %10237 = vmatpush1.msra.mxu0 0.0
  %10238 = vmatprep.subr.mxu0 0.0
  %10239 = vmatpush1.msra.mxu0 0.0
  %10240 = vmatprep.subr.mxu0 0.0
  %10241 = vmatpush1.msra.mxu0 0.0
  %10242 = vmatprep.subr.mxu0 0.0
  %10243 = vmatpush1.msra.mxu0 0.0
  %10244 = vmatprep.subr.mxu0 0.0
  %10245 = vmatpush1.msra.mxu0 0.0
  %10246 = vmatprep.subr.mxu0 0.0
  %10247 = vmatpush1.msra.mxu0 0.0
  %10248 = vmatprep.subr.mxu0 0.0
  %10249 = vmatpush1.msra.mxu0 0.0
  %10250 = vmatprep.subr.mxu0 0.0
  %10251 = vmatpush1.msra.mxu0 0.0
  %10252 = vmatprep.subr.mxu0 0.0
  %10253 = vmatpush1.msra.mxu0 0.0
  %10254 = vmatprep.subr.mxu0 0.0
  %10255 = vmatpush1.msra.mxu0 0.0
  %10256 = vmatprep.subr.mxu0 0.0
  %10257 = vmatpush1.msra.mxu0 0.0
  %10258 = vmatprep.subr.mxu0 0.0
  %10259 = vmatpush1.msra.mxu0 0.0
  %10260 = vmatprep.subr.mxu0 0.0
  %10261 = vmatpush1.msra.mxu0 0.0
  %10262 = vmatprep.subr.mxu0 0.0
  %10263 = vmatpush1.msra.mxu0 0.0
  %10264 = vmatprep.subr.mxu0 0.0
  %10265 = vmatpush1.msra.mxu0 0.0
  %10266 = vmatprep.subr.mxu0 0.0
  %10267 = vmatpush1.msra.mxu0 0.0
  %10268 = vmatprep.mubr.f32.mxu0 0.0
  %10269 = vmatmul.mubr.f32.gmra.mrb[0].mxu0 %v10180
  %v10270 = vpop.f32.mrb[0].mxu0
  %v10271 = vadd.f32 %v10202, %v10270
  %v10272 = vpop.f32.mrb[0].mxu0
  %10273 = vdwg.mxu0
  %vm10274 = vcmask 1024
  %10275 = vst.msk [vmem:[%s21] sm:$0x3] %vm10274, %v10271
  // Predicated region
  $region86: #{discriminator_forward.1} parent=0 // pred_check
    _
  $region87: #{discriminator_forward.1} parent=0 // pred_check_branch
    %10277 = sbr.rel (0) target = $region89
  $region88: #{discriminator_forward.1} parent=0 // pred_region
    _
  $region89: #{discriminator_forward.1} parent=0 // pred_fallthru
    _
  // Predicated region
  $region90: #{discriminator_forward.1} parent=0 // pred_check
    _
  $region91: #{discriminator_forward.1} parent=0 // pred_check_branch
    %10279 = sbr.rel (0) target = $region93
  $region92: #{discriminator_forward.1} parent=0 // pred_region
    _
  $region93: #{discriminator_forward.1} parent=0 // pred_fallthru
    _

</llo_original>
